<compile_context>
chip_gen: v7x
topology: tpu7x:2x2x1
jax: 0.10.0
libtpu: 0.0.40
codegen_flags: <defaults>
</compile_context>

<pallas_src>
import functools

import numpy as np
import jax
import jax.numpy as jnp
from jax.experimental import pallas as pl
from jax.experimental.pallas import tpu as pltpu


# ---------------------------------------------------------------------------
# Model configuration
# ---------------------------------------------------------------------------
BACKBONE_CHANNELS = [24, 40, 112, 320]     # logical tf_efficientnet_lite0 taps
CB_PAD = [128, 128, 128, 320]              # lane-dense widths (level-3 hidden
                                           # is never stored, so left at 320)
IMG_PAD = 8                                # RGB padded 3->8 so level-0 K = 128
COUT = 64
CCM_CHANNELS = [COUT, COUT * 2, COUT * 4, COUT * 8]           # [64,128,256,512]
CSM_IN = [CCM_CHANNELS[3], CCM_CHANNELS[2], CCM_CHANNELS[1], CCM_CHANNELS[0]]
CSM_OUT = [CCM_CHANNELS[3] // 2, CCM_CHANNELS[2] // 2,
           CCM_CHANNELS[1] // 2, CCM_CHANNELS[0]]             # [256,128,64,64]
S2D_FACTORS = [4, 2, 2, 2]                                    # /4, /8, /16, /32
_COMPUTE_DTYPE = jnp.bfloat16


# ---------------------------------------------------------------------------
# Per-chip tiling configuration
# ---------------------------------------------------------------------------
@functools.lru_cache(maxsize=None)
def _chip_config():
    """(row-block target, vmem_limit_bytes), gated on VMEM capacity."""
    vmem_cap = 0
    try:
        info = pltpu.get_tpu_info()
        vmem_cap = int(getattr(info, "vmem_capacity_bytes", 0) or 0)
    except Exception:
        vmem_cap = 0
    if vmem_cap >= 100 * 1024 * 1024:       # v5e / v6e: 128 MiB physical VMEM
        return 2048, 64 * 1024 * 1024
    # v7x-class (64 MiB / TensorCore) or unknown: stay well under physical.
    return 2048, 40 * 1024 * 1024


def _compiler_params():
    _, vmem_limit = _chip_config()
    return pltpu.CompilerParams(dimension_semantics=("parallel",),
                                vmem_limit_bytes=vmem_limit)


def _round_up(x, m):
    return ((x + m - 1) // m) * m


def _pick_rows(M, quantum=8):
    """Rows per grid step: <= per-chip BLOCK_M, multiple of `quantum`, and a
    >=2-step parallel grid whenever M allows (v7x megacore sharding)."""
    block_m, _ = _chip_config()
    bm = min(M, block_m)
    if bm == M and M > quantum:             # single step -> split in two
        bm = -(-M // 2)
    bm = _round_up(bm, quantum)
    return max(1, min(bm, M))


def _superrow_block(Q, Wh):
    """Producer row-pairs ("super-rows") per grid step for the fused s2d kernel."""
    block_m, _ = _chip_config()
    qb = max(1, min(Q, max(1, block_m // max(Wh, 1))))
    if qb >= Q and Q > 1:                   # give the parallel axis >=2 steps
        qb = -(-Q // 2)
    return qb, (pl.cdiv(Q, qb),)


# ---------------------------------------------------------------------------
# Pallas kernels
# ---------------------------------------------------------------------------
def _bb_ccm_kernel(x_ref, w1_ref, b1_ref, w2_ref, b2_ref, *out_refs,
                   emit_hidden):
    """h = relu6(x @ w1 + b1);  y2 = h @ w2 + b2.  Generic flat-pixel input."""
    h = jnp.dot(x_ref[...], w1_ref[...], preferred_element_type=jnp.float32)
    h = jnp.clip(h + b1_ref[...], 0.0, 6.0)
    if emit_hidden:
        out_refs[0][...] = h.astype(out_refs[0].dtype)
    y2_ref = out_refs[-1]
    y2 = jnp.dot(h.astype(w2_ref.dtype), w2_ref[...],
                 preferred_element_type=jnp.float32) + b2_ref[...]
    y2_ref[...] = y2.astype(y2_ref.dtype)


def _s2d_bb_ccm_kernel(x_ref, w1e_ref, w1o_ref, b1_ref, w2_ref, b2_ref,
                       *out_refs, emit_hidden):
    """Fused space-to-depth(2) + backbone 1x1 (ReLU6) + CCM 1x1.

    x_ref block: (qb, 2, Wh, 2*Cp) = qb producer row-pairs; the two
    horizontally adjacent pixels of every output pixel are already contiguous
    along the last axis, so the K = 4*Cp s2d matmul becomes two K = 2*Cp
    matmuls (row parity) on plain contiguous views: no in-kernel transpose,
    no HBM relayout.  Wh is guaranteed to be a multiple of 8 by the wrapper,
    so the leading-dim merge below is layout-free.
    """
    qb, _, wh, k2 = x_ref.shape
    x = x_ref[...]
    a_even = x[:, 0].reshape(qb * wh, k2)
    a_odd = x[:, 1].reshape(qb * wh, k2)
    h = jnp.dot(a_even, w1e_ref[...], preferred_element_type=jnp.float32)
    h = h + jnp.dot(a_odd, w1o_ref[...], preferred_element_type=jnp.float32)
    h = jnp.clip(h + b1_ref[...], 0.0, 6.0)
    if emit_hidden:
        out_refs[0][...] = h.astype(out_refs[0].dtype)
    y2_ref = out_refs[-1]
    y2 = jnp.dot(h.astype(w2_ref.dtype), w2_ref[...],
                 preferred_element_type=jnp.float32) + b2_ref[...]
    y2_ref[...] = y2.astype(y2_ref.dtype)


def _conv1x1_kernel(x_ref, w_ref, b_ref, o_ref):
    """o = x @ w + b (1x1 conv on flattened pixels)."""
    acc = jnp.dot(x_ref[...], w_ref[...], preferred_element_type=jnp.float32)
    o_ref[...] = (acc + b_ref[...]).astype(o_ref.dtype)


def _skip_conv1x1_kernel(x_ref, s_ref, w_ref, b_ref, o_ref):
    """o = (x + skip) @ w + b (FeatureFusionBlock with fused skip-add)."""
    x = x_ref[...] + s_ref[...]
    acc = jnp.dot(x, w_ref[...], preferred_element_type=jnp.float32)
    o_ref[...] = (acc + b_ref[...]).astype(o_ref.dtype)


# ---------------------------------------------------------------------------
# Pallas wrappers
# ---------------------------------------------------------------------------
def fused_backbone_ccm(xm, w1, b1, w2, b2, *, emit_hidden=True):
    """Generic fused backbone-conv(ReLU6) + CCM-conv on flat pixels (M, K)."""
    M, K = xm.shape
    C1, C2 = w1.shape[1], w2.shape[1]
    bm = _pick_rows(M)
    grid = (pl.cdiv(M, bm),)

    out_shapes, out_specs = [], []
    if emit_hidden:
        out_shapes.append(jax.ShapeDtypeStruct((M, C1), xm.dtype))
        out_specs.append(pl.BlockSpec((bm, C1), lambda i: (i, 0)))
    out_shapes.append(jax.ShapeDtypeStruct((M, C2), xm.dtype))
    out_specs.append(pl.BlockSpec((bm, C2), lambda i: (i, 0)))

    cost = pl.CostEstimate(
        flops=2 * M * K * C1 + 2 * M * C1 * C2, transcendentals=0,
        bytes_accessed=int(2 * (M * K + K * C1 + C1 * C2 + M * C2
                                + (M * C1 if emit_hidden else 0))
                           + 4 * (C1 + C2)))

    outs = pl.pallas_call(
        functools.partial(_bb_ccm_kernel, emit_hidden=emit_hidden),
        out_shape=tuple(out_shapes),
        grid=grid,
        in_specs=[
            pl.BlockSpec((bm, K), lambda i: (i, 0)),
            pl.BlockSpec((K, C1), lambda i: (0, 0)),
            pl.BlockSpec((1, C1), lambda i: (0, 0)),
            pl.BlockSpec((C1, C2), lambda i: (0, 0)),
            pl.BlockSpec((1, C2), lambda i: (0, 0)),
        ],
        out_specs=tuple(out_specs),
        compiler_params=_compiler_params(),
        cost_estimate=cost,
    )(xm, w1, b1.reshape(1, C1), w2, b2.reshape(1, C2))
    if emit_hidden:
        return outs
    return outs[0] if isinstance(outs, (tuple, list)) else outs


def fused_s2d_backbone_ccm(h_prev_flat, nhwc_shape, w1, b1, w2, b2, *,
                           emit_hidden=True):
    """space-to-depth(2) + backbone conv (ReLU6) + CCM conv, fully fused.

    `h_prev_flat` is the producer's hidden activation (any free reshape of
    the NHWC tensor with logical shape `nhwc_shape`).  Uses the fused kernel
    whenever the producer row width allows a layout-free in-VMEM regrouping
    (Wp/2 a multiple of 8); otherwise falls back to XLA s2d + generic kernel.
    """
    N, Hp, Wp, Cp = nhwc_shape
    C1, C2 = w1.shape[1], w2.shape[1]
    Wh, Q = Wp // 2, (N * Hp) // 2
    M_out = Q * Wh

    if (Hp % 2) or (Wp % 2) or (Wh % 8 != 0):
        x = space_to_depth(h_prev_flat.reshape(N, Hp, Wp, Cp), 2)
        return fused_backbone_ccm(x.reshape(M_out, 4 * Cp), w1, b1, w2, b2,
                                  emit_hidden=emit_hidden)

    K2 = 2 * Cp
    x4 = h_prev_flat.reshape(Q, 2, Wh, K2)     # free re-view (no copy)
    w1e, w1o = w1[:K2], w1[K2:]                # row-parity halves of s2d weight
    qb, grid = _superrow_block(Q, Wh)
    bm_out = qb * Wh

    out_shapes, out_specs = [], []
    if emit_hidden:
        out_shapes.append(jax.ShapeDtypeStruct((M_out, C1), h_prev_flat.dtype))
        out_specs.append(pl.BlockSpec((bm_out, C1), lambda i: (i, 0)))
    out_shapes.append(jax.ShapeDtypeStruct((M_out, C2), h_prev_flat.dtype))
    out_specs.append(pl.BlockSpec((bm_out, C2), lambda i: (i, 0)))

    cost = pl.CostEstimate(
        flops=2 * M_out * (4 * Cp) * C1 + 2 * M_out * C1 * C2,
        transcendentals=0,
        bytes_accessed=int(2 * (M_out * 4 * Cp + 4 * Cp * C1 + C1 * C2
                                + M_out * C2
                                + (M_out * C1 if emit_hidden else 0))))

    outs = pl.pallas_call(
        functools.partial(_s2d_bb_ccm_kernel, emit_hidden=emit_hidden),
        out_shape=tuple(out_shapes),
        grid=grid,
        in_specs=[
            pl.BlockSpec((qb, 2, Wh, K2), lambda i: (i, 0, 0, 0)),
            pl.BlockSpec((K2, C1), lambda i: (0, 0)),
            pl.BlockSpec((K2, C1), lambda i: (0, 0)),
            pl.BlockSpec((1, C1), lambda i: (0, 0)),
            pl.BlockSpec((C1, C2), lambda i: (0, 0)),
            pl.BlockSpec((1, C2), lambda i: (0, 0)),
        ],
        out_specs=tuple(out_specs),
        compiler_params=_compiler_params(),
        cost_estimate=cost,
    )(x4, w1e, w1o, b1.reshape(1, C1), w2, b2.reshape(1, C2))
    if emit_hidden:
        return outs
    return outs[0] if isinstance(outs, (tuple, list)) else outs


def _ffb_conv_flat(xm, sm, w, b):
    """(x [+ skip]) @ w + b on flat pixels."""
    M, Cin = xm.shape
    Cout = w.shape[1]
    bm = _pick_rows(M)
    grid = (pl.cdiv(M, bm),)

    ins = [xm]
    in_specs = [pl.BlockSpec((bm, Cin), lambda i: (i, 0))]
    if sm is not None:
        ins.append(sm)
        in_specs.append(pl.BlockSpec((bm, Cin), lambda i: (i, 0)))
    ins += [w, b.reshape(1, Cout)]
    in_specs += [pl.BlockSpec((Cin, Cout), lambda i: (0, 0)),
                 pl.BlockSpec((1, Cout), lambda i: (0, 0))]

    cost = pl.CostEstimate(
        flops=2 * M * Cin * Cout + (M * Cin if sm is not None else 0),
        transcendentals=0,
        bytes_accessed=int(2 * (M * Cin * (2 if sm is not None else 1)
                                + Cin * Cout + M * Cout) + 4 * Cout))

    kernel = _conv1x1_kernel if sm is None else _skip_conv1x1_kernel
    return pl.pallas_call(
        kernel,
        out_shape=jax.ShapeDtypeStruct((M, Cout), xm.dtype),
        grid=grid,
        in_specs=in_specs,
        out_specs=pl.BlockSpec((bm, Cout), lambda i: (i, 0)),
        compiler_params=_compiler_params(),
        cost_estimate=cost,
    )(*ins)


def _block_diag2(w):
    z = jnp.zeros_like(w)
    return jnp.concatenate([jnp.concatenate([w, z], axis=1),
                            jnp.concatenate([z, w], axis=1)], axis=0)


def _tile2(b):
    return jnp.concatenate([b, b])


def ffb_conv(x_nhwc, skip_nhwc, w, b, *, pack=False):
    """FeatureFusionBlock out_conv (+ fused skip add), run pre-upsample.

    With pack=True the 64-wide conv is evaluated two pixels per row against a
    block-diagonal [[W,0],[0,W]] weight so loads, the MXU K/N dims and stores
    are all 128-lane dense; the packing itself is a free reshape.
    """
    N, H, W, Cin = x_nhwc.shape
    Cout = w.shape[1]
    M = N * H * W
    if pack and M % 2 == 0:
        xm = x_nhwc.reshape(M // 2, 2 * Cin)
        sm = None if skip_nhwc is None else skip_nhwc.reshape(M // 2, 2 * Cin)
        out = _ffb_conv_flat(xm, sm, _block_diag2(w), _tile2(b))
        return out.reshape(N, H, W, Cout)
    xm = x_nhwc.reshape(M, Cin)
    sm = None if skip_nhwc is None else skip_nhwc.reshape(M, Cin)
    return _ffb_conv_flat(xm, sm, w, b).reshape(N, H, W, Cout)


# ---------------------------------------------------------------------------
# Plain-JAX glue
# ---------------------------------------------------------------------------
def space_to_depth(x, r):
    """NHWC space-to-depth by factor r (channel order: (dy, dx, c))."""
    N, H, W, C = x.shape
    x = x.reshape(N, H // r, r, W // r, r, C)
    x = x.transpose(0, 1, 3, 2, 4, 5)
    return x.reshape(N, H // r, W // r, r * r * C)


def _interp_matrix_np(n_in, n_out):
    """Interpolation matrix for bilinear resize with align_corners=True."""
    if n_in == 1:
        return np.ones((n_out, 1), np.float32)
    pos = np.arange(n_out, dtype=np.float64) * ((n_in - 1) / (n_out - 1))
    lo = np.clip(np.floor(pos), 0, n_in - 1).astype(np.int64)
    hi = np.minimum(lo + 1, n_in - 1)
    frac = (pos - lo).astype(np.float32)
    A = np.zeros((n_out, n_in), np.float32)
    A[np.arange(n_out), lo] += 1.0 - frac
    A[np.arange(n_out), hi] += frac
    return A


def bilinear_up2_align_corners(x_nhwc):
    """F.interpolate(scale_factor=2, mode='bilinear', align_corners=True),
    evaluated as two bf16 contractions so no f32 intermediate hits HBM."""
    # TODO(synk): could be folded into the Pallas FFB kernel (two tiny MXU
    # matmuls per block with a +1-row halo); kept in XLA, now fully bf16.
    N, H, W, C = x_nhwc.shape
    Ah = jnp.asarray(_interp_matrix_np(H, 2 * H)).astype(x_nhwc.dtype)
    Aw = jnp.asarray(_interp_matrix_np(W, 2 * W)).astype(x_nhwc.dtype)
    y = jnp.einsum("oh,nhwc->nowc", Ah, x_nhwc,
                   preferred_element_type=jnp.float32).astype(x_nhwc.dtype)
    y = jnp.einsum("pw,nowc->nopc", Aw, y,
                   preferred_element_type=jnp.float32).astype(x_nhwc.dtype)
    return y


# ---------------------------------------------------------------------------
# Parameter construction (deterministic, synthetic; zero-padded lane-dense)
# ---------------------------------------------------------------------------
def init_params(key, dtype=_COMPUTE_DTYPE):
    keys = jax.random.split(key, 24)
    k = iter(range(24))
    params = {}
    prev_log, prev_pad = 3, IMG_PAD           # RGB padded to 8 input channels
    for i in range(4):
        r = S2D_FACTORS[i]
        cb_log, cb_pad = BACKBONE_CHANNELS[i], CB_PAD[i]
        cc = CCM_CHANNELS[i]
        fan_in = r * r * prev_log
        w1 = jax.random.normal(keys[next(k)], (fan_in, cb_log),
                               jnp.float32) / np.sqrt(fan_in)
        b1 = jax.random.normal(keys[next(k)], (cb_log,), jnp.float32) * 0.01
        w2 = jax.random.normal(keys[next(k)], (cb_log, cc),
                               jnp.float32) / np.sqrt(cb_log)
        b2 = jax.random.normal(keys[next(k)], (cc,), jnp.float32) * 0.01
        # zero-padded weight rows/cols + zero bias => padded channels are
        # exactly zero after ReLU6 and inert downstream.
        w1p = jnp.pad(w1.reshape(r, r, prev_log, cb_log),
                      ((0, 0), (0, 0), (0, prev_pad - prev_log),
                       (0, cb_pad - cb_log)))
        params[f"bb{i}"] = {
            "w1": w1p.reshape(r * r * prev_pad, cb_pad).astype(dtype),
            "b1": jnp.pad(b1, (0, cb_pad - cb_log)),                 # f32
            "w2": jnp.pad(w2, ((0, cb_pad - cb_log), (0, 0))).astype(dtype),
            "b2": b2,                                                # f32
        }
        prev_log, prev_pad = cb_log, cb_pad
    for n, ci, co in zip(["csm3", "csm2", "csm1", "csm0"], CSM_IN, CSM_OUT):
        w = jax.random.normal(keys[next(k)], (ci, co), jnp.float32) / np.sqrt(ci)
        b = jax.random.normal(keys[next(k)], (co,), jnp.float32) * 0.01
        params[n] = {"w": w.astype(dtype), "b": b}
    return params


# ---------------------------------------------------------------------------
# Forward pass (mirrors F_RandomProj.forward with proj_type=2, expand=True)
# ---------------------------------------------------------------------------
def feature_fusion_block(p, x_nhwc, skip_nhwc=None, *, pack=False):
    # out_conv (pure channel mix) commutes exactly with the bilinear x2
    # upsample (linear, interp weights sum to 1 so the bias commutes too):
    # run conv + skip-add at LOW resolution, then upsample.
    y = ffb_conv(x_nhwc, skip_nhwc, p["w"], p["b"], pack=pack)
    return bilinear_up2_align_corners(y)


@jax.jit
def f_random_proj_forward(params, x_nchw):
    N, C, H, W = x_nchw.shape
    assert C == 3 and H % 32 == 0 and W % 32 == 0, "expects RGB, H/W % 32 == 0"

    # NCHW -> NHWC bf16, pad RGB to 8 channels (inert zeros), s2d(4): level-0
    # fan_in becomes 16*8 = 128 (lane-dense K) -- one small XLA op on the
    # raw image only.
    x = jnp.transpose(x_nchw, (0, 2, 3, 1)).astype(_COMPUTE_DTYPE)
    x = jnp.pad(x, ((0, 0), (0, 0), (0, 0), (0, IMG_PAD - 3)))
    x = space_to_depth(x, 4)                              # (N, H/4, W/4, 128)
    H0, W0 = H // 4, W // 4
    M0 = N * H0 * W0

    # --- level 0: fused backbone(ReLU6) + CCM, two pixels per row against
    # block-diagonal weights => all loads / MXU passes / stores 128-lane. ---
    p0 = params["bb0"]
    h0, cm0 = fused_backbone_ccm(
        x.reshape(M0 // 2, 2 * x.shape[-1]),
        _block_diag2(p0["w1"]), _tile2(p0["b1"]),
        _block_diag2(p0["w2"]), _tile2(p0["b2"]), emit_hidden=True)
    cm0 = cm0.reshape(N, H0, W0, CCM_CHANNELS[0])         # packed == same bytes
    h_flat, h_shape = h0, (N, H0, W0, CB_PAD[0])

    # --- levels 1..3: fused space-to-depth(2) + backbone + CCM ---
    cms = [cm0]
    for i in (1, 2, 3):
        p = params[f"bb{i}"]
        emit = i < 3                     # level-3 hidden has no consumer
        outs = fused_s2d_backbone_ccm(h_flat, h_shape, p["w1"], p["b1"],
                                      p["w2"], p["b2"], emit_hidden=emit)
        Np, Hp, Wp, _ = h_shape
        Hn, Wn = Hp // 2, Wp // 2
        if emit:
            h_flat, cm = outs
            h_shape = (Np, Hn, Wn, CB_PAD[i])
        else:
            cm = outs
        cms.append(cm.reshape(Np, Hn, Wn, CCM_CHANNELS[i]))
    out0_cm, out1_cm, out2_cm, out3_cm = cms

    # --- CSM: FeatureFusionBlocks, top-down (conv before x2 upsample) ---
    out3_sm = feature_fusion_block(params["csm3"], out3_cm)
    out2_sm = feature_fusion_block(params["csm2"], out3_sm, out2_cm)
    out1_sm = feature_fusion_block(params["csm1"], out2_sm, out1_cm, pack=True)
    out0_sm = feature_fusion_block(params["csm0"], out1_sm, out0_cm, pack=True)

    # NHWC -> NCHW (f32) to match the PyTorch module's output convention.
    # TODO(synk): drop (keep NHWC/bf16) if the downstream consumer allows.
    to_nchw = lambda t: jnp.transpose(t, (0, 3, 1, 2)).astype(jnp.float32)
    return {"0": to_nchw(out0_sm), "1": to_nchw(out1_sm),
            "2": to_nchw(out2_sm), "3": to_nchw(out3_sm)}


# ---------------------------------------------------------------------------
# Pure-JAX reference (original op order: upsample BEFORE out_conv)
# ---------------------------------------------------------------------------
def _reference_forward(params, x_nchw):
    f32 = jnp.float32
    x = jnp.transpose(x_nchw, (0, 2, 3, 1)).astype(_COMPUTE_DTYPE)
    x = jnp.pad(x, ((0, 0), (0, 0), (0, 0), (0, IMG_PAD - 3)))
    h, cms = x, []
    for i in range(4):
        p = params[f"bb{i}"]
        h = space_to_depth(h, S2D_FACTORS[i])
        N, H, W, K = h.shape
        a = jnp.dot(h.reshape(-1, K), p["w1"],
                    preferred_element_type=f32) + p["b1"]
        a = jnp.clip(a, 0.0, 6.0)
        cm = jnp.dot(a.astype(_COMPUTE_DTYPE), p["w2"],
                     preferred_element_type=f32) + p["b2"]
        cms.append(cm.astype(_COMPUTE_DTYPE).reshape(N, H, W, -1))
        h = a.astype(_COMPUTE_DTYPE).reshape(N, H, W, -1)
    out0_cm, out1_cm, out2_cm, out3_cm = cms

    def ffb(p, xin, skip=None):
        if skip is not None:
            xin = xin + skip
        y = bilinear_up2_align_corners(xin)           # PyTorch order
        N, H, W, C = y.shape
        o = jnp.dot(y.reshape(-1, C), p["w"], preferred_element_type=f32) + p["b"]
        return o.astype(_COMPUTE_DTYPE).reshape(N, H, W, -1)

    out3 = ffb(params["csm3"], out3_cm)
    out2 = ffb(params["csm2"], out3, out2_cm)
    out1 = ffb(params["csm1"], out2, out1_cm)
    out0 = ffb(params["csm0"], out1, out0_cm)
    to_nchw = lambda t: jnp.transpose(t, (0, 3, 1, 2)).astype(jnp.float32)
    return {"0": to_nchw(out0), "1": to_nchw(out1),
            "2": to_nchw(out2), "3": to_nchw(out3)}


# ---------------------------------------------------------------------------
if __name__ == "__main__":
    x = jax.random.normal(jax.random.PRNGKey(0), (2, 3, 64, 64), jnp.float32)
    params = init_params(jax.random.PRNGKey(1))

    out = f_random_proj_forward(params, x)
    jax.block_until_ready(out)

    # channels [64, 64, 128, 256], resolutions x2 per level
    assert out["0"].shape == (2, 64, 32, 32), out["0"].shape
    assert out["1"].shape == (2, 64, 16, 16), out["1"].shape
    assert out["2"].shape == (2, 128, 8, 8), out["2"].shape
    assert out["3"].shape == (2, 256, 4, 4), out["3"].shape
    for v in out.values():
        assert bool(jnp.isfinite(v).all())

    # Cross-check against a pure-JAX reference using the original module op
    # order (upsample before out_conv): validates the fused s2d kernels, the
    # packed / block-diagonal layouts and the conv<->upsample commutation.
    ref = jax.jit(_reference_forward)(params, x)
    jax.block_until_ready(ref)
    for k in out:
        np.testing.assert_allclose(np.asarray(out[k], dtype=np.float32),
                                   np.asarray(ref[k], dtype=np.float32),
                                   rtol=0.1, atol=0.1)

    print("KERNEL_OK")
</pallas_src>

<mosaic_0001>
module attributes {stable_mosaic.version = 11 : i64} {
  func.func @_bb_ccm_kernel(%arg0: i32, %arg1: memref<128x256xbf16, #tpu.memory_space<vmem>>, %arg2: memref<256x256xbf16, #tpu.memory_space<vmem>>, %arg3: memref<1x256xf32, #tpu.memory_space<vmem>>, %arg4: memref<256x128xbf16, #tpu.memory_space<vmem>>, %arg5: memref<1x128xf32, #tpu.memory_space<vmem>>, %arg6: memref<128x256xbf16, #tpu.memory_space<vmem>>, %arg7: memref<128x128xbf16, #tpu.memory_space<vmem>>) attributes {dimension_semantics = [#tpu.dimension_semantics<parallel>], iteration_bounds = array<i64: 2>, scalar_prefetch = 0 : i64, scratch_operands = 0 : i64, tpu.core_type = #tpu.core_type<tc>, window_params = [{transform_indices = @transform_0, window_bounds = array<i64: 128, 256>}, {pipeline_mode = #tpu.pipeline_mode<synchronous>, transform_indices = @transform_1, window_bounds = array<i64: 256, 256>}, {pipeline_mode = #tpu.pipeline_mode<synchronous>, transform_indices = @transform_2, window_bounds = array<i64: 1, 256>}, {pipeline_mode = #tpu.pipeline_mode<synchronous>, transform_indices = @transform_3, window_bounds = array<i64: 256, 128>}, {pipeline_mode = #tpu.pipeline_mode<synchronous>, transform_indices = @transform_4, window_bounds = array<i64: 1, 128>}, {transform_indices = @transform_5, window_bounds = array<i64: 128, 256>}, {transform_indices = @transform_6, window_bounds = array<i64: 128, 128>}]} {
    %c0 = arith.constant 0 : index
    %c0_0 = arith.constant 0 : index
    %0 = vector.load %arg1[%c0, %c0_0] : memref<128x256xbf16, #tpu.memory_space<vmem>>, vector<128x256xbf16>
    %c0_1 = arith.constant 0 : index
    %c0_2 = arith.constant 0 : index
    %1 = vector.load %arg2[%c0_1, %c0_2] : memref<256x256xbf16, #tpu.memory_space<vmem>>, vector<256x256xbf16>
    %cst = arith.constant dense<0.000000e+00> : vector<128x256xf32>
    %2 = tpu.matmul %0, %1, %cst {dimension_numbers = #tpu.dot_dimension_numbers<[1], [0], [0], [1], [0, 0, 1, 1], [], []>} : vector<128x256xbf16>, vector<256x256xbf16>, vector<128x256xf32> -> vector<128x256xf32>
    %c0_3 = arith.constant 0 : index
    %c0_4 = arith.constant 0 : index
    %3 = vector.load %arg3[%c0_3, %c0_4] : memref<1x256xf32, #tpu.memory_space<vmem>>, vector<1x256xf32>
    %4 = vector.broadcast %3 : vector<1x256xf32> to vector<128x256xf32>
    %5 = arith.addf %2, %4 : vector<128x256xf32>
    %cst_5 = arith.constant 0.000000e+00 : f32
    %cst_6 = arith.constant 6.000000e+00 : f32
    %6 = vector.broadcast %cst_5 : f32 to vector<128x256xf32>
    %7 = arith.maximumf %6, %5 : vector<128x256xf32>
    %8 = vector.broadcast %cst_6 : f32 to vector<128x256xf32>
    %9 = arith.minimumf %8, %7 : vector<128x256xf32>
    %10 = arith.truncf %9 : vector<128x256xf32> to vector<128x256xbf16>
    %c0_7 = arith.constant 0 : index
    %c0_8 = arith.constant 0 : index
    %11 = vector.load %arg6[%c0_7, %c0_8] : memref<128x256xbf16, #tpu.memory_space<vmem>>, vector<128x256xbf16>
    tpu.vector_store %arg6[%c0_7, %c0_8], %10 {strides = array<i32>} : memref<128x256xbf16, #tpu.memory_space<vmem>>, vector<128x256xbf16>,
    %12 = arith.truncf %9 : vector<128x256xf32> to vector<128x256xbf16>
    %c0_9 = arith.constant 0 : index
    %c0_10 = arith.constant 0 : index
    %13 = vector.load %arg4[%c0_9, %c0_10] : memref<256x128xbf16, #tpu.memory_space<vmem>>, vector<256x128xbf16>
    %cst_11 = arith.constant dense<0.000000e+00> : vector<128x128xf32>
    %14 = tpu.matmul %12, %13, %cst_11 {dimension_numbers = #tpu.dot_dimension_numbers<[1], [0], [0], [1], [0, 0, 1, 1], [], []>} : vector<128x256xbf16>, vector<256x128xbf16>, vector<128x128xf32> -> vector<128x128xf32>
    %c0_12 = arith.constant 0 : index
    %c0_13 = arith.constant 0 : index
    %15 = vector.load %arg5[%c0_12, %c0_13] : memref<1x128xf32, #tpu.memory_space<vmem>>, vector<1x128xf32>
    %16 = vector.broadcast %15 : vector<1x128xf32> to vector<128x128xf32>
    %17 = arith.addf %14, %16 : vector<128x128xf32>
    %18 = arith.truncf %17 : vector<128x128xf32> to vector<128x128xbf16>
    %c0_14 = arith.constant 0 : index
    %c0_15 = arith.constant 0 : index
    %19 = vector.load %arg7[%c0_14, %c0_15] : memref<128x128xbf16, #tpu.memory_space<vmem>>, vector<128x128xbf16>
    tpu.vector_store %arg7[%c0_14, %c0_15], %18 {strides = array<i32>} : memref<128x128xbf16, #tpu.memory_space<vmem>>, vector<128x128xbf16>,
    return
  }
  func.func @transform_0(%arg0: i32) -> (i32, i32) {
    %c0_i32 = arith.constant 0 : i32
    %c0_i32_0 = arith.constant 0 : i32
    return %arg0, %c0_i32 : i32, i32
  }
  func.func @transform_1(%arg0: i32) -> (i32, i32) {
    %c0_i32 = arith.constant 0 : i32
    %c0_i32_0 = arith.constant 0 : i32
    %c0_i32_1 = arith.constant 0 : i32
    return %c0_i32, %c0_i32_0 : i32, i32
  }
  func.func @transform_2(%arg0: i32) -> (i32, i32) {
    %c0_i32 = arith.constant 0 : i32
    %c0_i32_0 = arith.constant 0 : i32
    %c0_i32_1 = arith.constant 0 : i32
    return %c0_i32, %c0_i32_0 : i32, i32
  }
  func.func @transform_3(%arg0: i32) -> (i32, i32) {
    %c0_i32 = arith.constant 0 : i32
    %c0_i32_0 = arith.constant 0 : i32
    %c0_i32_1 = arith.constant 0 : i32
    return %c0_i32, %c0_i32_0 : i32, i32
  }
  func.func @transform_4(%arg0: i32) -> (i32, i32) {
    %c0_i32 = arith.constant 0 : i32
    %c0_i32_0 = arith.constant 0 : i32
    %c0_i32_1 = arith.constant 0 : i32
    return %c0_i32, %c0_i32_0 : i32, i32
  }
  func.func @transform_5(%arg0: i32) -> (i32, i32) {
    %c0_i32 = arith.constant 0 : i32
    %c0_i32_0 = arith.constant 0 : i32
    return %arg0, %c0_i32 : i32, i32
  }
  func.func @transform_6(%arg0: i32) -> (i32, i32) {
    %c0_i32 = arith.constant 0 : i32
    %c0_i32_0 = arith.constant 0 : i32
    return %arg0, %c0_i32 : i32, i32
  }
}

module attributes {stable_mosaic.version = 11 : i64} {
  func.func @_s2d_bb_ccm_kernel(%arg0: i32, %arg1: memref<8x2x8x256xbf16, #tpu.memory_space<vmem>>, %arg2: memref<256x128xbf16, #tpu.memory_space<vmem>>, %arg3: memref<256x128xbf16, #tpu.memory_space<vmem>>, %arg4: memref<1x128xf32, #tpu.memory_space<vmem>>, %arg5: memref<128x128xbf16, #tpu.memory_space<vmem>>, %arg6: memref<1x128xf32, #tpu.memory_space<vmem>>, %arg7: memref<64x128xbf16, #tpu.memory_space<vmem>>, %arg8: memref<64x128xbf16, #tpu.memory_space<vmem>>) attributes {dimension_semantics = [#tpu.dimension_semantics<parallel>], iteration_bounds = array<i64: 2>, scalar_prefetch = 0 : i64, scratch_operands = 0 : i64, tpu.core_type = #tpu.core_type<tc>, window_params = [{transform_indices = @transform_0, window_bounds = array<i64: 8, 2, 8, 256>}, {pipeline_mode = #tpu.pipeline_mode<synchronous>, transform_indices = @transform_1, window_bounds = array<i64: 256, 128>}, {pipeline_mode = #tpu.pipeline_mode<synchronous>, transform_indices = @transform_2, window_bounds = array<i64: 256, 128>}, {pipeline_mode = #tpu.pipeline_mode<synchronous>, transform_indices = @transform_3, window_bounds = array<i64: 1, 128>}, {pipeline_mode = #tpu.pipeline_mode<synchronous>, transform_indices = @transform_4, window_bounds = array<i64: 128, 128>}, {pipeline_mode = #tpu.pipeline_mode<synchronous>, transform_indices = @transform_5, window_bounds = array<i64: 1, 128>}, {transform_indices = @transform_6, window_bounds = array<i64: 64, 128>}, {transform_indices = @transform_7, window_bounds = array<i64: 64, 128>}]} {
    %c0 = arith.constant 0 : index
    %c0_0 = arith.constant 0 : index
    %c0_1 = arith.constant 0 : index
    %c0_2 = arith.constant 0 : index
    %0 = vector.load %arg1[%c0, %c0_0, %c0_1, %c0_2] : memref<8x2x8x256xbf16, #tpu.memory_space<vmem>>, vector<8x2x8x256xbf16>
    %1 = vector.extract_strided_slice %0 {offsets = [0, 0, 0, 0], sizes = [8, 1, 8, 256], strides = [1, 1, 1, 1]} : vector<8x2x8x256xbf16> to vector<8x1x8x256xbf16>
    %2 = vector.shape_cast %1 : vector<8x1x8x256xbf16> to vector<8x8x256xbf16>
    %3 = vector.shape_cast %2 : vector<8x8x256xbf16> to vector<64x256xbf16>
    %4 = vector.extract_strided_slice %0 {offsets = [0, 1, 0, 0], sizes = [8, 1, 8, 256], strides = [1, 1, 1, 1]} : vector<8x2x8x256xbf16> to vector<8x1x8x256xbf16>
    %5 = vector.shape_cast %4 : vector<8x1x8x256xbf16> to vector<8x8x256xbf16>
    %6 = vector.shape_cast %5 : vector<8x8x256xbf16> to vector<64x256xbf16>
    %c0_3 = arith.constant 0 : index
    %c0_4 = arith.constant 0 : index
    %7 = vector.load %arg2[%c0_3, %c0_4] : memref<256x128xbf16, #tpu.memory_space<vmem>>, vector<256x128xbf16>
    %cst = arith.constant dense<0.000000e+00> : vector<64x128xf32>
    %8 = tpu.matmul %3, %7, %cst {dimension_numbers = #tpu.dot_dimension_numbers<[1], [0], [0], [1], [0, 0, 1, 1], [], []>} : vector<64x256xbf16>, vector<256x128xbf16>, vector<64x128xf32> -> vector<64x128xf32>
    %c0_5 = arith.constant 0 : index
    %c0_6 = arith.constant 0 : index
    %9 = vector.load %arg3[%c0_5, %c0_6] : memref<256x128xbf16, #tpu.memory_space<vmem>>, vector<256x128xbf16>
    %cst_7 = arith.constant dense<0.000000e+00> : vector<64x128xf32>
    %10 = tpu.matmul %6, %9, %cst_7 {dimension_numbers = #tpu.dot_dimension_numbers<[1], [0], [0], [1], [0, 0, 1, 1], [], []>} : vector<64x256xbf16>, vector<256x128xbf16>, vector<64x128xf32> -> vector<64x128xf32>
    %11 = arith.addf %8, %10 : vector<64x128xf32>
    %c0_8 = arith.constant 0 : index
    %c0_9 = arith.constant 0 : index
    %12 = vector.load %arg4[%c0_8, %c0_9] : memref<1x128xf32, #tpu.memory_space<vmem>>, vector<1x128xf32>
    %13 = vector.broadcast %12 : vector<1x128xf32> to vector<64x128xf32>
    %14 = arith.addf %11, %13 : vector<64x128xf32>
    %cst_10 = arith.constant 0.000000e+00 : f32
    %cst_11 = arith.constant 6.000000e+00 : f32
    %15 = vector.broadcast %cst_10 : f32 to vector<64x128xf32>
    %16 = arith.maximumf %15, %14 : vector<64x128xf32>
    %17 = vector.broadcast %cst_11 : f32 to vector<64x128xf32>
    %18 = arith.minimumf %17, %16 : vector<64x128xf32>
    %19 = arith.truncf %18 : vector<64x128xf32> to vector<64x128xbf16>
    %c0_12 = arith.constant 0 : index
    %c0_13 = arith.constant 0 : index
    %20 = vector.load %arg7[%c0_12, %c0_13] : memref<64x128xbf16, #tpu.memory_space<vmem>>, vector<64x128xbf16>
    tpu.vector_store %arg7[%c0_12, %c0_13], %19 {strides = array<i32>} : memref<64x128xbf16, #tpu.memory_space<vmem>>, vector<64x128xbf16>,
    %21 = arith.truncf %18 : vector<64x128xf32> to vector<64x128xbf16>
    %c0_14 = arith.constant 0 : index
    %c0_15 = arith.constant 0 : index
    %22 = vector.load %arg5[%c0_14, %c0_15] : memref<128x128xbf16, #tpu.memory_space<vmem>>, vector<128x128xbf16>
    %cst_16 = arith.constant dense<0.000000e+00> : vector<64x128xf32>
    %23 = tpu.matmul %21, %22, %cst_16 {dimension_numbers = #tpu.dot_dimension_numbers<[1], [0], [0], [1], [0, 0, 1, 1], [], []>} : vector<64x128xbf16>, vector<128x128xbf16>, vector<64x128xf32> -> vector<64x128xf32>
    %c0_17 = arith.constant 0 : index
    %c0_18 = arith.constant 0 : index
    %24 = vector.load %arg6[%c0_17, %c0_18] : memref<1x128xf32, #tpu.memory_space<vmem>>, vector<1x128xf32>
    %25 = vector.broadcast %24 : vector<1x128xf32> to vector<64x128xf32>
    %26 = arith.addf %23, %25 : vector<64x128xf32>
    %27 = arith.truncf %26 : vector<64x128xf32> to vector<64x128xbf16>
    %c0_19 = arith.constant 0 : index
    %c0_20 = arith.constant 0 : index
    %28 = vector.load %arg8[%c0_19, %c0_20] : memref<64x128xbf16, #tpu.memory_space<vmem>>, vector<64x128xbf16>
    tpu.vector_store %arg8[%c0_19, %c0_20], %27 {strides = array<i32>} : memref<64x128xbf16, #tpu.memory_space<vmem>>, vector<64x128xbf16>,
    return
  }
  func.func @transform_0(%arg0: i32) -> (i32, i32, i32, i32) {
    %c0_i32 = arith.constant 0 : i32
    %c0_i32_0 = arith.constant 0 : i32
    %c0_i32_1 = arith.constant 0 : i32
    %c0_i32_2 = arith.constant 0 : i32
    return %arg0, %c0_i32, %c0_i32_0, %c0_i32_1 : i32, i32, i32, i32
  }
  func.func @transform_1(%arg0: i32) -> (i32, i32) {
    %c0_i32 = arith.constant 0 : i32
    %c0_i32_0 = arith.constant 0 : i32
    %c0_i32_1 = arith.constant 0 : i32
    return %c0_i32, %c0_i32_0 : i32, i32
  }
  func.func @transform_2(%arg0: i32) -> (i32, i32) {
    %c0_i32 = arith.constant 0 : i32
    %c0_i32_0 = arith.constant 0 : i32
    %c0_i32_1 = arith.constant 0 : i32
    return %c0_i32, %c0_i32_0 : i32, i32
  }
  func.func @transform_3(%arg0: i32) -> (i32, i32) {
    %c0_i32 = arith.constant 0 : i32
    %c0_i32_0 = arith.constant 0 : i32
    %c0_i32_1 = arith.constant 0 : i32
    return %c0_i32, %c0_i32_0 : i32, i32
  }
  func.func @transform_4(%arg0: i32) -> (i32, i32) {
    %c0_i32 = arith.constant 0 : i32
    %c0_i32_0 = arith.constant 0 : i32
    %c0_i32_1 = arith.constant 0 : i32
    return %c0_i32, %c0_i32_0 : i32, i32
  }
  func.func @transform_5(%arg0: i32) -> (i32, i32) {
    %c0_i32 = arith.constant 0 : i32
    %c0_i32_0 = arith.constant 0 : i32
    %c0_i32_1 = arith.constant 0 : i32
    return %c0_i32, %c0_i32_0 : i32, i32
  }
  func.func @transform_6(%arg0: i32) -> (i32, i32) {
    %c0_i32 = arith.constant 0 : i32
    %c0_i32_0 = arith.constant 0 : i32
    return %arg0, %c0_i32 : i32, i32
  }
  func.func @transform_7(%arg0: i32) -> (i32, i32) {
    %c0_i32 = arith.constant 0 : i32
    %c0_i32_0 = arith.constant 0 : i32
    return %arg0, %c0_i32 : i32, i32
  }
}

module attributes {stable_mosaic.version = 11 : i64} {
  func.func @_bb_ccm_kernel(%arg0: i32, %arg1: memref<16x512xbf16, #tpu.memory_space<vmem>>, %arg2: memref<512x128xbf16, #tpu.memory_space<vmem>>, %arg3: memref<1x128xf32, #tpu.memory_space<vmem>>, %arg4: memref<128x256xbf16, #tpu.memory_space<vmem>>, %arg5: memref<1x256xf32, #tpu.memory_space<vmem>>, %arg6: memref<16x128xbf16, #tpu.memory_space<vmem>>, %arg7: memref<16x256xbf16, #tpu.memory_space<vmem>>) attributes {dimension_semantics = [#tpu.dimension_semantics<parallel>], iteration_bounds = array<i64: 2>, scalar_prefetch = 0 : i64, scratch_operands = 0 : i64, tpu.core_type = #tpu.core_type<tc>, window_params = [{transform_indices = @transform_0, window_bounds = array<i64: 16, 512>}, {pipeline_mode = #tpu.pipeline_mode<synchronous>, transform_indices = @transform_1, window_bounds = array<i64: 512, 128>}, {pipeline_mode = #tpu.pipeline_mode<synchronous>, transform_indices = @transform_2, window_bounds = array<i64: 1, 128>}, {pipeline_mode = #tpu.pipeline_mode<synchronous>, transform_indices = @transform_3, window_bounds = array<i64: 128, 256>}, {pipeline_mode = #tpu.pipeline_mode<synchronous>, transform_indices = @transform_4, window_bounds = array<i64: 1, 256>}, {transform_indices = @transform_5, window_bounds = array<i64: 16, 128>}, {transform_indices = @transform_6, window_bounds = array<i64: 16, 256>}]} {
    %c0 = arith.constant 0 : index
    %c0_0 = arith.constant 0 : index
    %0 = vector.load %arg1[%c0, %c0_0] : memref<16x512xbf16, #tpu.memory_space<vmem>>, vector<16x512xbf16>
    %c0_1 = arith.constant 0 : index
    %c0_2 = arith.constant 0 : index
    %1 = vector.load %arg2[%c0_1, %c0_2] : memref<512x128xbf16, #tpu.memory_space<vmem>>, vector<512x128xbf16>
    %cst = arith.constant dense<0.000000e+00> : vector<16x128xf32>
    %2 = tpu.matmul %0, %1, %cst {dimension_numbers = #tpu.dot_dimension_numbers<[1], [0], [0], [1], [0, 0, 1, 1], [], []>} : vector<16x512xbf16>, vector<512x128xbf16>, vector<16x128xf32> -> vector<16x128xf32>
    %c0_3 = arith.constant 0 : index
    %c0_4 = arith.constant 0 : index
    %3 = vector.load %arg3[%c0_3, %c0_4] : memref<1x128xf32, #tpu.memory_space<vmem>>, vector<1x128xf32>
    %4 = vector.broadcast %3 : vector<1x128xf32> to vector<16x128xf32>
    %5 = arith.addf %2, %4 : vector<16x128xf32>
    %cst_5 = arith.constant 0.000000e+00 : f32
    %cst_6 = arith.constant 6.000000e+00 : f32
    %6 = vector.broadcast %cst_5 : f32 to vector<16x128xf32>
    %7 = arith.maximumf %6, %5 : vector<16x128xf32>
    %8 = vector.broadcast %cst_6 : f32 to vector<16x128xf32>
    %9 = arith.minimumf %8, %7 : vector<16x128xf32>
    %10 = arith.truncf %9 : vector<16x128xf32> to vector<16x128xbf16>
    %c0_7 = arith.constant 0 : index
    %c0_8 = arith.constant 0 : index
    %11 = vector.load %arg6[%c0_7, %c0_8] : memref<16x128xbf16, #tpu.memory_space<vmem>>, vector<16x128xbf16>
    tpu.vector_store %arg6[%c0_7, %c0_8], %10 {strides = array<i32>} : memref<16x128xbf16, #tpu.memory_space<vmem>>, vector<16x128xbf16>,
    %12 = arith.truncf %9 : vector<16x128xf32> to vector<16x128xbf16>
    %c0_9 = arith.constant 0 : index
    %c0_10 = arith.constant 0 : index
    %13 = vector.load %arg4[%c0_9, %c0_10] : memref<128x256xbf16, #tpu.memory_space<vmem>>, vector<128x256xbf16>
    %cst_11 = arith.constant dense<0.000000e+00> : vector<16x256xf32>
    %14 = tpu.matmul %12, %13, %cst_11 {dimension_numbers = #tpu.dot_dimension_numbers<[1], [0], [0], [1], [0, 0, 1, 1], [], []>} : vector<16x128xbf16>, vector<128x256xbf16>, vector<16x256xf32> -> vector<16x256xf32>
    %c0_12 = arith.constant 0 : index
    %c0_13 = arith.constant 0 : index
    %15 = vector.load %arg5[%c0_12, %c0_13] : memref<1x256xf32, #tpu.memory_space<vmem>>, vector<1x256xf32>
    %16 = vector.broadcast %15 : vector<1x256xf32> to vector<16x256xf32>
    %17 = arith.addf %14, %16 : vector<16x256xf32>
    %18 = arith.truncf %17 : vector<16x256xf32> to vector<16x256xbf16>
    %c0_14 = arith.constant 0 : index
    %c0_15 = arith.constant 0 : index
    %19 = vector.load %arg7[%c0_14, %c0_15] : memref<16x256xbf16, #tpu.memory_space<vmem>>, vector<16x256xbf16>
    tpu.vector_store %arg7[%c0_14, %c0_15], %18 {strides = array<i32>} : memref<16x256xbf16, #tpu.memory_space<vmem>>, vector<16x256xbf16>,
    return
  }
  func.func @transform_0(%arg0: i32) -> (i32, i32) {
    %c0_i32 = arith.constant 0 : i32
    %c0_i32_0 = arith.constant 0 : i32
    return %arg0, %c0_i32 : i32, i32
  }
  func.func @transform_1(%arg0: i32) -> (i32, i32) {
    %c0_i32 = arith.constant 0 : i32
    %c0_i32_0 = arith.constant 0 : i32
    %c0_i32_1 = arith.constant 0 : i32
    return %c0_i32, %c0_i32_0 : i32, i32
  }
  func.func @transform_2(%arg0: i32) -> (i32, i32) {
    %c0_i32 = arith.constant 0 : i32
    %c0_i32_0 = arith.constant 0 : i32
    %c0_i32_1 = arith.constant 0 : i32
    return %c0_i32, %c0_i32_0 : i32, i32
  }
  func.func @transform_3(%arg0: i32) -> (i32, i32) {
    %c0_i32 = arith.constant 0 : i32
    %c0_i32_0 = arith.constant 0 : i32
    %c0_i32_1 = arith.constant 0 : i32
    return %c0_i32, %c0_i32_0 : i32, i32
  }
  func.func @transform_4(%arg0: i32) -> (i32, i32) {
    %c0_i32 = arith.constant 0 : i32
    %c0_i32_0 = arith.constant 0 : i32
    %c0_i32_1 = arith.constant 0 : i32
    return %c0_i32, %c0_i32_0 : i32, i32
  }
  func.func @transform_5(%arg0: i32) -> (i32, i32) {
    %c0_i32 = arith.constant 0 : i32
    %c0_i32_0 = arith.constant 0 : i32
    return %arg0, %c0_i32 : i32, i32
  }
  func.func @transform_6(%arg0: i32) -> (i32, i32) {
    %c0_i32 = arith.constant 0 : i32
    %c0_i32_0 = arith.constant 0 : i32
    return %arg0, %c0_i32 : i32, i32
  }
}

module attributes {stable_mosaic.version = 11 : i64} {
  func.func @_bb_ccm_kernel(%arg0: i32, %arg1: memref<8x512xbf16, #tpu.memory_space<vmem>>, %arg2: memref<512x320xbf16, #tpu.memory_space<vmem>>, %arg3: memref<1x320xf32, #tpu.memory_space<vmem>>, %arg4: memref<320x512xbf16, #tpu.memory_space<vmem>>, %arg5: memref<1x512xf32, #tpu.memory_space<vmem>>, %arg6: memref<8x512xbf16, #tpu.memory_space<vmem>>) attributes {dimension_semantics = [#tpu.dimension_semantics<parallel>], iteration_bounds = array<i64: 1>, scalar_prefetch = 0 : i64, scratch_operands = 0 : i64, tpu.core_type = #tpu.core_type<tc>, window_params = [{transform_indices = @transform_0, window_bounds = array<i64: 8, 512>}, {pipeline_mode = #tpu.pipeline_mode<synchronous>, transform_indices = @transform_1, window_bounds = array<i64: 512, 320>}, {pipeline_mode = #tpu.pipeline_mode<synchronous>, transform_indices = @transform_2, window_bounds = array<i64: 1, 320>}, {pipeline_mode = #tpu.pipeline_mode<synchronous>, transform_indices = @transform_3, window_bounds = array<i64: 320, 512>}, {pipeline_mode = #tpu.pipeline_mode<synchronous>, transform_indices = @transform_4, window_bounds = array<i64: 1, 512>}, {transform_indices = @transform_5, window_bounds = array<i64: 8, 512>}]} {
    %c0 = arith.constant 0 : index
    %c0_0 = arith.constant 0 : index
    %0 = vector.load %arg1[%c0, %c0_0] : memref<8x512xbf16, #tpu.memory_space<vmem>>, vector<8x512xbf16>
    %c0_1 = arith.constant 0 : index
    %c0_2 = arith.constant 0 : index
    %1 = vector.load %arg2[%c0_1, %c0_2] : memref<512x320xbf16, #tpu.memory_space<vmem>>, vector<512x320xbf16>
    %cst = arith.constant dense<0.000000e+00> : vector<8x320xf32>
    %2 = tpu.matmul %0, %1, %cst {dimension_numbers = #tpu.dot_dimension_numbers<[1], [0], [0], [1], [0, 0, 1, 1], [], []>} : vector<8x512xbf16>, vector<512x320xbf16>, vector<8x320xf32> -> vector<8x320xf32>
    %c0_3 = arith.constant 0 : index
    %c0_4 = arith.constant 0 : index
    %3 = vector.load %arg3[%c0_3, %c0_4] : memref<1x320xf32, #tpu.memory_space<vmem>>, vector<1x320xf32>
    %4 = vector.broadcast %3 : vector<1x320xf32> to vector<8x320xf32>
    %5 = arith.addf %2, %4 : vector<8x320xf32>
    %cst_5 = arith.constant 0.000000e+00 : f32
    %cst_6 = arith.constant 6.000000e+00 : f32
    %6 = vector.broadcast %cst_5 : f32 to vector<8x320xf32>
    %7 = arith.maximumf %6, %5 : vector<8x320xf32>
    %8 = vector.broadcast %cst_6 : f32 to vector<8x320xf32>
    %9 = arith.minimumf %8, %7 : vector<8x320xf32>
    %10 = arith.truncf %9 : vector<8x320xf32> to vector<8x320xbf16>
    %c0_7 = arith.constant 0 : index
    %c0_8 = arith.constant 0 : index
    %11 = vector.load %arg4[%c0_7, %c0_8] : memref<320x512xbf16, #tpu.memory_space<vmem>>, vector<320x512xbf16>
    %cst_9 = arith.constant dense<0.000000e+00> : vector<8x512xf32>
    %12 = tpu.matmul %10, %11, %cst_9 {dimension_numbers = #tpu.dot_dimension_numbers<[1], [0], [0], [1], [0, 0, 1, 1], [], []>} : vector<8x320xbf16>, vector<320x512xbf16>, vector<8x512xf32> -> vector<8x512xf32>
    %c0_10 = arith.constant 0 : index
    %c0_11 = arith.constant 0 : index
    %13 = vector.load %arg5[%c0_10, %c0_11] : memref<1x512xf32, #tpu.memory_space<vmem>>, vector<1x512xf32>
    %14 = vector.broadcast %13 : vector<1x512xf32> to vector<8x512xf32>
    %15 = arith.addf %12, %14 : vector<8x512xf32>
    %16 = arith.truncf %15 : vector<8x512xf32> to vector<8x512xbf16>
    %c0_12 = arith.constant 0 : index
    %c0_13 = arith.constant 0 : index
    %17 = vector.load %arg6[%c0_12, %c0_13] : memref<8x512xbf16, #tpu.memory_space<vmem>>, vector<8x512xbf16>
    tpu.vector_store %arg6[%c0_12, %c0_13], %16 {strides = array<i32>} : memref<8x512xbf16, #tpu.memory_space<vmem>>, vector<8x512xbf16>,
    return
  }
  func.func @transform_0(%arg0: i32) -> (i32, i32) {
    %c0_i32 = arith.constant 0 : i32
    %c0_i32_0 = arith.constant 0 : i32
    return %arg0, %c0_i32 : i32, i32
  }
  func.func @transform_1(%arg0: i32) -> (i32, i32) {
    %c0_i32 = arith.constant 0 : i32
    %c0_i32_0 = arith.constant 0 : i32
    %c0_i32_1 = arith.constant 0 : i32
    return %c0_i32, %c0_i32_0 : i32, i32
  }
  func.func @transform_2(%arg0: i32) -> (i32, i32) {
    %c0_i32 = arith.constant 0 : i32
    %c0_i32_0 = arith.constant 0 : i32
    %c0_i32_1 = arith.constant 0 : i32
    return %c0_i32, %c0_i32_0 : i32, i32
  }
  func.func @transform_3(%arg0: i32) -> (i32, i32) {
    %c0_i32 = arith.constant 0 : i32
    %c0_i32_0 = arith.constant 0 : i32
    %c0_i32_1 = arith.constant 0 : i32
    return %c0_i32, %c0_i32_0 : i32, i32
  }
  func.func @transform_4(%arg0: i32) -> (i32, i32) {
    %c0_i32 = arith.constant 0 : i32
    %c0_i32_0 = arith.constant 0 : i32
    %c0_i32_1 = arith.constant 0 : i32
    return %c0_i32, %c0_i32_0 : i32, i32
  }
  func.func @transform_5(%arg0: i32) -> (i32, i32) {
    %c0_i32 = arith.constant 0 : i32
    %c0_i32_0 = arith.constant 0 : i32
    return %arg0, %c0_i32 : i32, i32
  }
}

module attributes {stable_mosaic.version = 11 : i64} {
  func.func @_conv1x1_kernel(%arg0: i32, %arg1: memref<8x512xbf16, #tpu.memory_space<vmem>>, %arg2: memref<512x256xbf16, #tpu.memory_space<vmem>>, %arg3: memref<1x256xf32, #tpu.memory_space<vmem>>, %arg4: memref<8x256xbf16, #tpu.memory_space<vmem>>) attributes {dimension_semantics = [#tpu.dimension_semantics<parallel>], iteration_bounds = array<i64: 1>, scalar_prefetch = 0 : i64, scratch_operands = 0 : i64, tpu.core_type = #tpu.core_type<tc>, window_params = [{transform_indices = @transform_0, window_bounds = array<i64: 8, 512>}, {pipeline_mode = #tpu.pipeline_mode<synchronous>, transform_indices = @transform_1, window_bounds = array<i64: 512, 256>}, {pipeline_mode = #tpu.pipeline_mode<synchronous>, transform_indices = @transform_2, window_bounds = array<i64: 1, 256>}, {transform_indices = @transform_3, window_bounds = array<i64: 8, 256>}]} {
    %c0 = arith.constant 0 : index
    %c0_0 = arith.constant 0 : index
    %0 = vector.load %arg1[%c0, %c0_0] : memref<8x512xbf16, #tpu.memory_space<vmem>>, vector<8x512xbf16>
    %c0_1 = arith.constant 0 : index
    %c0_2 = arith.constant 0 : index
    %1 = vector.load %arg2[%c0_1, %c0_2] : memref<512x256xbf16, #tpu.memory_space<vmem>>, vector<512x256xbf16>
    %cst = arith.constant dense<0.000000e+00> : vector<8x256xf32>
    %2 = tpu.matmul %0, %1, %cst {dimension_numbers = #tpu.dot_dimension_numbers<[1], [0], [0], [1], [0, 0, 1, 1], [], []>} : vector<8x512xbf16>, vector<512x256xbf16>, vector<8x256xf32> -> vector<8x256xf32>
    %c0_3 = arith.constant 0 : index
    %c0_4 = arith.constant 0 : index
    %3 = vector.load %arg3[%c0_3, %c0_4] : memref<1x256xf32, #tpu.memory_space<vmem>>, vector<1x256xf32>
    %4 = vector.broadcast %3 : vector<1x256xf32> to vector<8x256xf32>
    %5 = arith.addf %2, %4 : vector<8x256xf32>
    %6 = arith.truncf %5 : vector<8x256xf32> to vector<8x256xbf16>
    %c0_5 = arith.constant 0 : index
    %c0_6 = arith.constant 0 : index
    %7 = vector.load %arg4[%c0_5, %c0_6] : memref<8x256xbf16, #tpu.memory_space<vmem>>, vector<8x256xbf16>
    tpu.vector_store %arg4[%c0_5, %c0_6], %6 {strides = array<i32>} : memref<8x256xbf16, #tpu.memory_space<vmem>>, vector<8x256xbf16>,
    return
  }
  func.func @transform_0(%arg0: i32) -> (i32, i32) {
    %c0_i32 = arith.constant 0 : i32
    %c0_i32_0 = arith.constant 0 : i32
    return %arg0, %c0_i32 : i32, i32
  }
  func.func @transform_1(%arg0: i32) -> (i32, i32) {
    %c0_i32 = arith.constant 0 : i32
    %c0_i32_0 = arith.constant 0 : i32
    %c0_i32_1 = arith.constant 0 : i32
    return %c0_i32, %c0_i32_0 : i32, i32
  }
  func.func @transform_2(%arg0: i32) -> (i32, i32) {
    %c0_i32 = arith.constant 0 : i32
    %c0_i32_0 = arith.constant 0 : i32
    %c0_i32_1 = arith.constant 0 : i32
    return %c0_i32, %c0_i32_0 : i32, i32
  }
  func.func @transform_3(%arg0: i32) -> (i32, i32) {
    %c0_i32 = arith.constant 0 : i32
    %c0_i32_0 = arith.constant 0 : i32
    return %arg0, %c0_i32 : i32, i32
  }
}

module attributes {stable_mosaic.version = 11 : i64} {
  func.func @_skip_conv1x1_kernel(%arg0: i32, %arg1: memref<16x256xbf16, #tpu.memory_space<vmem>>, %arg2: memref<16x256xbf16, #tpu.memory_space<vmem>>, %arg3: memref<256x128xbf16, #tpu.memory_space<vmem>>, %arg4: memref<1x128xf32, #tpu.memory_space<vmem>>, %arg5: memref<16x128xbf16, #tpu.memory_space<vmem>>) attributes {dimension_semantics = [#tpu.dimension_semantics<parallel>], iteration_bounds = array<i64: 2>, scalar_prefetch = 0 : i64, scratch_operands = 0 : i64, tpu.core_type = #tpu.core_type<tc>, window_params = [{transform_indices = @transform_0, window_bounds = array<i64: 16, 256>}, {transform_indices = @transform_1, window_bounds = array<i64: 16, 256>}, {pipeline_mode = #tpu.pipeline_mode<synchronous>, transform_indices = @transform_2, window_bounds = array<i64: 256, 128>}, {pipeline_mode = #tpu.pipeline_mode<synchronous>, transform_indices = @transform_3, window_bounds = array<i64: 1, 128>}, {transform_indices = @transform_4, window_bounds = array<i64: 16, 128>}]} {
    %c0 = arith.constant 0 : index
    %c0_0 = arith.constant 0 : index
    %0 = vector.load %arg1[%c0, %c0_0] : memref<16x256xbf16, #tpu.memory_space<vmem>>, vector<16x256xbf16>
    %c0_1 = arith.constant 0 : index
    %c0_2 = arith.constant 0 : index
    %1 = vector.load %arg2[%c0_1, %c0_2] : memref<16x256xbf16, #tpu.memory_space<vmem>>, vector<16x256xbf16>
    %2 = arith.addf %0, %1 : vector<16x256xbf16>
    %c0_3 = arith.constant 0 : index
    %c0_4 = arith.constant 0 : index
    %3 = vector.load %arg3[%c0_3, %c0_4] : memref<256x128xbf16, #tpu.memory_space<vmem>>, vector<256x128xbf16>
    %cst = arith.constant dense<0.000000e+00> : vector<16x128xf32>
    %4 = tpu.matmul %2, %3, %cst {dimension_numbers = #tpu.dot_dimension_numbers<[1], [0], [0], [1], [0, 0, 1, 1], [], []>} : vector<16x256xbf16>, vector<256x128xbf16>, vector<16x128xf32> -> vector<16x128xf32>
    %c0_5 = arith.constant 0 : index
    %c0_6 = arith.constant 0 : index
    %5 = vector.load %arg4[%c0_5, %c0_6] : memref<1x128xf32, #tpu.memory_space<vmem>>, vector<1x128xf32>
    %6 = vector.broadcast %5 : vector<1x128xf32> to vector<16x128xf32>
    %7 = arith.addf %4, %6 : vector<16x128xf32>
    %8 = arith.truncf %7 : vector<16x128xf32> to vector<16x128xbf16>
    %c0_7 = arith.constant 0 : index
    %c0_8 = arith.constant 0 : index
    %9 = vector.load %arg5[%c0_7, %c0_8] : memref<16x128xbf16, #tpu.memory_space<vmem>>, vector<16x128xbf16>
    tpu.vector_store %arg5[%c0_7, %c0_8], %8 {strides = array<i32>} : memref<16x128xbf16, #tpu.memory_space<vmem>>, vector<16x128xbf16>,
    return
  }
  func.func @transform_0(%arg0: i32) -> (i32, i32) {
    %c0_i32 = arith.constant 0 : i32
    %c0_i32_0 = arith.constant 0 : i32
    return %arg0, %c0_i32 : i32, i32
  }
  func.func @transform_1(%arg0: i32) -> (i32, i32) {
    %c0_i32 = arith.constant 0 : i32
    %c0_i32_0 = arith.constant 0 : i32
    return %arg0, %c0_i32 : i32, i32
  }
  func.func @transform_2(%arg0: i32) -> (i32, i32) {
    %c0_i32 = arith.constant 0 : i32
    %c0_i32_0 = arith.constant 0 : i32
    %c0_i32_1 = arith.constant 0 : i32
    return %c0_i32, %c0_i32_0 : i32, i32
  }
  func.func @transform_3(%arg0: i32) -> (i32, i32) {
    %c0_i32 = arith.constant 0 : i32
    %c0_i32_0 = arith.constant 0 : i32
    %c0_i32_1 = arith.constant 0 : i32
    return %c0_i32, %c0_i32_0 : i32, i32
  }
  func.func @transform_4(%arg0: i32) -> (i32, i32) {
    %c0_i32 = arith.constant 0 : i32
    %c0_i32_0 = arith.constant 0 : i32
    return %arg0, %c0_i32 : i32, i32
  }
}

module attributes {stable_mosaic.version = 11 : i64} {
  func.func @_skip_conv1x1_kernel(%arg0: i32, %arg1: memref<32x256xbf16, #tpu.memory_space<vmem>>, %arg2: memref<32x256xbf16, #tpu.memory_space<vmem>>, %arg3: memref<256x128xbf16, #tpu.memory_space<vmem>>, %arg4: memref<1x128xf32, #tpu.memory_space<vmem>>, %arg5: memref<32x128xbf16, #tpu.memory_space<vmem>>) attributes {dimension_semantics = [#tpu.dimension_semantics<parallel>], iteration_bounds = array<i64: 2>, scalar_prefetch = 0 : i64, scratch_operands = 0 : i64, tpu.core_type = #tpu.core_type<tc>, window_params = [{transform_indices = @transform_0, window_bounds = array<i64: 32, 256>}, {transform_indices = @transform_1, window_bounds = array<i64: 32, 256>}, {pipeline_mode = #tpu.pipeline_mode<synchronous>, transform_indices = @transform_2, window_bounds = array<i64: 256, 128>}, {pipeline_mode = #tpu.pipeline_mode<synchronous>, transform_indices = @transform_3, window_bounds = array<i64: 1, 128>}, {transform_indices = @transform_4, window_bounds = array<i64: 32, 128>}]} {
    %c0 = arith.constant 0 : index
    %c0_0 = arith.constant 0 : index
    %0 = vector.load %arg1[%c0, %c0_0] : memref<32x256xbf16, #tpu.memory_space<vmem>>, vector<32x256xbf16>
    %c0_1 = arith.constant 0 : index
    %c0_2 = arith.constant 0 : index
    %1 = vector.load %arg2[%c0_1, %c0_2] : memref<32x256xbf16, #tpu.memory_space<vmem>>, vector<32x256xbf16>
    %2 = arith.addf %0, %1 : vector<32x256xbf16>
    %c0_3 = arith.constant 0 : index
    %c0_4 = arith.constant 0 : index
    %3 = vector.load %arg3[%c0_3, %c0_4] : memref<256x128xbf16, #tpu.memory_space<vmem>>, vector<256x128xbf16>
    %cst = arith.constant dense<0.000000e+00> : vector<32x128xf32>
    %4 = tpu.matmul %2, %3, %cst {dimension_numbers = #tpu.dot_dimension_numbers<[1], [0], [0], [1], [0, 0, 1, 1], [], []>} : vector<32x256xbf16>, vector<256x128xbf16>, vector<32x128xf32> -> vector<32x128xf32>
    %c0_5 = arith.constant 0 : index
    %c0_6 = arith.constant 0 : index
    %5 = vector.load %arg4[%c0_5, %c0_6] : memref<1x128xf32, #tpu.memory_space<vmem>>, vector<1x128xf32>
    %6 = vector.broadcast %5 : vector<1x128xf32> to vector<32x128xf32>
    %7 = arith.addf %4, %6 : vector<32x128xf32>
    %8 = arith.truncf %7 : vector<32x128xf32> to vector<32x128xbf16>
    %c0_7 = arith.constant 0 : index
    %c0_8 = arith.constant 0 : index
    %9 = vector.load %arg5[%c0_7, %c0_8] : memref<32x128xbf16, #tpu.memory_space<vmem>>, vector<32x128xbf16>
    tpu.vector_store %arg5[%c0_7, %c0_8], %8 {strides = array<i32>} : memref<32x128xbf16, #tpu.memory_space<vmem>>, vector<32x128xbf16>,
    return
  }
  func.func @transform_0(%arg0: i32) -> (i32, i32) {
    %c0_i32 = arith.constant 0 : i32
    %c0_i32_0 = arith.constant 0 : i32
    return %arg0, %c0_i32 : i32, i32
  }
  func.func @transform_1(%arg0: i32) -> (i32, i32) {
    %c0_i32 = arith.constant 0 : i32
    %c0_i32_0 = arith.constant 0 : i32
    return %arg0, %c0_i32 : i32, i32
  }
  func.func @transform_2(%arg0: i32) -> (i32, i32) {
    %c0_i32 = arith.constant 0 : i32
    %c0_i32_0 = arith.constant 0 : i32
    %c0_i32_1 = arith.constant 0 : i32
    return %c0_i32, %c0_i32_0 : i32, i32
  }
  func.func @transform_3(%arg0: i32) -> (i32, i32) {
    %c0_i32 = arith.constant 0 : i32
    %c0_i32_0 = arith.constant 0 : i32
    %c0_i32_1 = arith.constant 0 : i32
    return %c0_i32, %c0_i32_0 : i32, i32
  }
  func.func @transform_4(%arg0: i32) -> (i32, i32) {
    %c0_i32 = arith.constant 0 : i32
    %c0_i32_0 = arith.constant 0 : i32
    return %arg0, %c0_i32 : i32, i32
  }
}

module attributes {stable_mosaic.version = 11 : i64} {
  func.func @_skip_conv1x1_kernel(%arg0: i32, %arg1: memref<128x128xbf16, #tpu.memory_space<vmem>>, %arg2: memref<128x128xbf16, #tpu.memory_space<vmem>>, %arg3: memref<128x128xbf16, #tpu.memory_space<vmem>>, %arg4: memref<1x128xf32, #tpu.memory_space<vmem>>, %arg5: memref<128x128xbf16, #tpu.memory_space<vmem>>) attributes {dimension_semantics = [#tpu.dimension_semantics<parallel>], iteration_bounds = array<i64: 2>, scalar_prefetch = 0 : i64, scratch_operands = 0 : i64, tpu.core_type = #tpu.core_type<tc>, window_params = [{transform_indices = @transform_0, window_bounds = array<i64: 128, 128>}, {transform_indices = @transform_1, window_bounds = array<i64: 128, 128>}, {pipeline_mode = #tpu.pipeline_mode<synchronous>, transform_indices = @transform_2, window_bounds = array<i64: 128, 128>}, {pipeline_mode = #tpu.pipeline_mode<synchronous>, transform_indices = @transform_3, window_bounds = array<i64: 1, 128>}, {transform_indices = @transform_4, window_bounds = array<i64: 128, 128>}]} {
    %c0 = arith.constant 0 : index
    %c0_0 = arith.constant 0 : index
    %0 = vector.load %arg1[%c0, %c0_0] : memref<128x128xbf16, #tpu.memory_space<vmem>>, vector<128x128xbf16>
    %c0_1 = arith.constant 0 : index
    %c0_2 = arith.constant 0 : index
    %1 = vector.load %arg2[%c0_1, %c0_2] : memref<128x128xbf16, #tpu.memory_space<vmem>>, vector<128x128xbf16>
    %2 = arith.addf %0, %1 : vector<128x128xbf16>
    %c0_3 = arith.constant 0 : index
    %c0_4 = arith.constant 0 : index
    %3 = vector.load %arg3[%c0_3, %c0_4] : memref<128x128xbf16, #tpu.memory_space<vmem>>, vector<128x128xbf16>
    %cst = arith.constant dense<0.000000e+00> : vector<128x128xf32>
    %4 = tpu.matmul %2, %3, %cst {dimension_numbers = #tpu.dot_dimension_numbers<[1], [0], [0], [1], [0, 0, 1, 1], [], []>} : vector<128x128xbf16>, vector<128x128xbf16>, vector<128x128xf32> -> vector<128x128xf32>
    %c0_5 = arith.constant 0 : index
    %c0_6 = arith.constant 0 : index
    %5 = vector.load %arg4[%c0_5, %c0_6] : memref<1x128xf32, #tpu.memory_space<vmem>>, vector<1x128xf32>
    %6 = vector.broadcast %5 : vector<1x128xf32> to vector<128x128xf32>
    %7 = arith.addf %4, %6 : vector<128x128xf32>
    %8 = arith.truncf %7 : vector<128x128xf32> to vector<128x128xbf16>
    %c0_7 = arith.constant 0 : index
    %c0_8 = arith.constant 0 : index
    %9 = vector.load %arg5[%c0_7, %c0_8] : memref<128x128xbf16, #tpu.memory_space<vmem>>, vector<128x128xbf16>
    tpu.vector_store %arg5[%c0_7, %c0_8], %8 {strides = array<i32>} : memref<128x128xbf16, #tpu.memory_space<vmem>>, vector<128x128xbf16>,
    return
  }
  func.func @transform_0(%arg0: i32) -> (i32, i32) {
    %c0_i32 = arith.constant 0 : i32
    %c0_i32_0 = arith.constant 0 : i32
    return %arg0, %c0_i32 : i32, i32
  }
  func.func @transform_1(%arg0: i32) -> (i32, i32) {
    %c0_i32 = arith.constant 0 : i32
    %c0_i32_0 = arith.constant 0 : i32
    return %arg0, %c0_i32 : i32, i32
  }
  func.func @transform_2(%arg0: i32) -> (i32, i32) {
    %c0_i32 = arith.constant 0 : i32
    %c0_i32_0 = arith.constant 0 : i32
    %c0_i32_1 = arith.constant 0 : i32
    return %c0_i32, %c0_i32_0 : i32, i32
  }
  func.func @transform_3(%arg0: i32) -> (i32, i32) {
    %c0_i32 = arith.constant 0 : i32
    %c0_i32_0 = arith.constant 0 : i32
    %c0_i32_1 = arith.constant 0 : i32
    return %c0_i32, %c0_i32_0 : i32, i32
  }
  func.func @transform_4(%arg0: i32) -> (i32, i32) {
    %c0_i32 = arith.constant 0 : i32
    %c0_i32_0 = arith.constant 0 : i32
    return %arg0, %c0_i32 : i32, i32
  }
}

</mosaic_0001>

<llo_original>
// kernel: f_random_proj_forward.8
$region0: #{f_random_proj_forward.8}
  #allocation0 [shape = 'u32[]', space=smem, size = 0x4, offset = 0x4, fixed_abs, tag = 'smem constant byte address 0x4 - core index']
  #allocation1 [shape = 'u32[144,128]{1,0:T(1,128)}', space=vmem, size = 0x12000, scoped, tag = 'internal scratch']
  %s0 = inlined_call_operand.vmem [shape: bf16[256,256], index: 0, kind: input, shape index: {}]
  %s1 = inlined_call_operand.vmem [shape: bf16[256,256], index: 1, kind: input, shape index: {}]
  %s2 = inlined_call_operand.vmem [shape: f32[1,256], index: 2, kind: input, shape index: {}]
  %s3 = inlined_call_operand.vmem [shape: bf16[256,128], index: 3, kind: input, shape index: {}]
  %s4 = inlined_call_operand.vmem [shape: f32[1,128], index: 4, kind: input, shape index: {}]
  %s5 = inlined_call_operand.vmem [shape: bf16[256,256], index: 5, kind: output, shape index: {0}]
  %s6 = inlined_call_operand.vmem [shape: bf16[256,128], index: 6, kind: output, shape index: {1}]
  %7 = xla_tuple %s5, %s6
  %s8 = sld [smem:[#allocation0]]
  $region61: #{f_random_proj_forward.8} parent=0
    _
  %s10 = ssub.s32 1, %s8
  %s11 = scalar_select 0, %s10, %s8
  loop: start=0, step=1, limit=4
  $region2: #{f_random_proj_forward.8} parent=0 // loop_pre_header
    _
  $region3: #{f_random_proj_forward.8} parent=0 // loop_header
    %s13 = sphi 0, %s17
    %p14 = scmp.ge.s32.totalorder %s13, 4
    %s23 = sphi 0, %s25
    %s26 = sphi 0, %s23
    %s27 = sphi 0, %s26
    %s43 = sphi 0, %s27
    %s47 = sphi 0, %s47
    %s49 = sphi 0, %s47
    %s50 = sphi 0, %s49
    %s64 = sphi 0, %s50
    %s68 = sphi 0, %s68
    %s70 = sphi 0, %s68
    %s71 = sphi 0, %s70
    %s85 = sphi 0, %s71
    %s89 = sphi 0, %s89
    %s91 = sphi 0, %s89
    %s92 = sphi 0, %s91
    %s106 = sphi 0, %s92
    %s110 = sphi 0, %s110
    %s112 = sphi 0, %s110
    %s113 = sphi 0, %s112
    %s127 = sphi 0, %s113
    %s133 = sphi 0, %s135
    %s136 = sphi 0, %s133
    %s137 = sphi 0, %s136
    %s153 = sphi 0, %s137
    %s159 = sphi 0, %s161
    %s162 = sphi 0, %s159
    %s163 = sphi 0, %s162
    %s179 = sphi 0, %s163
  $region4: #{f_random_proj_forward.8} parent=0 // loop_header_branch
    %16 = sbr.rel (%p14) target = $region8
  $region5: #{f_random_proj_forward.8} parent=0 // loop_body
    %s18 = ssub.s32 %s13, 1
    %s19 = ssub.s32 %s13, 2
    %s20 = sadd.s32 %s13, 1
    %s21 = ssub.s32 %s13, %s20
    %p22 = scmp.eq.s32.totalorder %s21, 0
    %s24 = sadd.s32 %s23, 1
    %s25 = scalar_select %p22, %s23, %s24
    %p28 = pneg %p22
    %p29 = scmp.eq.s32.totalorder %s13, 1
    %p30 = por %p28, %p29
    %p31 = scmp.ne.s32.totalorder %s23, %s26
    %p32 = scmp.eq.s32.totalorder %s13, 0
    %p33 = por %p31, %p32
    %p34 = scmp.ne.s32.totalorder %s23, %s26
    %p35 = scmp.eq.s32.totalorder %s18, 1
    %p36 = por %p34, %p35
    %p37 = scmp.ne.s32.totalorder %s26, %s27
    %p38 = scmp.eq.s32.totalorder %s18, 0
    %p39 = por %p37, %p38
    %p40 = scmp.ne.s32.totalorder %s26, %s27
    %p41 = scmp.eq.s32.totalorder %s19, 1
    %p42 = por %p40, %p41
    %p44 = scmp.ne.s32.totalorder %s27, %s43
    %p45 = scmp.eq.s32.totalorder %s19, 0
    %p46 = por %p44, %p45
    %s48 = sadd.s32 %s47, 1
    %p51 = scmp.eq.s32.totalorder %s13, 1
    %p52 = scmp.ne.s32.totalorder %s47, %s49
    %p53 = scmp.eq.s32.totalorder %s13, 0
    %p54 = por %p52, %p53
    %p55 = scmp.ne.s32.totalorder %s47, %s49
    %p56 = scmp.eq.s32.totalorder %s18, 1
    %p57 = por %p55, %p56
    %p58 = scmp.ne.s32.totalorder %s49, %s50
    %p59 = scmp.eq.s32.totalorder %s18, 0
    %p60 = por %p58, %p59
    %p61 = scmp.ne.s32.totalorder %s49, %s50
    %p62 = scmp.eq.s32.totalorder %s19, 1
    %p63 = por %p61, %p62
    %p65 = scmp.ne.s32.totalorder %s50, %s64
    %p66 = scmp.eq.s32.totalorder %s19, 0
    %p67 = por %p65, %p66
    %s69 = sadd.s32 %s68, 1
    %p72 = scmp.eq.s32.totalorder %s13, 1
    %p73 = scmp.ne.s32.totalorder %s68, %s70
    %p74 = scmp.eq.s32.totalorder %s13, 0
    %p75 = por %p73, %p74
    %p76 = scmp.ne.s32.totalorder %s68, %s70
    %p77 = scmp.eq.s32.totalorder %s18, 1
    %p78 = por %p76, %p77
    %p79 = scmp.ne.s32.totalorder %s70, %s71
    %p80 = scmp.eq.s32.totalorder %s18, 0
    %p81 = por %p79, %p80
    %p82 = scmp.ne.s32.totalorder %s70, %s71
    %p83 = scmp.eq.s32.totalorder %s19, 1
    %p84 = por %p82, %p83
    %p86 = scmp.ne.s32.totalorder %s71, %s85
    %p87 = scmp.eq.s32.totalorder %s19, 0
    %p88 = por %p86, %p87
    %s90 = sadd.s32 %s89, 1
    %p93 = scmp.eq.s32.totalorder %s13, 1
    %p94 = scmp.ne.s32.totalorder %s89, %s91
    %p95 = scmp.eq.s32.totalorder %s13, 0
    %p96 = por %p94, %p95
    %p97 = scmp.ne.s32.totalorder %s89, %s91
    %p98 = scmp.eq.s32.totalorder %s18, 1
    %p99 = por %p97, %p98
    %p100 = scmp.ne.s32.totalorder %s91, %s92
    %p101 = scmp.eq.s32.totalorder %s18, 0
    %p102 = por %p100, %p101
    %p103 = scmp.ne.s32.totalorder %s91, %s92
    %p104 = scmp.eq.s32.totalorder %s19, 1
    %p105 = por %p103, %p104
    %p107 = scmp.ne.s32.totalorder %s92, %s106
    %p108 = scmp.eq.s32.totalorder %s19, 0
    %p109 = por %p107, %p108
    %s111 = sadd.s32 %s110, 1
    %p114 = scmp.eq.s32.totalorder %s13, 1
    %p115 = scmp.ne.s32.totalorder %s110, %s112
    %p116 = scmp.eq.s32.totalorder %s13, 0
    %p117 = por %p115, %p116
    %p118 = scmp.ne.s32.totalorder %s110, %s112
    %p119 = scmp.eq.s32.totalorder %s18, 1
    %p120 = por %p118, %p119
    %p121 = scmp.ne.s32.totalorder %s112, %s113
    %p122 = scmp.eq.s32.totalorder %s18, 0
    %p123 = por %p121, %p122
    %p124 = scmp.ne.s32.totalorder %s112, %s113
    %p125 = scmp.eq.s32.totalorder %s19, 1
    %p126 = por %p124, %p125
    %p128 = scmp.ne.s32.totalorder %s113, %s127
    %p129 = scmp.eq.s32.totalorder %s19, 0
    %p130 = por %p128, %p129
    %s131 = ssub.s32 %s13, %s20
    %p132 = scmp.eq.s32.totalorder %s131, 0
    %s134 = sadd.s32 %s133, 1
    %s135 = scalar_select %p132, %s133, %s134
    %p138 = pneg %p132
    %p139 = scmp.eq.s32.totalorder %s13, 1
    %p140 = por %p138, %p139
    %p141 = scmp.ne.s32.totalorder %s133, %s136
    %p142 = scmp.eq.s32.totalorder %s13, 0
    %p143 = por %p141, %p142
    %p144 = scmp.ne.s32.totalorder %s133, %s136
    %p145 = scmp.eq.s32.totalorder %s18, 1
    %p146 = por %p144, %p145
    %p147 = scmp.ne.s32.totalorder %s136, %s137
    %p148 = scmp.eq.s32.totalorder %s18, 0
    %p149 = por %p147, %p148
    %p150 = scmp.ne.s32.totalorder %s136, %s137
    %p151 = scmp.eq.s32.totalorder %s19, 1
    %p152 = por %p150, %p151
    %p154 = scmp.ne.s32.totalorder %s137, %s153
    %p155 = scmp.eq.s32.totalorder %s19, 0
    %p156 = por %p154, %p155
    %s157 = ssub.s32 %s13, %s20
    %p158 = scmp.eq.s32.totalorder %s157, 0
    %s160 = sadd.s32 %s159, 1
    %s161 = scalar_select %p158, %s159, %s160
    %p164 = pneg %p158
    %p165 = scmp.eq.s32.totalorder %s13, 1
    %p166 = por %p164, %p165
    %p167 = scmp.ne.s32.totalorder %s159, %s162
    %p168 = scmp.eq.s32.totalorder %s13, 0
    %p169 = por %p167, %p168
    %p170 = scmp.ne.s32.totalorder %s159, %s162
    %p171 = scmp.eq.s32.totalorder %s18, 1
    %p172 = por %p170, %p171
    %p173 = scmp.ne.s32.totalorder %s162, %s163
    %p174 = scmp.eq.s32.totalorder %s18, 0
    %p175 = por %p173, %p174
    %p176 = scmp.ne.s32.totalorder %s162, %s163
    %p177 = scmp.eq.s32.totalorder %s19, 1
    %p178 = por %p176, %p177
    %p180 = scmp.ne.s32.totalorder %s163, %s179
    %p181 = scmp.eq.s32.totalorder %s19, 0
    %p182 = por %p180, %p181
    %p183 = scmp.le.s32.totalorder 1, %s13
    %p184 = scmp.lt.s32.totalorder %s13, 3
    %p185 = pnand %p183, %p184
    %p186 = pneg %p185
    // Predicated region
    $region9: #{f_random_proj_forward.8} parent=5 // pred_check
      _
    $region10: #{f_random_proj_forward.8} parent=5 // pred_check_branch
      %188 = sbr.rel (%p185) target = $region12
    $region11: #{f_random_proj_forward.8} parent=5 // pred_region
      %s189 = ssub.s32 %s13, 1
      // Predicated region
      $region13: #{f_random_proj_forward.8} parent=11 // pred_check
        %p190 = pneg %p60
      $region14: #{f_random_proj_forward.8} parent=11 // pred_check_branch
        %192 = sbr.rel (%p190) target = $region16
      $region15: #{f_random_proj_forward.8} parent=11 // pred_region
        _
      $region16: #{f_random_proj_forward.8} parent=11 // pred_fallthru
        _
      // Predicated region
      $region17: #{f_random_proj_forward.8} parent=11 // pred_check
        %p193 = pneg %p81
      $region18: #{f_random_proj_forward.8} parent=11 // pred_check_branch
        %195 = sbr.rel (%p193) target = $region20
      $region19: #{f_random_proj_forward.8} parent=11 // pred_region
        _
      $region20: #{f_random_proj_forward.8} parent=11 // pred_fallthru
        _
      // Predicated region
      $region21: #{f_random_proj_forward.8} parent=11 // pred_check
        %p196 = pneg %p102
      $region22: #{f_random_proj_forward.8} parent=11 // pred_check_branch
        %198 = sbr.rel (%p196) target = $region24
      $region23: #{f_random_proj_forward.8} parent=11 // pred_region
        _
      $region24: #{f_random_proj_forward.8} parent=11 // pred_fallthru
        _
      // Predicated region
      $region25: #{f_random_proj_forward.8} parent=11 // pred_check
        %p199 = pneg %p123
      $region26: #{f_random_proj_forward.8} parent=11 // pred_check_branch
        %201 = sbr.rel (%p199) target = $region28
      $region27: #{f_random_proj_forward.8} parent=11 // pred_region
        _
      $region28: #{f_random_proj_forward.8} parent=11 // pred_fallthru
        _
    $region12: #{f_random_proj_forward.8} parent=5 // pred_fallthru
      _
    %p202 = scmp.lt.s32.totalorder %s13, 2
    // Predicated region
    $region29: #{f_random_proj_forward.8} parent=5 // pred_check
      %p203 = pneg %p202
    $region30: #{f_random_proj_forward.8} parent=5 // pred_check_branch
      %205 = sbr.rel (%p203) target = $region32
    $region31: #{f_random_proj_forward.8} parent=5 // pred_region
      // Predicated region
      $region33: #{f_random_proj_forward.8} parent=31 // pred_check
        %p206 = pneg %p33
      $region34: #{f_random_proj_forward.8} parent=31 // pred_check_branch
        %208 = sbr.rel (%p206) target = $region36
      $region35: #{f_random_proj_forward.8} parent=31 // pred_region
        %s209 = smul.u32 16, %s13
        %p210 = scmp.lt.s32.totalorder %s209, 31
        %s211 = scalar_select %p210, %s209, 31
        %s212 = smul.addr %s211, 2
        %s213 = smul.addr %s212, 4
        %s214 = scalar_lea.vmem %s0, %s213
        %s215 = smul.u32 16, %s13
      $region36: #{f_random_proj_forward.8} parent=31 // pred_fallthru
        _
    $region32: #{f_random_proj_forward.8} parent=5 // pred_fallthru
      _
    %p216 = scmp.le.s32.totalorder 1, %s13
    %p217 = scmp.lt.s32.totalorder %s13, 3
    %p218 = pnand %p216, %p217
    %p219 = pneg %p218
    // Predicated region
    $region37: #{f_random_proj_forward.8} parent=5 // pred_check
      _
    $region38: #{f_random_proj_forward.8} parent=5 // pred_check_branch
      %221 = sbr.rel (%p218) target = $region40
    $region39: #{f_random_proj_forward.8} parent=5 // pred_region
      %s222 = ssub.s32 %s13, 1
      %s223 = smul.u32 16, %s18
      %p224 = scmp.lt.s32.totalorder %s223, 31
      %s225 = scalar_select %p224, %s223, 31
      %s226 = smul.addr %s225, 2
      %s227 = smul.addr %s226, 4
      %s228 = scalar_lea.vmem %s0, %s227
      %p229 = pneg %p39
      %p230 = pneg %p36
      %p231 = pneg %p60
      %p232 = pneg %p57
      %p233 = pneg %p81
      %p234 = pneg %p78
      %p235 = pneg %p102
      %p236 = pneg %p99
      %p237 = pneg %p123
      %p238 = pneg %p120
      %p239 = pneg %p149
      %p240 = pneg %p146
      %s241 = smul.u32 16, %s18
      %p242 = scmp.lt.s32.totalorder %s241, 31
      %s243 = scalar_select %p242, %s241, 31
      %s244 = smul.addr %s243, 2
      %s245 = smul.addr %s244, 4
      %s246 = scalar_lea.vmem %s5, %s245
      %p247 = pneg %p175
      %p248 = pneg %p172
      %s249 = smul.u32 16, %s18
      %p250 = scmp.lt.s32.totalorder %s249, 31
      %s251 = scalar_select %p250, %s249, 31
      %s252 = smul.addr %s251, 4
      %s253 = scalar_lea.vmem %s6, %s252
      %s254 = smul.u32 16, %s18
      %p255 = scmp.lt.s32.totalorder %s254, 31
      %s256 = scalar_select %p255, %s254, 31
      %s257 = smul.addr %s256, 2
      %s258 = smul.addr %s257, 4
      %s259 = scalar_lea.vmem %s0, %s258
      %s260 = smul.u32 16, %s18
      %s261 = smul.u32 16, %s18
      %p262 = scmp.lt.s32.totalorder %s261, 31
      %s263 = scalar_select %p262, %s261, 31
      %s264 = smul.addr %s263, 2
      %s265 = smul.addr %s264, 4
      %s266 = scalar_lea.vmem %s5, %s265
      %s267 = smul.u32 16, %s18
      %s268 = smul.u32 16, %s18
      %p269 = scmp.lt.s32.totalorder %s268, 31
      %s270 = scalar_select %p269, %s268, 31
      %s271 = smul.addr %s270, 4
      %s272 = scalar_lea.vmem %s6, %s271
      %s273 = smul.u32 16, %s18
      %v275 = vld [vmem:[%s259] sm:$0xff]
      %v276 = vld [vmem:[%s259 + $0x8] sm:$0xff]
      %v277 = vld [vmem:[%s259 + $0x10] sm:$0xff]
      %v278 = vld [vmem:[%s259 + $0x18] sm:$0xff]
      %v279 = vld [vmem:[%s259 + $0x20] sm:$0xff]
      %v280 = vld [vmem:[%s259 + $0x28] sm:$0xff]
      %v281 = vld [vmem:[%s259 + $0x30] sm:$0xff]
      %v282 = vld [vmem:[%s259 + $0x38] sm:$0xff]
      %v283 = vld [vmem:[%s259 + $0x40] sm:$0xff]
      %v284 = vld [vmem:[%s259 + $0x48] sm:$0xff]
      %v285 = vld [vmem:[%s259 + $0x50] sm:$0xff]
      %v286 = vld [vmem:[%s259 + $0x58] sm:$0xff]
      %v287 = vld [vmem:[%s259 + $0x60] sm:$0xff]
      %v288 = vld [vmem:[%s259 + $0x68] sm:$0xff]
      %v289 = vld [vmem:[%s259 + $0x70] sm:$0xff]
      %v290 = vld [vmem:[%s259 + $0x78] sm:$0xff]
      %v291 = vld [vmem:[%s1] sm:$0xff]
      %v292 = vld [vmem:[%s1 + $0x8] sm:$0xff]
      %v293 = vld [vmem:[%s1 + $0x10] sm:$0xff]
      %v294 = vld [vmem:[%s1 + $0x18] sm:$0xff]
      %v295 = vld [vmem:[%s1 + $0x20] sm:$0xff]
      %v296 = vld [vmem:[%s1 + $0x28] sm:$0xff]
      %v297 = vld [vmem:[%s1 + $0x30] sm:$0xff]
      %v298 = vld [vmem:[%s1 + $0x38] sm:$0xff]
      %v299 = vld [vmem:[%s1 + $0x40] sm:$0xff]
      %v300 = vld [vmem:[%s1 + $0x48] sm:$0xff]
      %v301 = vld [vmem:[%s1 + $0x50] sm:$0xff]
      %v302 = vld [vmem:[%s1 + $0x58] sm:$0xff]
      %v303 = vld [vmem:[%s1 + $0x60] sm:$0xff]
      %v304 = vld [vmem:[%s1 + $0x68] sm:$0xff]
      %v305 = vld [vmem:[%s1 + $0x70] sm:$0xff]
      %v306 = vld [vmem:[%s1 + $0x78] sm:$0xff]
      %v307 = vld [vmem:[%s1 + $0x80] sm:$0xff]
      %v308 = vld [vmem:[%s1 + $0x88] sm:$0xff]
      %v309 = vld [vmem:[%s1 + $0x90] sm:$0xff]
      %v310 = vld [vmem:[%s1 + $0x98] sm:$0xff]
      %v311 = vld [vmem:[%s1 + $0xa0] sm:$0xff]
      %v312 = vld [vmem:[%s1 + $0xa8] sm:$0xff]
      %v313 = vld [vmem:[%s1 + $0xb0] sm:$0xff]
      %v314 = vld [vmem:[%s1 + $0xb8] sm:$0xff]
      %v315 = vld [vmem:[%s1 + $0xc0] sm:$0xff]
      %v316 = vld [vmem:[%s1 + $0xc8] sm:$0xff]
      %v317 = vld [vmem:[%s1 + $0xd0] sm:$0xff]
      %v318 = vld [vmem:[%s1 + $0xd8] sm:$0xff]
      %v319 = vld [vmem:[%s1 + $0xe0] sm:$0xff]
      %v320 = vld [vmem:[%s1 + $0xe8] sm:$0xff]
      %v321 = vld [vmem:[%s1 + $0xf0] sm:$0xff]
      %v322 = vld [vmem:[%s1 + $0xf8] sm:$0xff]
      %v323 = vld [vmem:[%s2] sm:$0x3]
      %v325 = vlaneseq
      %v326 = vshrl.u32 %v325, 7
      %v327 = vsub.s32 0, %v326
      %v328 = vrot.slane %v323, %v327
      %v329 = vlaneseq
      %v330 = vshrl.u32 %v329, 7
      %v331 = vsub.s32 1, %v330
      %v332 = vrot.slane %v323, %v331
      %v351 = vunpack.c.l.b16 %v275
      %v352 = vunpack.c.h.b16 %v275
      %v353 = vunpack.c.l.b16 %v276
      %v354 = vunpack.c.h.b16 %v276
      %v355 = vunpack.c.l.b16 %v277
      %v356 = vunpack.c.h.b16 %v277
      %v357 = vunpack.c.l.b16 %v278
      %v358 = vunpack.c.h.b16 %v278
      %v359 = vunpack.c.l.b16 %v279
      %v360 = vunpack.c.h.b16 %v279
      %v361 = vunpack.c.l.b16 %v280
      %v362 = vunpack.c.h.b16 %v280
      %v363 = vunpack.c.l.b16 %v281
      %v364 = vunpack.c.h.b16 %v281
      %v365 = vunpack.c.l.b16 %v282
      %v366 = vunpack.c.h.b16 %v282
      %v367 = vunpack.c.l.b16 %v283
      %v368 = vunpack.c.h.b16 %v283
      %v369 = vunpack.c.l.b16 %v284
      %v370 = vunpack.c.h.b16 %v284
      %v371 = vunpack.c.l.b16 %v285
      %v372 = vunpack.c.h.b16 %v285
      %v373 = vunpack.c.l.b16 %v286
      %v374 = vunpack.c.h.b16 %v286
      %v375 = vunpack.c.l.b16 %v287
      %v376 = vunpack.c.h.b16 %v287
      %v377 = vunpack.c.l.b16 %v288
      %v378 = vunpack.c.h.b16 %v288
      %v379 = vunpack.c.l.b16 %v289
      %v380 = vunpack.c.h.b16 %v289
      %v381 = vunpack.c.l.b16 %v290
      %v382 = vunpack.c.h.b16 %v290
      %v383 = vpack.c.b16 %v353, %v351
      %v384 = vpack.c.b16 %v354, %v352
      %v385 = vpack.c.b16 %v357, %v355
      %v386 = vpack.c.b16 %v358, %v356
      %v387 = vpack.c.b16 %v361, %v359
      %v388 = vpack.c.b16 %v362, %v360
      %v389 = vpack.c.b16 %v365, %v363
      %v390 = vpack.c.b16 %v366, %v364
      %v391 = vpack.c.b16 %v369, %v367
      %v392 = vpack.c.b16 %v370, %v368
      %v393 = vpack.c.b16 %v373, %v371
      %v394 = vpack.c.b16 %v374, %v372
      %v395 = vpack.c.b16 %v377, %v375
      %v396 = vpack.c.b16 %v378, %v376
      %v397 = vpack.c.b16 %v381, %v379
      %v398 = vpack.c.b16 %v382, %v380
      %v447 = vunpack.c.l.b16 %v291
      %v448 = vunpack.c.h.b16 %v291
      %v449 = vunpack.c.l.b16 %v292
      %v450 = vunpack.c.h.b16 %v292
      %v451 = vunpack.c.l.b16 %v293
      %v452 = vunpack.c.h.b16 %v293
      %v453 = vunpack.c.l.b16 %v294
      %v454 = vunpack.c.h.b16 %v294
      %v455 = vunpack.c.l.b16 %v295
      %v456 = vunpack.c.h.b16 %v295
      %v457 = vunpack.c.l.b16 %v296
      %v458 = vunpack.c.h.b16 %v296
      %v459 = vunpack.c.l.b16 %v297
      %v460 = vunpack.c.h.b16 %v297
      %v461 = vunpack.c.l.b16 %v298
      %v462 = vunpack.c.h.b16 %v298
      %v463 = vunpack.c.l.b16 %v299
      %v464 = vunpack.c.h.b16 %v299
      %v465 = vunpack.c.l.b16 %v300
      %v466 = vunpack.c.h.b16 %v300
      %v467 = vunpack.c.l.b16 %v301
      %v468 = vunpack.c.h.b16 %v301
      %v469 = vunpack.c.l.b16 %v302
      %v470 = vunpack.c.h.b16 %v302
      %v471 = vunpack.c.l.b16 %v303
      %v472 = vunpack.c.h.b16 %v303
      %v473 = vunpack.c.l.b16 %v304
      %v474 = vunpack.c.h.b16 %v304
      %v475 = vunpack.c.l.b16 %v305
      %v476 = vunpack.c.h.b16 %v305
      %v477 = vunpack.c.l.b16 %v306
      %v478 = vunpack.c.h.b16 %v306
      %v479 = vunpack.c.l.b16 %v307
      %v480 = vunpack.c.h.b16 %v307
      %v481 = vunpack.c.l.b16 %v308
      %v482 = vunpack.c.h.b16 %v308
      %v483 = vunpack.c.l.b16 %v309
      %v484 = vunpack.c.h.b16 %v309
      %v485 = vunpack.c.l.b16 %v310
      %v486 = vunpack.c.h.b16 %v310
      %v487 = vunpack.c.l.b16 %v311
      %v488 = vunpack.c.h.b16 %v311
      %v489 = vunpack.c.l.b16 %v312
      %v490 = vunpack.c.h.b16 %v312
      %v491 = vunpack.c.l.b16 %v313
      %v492 = vunpack.c.h.b16 %v313
      %v493 = vunpack.c.l.b16 %v314
      %v494 = vunpack.c.h.b16 %v314
      %v495 = vunpack.c.l.b16 %v315
      %v496 = vunpack.c.h.b16 %v315
      %v497 = vunpack.c.l.b16 %v316
      %v498 = vunpack.c.h.b16 %v316
      %v499 = vunpack.c.l.b16 %v317
      %v500 = vunpack.c.h.b16 %v317
      %v501 = vunpack.c.l.b16 %v318
      %v502 = vunpack.c.h.b16 %v318
      %v503 = vunpack.c.l.b16 %v319
      %v504 = vunpack.c.h.b16 %v319
      %v505 = vunpack.c.l.b16 %v320
      %v506 = vunpack.c.h.b16 %v320
      %v507 = vunpack.c.l.b16 %v321
      %v508 = vunpack.c.h.b16 %v321
      %v509 = vunpack.c.l.b16 %v322
      %v510 = vunpack.c.h.b16 %v322
      %v511 = vpack.c.b16 %v449, %v447
      %v512 = vpack.c.b16 %v450, %v448
      %v513 = vpack.c.b16 %v453, %v451
      %v514 = vpack.c.b16 %v454, %v452
      %v515 = vpack.c.b16 %v457, %v455
      %v516 = vpack.c.b16 %v458, %v456
      %v517 = vpack.c.b16 %v461, %v459
      %v518 = vpack.c.b16 %v462, %v460
      %v519 = vpack.c.b16 %v465, %v463
      %v520 = vpack.c.b16 %v466, %v464
      %v521 = vpack.c.b16 %v469, %v467
      %v522 = vpack.c.b16 %v470, %v468
      %v523 = vpack.c.b16 %v473, %v471
      %v524 = vpack.c.b16 %v474, %v472
      %v525 = vpack.c.b16 %v477, %v475
      %v526 = vpack.c.b16 %v478, %v476
      %v527 = vpack.c.b16 %v481, %v479
      %v528 = vpack.c.b16 %v482, %v480
      %v529 = vpack.c.b16 %v485, %v483
      %v530 = vpack.c.b16 %v486, %v484
      %v531 = vpack.c.b16 %v489, %v487
      %v532 = vpack.c.b16 %v490, %v488
      %v533 = vpack.c.b16 %v493, %v491
      %v534 = vpack.c.b16 %v494, %v492
      %v535 = vpack.c.b16 %v497, %v495
      %v536 = vpack.c.b16 %v498, %v496
      %v537 = vpack.c.b16 %v501, %v499
      %v538 = vpack.c.b16 %v502, %v500
      %v539 = vpack.c.b16 %v505, %v503
      %v540 = vpack.c.b16 %v506, %v504
      %v541 = vpack.c.b16 %v509, %v507
      %v542 = vpack.c.b16 %v510, %v508
      %575 = vmatprep.subr.bf16.mxu0 %v512
      %576 = vmatpush1.bf16.msra.mxu0 %v511
      %577 = vmatprep.subr.bf16.mxu0 %v514
      %578 = vmatpush1.bf16.msra.mxu0 %v513
      %579 = vmatprep.subr.bf16.mxu0 %v516
      %580 = vmatpush1.bf16.msra.mxu0 %v515
      %581 = vmatprep.subr.bf16.mxu0 %v518
      %582 = vmatpush1.bf16.msra.mxu0 %v517
      %583 = vmatprep.subr.bf16.mxu0 %v520
      %584 = vmatpush1.bf16.msra.mxu0 %v519
      %585 = vmatprep.subr.bf16.mxu0 %v522
      %586 = vmatpush1.bf16.msra.mxu0 %v521
      %587 = vmatprep.subr.bf16.mxu0 %v524
      %588 = vmatpush1.bf16.msra.mxu0 %v523
      %589 = vmatprep.subr.bf16.mxu0 %v526
      %590 = vmatpush1.bf16.msra.mxu0 %v525
      %591 = vmatprep.subr.bf16.mxu0 %v528
      %592 = vmatpush1.bf16.msra.mxu0 %v527
      %593 = vmatprep.subr.bf16.mxu0 %v530
      %594 = vmatpush1.bf16.msra.mxu0 %v529
      %595 = vmatprep.subr.bf16.mxu0 %v532
      %596 = vmatpush1.bf16.msra.mxu0 %v531
      %597 = vmatprep.subr.bf16.mxu0 %v534
      %598 = vmatpush1.bf16.msra.mxu0 %v533
      %599 = vmatprep.subr.bf16.mxu0 %v536
      %600 = vmatpush1.bf16.msra.mxu0 %v535
      %601 = vmatprep.subr.bf16.mxu0 %v538
      %602 = vmatpush1.bf16.msra.mxu0 %v537
      %603 = vmatprep.subr.bf16.mxu0 %v540
      %604 = vmatpush1.bf16.msra.mxu0 %v539
      %605 = vmatprep.subr.bf16.mxu0 %v542
      %606 = vmatpush1.bf16.msra.mxu0 %v541
      %607 = vmatprep.mubr.bf16.mxu0 %v384
      %608 = vmatmul.mubr.bf16.gmra.mrb[0].mxu0 %v383
      %v609 = vpop.f32.mrb[0].mxu0
      %v610 = vadd.f32 %v328, %v609
      %v611 = vpop.f32.mrb[0].mxu0
      %v612 = vadd.f32 %v332, %v611
      %v613 = vpop.f32.mrb[0].mxu0
      %v614 = vadd.f32 %v328, %v613
      %v615 = vpop.f32.mrb[0].mxu0
      %v616 = vadd.f32 %v332, %v615
      %617 = vmatprep.mubr.bf16.mxu0 %v386
      %618 = vmatmul.mubr.bf16.gmra.mrb[0].mxu0 %v385
      %v619 = vpop.f32.mrb[0].mxu0
      %v620 = vadd.f32 %v328, %v619
      %v621 = vpop.f32.mrb[0].mxu0
      %v622 = vadd.f32 %v332, %v621
      %v623 = vpop.f32.mrb[0].mxu0
      %v624 = vadd.f32 %v328, %v623
      %v625 = vpop.f32.mrb[0].mxu0
      %v626 = vadd.f32 %v332, %v625
      %627 = vmatprep.mubr.bf16.mxu0 %v388
      %628 = vmatmul.mubr.bf16.gmra.mrb[0].mxu0 %v387
      %v629 = vpop.f32.mrb[0].mxu0
      %v630 = vadd.f32 %v328, %v629
      %v631 = vpop.f32.mrb[0].mxu0
      %v632 = vadd.f32 %v332, %v631
      %v633 = vpop.f32.mrb[0].mxu0
      %v634 = vadd.f32 %v328, %v633
      %v635 = vpop.f32.mrb[0].mxu0
      %v636 = vadd.f32 %v332, %v635
      %637 = vmatprep.mubr.bf16.mxu0 %v390
      %638 = vmatmul.mubr.bf16.gmra.mrb[0].mxu0 %v389
      %v639 = vpop.f32.mrb[0].mxu0
      %v640 = vadd.f32 %v328, %v639
      %v641 = vpop.f32.mrb[0].mxu0
      %v642 = vadd.f32 %v332, %v641
      %v643 = vpop.f32.mrb[0].mxu0
      %v644 = vadd.f32 %v328, %v643
      %v645 = vpop.f32.mrb[0].mxu0
      %v646 = vadd.f32 %v332, %v645
      %647 = vmatprep.mubr.bf16.mxu0 %v392
      %648 = vmatmul.mubr.bf16.gmra.mrb[0].mxu0 %v391
      %v649 = vpop.f32.mrb[0].mxu0
      %v650 = vadd.f32 %v328, %v649
      %v651 = vpop.f32.mrb[0].mxu0
      %v652 = vadd.f32 %v332, %v651
      %v653 = vpop.f32.mrb[0].mxu0
      %v654 = vadd.f32 %v328, %v653
      %v655 = vpop.f32.mrb[0].mxu0
      %v656 = vadd.f32 %v332, %v655
      %657 = vmatprep.mubr.bf16.mxu0 %v394
      %658 = vmatmul.mubr.bf16.gmra.mrb[0].mxu0 %v393
      %v659 = vpop.f32.mrb[0].mxu0
      %v660 = vadd.f32 %v328, %v659
      %v661 = vpop.f32.mrb[0].mxu0
      %v662 = vadd.f32 %v332, %v661
      %v663 = vpop.f32.mrb[0].mxu0
      %v664 = vadd.f32 %v328, %v663
      %v665 = vpop.f32.mrb[0].mxu0
      %v666 = vadd.f32 %v332, %v665
      %667 = vmatprep.mubr.bf16.mxu0 %v396
      %668 = vmatmul.mubr.bf16.gmra.mrb[0].mxu0 %v395
      %v669 = vpop.f32.mrb[0].mxu0
      %v670 = vadd.f32 %v328, %v669
      %v671 = vpop.f32.mrb[0].mxu0
      %v672 = vadd.f32 %v332, %v671
      %v673 = vpop.f32.mrb[0].mxu0
      %v674 = vadd.f32 %v328, %v673
      %v675 = vpop.f32.mrb[0].mxu0
      %v676 = vadd.f32 %v332, %v675
      %677 = vmatprep.mubr.bf16.mxu0 %v398
      %678 = vmatmul.mubr.bf16.gmra.mrb[0].mxu0 %v397
      %v679 = vpop.f32.mrb[0].mxu0
      %v680 = vadd.f32 %v328, %v679
      %v681 = vpop.f32.mrb[0].mxu0
      %v682 = vadd.f32 %v332, %v681
      %v683 = vpop.f32.mrb[0].mxu0
      %v684 = vadd.f32 %v328, %v683
      %v685 = vpop.f32.mrb[0].mxu0
      %v686 = vadd.f32 %v332, %v685
      %687 = vdwg.mxu0
      %v688 = vmax.f32 %v610, 0.0
      %v689 = vmax.f32 %v612, 0.0
      %v690 = vmax.f32 %v614, 0.0
      %v691 = vmax.f32 %v616, 0.0
      %v692 = vmax.f32 %v620, 0.0
      %v693 = vmax.f32 %v622, 0.0
      %v694 = vmax.f32 %v624, 0.0
      %v695 = vmax.f32 %v626, 0.0
      %v696 = vmax.f32 %v630, 0.0
      %v697 = vmax.f32 %v632, 0.0
      %v698 = vmax.f32 %v634, 0.0
      %v699 = vmax.f32 %v636, 0.0
      %v700 = vmax.f32 %v640, 0.0
      %v701 = vmax.f32 %v642, 0.0
      %v702 = vmax.f32 %v644, 0.0
      %v703 = vmax.f32 %v646, 0.0
      %v704 = vmax.f32 %v650, 0.0
      %v705 = vmax.f32 %v652, 0.0
      %v706 = vmax.f32 %v654, 0.0
      %v707 = vmax.f32 %v656, 0.0
      %v708 = vmax.f32 %v660, 0.0
      %v709 = vmax.f32 %v662, 0.0
      %v710 = vmax.f32 %v664, 0.0
      %v711 = vmax.f32 %v666, 0.0
      %v712 = vmax.f32 %v670, 0.0
      %v713 = vmax.f32 %v672, 0.0
      %v714 = vmax.f32 %v674, 0.0
      %v715 = vmax.f32 %v676, 0.0
      %v716 = vmax.f32 %v680, 0.0
      %v717 = vmax.f32 %v682, 0.0
      %v718 = vmax.f32 %v684, 0.0
      %v719 = vmax.f32 %v686, 0.0
      %v720 = vmin.f32 %v688, 6.0
      %v721 = vmin.f32 %v689, 6.0
      %v722 = vmin.f32 %v690, 6.0
      %v723 = vmin.f32 %v691, 6.0
      %v724 = vmin.f32 %v692, 6.0
      %v725 = vmin.f32 %v693, 6.0
      %v726 = vmin.f32 %v694, 6.0
      %v727 = vmin.f32 %v695, 6.0
      %v728 = vmin.f32 %v696, 6.0
      %v729 = vmin.f32 %v697, 6.0
      %v730 = vmin.f32 %v698, 6.0
      %v731 = vmin.f32 %v699, 6.0
      %v732 = vmin.f32 %v700, 6.0
      %v733 = vmin.f32 %v701, 6.0
      %v734 = vmin.f32 %v702, 6.0
      %v735 = vmin.f32 %v703, 6.0
      %v736 = vmin.f32 %v704, 6.0
      %v737 = vmin.f32 %v705, 6.0
      %v738 = vmin.f32 %v706, 6.0
      %v739 = vmin.f32 %v707, 6.0
      %v740 = vmin.f32 %v708, 6.0
      %v741 = vmin.f32 %v709, 6.0
      %v742 = vmin.f32 %v710, 6.0
      %v743 = vmin.f32 %v711, 6.0
      %v744 = vmin.f32 %v712, 6.0
      %v745 = vmin.f32 %v713, 6.0
      %v746 = vmin.f32 %v714, 6.0
      %v747 = vmin.f32 %v715, 6.0
      %v748 = vmin.f32 %v716, 6.0
      %v749 = vmin.f32 %v717, 6.0
      %v750 = vmin.f32 %v718, 6.0
      %v751 = vmin.f32 %v719, 6.0
      %v752 = vpack.c.bf16 %v722, %v720
      %v753 = vpack.c.bf16 %v723, %v721
      %v754 = vpack.c.bf16 %v726, %v724
      %v755 = vpack.c.bf16 %v727, %v725
      %v756 = vpack.c.bf16 %v730, %v728
      %v757 = vpack.c.bf16 %v731, %v729
      %v758 = vpack.c.bf16 %v734, %v732
      %v759 = vpack.c.bf16 %v735, %v733
      %v760 = vpack.c.bf16 %v738, %v736
      %v761 = vpack.c.bf16 %v739, %v737
      %v762 = vpack.c.bf16 %v742, %v740
      %v763 = vpack.c.bf16 %v743, %v741
      %v764 = vpack.c.bf16 %v746, %v744
      %v765 = vpack.c.bf16 %v747, %v745
      %v766 = vpack.c.bf16 %v750, %v748
      %v767 = vpack.c.bf16 %v751, %v749
      %v784 = vunpack.c.l.b16 %v752
      %v785 = vunpack.c.l.b16 %v753
      %v786 = vunpack.c.h.b16 %v752
      %v787 = vunpack.c.h.b16 %v753
      %v788 = vunpack.c.l.b16 %v754
      %v789 = vunpack.c.l.b16 %v755
      %v790 = vunpack.c.h.b16 %v754
      %v791 = vunpack.c.h.b16 %v755
      %v792 = vunpack.c.l.b16 %v756
      %v793 = vunpack.c.l.b16 %v757
      %v794 = vunpack.c.h.b16 %v756
      %v795 = vunpack.c.h.b16 %v757
      %v796 = vunpack.c.l.b16 %v758
      %v797 = vunpack.c.l.b16 %v759
      %v798 = vunpack.c.h.b16 %v758
      %v799 = vunpack.c.h.b16 %v759
      %v800 = vunpack.c.l.b16 %v760
      %v801 = vunpack.c.l.b16 %v761
      %v802 = vunpack.c.h.b16 %v760
      %v803 = vunpack.c.h.b16 %v761
      %v804 = vunpack.c.l.b16 %v762
      %v805 = vunpack.c.l.b16 %v763
      %v806 = vunpack.c.h.b16 %v762
      %v807 = vunpack.c.h.b16 %v763
      %v808 = vunpack.c.l.b16 %v764
      %v809 = vunpack.c.l.b16 %v765
      %v810 = vunpack.c.h.b16 %v764
      %v811 = vunpack.c.h.b16 %v765
      %v812 = vunpack.c.l.b16 %v766
      %v813 = vunpack.c.l.b16 %v767
      %v814 = vunpack.c.h.b16 %v766
      %v815 = vunpack.c.h.b16 %v767
      %v816 = vpack.c.b16 %v785, %v784
      %v817 = vpack.c.b16 %v787, %v786
      %v818 = vpack.c.b16 %v789, %v788
      %v819 = vpack.c.b16 %v791, %v790
      %v820 = vpack.c.b16 %v793, %v792
      %v821 = vpack.c.b16 %v795, %v794
      %v822 = vpack.c.b16 %v797, %v796
      %v823 = vpack.c.b16 %v799, %v798
      %v824 = vpack.c.b16 %v801, %v800
      %v825 = vpack.c.b16 %v803, %v802
      %v826 = vpack.c.b16 %v805, %v804
      %v827 = vpack.c.b16 %v807, %v806
      %v828 = vpack.c.b16 %v809, %v808
      %v829 = vpack.c.b16 %v811, %v810
      %v830 = vpack.c.b16 %v813, %v812
      %v831 = vpack.c.b16 %v815, %v814
      %848 = vst [vmem:[%s266] sm:$0xff] %v816
      %849 = vst [vmem:[%s266 + $0x8] sm:$0xff] %v817
      %850 = vst [vmem:[%s266 + $0x10] sm:$0xff] %v818
      %851 = vst [vmem:[%s266 + $0x18] sm:$0xff] %v819
      %852 = vst [vmem:[%s266 + $0x20] sm:$0xff] %v820
      %853 = vst [vmem:[%s266 + $0x28] sm:$0xff] %v821
      %854 = vst [vmem:[%s266 + $0x30] sm:$0xff] %v822
      %855 = vst [vmem:[%s266 + $0x38] sm:$0xff] %v823
      %856 = vst [vmem:[%s266 + $0x40] sm:$0xff] %v824
      %857 = vst [vmem:[%s266 + $0x48] sm:$0xff] %v825
      %858 = vst [vmem:[%s266 + $0x50] sm:$0xff] %v826
      %859 = vst [vmem:[%s266 + $0x58] sm:$0xff] %v827
      %860 = vst [vmem:[%s266 + $0x60] sm:$0xff] %v828
      %861 = vst [vmem:[%s266 + $0x68] sm:$0xff] %v829
      %862 = vst [vmem:[%s266 + $0x70] sm:$0xff] %v830
      %863 = vst [vmem:[%s266 + $0x78] sm:$0xff] %v831
      %v864 = vld [vmem:[%s3] sm:$0xf]
      %v865 = vld [vmem:[%s3 + $0x4] sm:$0xf]
      %v866 = vld [vmem:[%s3 + $0x8] sm:$0xf]
      %v867 = vld [vmem:[%s3 + $0xc] sm:$0xf]
      %v868 = vld [vmem:[%s3 + $0x10] sm:$0xf]
      %v869 = vld [vmem:[%s3 + $0x14] sm:$0xf]
      %v870 = vld [vmem:[%s3 + $0x18] sm:$0xf]
      %v871 = vld [vmem:[%s3 + $0x1c] sm:$0xf]
      %v872 = vld [vmem:[%s3 + $0x20] sm:$0xf]
      %v873 = vld [vmem:[%s3 + $0x24] sm:$0xf]
      %v874 = vld [vmem:[%s3 + $0x28] sm:$0xf]
      %v875 = vld [vmem:[%s3 + $0x2c] sm:$0xf]
      %v876 = vld [vmem:[%s3 + $0x30] sm:$0xf]
      %v877 = vld [vmem:[%s3 + $0x34] sm:$0xf]
      %v878 = vld [vmem:[%s3 + $0x38] sm:$0xf]
      %v879 = vld [vmem:[%s3 + $0x3c] sm:$0xf]
      %v880 = vld [vmem:[%s3 + $0x40] sm:$0xf]
      %v881 = vld [vmem:[%s3 + $0x44] sm:$0xf]
      %v882 = vld [vmem:[%s3 + $0x48] sm:$0xf]
      %v883 = vld [vmem:[%s3 + $0x4c] sm:$0xf]
      %v884 = vld [vmem:[%s3 + $0x50] sm:$0xf]
      %v885 = vld [vmem:[%s3 + $0x54] sm:$0xf]
      %v886 = vld [vmem:[%s3 + $0x58] sm:$0xf]
      %v887 = vld [vmem:[%s3 + $0x5c] sm:$0xf]
      %v888 = vld [vmem:[%s3 + $0x60] sm:$0xf]
      %v889 = vld [vmem:[%s3 + $0x64] sm:$0xf]
      %v890 = vld [vmem:[%s3 + $0x68] sm:$0xf]
      %v891 = vld [vmem:[%s3 + $0x6c] sm:$0xf]
      %v892 = vld [vmem:[%s3 + $0x70] sm:$0xf]
      %v893 = vld [vmem:[%s3 + $0x74] sm:$0xf]
      %v894 = vld [vmem:[%s3 + $0x78] sm:$0xf]
      %v895 = vld [vmem:[%s3 + $0x7c] sm:$0xf]
      %v896 = vld [vmem:[%s4] sm:$0x1]
      %v898 = vlaneseq
      %v899 = vshrl.u32 %v898, 7
      %v900 = vsub.s32 0, %v899
      %v901 = vrot.slane %v896, %v900
      %v935 = vunpack.c.l.b16 %v864
      %v936 = vunpack.c.l.b16 %v865
      %v937 = vunpack.c.l.b16 %v866
      %v938 = vunpack.c.l.b16 %v867
      %v939 = vunpack.c.l.b16 %v868
      %v940 = vunpack.c.l.b16 %v869
      %v941 = vunpack.c.l.b16 %v870
      %v942 = vunpack.c.l.b16 %v871
      %v943 = vunpack.c.l.b16 %v872
      %v944 = vunpack.c.l.b16 %v873
      %v945 = vunpack.c.l.b16 %v874
      %v946 = vunpack.c.l.b16 %v875
      %v947 = vunpack.c.l.b16 %v876
      %v948 = vunpack.c.l.b16 %v877
      %v949 = vunpack.c.l.b16 %v878
      %v950 = vunpack.c.l.b16 %v879
      %v951 = vunpack.c.l.b16 %v880
      %v952 = vunpack.c.l.b16 %v881
      %v953 = vunpack.c.l.b16 %v882
      %v954 = vunpack.c.l.b16 %v883
      %v955 = vunpack.c.l.b16 %v884
      %v956 = vunpack.c.l.b16 %v885
      %v957 = vunpack.c.l.b16 %v886
      %v958 = vunpack.c.l.b16 %v887
      %v959 = vunpack.c.l.b16 %v888
      %v960 = vunpack.c.l.b16 %v889
      %v961 = vunpack.c.l.b16 %v890
      %v962 = vunpack.c.l.b16 %v891
      %v963 = vunpack.c.l.b16 %v892
      %v964 = vunpack.c.l.b16 %v893
      %v965 = vunpack.c.l.b16 %v894
      %v966 = vunpack.c.l.b16 %v895
      %v967 = vpack.c.b16 %v936, %v935
      %v968 = vpack.c.b16 %v938, %v937
      %v969 = vpack.c.b16 %v940, %v939
      %v970 = vpack.c.b16 %v942, %v941
      %v971 = vpack.c.b16 %v944, %v943
      %v972 = vpack.c.b16 %v946, %v945
      %v973 = vpack.c.b16 %v948, %v947
      %v974 = vpack.c.b16 %v950, %v949
      %v975 = vpack.c.b16 %v952, %v951
      %v976 = vpack.c.b16 %v954, %v953
      %v977 = vpack.c.b16 %v956, %v955
      %v978 = vpack.c.b16 %v958, %v957
      %v979 = vpack.c.b16 %v960, %v959
      %v980 = vpack.c.b16 %v962, %v961
      %v981 = vpack.c.b16 %v964, %v963
      %v982 = vpack.c.b16 %v966, %v965
      %999 = vmatprep.subr.bf16.mxu0 0
      %1000 = vmatpush1.bf16.msra.mxu0 %v967
      %1001 = vmatprep.subr.bf16.mxu0 0
      %1002 = vmatpush1.bf16.msra.mxu0 %v968
      %1003 = vmatprep.subr.bf16.mxu0 0
      %1004 = vmatpush1.bf16.msra.mxu0 %v969
      %1005 = vmatprep.subr.bf16.mxu0 0
      %1006 = vmatpush1.bf16.msra.mxu0 %v970
      %1007 = vmatprep.subr.bf16.mxu0 0
      %1008 = vmatpush1.bf16.msra.mxu0 %v971
      %1009 = vmatprep.subr.bf16.mxu0 0
      %1010 = vmatpush1.bf16.msra.mxu0 %v972
      %1011 = vmatprep.subr.bf16.mxu0 0
      %1012 = vmatpush1.bf16.msra.mxu0 %v973
      %1013 = vmatprep.subr.bf16.mxu0 0
      %1014 = vmatpush1.bf16.msra.mxu0 %v974
      %1015 = vmatprep.subr.bf16.mxu0 0
      %1016 = vmatpush1.bf16.msra.mxu0 %v975
      %1017 = vmatprep.subr.bf16.mxu0 0
      %1018 = vmatpush1.bf16.msra.mxu0 %v976
      %1019 = vmatprep.subr.bf16.mxu0 0
      %1020 = vmatpush1.bf16.msra.mxu0 %v977
      %1021 = vmatprep.subr.bf16.mxu0 0
      %1022 = vmatpush1.bf16.msra.mxu0 %v978
      %1023 = vmatprep.subr.bf16.mxu0 0
      %1024 = vmatpush1.bf16.msra.mxu0 %v979
      %1025 = vmatprep.subr.bf16.mxu0 0
      %1026 = vmatpush1.bf16.msra.mxu0 %v980
      %1027 = vmatprep.subr.bf16.mxu0 0
      %1028 = vmatpush1.bf16.msra.mxu0 %v981
      %1029 = vmatprep.subr.bf16.mxu0 0
      %1030 = vmatpush1.bf16.msra.mxu0 %v982
      %1031 = vmatprep.mubr.bf16.mxu0 %v753
      %1032 = vmatmul.mubr.bf16.gmra.mrb[0].mxu0 %v752
      %v1033 = vpop.f32.mrb[0].mxu0
      %v1034 = vadd.f32 %v901, %v1033
      %v1035 = vpop.f32.mrb[0].mxu0
      %v1036 = vpop.f32.mrb[0].mxu0
      %v1037 = vadd.f32 %v901, %v1036
      %v1038 = vpop.f32.mrb[0].mxu0
      %1039 = vmatprep.mubr.bf16.mxu0 %v755
      %1040 = vmatmul.mubr.bf16.gmra.mrb[0].mxu0 %v754
      %v1041 = vpop.f32.mrb[0].mxu0
      %v1042 = vadd.f32 %v901, %v1041
      %v1043 = vpop.f32.mrb[0].mxu0
      %v1044 = vpop.f32.mrb[0].mxu0
      %v1045 = vadd.f32 %v901, %v1044
      %v1046 = vpop.f32.mrb[0].mxu0
      %1047 = vmatprep.mubr.bf16.mxu0 %v757
      %1048 = vmatmul.mubr.bf16.gmra.mrb[0].mxu0 %v756
      %v1049 = vpop.f32.mrb[0].mxu0
      %v1050 = vadd.f32 %v901, %v1049
      %v1051 = vpop.f32.mrb[0].mxu0
      %v1052 = vpop.f32.mrb[0].mxu0
      %v1053 = vadd.f32 %v901, %v1052
      %v1054 = vpop.f32.mrb[0].mxu0
      %1055 = vmatprep.mubr.bf16.mxu0 %v759
      %1056 = vmatmul.mubr.bf16.gmra.mrb[0].mxu0 %v758
      %v1057 = vpop.f32.mrb[0].mxu0
      %v1058 = vadd.f32 %v901, %v1057
      %v1059 = vpop.f32.mrb[0].mxu0
      %v1060 = vpop.f32.mrb[0].mxu0
      %v1061 = vadd.f32 %v901, %v1060
      %v1062 = vpop.f32.mrb[0].mxu0
      %1063 = vmatprep.mubr.bf16.mxu0 %v761
      %1064 = vmatmul.mubr.bf16.gmra.mrb[0].mxu0 %v760
      %v1065 = vpop.f32.mrb[0].mxu0
      %v1066 = vadd.f32 %v901, %v1065
      %v1067 = vpop.f32.mrb[0].mxu0
      %v1068 = vpop.f32.mrb[0].mxu0
      %v1069 = vadd.f32 %v901, %v1068
      %v1070 = vpop.f32.mrb[0].mxu0
      %1071 = vmatprep.mubr.bf16.mxu0 %v763
      %1072 = vmatmul.mubr.bf16.gmra.mrb[0].mxu0 %v762
      %v1073 = vpop.f32.mrb[0].mxu0
      %v1074 = vadd.f32 %v901, %v1073
      %v1075 = vpop.f32.mrb[0].mxu0
      %v1076 = vpop.f32.mrb[0].mxu0
      %v1077 = vadd.f32 %v901, %v1076
      %v1078 = vpop.f32.mrb[0].mxu0
      %1079 = vmatprep.mubr.bf16.mxu0 %v765
      %1080 = vmatmul.mubr.bf16.gmra.mrb[0].mxu0 %v764
      %v1081 = vpop.f32.mrb[0].mxu0
      %v1082 = vadd.f32 %v901, %v1081
      %v1083 = vpop.f32.mrb[0].mxu0
      %v1084 = vpop.f32.mrb[0].mxu0
      %v1085 = vadd.f32 %v901, %v1084
      %v1086 = vpop.f32.mrb[0].mxu0
      %1087 = vmatprep.mubr.bf16.mxu0 %v767
      %1088 = vmatmul.mubr.bf16.gmra.mrb[0].mxu0 %v766
      %v1089 = vpop.f32.mrb[0].mxu0
      %v1090 = vadd.f32 %v901, %v1089
      %v1091 = vpop.f32.mrb[0].mxu0
      %v1092 = vpop.f32.mrb[0].mxu0
      %v1093 = vadd.f32 %v901, %v1092
      %v1094 = vpop.f32.mrb[0].mxu0
      %1095 = vdwg.mxu0
      %v1096 = vpack.c.bf16 %v1037, %v1034
      %v1097 = vpack.c.bf16 %v1045, %v1042
      %v1098 = vpack.c.bf16 %v1053, %v1050
      %v1099 = vpack.c.bf16 %v1061, %v1058
      %v1100 = vpack.c.bf16 %v1069, %v1066
      %v1101 = vpack.c.bf16 %v1077, %v1074
      %v1102 = vpack.c.bf16 %v1085, %v1082
      %v1103 = vpack.c.bf16 %v1093, %v1090
      %v1112 = vunpack.c.l.b16 %v1096
      %v1113 = vunpack.c.h.b16 %v1096
      %v1114 = vunpack.c.l.b16 %v1097
      %v1115 = vunpack.c.h.b16 %v1097
      %v1116 = vunpack.c.l.b16 %v1098
      %v1117 = vunpack.c.h.b16 %v1098
      %v1118 = vunpack.c.l.b16 %v1099
      %v1119 = vunpack.c.h.b16 %v1099
      %v1120 = vunpack.c.l.b16 %v1100
      %v1121 = vunpack.c.h.b16 %v1100
      %v1122 = vunpack.c.l.b16 %v1101
      %v1123 = vunpack.c.h.b16 %v1101
      %v1124 = vunpack.c.l.b16 %v1102
      %v1125 = vunpack.c.h.b16 %v1102
      %v1126 = vunpack.c.l.b16 %v1103
      %v1127 = vunpack.c.h.b16 %v1103
      %v1128 = vpack.c.b16 %v1112, %v1112
      %v1129 = vpack.c.b16 %v1113, %v1113
      %v1130 = vpack.c.b16 %v1114, %v1114
      %v1131 = vpack.c.b16 %v1115, %v1115
      %v1132 = vpack.c.b16 %v1116, %v1116
      %v1133 = vpack.c.b16 %v1117, %v1117
      %v1134 = vpack.c.b16 %v1118, %v1118
      %v1135 = vpack.c.b16 %v1119, %v1119
      %v1136 = vpack.c.b16 %v1120, %v1120
      %v1137 = vpack.c.b16 %v1121, %v1121
      %v1138 = vpack.c.b16 %v1122, %v1122
      %v1139 = vpack.c.b16 %v1123, %v1123
      %v1140 = vpack.c.b16 %v1124, %v1124
      %v1141 = vpack.c.b16 %v1125, %v1125
      %v1142 = vpack.c.b16 %v1126, %v1126
      %v1143 = vpack.c.b16 %v1127, %v1127
      %1160 = vst [vmem:[%s272] sm:$0xf] %v1128
      %1161 = vst [vmem:[%s272 + $0x4] sm:$0xf] %v1129
      %1162 = vst [vmem:[%s272 + $0x8] sm:$0xf] %v1130
      %1163 = vst [vmem:[%s272 + $0xc] sm:$0xf] %v1131
      %1164 = vst [vmem:[%s272 + $0x10] sm:$0xf] %v1132
      %1165 = vst [vmem:[%s272 + $0x14] sm:$0xf] %v1133
      %1166 = vst [vmem:[%s272 + $0x18] sm:$0xf] %v1134
      %1167 = vst [vmem:[%s272 + $0x1c] sm:$0xf] %v1135
      %1168 = vst [vmem:[%s272 + $0x20] sm:$0xf] %v1136
      %1169 = vst [vmem:[%s272 + $0x24] sm:$0xf] %v1137
      %1170 = vst [vmem:[%s272 + $0x28] sm:$0xf] %v1138
      %1171 = vst [vmem:[%s272 + $0x2c] sm:$0xf] %v1139
      %1172 = vst [vmem:[%s272 + $0x30] sm:$0xf] %v1140
      %1173 = vst [vmem:[%s272 + $0x34] sm:$0xf] %v1141
      %1174 = vst [vmem:[%s272 + $0x38] sm:$0xf] %v1142
      %1175 = vst [vmem:[%s272 + $0x3c] sm:$0xf] %v1143
      %s1176 = smul.u32 16, %s18
      %p1177 = scmp.lt.s32.totalorder %s1176, 31
      %s1178 = scalar_select %p1177, %s1176, 31
      %s1179 = smul.addr %s1178, 2
      %s1180 = smul.addr %s1179, 4
      %s1181 = scalar_lea.vmem %s5, %s1180
      %s1182 = smul.u32 16, %s18
      %p1183 = scmp.lt.s32.totalorder %s1182, 31
      %s1184 = scalar_select %p1183, %s1182, 31
      %s1185 = smul.addr %s1184, 4
      %s1186 = scalar_lea.vmem %s6, %s1185
      // Predicated region
      $region41: #{f_random_proj_forward.8} parent=39 // pred_check
        %p1187 = pneg %p146
      $region42: #{f_random_proj_forward.8} parent=39 // pred_check_branch
        %1189 = sbr.rel (%p1187) target = $region44
      $region43: #{f_random_proj_forward.8} parent=39 // pred_region
        %s1190 = smul.u32 16, %s18
      $region44: #{f_random_proj_forward.8} parent=39 // pred_fallthru
        _
      // Predicated region
      $region45: #{f_random_proj_forward.8} parent=39 // pred_check
        %p1191 = pneg %p172
      $region46: #{f_random_proj_forward.8} parent=39 // pred_check_branch
        %1193 = sbr.rel (%p1191) target = $region48
      $region47: #{f_random_proj_forward.8} parent=39 // pred_region
        %s1194 = smul.u32 16, %s18
      $region48: #{f_random_proj_forward.8} parent=39 // pred_fallthru
        _
    $region40: #{f_random_proj_forward.8} parent=5 // pred_fallthru
      _
    %p1195 = scmp.le.s32.totalorder 2, %s13
    // Predicated region
    $region49: #{f_random_proj_forward.8} parent=5 // pred_check
      %p1196 = pneg %p1195
    $region50: #{f_random_proj_forward.8} parent=5 // pred_check_branch
      %1198 = sbr.rel (%p1196) target = $region52
    $region51: #{f_random_proj_forward.8} parent=5 // pred_region
      %s1199 = ssub.s32 %s13, 2
      // Predicated region
      $region53: #{f_random_proj_forward.8} parent=51 // pred_check
        %p1200 = pneg %p152
      $region54: #{f_random_proj_forward.8} parent=51 // pred_check_branch
        %1202 = sbr.rel (%p1200) target = $region56
      $region55: #{f_random_proj_forward.8} parent=51 // pred_region
        %s1203 = smul.u32 16, %s19
        %p1204 = scmp.lt.s32.totalorder %s1203, 31
        %s1205 = scalar_select %p1204, %s1203, 31
        %s1206 = smul.addr %s1205, 2
        %s1207 = smul.addr %s1206, 4
        %s1208 = scalar_lea.vmem %s5, %s1207
      $region56: #{f_random_proj_forward.8} parent=51 // pred_fallthru
        _
      // Predicated region
      $region57: #{f_random_proj_forward.8} parent=51 // pred_check
        %p1209 = pneg %p178
      $region58: #{f_random_proj_forward.8} parent=51 // pred_check_branch
        %1211 = sbr.rel (%p1209) target = $region60
      $region59: #{f_random_proj_forward.8} parent=51 // pred_region
        %s1212 = smul.u32 16, %s19
        %p1213 = scmp.lt.s32.totalorder %s1212, 31
        %s1214 = scalar_select %p1213, %s1212, 31
        %s1215 = smul.addr %s1214, 4
        %s1216 = scalar_lea.vmem %s6, %s1215
      $region60: #{f_random_proj_forward.8} parent=51 // pred_fallthru
        _
    $region52: #{f_random_proj_forward.8} parent=5 // pred_fallthru
      _
  $region6: #{f_random_proj_forward.8} parent=0 // loop_footer
    %s17 = sadd.s32 1, %s13
  $region7: #{f_random_proj_forward.8} parent=0 // loop_footer_branch
    %12 = sbr.rel target = $region3
  $region8: #{f_random_proj_forward.8} parent=0 // loop_exit
    _

// kernel: f_random_proj_forward.9
$region0: #{f_random_proj_forward.9}
  #allocation0 [shape = 'u32[]', space=smem, size = 0x4, offset = 0x4, fixed_abs, tag = 'smem constant byte address 0x4 - core index']
  #allocation1 [shape = 'u32[144,128]{1,0:T(1,128)}', space=vmem, size = 0x12000, scoped, tag = 'internal scratch']
  %s0 = inlined_call_operand.vmem [shape: bf16[16,2,8,256], index: 0, kind: input, shape index: {}]
  %s1 = inlined_call_operand.vmem [shape: bf16[256,128], index: 1, kind: input, shape index: {}]
  %s2 = inlined_call_operand.vmem [shape: bf16[256,128], index: 2, kind: input, shape index: {}]
  %s3 = inlined_call_operand.vmem [shape: f32[1,128], index: 3, kind: input, shape index: {}]
  %s4 = inlined_call_operand.vmem [shape: bf16[128,128], index: 4, kind: input, shape index: {}]
  %s5 = inlined_call_operand.vmem [shape: f32[1,128], index: 5, kind: input, shape index: {}]
  %s6 = inlined_call_operand.vmem [shape: bf16[128,128], index: 6, kind: output, shape index: {0}]
  %s7 = inlined_call_operand.vmem [shape: bf16[128,128], index: 7, kind: output, shape index: {1}]
  %8 = xla_tuple %s6, %s7
  %s9 = sld [smem:[#allocation0]]
  $region65: #{f_random_proj_forward.9} parent=0
    _
  %s11 = ssub.s32 1, %s9
  %s12 = scalar_select 0, %s11, %s9
  loop: start=0, step=1, limit=4
  $region2: #{f_random_proj_forward.9} parent=0 // loop_pre_header
    _
  $region3: #{f_random_proj_forward.9} parent=0 // loop_header
    %s14 = sphi 0, %s18
    %p15 = scmp.ge.s32.totalorder %s14, 4
    %s24 = sphi 0, %s26
    %s27 = sphi 0, %s24
    %s28 = sphi 0, %s27
    %s44 = sphi 0, %s28
    %s48 = sphi 0, %s48
    %s50 = sphi 0, %s48
    %s51 = sphi 0, %s50
    %s65 = sphi 0, %s51
    %s69 = sphi 0, %s69
    %s71 = sphi 0, %s69
    %s72 = sphi 0, %s71
    %s86 = sphi 0, %s72
    %s90 = sphi 0, %s90
    %s92 = sphi 0, %s90
    %s93 = sphi 0, %s92
    %s107 = sphi 0, %s93
    %s111 = sphi 0, %s111
    %s113 = sphi 0, %s111
    %s114 = sphi 0, %s113
    %s128 = sphi 0, %s114
    %s132 = sphi 0, %s132
    %s134 = sphi 0, %s132
    %s135 = sphi 0, %s134
    %s149 = sphi 0, %s135
    %s155 = sphi 0, %s157
    %s158 = sphi 0, %s155
    %s159 = sphi 0, %s158
    %s175 = sphi 0, %s159
    %s181 = sphi 0, %s183
    %s184 = sphi 0, %s181
    %s185 = sphi 0, %s184
    %s201 = sphi 0, %s185
  $region4: #{f_random_proj_forward.9} parent=0 // loop_header_branch
    %17 = sbr.rel (%p15) target = $region8
  $region5: #{f_random_proj_forward.9} parent=0 // loop_body
    %s19 = ssub.s32 %s14, 1
    %s20 = ssub.s32 %s14, 2
    %s21 = sadd.s32 %s14, 1
    %s22 = ssub.s32 %s14, %s21
    %p23 = scmp.eq.s32.totalorder %s22, 0
    %s25 = sadd.s32 %s24, 1
    %s26 = scalar_select %p23, %s24, %s25
    %p29 = pneg %p23
    %p30 = scmp.eq.s32.totalorder %s14, 1
    %p31 = por %p29, %p30
    %p32 = scmp.ne.s32.totalorder %s24, %s27
    %p33 = scmp.eq.s32.totalorder %s14, 0
    %p34 = por %p32, %p33
    %p35 = scmp.ne.s32.totalorder %s24, %s27
    %p36 = scmp.eq.s32.totalorder %s19, 1
    %p37 = por %p35, %p36
    %p38 = scmp.ne.s32.totalorder %s27, %s28
    %p39 = scmp.eq.s32.totalorder %s19, 0
    %p40 = por %p38, %p39
    %p41 = scmp.ne.s32.totalorder %s27, %s28
    %p42 = scmp.eq.s32.totalorder %s20, 1
    %p43 = por %p41, %p42
    %p45 = scmp.ne.s32.totalorder %s28, %s44
    %p46 = scmp.eq.s32.totalorder %s20, 0
    %p47 = por %p45, %p46
    %s49 = sadd.s32 %s48, 1
    %p52 = scmp.eq.s32.totalorder %s14, 1
    %p53 = scmp.ne.s32.totalorder %s48, %s50
    %p54 = scmp.eq.s32.totalorder %s14, 0
    %p55 = por %p53, %p54
    %p56 = scmp.ne.s32.totalorder %s48, %s50
    %p57 = scmp.eq.s32.totalorder %s19, 1
    %p58 = por %p56, %p57
    %p59 = scmp.ne.s32.totalorder %s50, %s51
    %p60 = scmp.eq.s32.totalorder %s19, 0
    %p61 = por %p59, %p60
    %p62 = scmp.ne.s32.totalorder %s50, %s51
    %p63 = scmp.eq.s32.totalorder %s20, 1
    %p64 = por %p62, %p63
    %p66 = scmp.ne.s32.totalorder %s51, %s65
    %p67 = scmp.eq.s32.totalorder %s20, 0
    %p68 = por %p66, %p67
    %s70 = sadd.s32 %s69, 1
    %p73 = scmp.eq.s32.totalorder %s14, 1
    %p74 = scmp.ne.s32.totalorder %s69, %s71
    %p75 = scmp.eq.s32.totalorder %s14, 0
    %p76 = por %p74, %p75
    %p77 = scmp.ne.s32.totalorder %s69, %s71
    %p78 = scmp.eq.s32.totalorder %s19, 1
    %p79 = por %p77, %p78
    %p80 = scmp.ne.s32.totalorder %s71, %s72
    %p81 = scmp.eq.s32.totalorder %s19, 0
    %p82 = por %p80, %p81
    %p83 = scmp.ne.s32.totalorder %s71, %s72
    %p84 = scmp.eq.s32.totalorder %s20, 1
    %p85 = por %p83, %p84
    %p87 = scmp.ne.s32.totalorder %s72, %s86
    %p88 = scmp.eq.s32.totalorder %s20, 0
    %p89 = por %p87, %p88
    %s91 = sadd.s32 %s90, 1
    %p94 = scmp.eq.s32.totalorder %s14, 1
    %p95 = scmp.ne.s32.totalorder %s90, %s92
    %p96 = scmp.eq.s32.totalorder %s14, 0
    %p97 = por %p95, %p96
    %p98 = scmp.ne.s32.totalorder %s90, %s92
    %p99 = scmp.eq.s32.totalorder %s19, 1
    %p100 = por %p98, %p99
    %p101 = scmp.ne.s32.totalorder %s92, %s93
    %p102 = scmp.eq.s32.totalorder %s19, 0
    %p103 = por %p101, %p102
    %p104 = scmp.ne.s32.totalorder %s92, %s93
    %p105 = scmp.eq.s32.totalorder %s20, 1
    %p106 = por %p104, %p105
    %p108 = scmp.ne.s32.totalorder %s93, %s107
    %p109 = scmp.eq.s32.totalorder %s20, 0
    %p110 = por %p108, %p109
    %s112 = sadd.s32 %s111, 1
    %p115 = scmp.eq.s32.totalorder %s14, 1
    %p116 = scmp.ne.s32.totalorder %s111, %s113
    %p117 = scmp.eq.s32.totalorder %s14, 0
    %p118 = por %p116, %p117
    %p119 = scmp.ne.s32.totalorder %s111, %s113
    %p120 = scmp.eq.s32.totalorder %s19, 1
    %p121 = por %p119, %p120
    %p122 = scmp.ne.s32.totalorder %s113, %s114
    %p123 = scmp.eq.s32.totalorder %s19, 0
    %p124 = por %p122, %p123
    %p125 = scmp.ne.s32.totalorder %s113, %s114
    %p126 = scmp.eq.s32.totalorder %s20, 1
    %p127 = por %p125, %p126
    %p129 = scmp.ne.s32.totalorder %s114, %s128
    %p130 = scmp.eq.s32.totalorder %s20, 0
    %p131 = por %p129, %p130
    %s133 = sadd.s32 %s132, 1
    %p136 = scmp.eq.s32.totalorder %s14, 1
    %p137 = scmp.ne.s32.totalorder %s132, %s134
    %p138 = scmp.eq.s32.totalorder %s14, 0
    %p139 = por %p137, %p138
    %p140 = scmp.ne.s32.totalorder %s132, %s134
    %p141 = scmp.eq.s32.totalorder %s19, 1
    %p142 = por %p140, %p141
    %p143 = scmp.ne.s32.totalorder %s134, %s135
    %p144 = scmp.eq.s32.totalorder %s19, 0
    %p145 = por %p143, %p144
    %p146 = scmp.ne.s32.totalorder %s134, %s135
    %p147 = scmp.eq.s32.totalorder %s20, 1
    %p148 = por %p146, %p147
    %p150 = scmp.ne.s32.totalorder %s135, %s149
    %p151 = scmp.eq.s32.totalorder %s20, 0
    %p152 = por %p150, %p151
    %s153 = ssub.s32 %s14, %s21
    %p154 = scmp.eq.s32.totalorder %s153, 0
    %s156 = sadd.s32 %s155, 1
    %s157 = scalar_select %p154, %s155, %s156
    %p160 = pneg %p154
    %p161 = scmp.eq.s32.totalorder %s14, 1
    %p162 = por %p160, %p161
    %p163 = scmp.ne.s32.totalorder %s155, %s158
    %p164 = scmp.eq.s32.totalorder %s14, 0
    %p165 = por %p163, %p164
    %p166 = scmp.ne.s32.totalorder %s155, %s158
    %p167 = scmp.eq.s32.totalorder %s19, 1
    %p168 = por %p166, %p167
    %p169 = scmp.ne.s32.totalorder %s158, %s159
    %p170 = scmp.eq.s32.totalorder %s19, 0
    %p171 = por %p169, %p170
    %p172 = scmp.ne.s32.totalorder %s158, %s159
    %p173 = scmp.eq.s32.totalorder %s20, 1
    %p174 = por %p172, %p173
    %p176 = scmp.ne.s32.totalorder %s159, %s175
    %p177 = scmp.eq.s32.totalorder %s20, 0
    %p178 = por %p176, %p177
    %s179 = ssub.s32 %s14, %s21
    %p180 = scmp.eq.s32.totalorder %s179, 0
    %s182 = sadd.s32 %s181, 1
    %s183 = scalar_select %p180, %s181, %s182
    %p186 = pneg %p180
    %p187 = scmp.eq.s32.totalorder %s14, 1
    %p188 = por %p186, %p187
    %p189 = scmp.ne.s32.totalorder %s181, %s184
    %p190 = scmp.eq.s32.totalorder %s14, 0
    %p191 = por %p189, %p190
    %p192 = scmp.ne.s32.totalorder %s181, %s184
    %p193 = scmp.eq.s32.totalorder %s19, 1
    %p194 = por %p192, %p193
    %p195 = scmp.ne.s32.totalorder %s184, %s185
    %p196 = scmp.eq.s32.totalorder %s19, 0
    %p197 = por %p195, %p196
    %p198 = scmp.ne.s32.totalorder %s184, %s185
    %p199 = scmp.eq.s32.totalorder %s20, 1
    %p200 = por %p198, %p199
    %p202 = scmp.ne.s32.totalorder %s185, %s201
    %p203 = scmp.eq.s32.totalorder %s20, 0
    %p204 = por %p202, %p203
    %p205 = scmp.le.s32.totalorder 1, %s14
    %p206 = scmp.lt.s32.totalorder %s14, 3
    %p207 = pnand %p205, %p206
    %p208 = pneg %p207
    // Predicated region
    $region9: #{f_random_proj_forward.9} parent=5 // pred_check
      _
    $region10: #{f_random_proj_forward.9} parent=5 // pred_check_branch
      %210 = sbr.rel (%p207) target = $region12
    $region11: #{f_random_proj_forward.9} parent=5 // pred_region
      %s211 = ssub.s32 %s14, 1
      // Predicated region
      $region13: #{f_random_proj_forward.9} parent=11 // pred_check
        %p212 = pneg %p61
      $region14: #{f_random_proj_forward.9} parent=11 // pred_check_branch
        %214 = sbr.rel (%p212) target = $region16
      $region15: #{f_random_proj_forward.9} parent=11 // pred_region
        _
      $region16: #{f_random_proj_forward.9} parent=11 // pred_fallthru
        _
      // Predicated region
      $region17: #{f_random_proj_forward.9} parent=11 // pred_check
        %p215 = pneg %p82
      $region18: #{f_random_proj_forward.9} parent=11 // pred_check_branch
        %217 = sbr.rel (%p215) target = $region20
      $region19: #{f_random_proj_forward.9} parent=11 // pred_region
        _
      $region20: #{f_random_proj_forward.9} parent=11 // pred_fallthru
        _
      // Predicated region
      $region21: #{f_random_proj_forward.9} parent=11 // pred_check
        %p218 = pneg %p103
      $region22: #{f_random_proj_forward.9} parent=11 // pred_check_branch
        %220 = sbr.rel (%p218) target = $region24
      $region23: #{f_random_proj_forward.9} parent=11 // pred_region
        _
      $region24: #{f_random_proj_forward.9} parent=11 // pred_fallthru
        _
      // Predicated region
      $region25: #{f_random_proj_forward.9} parent=11 // pred_check
        %p221 = pneg %p124
      $region26: #{f_random_proj_forward.9} parent=11 // pred_check_branch
        %223 = sbr.rel (%p221) target = $region28
      $region27: #{f_random_proj_forward.9} parent=11 // pred_region
        _
      $region28: #{f_random_proj_forward.9} parent=11 // pred_fallthru
        _
      // Predicated region
      $region29: #{f_random_proj_forward.9} parent=11 // pred_check
        %p224 = pneg %p145
      $region30: #{f_random_proj_forward.9} parent=11 // pred_check_branch
        %226 = sbr.rel (%p224) target = $region32
      $region31: #{f_random_proj_forward.9} parent=11 // pred_region
        _
      $region32: #{f_random_proj_forward.9} parent=11 // pred_fallthru
        _
    $region12: #{f_random_proj_forward.9} parent=5 // pred_fallthru
      _
    %p227 = scmp.lt.s32.totalorder %s14, 2
    // Predicated region
    $region33: #{f_random_proj_forward.9} parent=5 // pred_check
      %p228 = pneg %p227
    $region34: #{f_random_proj_forward.9} parent=5 // pred_check_branch
      %230 = sbr.rel (%p228) target = $region36
    $region35: #{f_random_proj_forward.9} parent=5 // pred_region
      // Predicated region
      $region37: #{f_random_proj_forward.9} parent=35 // pred_check
        %p231 = pneg %p34
      $region38: #{f_random_proj_forward.9} parent=35 // pred_check_branch
        %233 = sbr.rel (%p231) target = $region40
      $region39: #{f_random_proj_forward.9} parent=35 // pred_region
        %s234 = smul.u32 8, %s14
        %p235 = scmp.lt.s32.totalorder %s234, 15
        %s236 = scalar_select %p235, %s234, 15
        %s237 = smul.addr %s236, 4
        %s238 = smul.addr %s237, 4
        %s239 = scalar_lea.vmem %s0, %s238
        %s240 = smul.u32 8, %s14
      $region40: #{f_random_proj_forward.9} parent=35 // pred_fallthru
        _
    $region36: #{f_random_proj_forward.9} parent=5 // pred_fallthru
      _
    %p241 = scmp.le.s32.totalorder 1, %s14
    %p242 = scmp.lt.s32.totalorder %s14, 3
    %p243 = pnand %p241, %p242
    %p244 = pneg %p243
    // Predicated region
    $region41: #{f_random_proj_forward.9} parent=5 // pred_check
      _
    $region42: #{f_random_proj_forward.9} parent=5 // pred_check_branch
      %246 = sbr.rel (%p243) target = $region44
    $region43: #{f_random_proj_forward.9} parent=5 // pred_region
      %s247 = ssub.s32 %s14, 1
      %s248 = smul.u32 8, %s19
      %p249 = scmp.lt.s32.totalorder %s248, 15
      %s250 = scalar_select %p249, %s248, 15
      %s251 = smul.addr %s250, 4
      %s252 = smul.addr %s251, 4
      %s253 = scalar_lea.vmem %s0, %s252
      %p254 = pneg %p40
      %p255 = pneg %p37
      %p256 = pneg %p61
      %p257 = pneg %p58
      %p258 = pneg %p82
      %p259 = pneg %p79
      %p260 = pneg %p103
      %p261 = pneg %p100
      %p262 = pneg %p124
      %p263 = pneg %p121
      %p264 = pneg %p145
      %p265 = pneg %p142
      %p266 = pneg %p171
      %p267 = pneg %p168
      %s268 = smul.u32 8, %s19
      %p269 = scmp.lt.s32.totalorder %s268, 15
      %s270 = scalar_select %p269, %s268, 15
      %s271 = smul.addr %s270, 4
      %s272 = scalar_lea.vmem %s6, %s271
      %p273 = pneg %p197
      %p274 = pneg %p194
      %s275 = smul.u32 8, %s19
      %p276 = scmp.lt.s32.totalorder %s275, 15
      %s277 = scalar_select %p276, %s275, 15
      %s278 = smul.addr %s277, 4
      %s279 = scalar_lea.vmem %s7, %s278
      %s280 = smul.u32 8, %s19
      %p281 = scmp.lt.s32.totalorder %s280, 15
      %s282 = scalar_select %p281, %s280, 15
      %s283 = smul.addr %s282, 4
      %s284 = smul.addr %s283, 4
      %s285 = scalar_lea.vmem %s0, %s284
      %s286 = smul.u32 8, %s19
      %s287 = smul.u32 8, %s19
      %p288 = scmp.lt.s32.totalorder %s287, 15
      %s289 = scalar_select %p288, %s287, 15
      %s290 = smul.addr %s289, 4
      %s291 = scalar_lea.vmem %s6, %s290
      %s292 = smul.u32 8, %s19
      %s293 = smul.u32 8, %s19
      %p294 = scmp.lt.s32.totalorder %s293, 15
      %s295 = scalar_select %p294, %s293, 15
      %s296 = smul.addr %s295, 4
      %s297 = scalar_lea.vmem %s7, %s296
      %s298 = smul.u32 8, %s19
      %v300 = vld [vmem:[%s285] sm:$0xff]
      %v301 = vld [vmem:[%s285 + $0x8] sm:$0xff]
      %v302 = vld [vmem:[%s285 + $0x10] sm:$0xff]
      %v303 = vld [vmem:[%s285 + $0x18] sm:$0xff]
      %v304 = vld [vmem:[%s285 + $0x20] sm:$0xff]
      %v305 = vld [vmem:[%s285 + $0x28] sm:$0xff]
      %v306 = vld [vmem:[%s285 + $0x30] sm:$0xff]
      %v307 = vld [vmem:[%s285 + $0x38] sm:$0xff]
      %v308 = vld [vmem:[%s285 + $0x40] sm:$0xff]
      %v309 = vld [vmem:[%s285 + $0x48] sm:$0xff]
      %v310 = vld [vmem:[%s285 + $0x50] sm:$0xff]
      %v311 = vld [vmem:[%s285 + $0x58] sm:$0xff]
      %v312 = vld [vmem:[%s285 + $0x60] sm:$0xff]
      %v313 = vld [vmem:[%s285 + $0x68] sm:$0xff]
      %v314 = vld [vmem:[%s285 + $0x70] sm:$0xff]
      %v315 = vld [vmem:[%s285 + $0x78] sm:$0xff]
      %v316 = vld [vmem:[%s1] sm:$0xf]
      %v317 = vld [vmem:[%s1 + $0x4] sm:$0xf]
      %v318 = vld [vmem:[%s1 + $0x8] sm:$0xf]
      %v319 = vld [vmem:[%s1 + $0xc] sm:$0xf]
      %v320 = vld [vmem:[%s1 + $0x10] sm:$0xf]
      %v321 = vld [vmem:[%s1 + $0x14] sm:$0xf]
      %v322 = vld [vmem:[%s1 + $0x18] sm:$0xf]
      %v323 = vld [vmem:[%s1 + $0x1c] sm:$0xf]
      %v324 = vld [vmem:[%s1 + $0x20] sm:$0xf]
      %v325 = vld [vmem:[%s1 + $0x24] sm:$0xf]
      %v326 = vld [vmem:[%s1 + $0x28] sm:$0xf]
      %v327 = vld [vmem:[%s1 + $0x2c] sm:$0xf]
      %v328 = vld [vmem:[%s1 + $0x30] sm:$0xf]
      %v329 = vld [vmem:[%s1 + $0x34] sm:$0xf]
      %v330 = vld [vmem:[%s1 + $0x38] sm:$0xf]
      %v331 = vld [vmem:[%s1 + $0x3c] sm:$0xf]
      %v332 = vld [vmem:[%s1 + $0x40] sm:$0xf]
      %v333 = vld [vmem:[%s1 + $0x44] sm:$0xf]
      %v334 = vld [vmem:[%s1 + $0x48] sm:$0xf]
      %v335 = vld [vmem:[%s1 + $0x4c] sm:$0xf]
      %v336 = vld [vmem:[%s1 + $0x50] sm:$0xf]
      %v337 = vld [vmem:[%s1 + $0x54] sm:$0xf]
      %v338 = vld [vmem:[%s1 + $0x58] sm:$0xf]
      %v339 = vld [vmem:[%s1 + $0x5c] sm:$0xf]
      %v340 = vld [vmem:[%s1 + $0x60] sm:$0xf]
      %v341 = vld [vmem:[%s1 + $0x64] sm:$0xf]
      %v342 = vld [vmem:[%s1 + $0x68] sm:$0xf]
      %v343 = vld [vmem:[%s1 + $0x6c] sm:$0xf]
      %v344 = vld [vmem:[%s1 + $0x70] sm:$0xf]
      %v345 = vld [vmem:[%s1 + $0x74] sm:$0xf]
      %v346 = vld [vmem:[%s1 + $0x78] sm:$0xf]
      %v347 = vld [vmem:[%s1 + $0x7c] sm:$0xf]
      %v348 = vld [vmem:[%s2] sm:$0xf]
      %v349 = vld [vmem:[%s2 + $0x4] sm:$0xf]
      %v350 = vld [vmem:[%s2 + $0x8] sm:$0xf]
      %v351 = vld [vmem:[%s2 + $0xc] sm:$0xf]
      %v352 = vld [vmem:[%s2 + $0x10] sm:$0xf]
      %v353 = vld [vmem:[%s2 + $0x14] sm:$0xf]
      %v354 = vld [vmem:[%s2 + $0x18] sm:$0xf]
      %v355 = vld [vmem:[%s2 + $0x1c] sm:$0xf]
      %v356 = vld [vmem:[%s2 + $0x20] sm:$0xf]
      %v357 = vld [vmem:[%s2 + $0x24] sm:$0xf]
      %v358 = vld [vmem:[%s2 + $0x28] sm:$0xf]
      %v359 = vld [vmem:[%s2 + $0x2c] sm:$0xf]
      %v360 = vld [vmem:[%s2 + $0x30] sm:$0xf]
      %v361 = vld [vmem:[%s2 + $0x34] sm:$0xf]
      %v362 = vld [vmem:[%s2 + $0x38] sm:$0xf]
      %v363 = vld [vmem:[%s2 + $0x3c] sm:$0xf]
      %v364 = vld [vmem:[%s2 + $0x40] sm:$0xf]
      %v365 = vld [vmem:[%s2 + $0x44] sm:$0xf]
      %v366 = vld [vmem:[%s2 + $0x48] sm:$0xf]
      %v367 = vld [vmem:[%s2 + $0x4c] sm:$0xf]
      %v368 = vld [vmem:[%s2 + $0x50] sm:$0xf]
      %v369 = vld [vmem:[%s2 + $0x54] sm:$0xf]
      %v370 = vld [vmem:[%s2 + $0x58] sm:$0xf]
      %v371 = vld [vmem:[%s2 + $0x5c] sm:$0xf]
      %v372 = vld [vmem:[%s2 + $0x60] sm:$0xf]
      %v373 = vld [vmem:[%s2 + $0x64] sm:$0xf]
      %v374 = vld [vmem:[%s2 + $0x68] sm:$0xf]
      %v375 = vld [vmem:[%s2 + $0x6c] sm:$0xf]
      %v376 = vld [vmem:[%s2 + $0x70] sm:$0xf]
      %v377 = vld [vmem:[%s2 + $0x74] sm:$0xf]
      %v378 = vld [vmem:[%s2 + $0x78] sm:$0xf]
      %v379 = vld [vmem:[%s2 + $0x7c] sm:$0xf]
      %v388 = vunpack.c.l.b16 %v301
      %v389 = vunpack.c.h.b16 %v301
      %v390 = vunpack.c.l.b16 %v303
      %v391 = vunpack.c.h.b16 %v303
      %v392 = vunpack.c.l.b16 %v305
      %v393 = vunpack.c.h.b16 %v305
      %v394 = vunpack.c.l.b16 %v307
      %v395 = vunpack.c.h.b16 %v307
      %v396 = vunpack.c.l.b16 %v309
      %v397 = vunpack.c.h.b16 %v309
      %v398 = vunpack.c.l.b16 %v311
      %v399 = vunpack.c.h.b16 %v311
      %v400 = vunpack.c.l.b16 %v313
      %v401 = vunpack.c.h.b16 %v313
      %v402 = vunpack.c.l.b16 %v315
      %v403 = vunpack.c.h.b16 %v315
      %v404 = vpack.c.b16 %v390, %v388
      %v405 = vpack.c.b16 %v391, %v389
      %v406 = vpack.c.b16 %v394, %v392
      %v407 = vpack.c.b16 %v395, %v393
      %v408 = vpack.c.b16 %v398, %v396
      %v409 = vpack.c.b16 %v399, %v397
      %v410 = vpack.c.b16 %v402, %v400
      %v411 = vpack.c.b16 %v403, %v401
      %v452 = vunpack.c.l.b16 %v348
      %v453 = vunpack.c.l.b16 %v349
      %v454 = vunpack.c.l.b16 %v350
      %v455 = vunpack.c.l.b16 %v351
      %v456 = vunpack.c.l.b16 %v352
      %v457 = vunpack.c.l.b16 %v353
      %v458 = vunpack.c.l.b16 %v354
      %v459 = vunpack.c.l.b16 %v355
      %v460 = vunpack.c.l.b16 %v356
      %v461 = vunpack.c.l.b16 %v357
      %v462 = vunpack.c.l.b16 %v358
      %v463 = vunpack.c.l.b16 %v359
      %v464 = vunpack.c.l.b16 %v360
      %v465 = vunpack.c.l.b16 %v361
      %v466 = vunpack.c.l.b16 %v362
      %v467 = vunpack.c.l.b16 %v363
      %v468 = vunpack.c.l.b16 %v364
      %v469 = vunpack.c.l.b16 %v365
      %v470 = vunpack.c.l.b16 %v366
      %v471 = vunpack.c.l.b16 %v367
      %v472 = vunpack.c.l.b16 %v368
      %v473 = vunpack.c.l.b16 %v369
      %v474 = vunpack.c.l.b16 %v370
      %v475 = vunpack.c.l.b16 %v371
      %v476 = vunpack.c.l.b16 %v372
      %v477 = vunpack.c.l.b16 %v373
      %v478 = vunpack.c.l.b16 %v374
      %v479 = vunpack.c.l.b16 %v375
      %v480 = vunpack.c.l.b16 %v376
      %v481 = vunpack.c.l.b16 %v377
      %v482 = vunpack.c.l.b16 %v378
      %v483 = vunpack.c.l.b16 %v379
      %v484 = vpack.c.b16 %v453, %v452
      %v485 = vpack.c.b16 %v455, %v454
      %v486 = vpack.c.b16 %v457, %v456
      %v487 = vpack.c.b16 %v459, %v458
      %v488 = vpack.c.b16 %v461, %v460
      %v489 = vpack.c.b16 %v463, %v462
      %v490 = vpack.c.b16 %v465, %v464
      %v491 = vpack.c.b16 %v467, %v466
      %v492 = vpack.c.b16 %v469, %v468
      %v493 = vpack.c.b16 %v471, %v470
      %v494 = vpack.c.b16 %v473, %v472
      %v495 = vpack.c.b16 %v475, %v474
      %v496 = vpack.c.b16 %v477, %v476
      %v497 = vpack.c.b16 %v479, %v478
      %v498 = vpack.c.b16 %v481, %v480
      %v499 = vpack.c.b16 %v483, %v482
      %516 = vmatprep.subr.bf16.mxu0 0
      %517 = vmatpush1.bf16.msra.mxu0 %v484
      %518 = vmatprep.subr.bf16.mxu0 0
      %519 = vmatpush1.bf16.msra.mxu0 %v485
      %520 = vmatprep.subr.bf16.mxu0 0
      %521 = vmatpush1.bf16.msra.mxu0 %v486
      %522 = vmatprep.subr.bf16.mxu0 0
      %523 = vmatpush1.bf16.msra.mxu0 %v487
      %524 = vmatprep.subr.bf16.mxu0 0
      %525 = vmatpush1.bf16.msra.mxu0 %v488
      %526 = vmatprep.subr.bf16.mxu0 0
      %527 = vmatpush1.bf16.msra.mxu0 %v489
      %528 = vmatprep.subr.bf16.mxu0 0
      %529 = vmatpush1.bf16.msra.mxu0 %v490
      %530 = vmatprep.subr.bf16.mxu0 0
      %531 = vmatpush1.bf16.msra.mxu0 %v491
      %532 = vmatprep.subr.bf16.mxu0 0
      %533 = vmatpush1.bf16.msra.mxu0 %v492
      %534 = vmatprep.subr.bf16.mxu0 0
      %535 = vmatpush1.bf16.msra.mxu0 %v493
      %536 = vmatprep.subr.bf16.mxu0 0
      %537 = vmatpush1.bf16.msra.mxu0 %v494
      %538 = vmatprep.subr.bf16.mxu0 0
      %539 = vmatpush1.bf16.msra.mxu0 %v495
      %540 = vmatprep.subr.bf16.mxu0 0
      %541 = vmatpush1.bf16.msra.mxu0 %v496
      %542 = vmatprep.subr.bf16.mxu0 0
      %543 = vmatpush1.bf16.msra.mxu0 %v497
      %544 = vmatprep.subr.bf16.mxu0 0
      %545 = vmatpush1.bf16.msra.mxu0 %v498
      %546 = vmatprep.subr.bf16.mxu0 0
      %547 = vmatpush1.bf16.msra.mxu0 %v499
      %548 = vmatprep.mubr.bf16.mxu0 %v405
      %549 = vmatmul.mubr.bf16.gmra.mrb[0].mxu0 %v404
      %v550 = vpop.f32.mrb[0].mxu0
      %v551 = vadd.f32 0.0, %v550
      %v552 = vpop.f32.mrb[0].mxu0
      %v553 = vpop.f32.mrb[0].mxu0
      %v554 = vadd.f32 0.0, %v553
      %v555 = vpop.f32.mrb[0].mxu0
      %556 = vmatprep.mubr.bf16.mxu0 %v407
      %557 = vmatmul.mubr.bf16.gmra.mrb[0].mxu0 %v406
      %v558 = vpop.f32.mrb[0].mxu0
      %v559 = vadd.f32 0.0, %v558
      %v560 = vpop.f32.mrb[0].mxu0
      %v561 = vpop.f32.mrb[0].mxu0
      %v562 = vadd.f32 0.0, %v561
      %v563 = vpop.f32.mrb[0].mxu0
      %564 = vmatprep.mubr.bf16.mxu0 %v409
      %565 = vmatmul.mubr.bf16.gmra.mrb[0].mxu0 %v408
      %v566 = vpop.f32.mrb[0].mxu0
      %v567 = vadd.f32 0.0, %v566
      %v568 = vpop.f32.mrb[0].mxu0
      %v569 = vpop.f32.mrb[0].mxu0
      %v570 = vadd.f32 0.0, %v569
      %v571 = vpop.f32.mrb[0].mxu0
      %572 = vmatprep.mubr.bf16.mxu0 %v411
      %573 = vmatmul.mubr.bf16.gmra.mrb[0].mxu0 %v410
      %v574 = vpop.f32.mrb[0].mxu0
      %v575 = vadd.f32 0.0, %v574
      %v576 = vpop.f32.mrb[0].mxu0
      %v577 = vpop.f32.mrb[0].mxu0
      %v578 = vadd.f32 0.0, %v577
      %v579 = vpop.f32.mrb[0].mxu0
      %580 = vdwg.mxu0
      %v589 = vunpack.c.l.b16 %v300
      %v590 = vunpack.c.h.b16 %v300
      %v591 = vunpack.c.l.b16 %v302
      %v592 = vunpack.c.h.b16 %v302
      %v593 = vunpack.c.l.b16 %v304
      %v594 = vunpack.c.h.b16 %v304
      %v595 = vunpack.c.l.b16 %v306
      %v596 = vunpack.c.h.b16 %v306
      %v597 = vunpack.c.l.b16 %v308
      %v598 = vunpack.c.h.b16 %v308
      %v599 = vunpack.c.l.b16 %v310
      %v600 = vunpack.c.h.b16 %v310
      %v601 = vunpack.c.l.b16 %v312
      %v602 = vunpack.c.h.b16 %v312
      %v603 = vunpack.c.l.b16 %v314
      %v604 = vunpack.c.h.b16 %v314
      %v605 = vpack.c.b16 %v591, %v589
      %v606 = vpack.c.b16 %v592, %v590
      %v607 = vpack.c.b16 %v595, %v593
      %v608 = vpack.c.b16 %v596, %v594
      %v609 = vpack.c.b16 %v599, %v597
      %v610 = vpack.c.b16 %v600, %v598
      %v611 = vpack.c.b16 %v603, %v601
      %v612 = vpack.c.b16 %v604, %v602
      %v653 = vunpack.c.l.b16 %v316
      %v654 = vunpack.c.l.b16 %v317
      %v655 = vunpack.c.l.b16 %v318
      %v656 = vunpack.c.l.b16 %v319
      %v657 = vunpack.c.l.b16 %v320
      %v658 = vunpack.c.l.b16 %v321
      %v659 = vunpack.c.l.b16 %v322
      %v660 = vunpack.c.l.b16 %v323
      %v661 = vunpack.c.l.b16 %v324
      %v662 = vunpack.c.l.b16 %v325
      %v663 = vunpack.c.l.b16 %v326
      %v664 = vunpack.c.l.b16 %v327
      %v665 = vunpack.c.l.b16 %v328
      %v666 = vunpack.c.l.b16 %v329
      %v667 = vunpack.c.l.b16 %v330
      %v668 = vunpack.c.l.b16 %v331
      %v669 = vunpack.c.l.b16 %v332
      %v670 = vunpack.c.l.b16 %v333
      %v671 = vunpack.c.l.b16 %v334
      %v672 = vunpack.c.l.b16 %v335
      %v673 = vunpack.c.l.b16 %v336
      %v674 = vunpack.c.l.b16 %v337
      %v675 = vunpack.c.l.b16 %v338
      %v676 = vunpack.c.l.b16 %v339
      %v677 = vunpack.c.l.b16 %v340
      %v678 = vunpack.c.l.b16 %v341
      %v679 = vunpack.c.l.b16 %v342
      %v680 = vunpack.c.l.b16 %v343
      %v681 = vunpack.c.l.b16 %v344
      %v682 = vunpack.c.l.b16 %v345
      %v683 = vunpack.c.l.b16 %v346
      %v684 = vunpack.c.l.b16 %v347
      %v685 = vpack.c.b16 %v654, %v653
      %v686 = vpack.c.b16 %v656, %v655
      %v687 = vpack.c.b16 %v658, %v657
      %v688 = vpack.c.b16 %v660, %v659
      %v689 = vpack.c.b16 %v662, %v661
      %v690 = vpack.c.b16 %v664, %v663
      %v691 = vpack.c.b16 %v666, %v665
      %v692 = vpack.c.b16 %v668, %v667
      %v693 = vpack.c.b16 %v670, %v669
      %v694 = vpack.c.b16 %v672, %v671
      %v695 = vpack.c.b16 %v674, %v673
      %v696 = vpack.c.b16 %v676, %v675
      %v697 = vpack.c.b16 %v678, %v677
      %v698 = vpack.c.b16 %v680, %v679
      %v699 = vpack.c.b16 %v682, %v681
      %v700 = vpack.c.b16 %v684, %v683
      %717 = vmatprep.subr.bf16.mxu0 0
      %718 = vmatpush1.bf16.msra.mxu0 %v685
      %719 = vmatprep.subr.bf16.mxu0 0
      %720 = vmatpush1.bf16.msra.mxu0 %v686
      %721 = vmatprep.subr.bf16.mxu0 0
      %722 = vmatpush1.bf16.msra.mxu0 %v687
      %723 = vmatprep.subr.bf16.mxu0 0
      %724 = vmatpush1.bf16.msra.mxu0 %v688
      %725 = vmatprep.subr.bf16.mxu0 0
      %726 = vmatpush1.bf16.msra.mxu0 %v689
      %727 = vmatprep.subr.bf16.mxu0 0
      %728 = vmatpush1.bf16.msra.mxu0 %v690
      %729 = vmatprep.subr.bf16.mxu0 0
      %730 = vmatpush1.bf16.msra.mxu0 %v691
      %731 = vmatprep.subr.bf16.mxu0 0
      %732 = vmatpush1.bf16.msra.mxu0 %v692
      %733 = vmatprep.subr.bf16.mxu0 0
      %734 = vmatpush1.bf16.msra.mxu0 %v693
      %735 = vmatprep.subr.bf16.mxu0 0
      %736 = vmatpush1.bf16.msra.mxu0 %v694
      %737 = vmatprep.subr.bf16.mxu0 0
      %738 = vmatpush1.bf16.msra.mxu0 %v695
      %739 = vmatprep.subr.bf16.mxu0 0
      %740 = vmatpush1.bf16.msra.mxu0 %v696
      %741 = vmatprep.subr.bf16.mxu0 0
      %742 = vmatpush1.bf16.msra.mxu0 %v697
      %743 = vmatprep.subr.bf16.mxu0 0
      %744 = vmatpush1.bf16.msra.mxu0 %v698
      %745 = vmatprep.subr.bf16.mxu0 0
      %746 = vmatpush1.bf16.msra.mxu0 %v699
      %747 = vmatprep.subr.bf16.mxu0 0
      %748 = vmatpush1.bf16.msra.mxu0 %v700
      %749 = vmatprep.mubr.bf16.mxu0 %v606
      %750 = vmatmul.mubr.bf16.gmra.mrb[0].mxu0 %v605
      %v751 = vpop.f32.mrb[0].mxu0
      %v752 = vadd.f32 %v551, %v751
      %v753 = vpop.f32.mrb[0].mxu0
      %v754 = vpop.f32.mrb[0].mxu0
      %v755 = vadd.f32 %v554, %v754
      %v756 = vpop.f32.mrb[0].mxu0
      %757 = vmatprep.mubr.bf16.mxu0 %v608
      %758 = vmatmul.mubr.bf16.gmra.mrb[0].mxu0 %v607
      %v759 = vpop.f32.mrb[0].mxu0
      %v760 = vadd.f32 %v559, %v759
      %v761 = vpop.f32.mrb[0].mxu0
      %v762 = vpop.f32.mrb[0].mxu0
      %v763 = vadd.f32 %v562, %v762
      %v764 = vpop.f32.mrb[0].mxu0
      %765 = vmatprep.mubr.bf16.mxu0 %v610
      %766 = vmatmul.mubr.bf16.gmra.mrb[0].mxu0 %v609
      %v767 = vpop.f32.mrb[0].mxu0
      %v768 = vadd.f32 %v567, %v767
      %v769 = vpop.f32.mrb[0].mxu0
      %v770 = vpop.f32.mrb[0].mxu0
      %v771 = vadd.f32 %v570, %v770
      %v772 = vpop.f32.mrb[0].mxu0
      %773 = vmatprep.mubr.bf16.mxu0 %v612
      %774 = vmatmul.mubr.bf16.gmra.mrb[0].mxu0 %v611
      %v775 = vpop.f32.mrb[0].mxu0
      %v776 = vadd.f32 %v575, %v775
      %v777 = vpop.f32.mrb[0].mxu0
      %v778 = vpop.f32.mrb[0].mxu0
      %v779 = vadd.f32 %v578, %v778
      %v780 = vpop.f32.mrb[0].mxu0
      %781 = vdwg.mxu0
      %v782 = vld [vmem:[%s3] sm:$0x1]
      %v784 = vlaneseq
      %v785 = vshrl.u32 %v784, 7
      %v786 = vsub.s32 0, %v785
      %v787 = vrot.slane %v782, %v786
      %v789 = vadd.f32 %v752, %v787
      %v790 = vadd.f32 %v755, %v787
      %v791 = vadd.f32 %v760, %v787
      %v792 = vadd.f32 %v763, %v787
      %v793 = vadd.f32 %v768, %v787
      %v794 = vadd.f32 %v771, %v787
      %v795 = vadd.f32 %v776, %v787
      %v796 = vadd.f32 %v779, %v787
      %v797 = vmax.f32 %v789, 0.0
      %v798 = vmax.f32 %v790, 0.0
      %v799 = vmax.f32 %v791, 0.0
      %v800 = vmax.f32 %v792, 0.0
      %v801 = vmax.f32 %v793, 0.0
      %v802 = vmax.f32 %v794, 0.0
      %v803 = vmax.f32 %v795, 0.0
      %v804 = vmax.f32 %v796, 0.0
      %v805 = vmin.f32 %v797, 6.0
      %v806 = vmin.f32 %v798, 6.0
      %v807 = vmin.f32 %v799, 6.0
      %v808 = vmin.f32 %v800, 6.0
      %v809 = vmin.f32 %v801, 6.0
      %v810 = vmin.f32 %v802, 6.0
      %v811 = vmin.f32 %v803, 6.0
      %v812 = vmin.f32 %v804, 6.0
      %v813 = vpack.c.bf16 %v806, %v805
      %v814 = vpack.c.bf16 %v808, %v807
      %v815 = vpack.c.bf16 %v810, %v809
      %v816 = vpack.c.bf16 %v812, %v811
      %v821 = vunpack.c.l.b16 %v813
      %v822 = vunpack.c.h.b16 %v813
      %v823 = vunpack.c.l.b16 %v814
      %v824 = vunpack.c.h.b16 %v814
      %v825 = vunpack.c.l.b16 %v815
      %v826 = vunpack.c.h.b16 %v815
      %v827 = vunpack.c.l.b16 %v816
      %v828 = vunpack.c.h.b16 %v816
      %v829 = vpack.c.b16 %v821, %v821
      %v830 = vpack.c.b16 %v822, %v822
      %v831 = vpack.c.b16 %v823, %v823
      %v832 = vpack.c.b16 %v824, %v824
      %v833 = vpack.c.b16 %v825, %v825
      %v834 = vpack.c.b16 %v826, %v826
      %v835 = vpack.c.b16 %v827, %v827
      %v836 = vpack.c.b16 %v828, %v828
      %845 = vst [vmem:[%s291] sm:$0xf] %v829
      %846 = vst [vmem:[%s291 + $0x4] sm:$0xf] %v830
      %847 = vst [vmem:[%s291 + $0x8] sm:$0xf] %v831
      %848 = vst [vmem:[%s291 + $0xc] sm:$0xf] %v832
      %849 = vst [vmem:[%s291 + $0x10] sm:$0xf] %v833
      %850 = vst [vmem:[%s291 + $0x14] sm:$0xf] %v834
      %851 = vst [vmem:[%s291 + $0x18] sm:$0xf] %v835
      %852 = vst [vmem:[%s291 + $0x1c] sm:$0xf] %v836
      %v853 = vld [vmem:[%s4] sm:$0xf]
      %v854 = vld [vmem:[%s4 + $0x4] sm:$0xf]
      %v855 = vld [vmem:[%s4 + $0x8] sm:$0xf]
      %v856 = vld [vmem:[%s4 + $0xc] sm:$0xf]
      %v857 = vld [vmem:[%s4 + $0x10] sm:$0xf]
      %v858 = vld [vmem:[%s4 + $0x14] sm:$0xf]
      %v859 = vld [vmem:[%s4 + $0x18] sm:$0xf]
      %v860 = vld [vmem:[%s4 + $0x1c] sm:$0xf]
      %v861 = vld [vmem:[%s4 + $0x20] sm:$0xf]
      %v862 = vld [vmem:[%s4 + $0x24] sm:$0xf]
      %v863 = vld [vmem:[%s4 + $0x28] sm:$0xf]
      %v864 = vld [vmem:[%s4 + $0x2c] sm:$0xf]
      %v865 = vld [vmem:[%s4 + $0x30] sm:$0xf]
      %v866 = vld [vmem:[%s4 + $0x34] sm:$0xf]
      %v867 = vld [vmem:[%s4 + $0x38] sm:$0xf]
      %v868 = vld [vmem:[%s4 + $0x3c] sm:$0xf]
      %v869 = vld [vmem:[%s5] sm:$0x1]
      %v871 = vlaneseq
      %v872 = vshrl.u32 %v871, 7
      %v873 = vsub.s32 0, %v872
      %v874 = vrot.slane %v869, %v873
      %v892 = vunpack.c.l.b16 %v853
      %v893 = vunpack.c.l.b16 %v854
      %v894 = vunpack.c.l.b16 %v855
      %v895 = vunpack.c.l.b16 %v856
      %v896 = vunpack.c.l.b16 %v857
      %v897 = vunpack.c.l.b16 %v858
      %v898 = vunpack.c.l.b16 %v859
      %v899 = vunpack.c.l.b16 %v860
      %v900 = vunpack.c.l.b16 %v861
      %v901 = vunpack.c.l.b16 %v862
      %v902 = vunpack.c.l.b16 %v863
      %v903 = vunpack.c.l.b16 %v864
      %v904 = vunpack.c.l.b16 %v865
      %v905 = vunpack.c.l.b16 %v866
      %v906 = vunpack.c.l.b16 %v867
      %v907 = vunpack.c.l.b16 %v868
      %v908 = vpack.c.b16 %v893, %v892
      %v909 = vpack.c.b16 %v895, %v894
      %v910 = vpack.c.b16 %v897, %v896
      %v911 = vpack.c.b16 %v899, %v898
      %v912 = vpack.c.b16 %v901, %v900
      %v913 = vpack.c.b16 %v903, %v902
      %v914 = vpack.c.b16 %v905, %v904
      %v915 = vpack.c.b16 %v907, %v906
      %924 = vmatprep.subr.bf16.mxu0 0
      %925 = vmatpush1.bf16.msra.mxu0 %v908
      %926 = vmatprep.subr.bf16.mxu0 0
      %927 = vmatpush1.bf16.msra.mxu0 %v909
      %928 = vmatprep.subr.bf16.mxu0 0
      %929 = vmatpush1.bf16.msra.mxu0 %v910
      %930 = vmatprep.subr.bf16.mxu0 0
      %931 = vmatpush1.bf16.msra.mxu0 %v911
      %932 = vmatprep.subr.bf16.mxu0 0
      %933 = vmatpush1.bf16.msra.mxu0 %v912
      %934 = vmatprep.subr.bf16.mxu0 0
      %935 = vmatpush1.bf16.msra.mxu0 %v913
      %936 = vmatprep.subr.bf16.mxu0 0
      %937 = vmatpush1.bf16.msra.mxu0 %v914
      %938 = vmatprep.subr.bf16.mxu0 0
      %939 = vmatpush1.bf16.msra.mxu0 %v915
      %940 = vmatprep.subr.bf16.mxu0 0
      %941 = vmatpush1.bf16.msra.mxu0 0
      %942 = vmatprep.subr.bf16.mxu0 0
      %943 = vmatpush1.bf16.msra.mxu0 0
      %944 = vmatprep.subr.bf16.mxu0 0
      %945 = vmatpush1.bf16.msra.mxu0 0
      %946 = vmatprep.subr.bf16.mxu0 0
      %947 = vmatpush1.bf16.msra.mxu0 0
      %948 = vmatprep.subr.bf16.mxu0 0
      %949 = vmatpush1.bf16.msra.mxu0 0
      %950 = vmatprep.subr.bf16.mxu0 0
      %951 = vmatpush1.bf16.msra.mxu0 0
      %952 = vmatprep.subr.bf16.mxu0 0
      %953 = vmatpush1.bf16.msra.mxu0 0
      %954 = vmatprep.subr.bf16.mxu0 0
      %955 = vmatpush1.bf16.msra.mxu0 0
      %956 = vmatprep.mubr.bf16.mxu0 0
      %957 = vmatmul.mubr.bf16.gmra.mrb[0].mxu0 %v813
      %v958 = vpop.f32.mrb[0].mxu0
      %v959 = vadd.f32 %v874, %v958
      %v960 = vpop.f32.mrb[0].mxu0
      %v961 = vpop.f32.mrb[0].mxu0
      %v962 = vadd.f32 %v874, %v961
      %v963 = vpop.f32.mrb[0].mxu0
      %964 = vmatprep.mubr.bf16.mxu0 0
      %965 = vmatmul.mubr.bf16.gmra.mrb[0].mxu0 %v814
      %v966 = vpop.f32.mrb[0].mxu0
      %v967 = vadd.f32 %v874, %v966
      %v968 = vpop.f32.mrb[0].mxu0
      %v969 = vpop.f32.mrb[0].mxu0
      %v970 = vadd.f32 %v874, %v969
      %v971 = vpop.f32.mrb[0].mxu0
      %972 = vmatprep.mubr.bf16.mxu0 0
      %973 = vmatmul.mubr.bf16.gmra.mrb[0].mxu0 %v815
      %v974 = vpop.f32.mrb[0].mxu0
      %v975 = vadd.f32 %v874, %v974
      %v976 = vpop.f32.mrb[0].mxu0
      %v977 = vpop.f32.mrb[0].mxu0
      %v978 = vadd.f32 %v874, %v977
      %v979 = vpop.f32.mrb[0].mxu0
      %980 = vmatprep.mubr.bf16.mxu0 0
      %981 = vmatmul.mubr.bf16.gmra.mrb[0].mxu0 %v816
      %v982 = vpop.f32.mrb[0].mxu0
      %v983 = vadd.f32 %v874, %v982
      %v984 = vpop.f32.mrb[0].mxu0
      %v985 = vpop.f32.mrb[0].mxu0
      %v986 = vadd.f32 %v874, %v985
      %v987 = vpop.f32.mrb[0].mxu0
      %988 = vdwg.mxu0
      %v989 = vpack.c.bf16 %v962, %v959
      %v990 = vpack.c.bf16 %v970, %v967
      %v991 = vpack.c.bf16 %v978, %v975
      %v992 = vpack.c.bf16 %v986, %v983
      %v997 = vunpack.c.l.b16 %v989
      %v998 = vunpack.c.h.b16 %v989
      %v999 = vunpack.c.l.b16 %v990
      %v1000 = vunpack.c.h.b16 %v990
      %v1001 = vunpack.c.l.b16 %v991
      %v1002 = vunpack.c.h.b16 %v991
      %v1003 = vunpack.c.l.b16 %v992
      %v1004 = vunpack.c.h.b16 %v992
      %v1005 = vpack.c.b16 %v997, %v997
      %v1006 = vpack.c.b16 %v998, %v998
      %v1007 = vpack.c.b16 %v999, %v999
      %v1008 = vpack.c.b16 %v1000, %v1000
      %v1009 = vpack.c.b16 %v1001, %v1001
      %v1010 = vpack.c.b16 %v1002, %v1002
      %v1011 = vpack.c.b16 %v1003, %v1003
      %v1012 = vpack.c.b16 %v1004, %v1004
      %1021 = vst [vmem:[%s297] sm:$0xf] %v1005
      %1022 = vst [vmem:[%s297 + $0x4] sm:$0xf] %v1006
      %1023 = vst [vmem:[%s297 + $0x8] sm:$0xf] %v1007
      %1024 = vst [vmem:[%s297 + $0xc] sm:$0xf] %v1008
      %1025 = vst [vmem:[%s297 + $0x10] sm:$0xf] %v1009
      %1026 = vst [vmem:[%s297 + $0x14] sm:$0xf] %v1010
      %1027 = vst [vmem:[%s297 + $0x18] sm:$0xf] %v1011
      %1028 = vst [vmem:[%s297 + $0x1c] sm:$0xf] %v1012
      %s1029 = smul.u32 8, %s19
      %p1030 = scmp.lt.s32.totalorder %s1029, 15
      %s1031 = scalar_select %p1030, %s1029, 15
      %s1032 = smul.addr %s1031, 4
      %s1033 = scalar_lea.vmem %s6, %s1032
      %s1034 = smul.u32 8, %s19
      %p1035 = scmp.lt.s32.totalorder %s1034, 15
      %s1036 = scalar_select %p1035, %s1034, 15
      %s1037 = smul.addr %s1036, 4
      %s1038 = scalar_lea.vmem %s7, %s1037
      // Predicated region
      $region45: #{f_random_proj_forward.9} parent=43 // pred_check
        %p1039 = pneg %p168
      $region46: #{f_random_proj_forward.9} parent=43 // pred_check_branch
        %1041 = sbr.rel (%p1039) target = $region48
      $region47: #{f_random_proj_forward.9} parent=43 // pred_region
        %s1042 = smul.u32 8, %s19
      $region48: #{f_random_proj_forward.9} parent=43 // pred_fallthru
        _
      // Predicated region
      $region49: #{f_random_proj_forward.9} parent=43 // pred_check
        %p1043 = pneg %p194
      $region50: #{f_random_proj_forward.9} parent=43 // pred_check_branch
        %1045 = sbr.rel (%p1043) target = $region52
      $region51: #{f_random_proj_forward.9} parent=43 // pred_region
        %s1046 = smul.u32 8, %s19
      $region52: #{f_random_proj_forward.9} parent=43 // pred_fallthru
        _
    $region44: #{f_random_proj_forward.9} parent=5 // pred_fallthru
      _
    %p1047 = scmp.le.s32.totalorder 2, %s14
    // Predicated region
    $region53: #{f_random_proj_forward.9} parent=5 // pred_check
      %p1048 = pneg %p1047
    $region54: #{f_random_proj_forward.9} parent=5 // pred_check_branch
      %1050 = sbr.rel (%p1048) target = $region56
    $region55: #{f_random_proj_forward.9} parent=5 // pred_region
      %s1051 = ssub.s32 %s14, 2
      // Predicated region
      $region57: #{f_random_proj_forward.9} parent=55 // pred_check
        %p1052 = pneg %p174
      $region58: #{f_random_proj_forward.9} parent=55 // pred_check_branch
        %1054 = sbr.rel (%p1052) target = $region60
      $region59: #{f_random_proj_forward.9} parent=55 // pred_region
        %s1055 = smul.u32 8, %s20
        %p1056 = scmp.lt.s32.totalorder %s1055, 15
        %s1057 = scalar_select %p1056, %s1055, 15
        %s1058 = smul.addr %s1057, 4
        %s1059 = scalar_lea.vmem %s6, %s1058
      $region60: #{f_random_proj_forward.9} parent=55 // pred_fallthru
        _
      // Predicated region
      $region61: #{f_random_proj_forward.9} parent=55 // pred_check
        %p1060 = pneg %p200
      $region62: #{f_random_proj_forward.9} parent=55 // pred_check_branch
        %1062 = sbr.rel (%p1060) target = $region64
      $region63: #{f_random_proj_forward.9} parent=55 // pred_region
        %s1063 = smul.u32 8, %s20
        %p1064 = scmp.lt.s32.totalorder %s1063, 15
        %s1065 = scalar_select %p1064, %s1063, 15
        %s1066 = smul.addr %s1065, 4
        %s1067 = scalar_lea.vmem %s7, %s1066
      $region64: #{f_random_proj_forward.9} parent=55 // pred_fallthru
        _
    $region56: #{f_random_proj_forward.9} parent=5 // pred_fallthru
      _
  $region6: #{f_random_proj_forward.9} parent=0 // loop_footer
    %s18 = sadd.s32 1, %s14
  $region7: #{f_random_proj_forward.9} parent=0 // loop_footer_branch
    %13 = sbr.rel target = $region3
  $region8: #{f_random_proj_forward.9} parent=0 // loop_exit
    _

// kernel: f_random_proj_forward.10
$region0: #{f_random_proj_forward.10}
  #allocation0 [shape = 'u32[]', space=smem, size = 0x4, offset = 0x4, fixed_abs, tag = 'smem constant byte address 0x4 - core index']
  #allocation1 [shape = 'u32[144,128]{1,0:T(1,128)}', space=vmem, size = 0x12000, scoped, tag = 'internal scratch']
  %s0 = inlined_call_operand.vmem [shape: bf16[32,512], index: 0, kind: input, shape index: {}]
  %s1 = inlined_call_operand.vmem [shape: bf16[512,128], index: 1, kind: input, shape index: {}]
  %s2 = inlined_call_operand.vmem [shape: f32[1,128], index: 2, kind: input, shape index: {}]
  %s3 = inlined_call_operand.vmem [shape: bf16[128,256], index: 3, kind: input, shape index: {}]
  %s4 = inlined_call_operand.vmem [shape: f32[1,256], index: 4, kind: input, shape index: {}]
  %s5 = inlined_call_operand.vmem [shape: bf16[32,128], index: 5, kind: output, shape index: {0}]
  %s6 = inlined_call_operand.vmem [shape: bf16[32,256], index: 6, kind: output, shape index: {1}]
  %7 = xla_tuple %s5, %s6
  %s8 = sld [smem:[#allocation0]]
  $region61: #{f_random_proj_forward.10} parent=0
    _
  %s10 = ssub.s32 1, %s8
  %s11 = scalar_select 0, %s10, %s8
  loop: start=0, step=1, limit=4
  $region2: #{f_random_proj_forward.10} parent=0 // loop_pre_header
    _
  $region3: #{f_random_proj_forward.10} parent=0 // loop_header
    %s13 = sphi 0, %s17
    %p14 = scmp.ge.s32.totalorder %s13, 4
    %s23 = sphi 0, %s25
    %s26 = sphi 0, %s23
    %s27 = sphi 0, %s26
    %s43 = sphi 0, %s27
    %s47 = sphi 0, %s47
    %s49 = sphi 0, %s47
    %s50 = sphi 0, %s49
    %s64 = sphi 0, %s50
    %s68 = sphi 0, %s68
    %s70 = sphi 0, %s68
    %s71 = sphi 0, %s70
    %s85 = sphi 0, %s71
    %s89 = sphi 0, %s89
    %s91 = sphi 0, %s89
    %s92 = sphi 0, %s91
    %s106 = sphi 0, %s92
    %s110 = sphi 0, %s110
    %s112 = sphi 0, %s110
    %s113 = sphi 0, %s112
    %s127 = sphi 0, %s113
    %s133 = sphi 0, %s135
    %s136 = sphi 0, %s133
    %s137 = sphi 0, %s136
    %s153 = sphi 0, %s137
    %s159 = sphi 0, %s161
    %s162 = sphi 0, %s159
    %s163 = sphi 0, %s162
    %s179 = sphi 0, %s163
  $region4: #{f_random_proj_forward.10} parent=0 // loop_header_branch
    %16 = sbr.rel (%p14) target = $region8
  $region5: #{f_random_proj_forward.10} parent=0 // loop_body
    %s18 = ssub.s32 %s13, 1
    %s19 = ssub.s32 %s13, 2
    %s20 = sadd.s32 %s13, 1
    %s21 = ssub.s32 %s13, %s20
    %p22 = scmp.eq.s32.totalorder %s21, 0
    %s24 = sadd.s32 %s23, 1
    %s25 = scalar_select %p22, %s23, %s24
    %p28 = pneg %p22
    %p29 = scmp.eq.s32.totalorder %s13, 1
    %p30 = por %p28, %p29
    %p31 = scmp.ne.s32.totalorder %s23, %s26
    %p32 = scmp.eq.s32.totalorder %s13, 0
    %p33 = por %p31, %p32
    %p34 = scmp.ne.s32.totalorder %s23, %s26
    %p35 = scmp.eq.s32.totalorder %s18, 1
    %p36 = por %p34, %p35
    %p37 = scmp.ne.s32.totalorder %s26, %s27
    %p38 = scmp.eq.s32.totalorder %s18, 0
    %p39 = por %p37, %p38
    %p40 = scmp.ne.s32.totalorder %s26, %s27
    %p41 = scmp.eq.s32.totalorder %s19, 1
    %p42 = por %p40, %p41
    %p44 = scmp.ne.s32.totalorder %s27, %s43
    %p45 = scmp.eq.s32.totalorder %s19, 0
    %p46 = por %p44, %p45
    %s48 = sadd.s32 %s47, 1
    %p51 = scmp.eq.s32.totalorder %s13, 1
    %p52 = scmp.ne.s32.totalorder %s47, %s49
    %p53 = scmp.eq.s32.totalorder %s13, 0
    %p54 = por %p52, %p53
    %p55 = scmp.ne.s32.totalorder %s47, %s49
    %p56 = scmp.eq.s32.totalorder %s18, 1
    %p57 = por %p55, %p56
    %p58 = scmp.ne.s32.totalorder %s49, %s50
    %p59 = scmp.eq.s32.totalorder %s18, 0
    %p60 = por %p58, %p59
    %p61 = scmp.ne.s32.totalorder %s49, %s50
    %p62 = scmp.eq.s32.totalorder %s19, 1
    %p63 = por %p61, %p62
    %p65 = scmp.ne.s32.totalorder %s50, %s64
    %p66 = scmp.eq.s32.totalorder %s19, 0
    %p67 = por %p65, %p66
    %s69 = sadd.s32 %s68, 1
    %p72 = scmp.eq.s32.totalorder %s13, 1
    %p73 = scmp.ne.s32.totalorder %s68, %s70
    %p74 = scmp.eq.s32.totalorder %s13, 0
    %p75 = por %p73, %p74
    %p76 = scmp.ne.s32.totalorder %s68, %s70
    %p77 = scmp.eq.s32.totalorder %s18, 1
    %p78 = por %p76, %p77
    %p79 = scmp.ne.s32.totalorder %s70, %s71
    %p80 = scmp.eq.s32.totalorder %s18, 0
    %p81 = por %p79, %p80
    %p82 = scmp.ne.s32.totalorder %s70, %s71
    %p83 = scmp.eq.s32.totalorder %s19, 1
    %p84 = por %p82, %p83
    %p86 = scmp.ne.s32.totalorder %s71, %s85
    %p87 = scmp.eq.s32.totalorder %s19, 0
    %p88 = por %p86, %p87
    %s90 = sadd.s32 %s89, 1
    %p93 = scmp.eq.s32.totalorder %s13, 1
    %p94 = scmp.ne.s32.totalorder %s89, %s91
    %p95 = scmp.eq.s32.totalorder %s13, 0
    %p96 = por %p94, %p95
    %p97 = scmp.ne.s32.totalorder %s89, %s91
    %p98 = scmp.eq.s32.totalorder %s18, 1
    %p99 = por %p97, %p98
    %p100 = scmp.ne.s32.totalorder %s91, %s92
    %p101 = scmp.eq.s32.totalorder %s18, 0
    %p102 = por %p100, %p101
    %p103 = scmp.ne.s32.totalorder %s91, %s92
    %p104 = scmp.eq.s32.totalorder %s19, 1
    %p105 = por %p103, %p104
    %p107 = scmp.ne.s32.totalorder %s92, %s106
    %p108 = scmp.eq.s32.totalorder %s19, 0
    %p109 = por %p107, %p108
    %s111 = sadd.s32 %s110, 1
    %p114 = scmp.eq.s32.totalorder %s13, 1
    %p115 = scmp.ne.s32.totalorder %s110, %s112
    %p116 = scmp.eq.s32.totalorder %s13, 0
    %p117 = por %p115, %p116
    %p118 = scmp.ne.s32.totalorder %s110, %s112
    %p119 = scmp.eq.s32.totalorder %s18, 1
    %p120 = por %p118, %p119
    %p121 = scmp.ne.s32.totalorder %s112, %s113
    %p122 = scmp.eq.s32.totalorder %s18, 0
    %p123 = por %p121, %p122
    %p124 = scmp.ne.s32.totalorder %s112, %s113
    %p125 = scmp.eq.s32.totalorder %s19, 1
    %p126 = por %p124, %p125
    %p128 = scmp.ne.s32.totalorder %s113, %s127
    %p129 = scmp.eq.s32.totalorder %s19, 0
    %p130 = por %p128, %p129
    %s131 = ssub.s32 %s13, %s20
    %p132 = scmp.eq.s32.totalorder %s131, 0
    %s134 = sadd.s32 %s133, 1
    %s135 = scalar_select %p132, %s133, %s134
    %p138 = pneg %p132
    %p139 = scmp.eq.s32.totalorder %s13, 1
    %p140 = por %p138, %p139
    %p141 = scmp.ne.s32.totalorder %s133, %s136
    %p142 = scmp.eq.s32.totalorder %s13, 0
    %p143 = por %p141, %p142
    %p144 = scmp.ne.s32.totalorder %s133, %s136
    %p145 = scmp.eq.s32.totalorder %s18, 1
    %p146 = por %p144, %p145
    %p147 = scmp.ne.s32.totalorder %s136, %s137
    %p148 = scmp.eq.s32.totalorder %s18, 0
    %p149 = por %p147, %p148
    %p150 = scmp.ne.s32.totalorder %s136, %s137
    %p151 = scmp.eq.s32.totalorder %s19, 1
    %p152 = por %p150, %p151
    %p154 = scmp.ne.s32.totalorder %s137, %s153
    %p155 = scmp.eq.s32.totalorder %s19, 0
    %p156 = por %p154, %p155
    %s157 = ssub.s32 %s13, %s20
    %p158 = scmp.eq.s32.totalorder %s157, 0
    %s160 = sadd.s32 %s159, 1
    %s161 = scalar_select %p158, %s159, %s160
    %p164 = pneg %p158
    %p165 = scmp.eq.s32.totalorder %s13, 1
    %p166 = por %p164, %p165
    %p167 = scmp.ne.s32.totalorder %s159, %s162
    %p168 = scmp.eq.s32.totalorder %s13, 0
    %p169 = por %p167, %p168
    %p170 = scmp.ne.s32.totalorder %s159, %s162
    %p171 = scmp.eq.s32.totalorder %s18, 1
    %p172 = por %p170, %p171
    %p173 = scmp.ne.s32.totalorder %s162, %s163
    %p174 = scmp.eq.s32.totalorder %s18, 0
    %p175 = por %p173, %p174
    %p176 = scmp.ne.s32.totalorder %s162, %s163
    %p177 = scmp.eq.s32.totalorder %s19, 1
    %p178 = por %p176, %p177
    %p180 = scmp.ne.s32.totalorder %s163, %s179
    %p181 = scmp.eq.s32.totalorder %s19, 0
    %p182 = por %p180, %p181
    %p183 = scmp.le.s32.totalorder 1, %s13
    %p184 = scmp.lt.s32.totalorder %s13, 3
    %p185 = pnand %p183, %p184
    %p186 = pneg %p185
    // Predicated region
    $region9: #{f_random_proj_forward.10} parent=5 // pred_check
      _
    $region10: #{f_random_proj_forward.10} parent=5 // pred_check_branch
      %188 = sbr.rel (%p185) target = $region12
    $region11: #{f_random_proj_forward.10} parent=5 // pred_region
      %s189 = ssub.s32 %s13, 1
      // Predicated region
      $region13: #{f_random_proj_forward.10} parent=11 // pred_check
        %p190 = pneg %p60
      $region14: #{f_random_proj_forward.10} parent=11 // pred_check_branch
        %192 = sbr.rel (%p190) target = $region16
      $region15: #{f_random_proj_forward.10} parent=11 // pred_region
        _
      $region16: #{f_random_proj_forward.10} parent=11 // pred_fallthru
        _
      // Predicated region
      $region17: #{f_random_proj_forward.10} parent=11 // pred_check
        %p193 = pneg %p81
      $region18: #{f_random_proj_forward.10} parent=11 // pred_check_branch
        %195 = sbr.rel (%p193) target = $region20
      $region19: #{f_random_proj_forward.10} parent=11 // pred_region
        _
      $region20: #{f_random_proj_forward.10} parent=11 // pred_fallthru
        _
      // Predicated region
      $region21: #{f_random_proj_forward.10} parent=11 // pred_check
        %p196 = pneg %p102
      $region22: #{f_random_proj_forward.10} parent=11 // pred_check_branch
        %198 = sbr.rel (%p196) target = $region24
      $region23: #{f_random_proj_forward.10} parent=11 // pred_region
        _
      $region24: #{f_random_proj_forward.10} parent=11 // pred_fallthru
        _
      // Predicated region
      $region25: #{f_random_proj_forward.10} parent=11 // pred_check
        %p199 = pneg %p123
      $region26: #{f_random_proj_forward.10} parent=11 // pred_check_branch
        %201 = sbr.rel (%p199) target = $region28
      $region27: #{f_random_proj_forward.10} parent=11 // pred_region
        _
      $region28: #{f_random_proj_forward.10} parent=11 // pred_fallthru
        _
    $region12: #{f_random_proj_forward.10} parent=5 // pred_fallthru
      _
    %p202 = scmp.lt.s32.totalorder %s13, 2
    // Predicated region
    $region29: #{f_random_proj_forward.10} parent=5 // pred_check
      %p203 = pneg %p202
    $region30: #{f_random_proj_forward.10} parent=5 // pred_check_branch
      %205 = sbr.rel (%p203) target = $region32
    $region31: #{f_random_proj_forward.10} parent=5 // pred_region
      // Predicated region
      $region33: #{f_random_proj_forward.10} parent=31 // pred_check
        %p206 = pneg %p33
      $region34: #{f_random_proj_forward.10} parent=31 // pred_check_branch
        %208 = sbr.rel (%p206) target = $region36
      $region35: #{f_random_proj_forward.10} parent=31 // pred_region
        %s209 = smul.u32 2, %s13
        %p210 = scmp.lt.s32.totalorder %s209, 3
        %s211 = scalar_select %p210, %s209, 3
        %s212 = smul.addr %s211, 4
        %s213 = smul.addr %s212, 4
        %s214 = scalar_lea.vmem %s0, %s213
        %s215 = smul.u32 2, %s13
      $region36: #{f_random_proj_forward.10} parent=31 // pred_fallthru
        _
    $region32: #{f_random_proj_forward.10} parent=5 // pred_fallthru
      _
    %p216 = scmp.le.s32.totalorder 1, %s13
    %p217 = scmp.lt.s32.totalorder %s13, 3
    %p218 = pnand %p216, %p217
    %p219 = pneg %p218
    // Predicated region
    $region37: #{f_random_proj_forward.10} parent=5 // pred_check
      _
    $region38: #{f_random_proj_forward.10} parent=5 // pred_check_branch
      %221 = sbr.rel (%p218) target = $region40
    $region39: #{f_random_proj_forward.10} parent=5 // pred_region
      %s222 = ssub.s32 %s13, 1
      %s223 = smul.u32 2, %s18
      %p224 = scmp.lt.s32.totalorder %s223, 3
      %s225 = scalar_select %p224, %s223, 3
      %s226 = smul.addr %s225, 4
      %s227 = smul.addr %s226, 4
      %s228 = scalar_lea.vmem %s0, %s227
      %p229 = pneg %p39
      %p230 = pneg %p36
      %p231 = pneg %p60
      %p232 = pneg %p57
      %p233 = pneg %p81
      %p234 = pneg %p78
      %p235 = pneg %p102
      %p236 = pneg %p99
      %p237 = pneg %p123
      %p238 = pneg %p120
      %p239 = pneg %p149
      %p240 = pneg %p146
      %s241 = smul.u32 2, %s18
      %p242 = scmp.lt.s32.totalorder %s241, 3
      %s243 = scalar_select %p242, %s241, 3
      %s244 = smul.addr %s243, 4
      %s245 = scalar_lea.vmem %s5, %s244
      %p246 = pneg %p175
      %p247 = pneg %p172
      %s248 = smul.u32 2, %s18
      %p249 = scmp.lt.s32.totalorder %s248, 3
      %s250 = scalar_select %p249, %s248, 3
      %s251 = smul.addr %s250, 2
      %s252 = smul.addr %s251, 4
      %s253 = scalar_lea.vmem %s6, %s252
      %s254 = smul.u32 2, %s18
      %p255 = scmp.lt.s32.totalorder %s254, 3
      %s256 = scalar_select %p255, %s254, 3
      %s257 = smul.addr %s256, 4
      %s258 = smul.addr %s257, 4
      %s259 = scalar_lea.vmem %s0, %s258
      %s260 = smul.u32 2, %s18
      %s261 = smul.u32 2, %s18
      %p262 = scmp.lt.s32.totalorder %s261, 3
      %s263 = scalar_select %p262, %s261, 3
      %s264 = smul.addr %s263, 4
      %s265 = scalar_lea.vmem %s5, %s264
      %s266 = smul.u32 2, %s18
      %s267 = smul.u32 2, %s18
      %p268 = scmp.lt.s32.totalorder %s267, 3
      %s269 = scalar_select %p268, %s267, 3
      %s270 = smul.addr %s269, 2
      %s271 = smul.addr %s270, 4
      %s272 = scalar_lea.vmem %s6, %s271
      %s273 = smul.u32 2, %s18
      %v275 = vld [vmem:[%s259] sm:$0xff]
      %v276 = vld [vmem:[%s259 + $0x8] sm:$0xff]
      %v277 = vld [vmem:[%s259 + $0x10] sm:$0xff]
      %v278 = vld [vmem:[%s259 + $0x18] sm:$0xff]
      %v279 = vld [vmem:[%s1] sm:$0xf]
      %v280 = vld [vmem:[%s1 + $0x4] sm:$0xf]
      %v281 = vld [vmem:[%s1 + $0x8] sm:$0xf]
      %v282 = vld [vmem:[%s1 + $0xc] sm:$0xf]
      %v283 = vld [vmem:[%s1 + $0x10] sm:$0xf]
      %v284 = vld [vmem:[%s1 + $0x14] sm:$0xf]
      %v285 = vld [vmem:[%s1 + $0x18] sm:$0xf]
      %v286 = vld [vmem:[%s1 + $0x1c] sm:$0xf]
      %v287 = vld [vmem:[%s1 + $0x20] sm:$0xf]
      %v288 = vld [vmem:[%s1 + $0x24] sm:$0xf]
      %v289 = vld [vmem:[%s1 + $0x28] sm:$0xf]
      %v290 = vld [vmem:[%s1 + $0x2c] sm:$0xf]
      %v291 = vld [vmem:[%s1 + $0x30] sm:$0xf]
      %v292 = vld [vmem:[%s1 + $0x34] sm:$0xf]
      %v293 = vld [vmem:[%s1 + $0x38] sm:$0xf]
      %v294 = vld [vmem:[%s1 + $0x3c] sm:$0xf]
      %v295 = vld [vmem:[%s1 + $0x40] sm:$0xf]
      %v296 = vld [vmem:[%s1 + $0x44] sm:$0xf]
      %v297 = vld [vmem:[%s1 + $0x48] sm:$0xf]
      %v298 = vld [vmem:[%s1 + $0x4c] sm:$0xf]
      %v299 = vld [vmem:[%s1 + $0x50] sm:$0xf]
      %v300 = vld [vmem:[%s1 + $0x54] sm:$0xf]
      %v301 = vld [vmem:[%s1 + $0x58] sm:$0xf]
      %v302 = vld [vmem:[%s1 + $0x5c] sm:$0xf]
      %v303 = vld [vmem:[%s1 + $0x60] sm:$0xf]
      %v304 = vld [vmem:[%s1 + $0x64] sm:$0xf]
      %v305 = vld [vmem:[%s1 + $0x68] sm:$0xf]
      %v306 = vld [vmem:[%s1 + $0x6c] sm:$0xf]
      %v307 = vld [vmem:[%s1 + $0x70] sm:$0xf]
      %v308 = vld [vmem:[%s1 + $0x74] sm:$0xf]
      %v309 = vld [vmem:[%s1 + $0x78] sm:$0xf]
      %v310 = vld [vmem:[%s1 + $0x7c] sm:$0xf]
      %v311 = vld [vmem:[%s1 + $0x80] sm:$0xf]
      %v312 = vld [vmem:[%s1 + $0x84] sm:$0xf]
      %v313 = vld [vmem:[%s1 + $0x88] sm:$0xf]
      %v314 = vld [vmem:[%s1 + $0x8c] sm:$0xf]
      %v315 = vld [vmem:[%s1 + $0x90] sm:$0xf]
      %v316 = vld [vmem:[%s1 + $0x94] sm:$0xf]
      %v317 = vld [vmem:[%s1 + $0x98] sm:$0xf]
      %v318 = vld [vmem:[%s1 + $0x9c] sm:$0xf]
      %v319 = vld [vmem:[%s1 + $0xa0] sm:$0xf]
      %v320 = vld [vmem:[%s1 + $0xa4] sm:$0xf]
      %v321 = vld [vmem:[%s1 + $0xa8] sm:$0xf]
      %v322 = vld [vmem:[%s1 + $0xac] sm:$0xf]
      %v323 = vld [vmem:[%s1 + $0xb0] sm:$0xf]
      %v324 = vld [vmem:[%s1 + $0xb4] sm:$0xf]
      %v325 = vld [vmem:[%s1 + $0xb8] sm:$0xf]
      %v326 = vld [vmem:[%s1 + $0xbc] sm:$0xf]
      %v327 = vld [vmem:[%s1 + $0xc0] sm:$0xf]
      %v328 = vld [vmem:[%s1 + $0xc4] sm:$0xf]
      %v329 = vld [vmem:[%s1 + $0xc8] sm:$0xf]
      %v330 = vld [vmem:[%s1 + $0xcc] sm:$0xf]
      %v331 = vld [vmem:[%s1 + $0xd0] sm:$0xf]
      %v332 = vld [vmem:[%s1 + $0xd4] sm:$0xf]
      %v333 = vld [vmem:[%s1 + $0xd8] sm:$0xf]
      %v334 = vld [vmem:[%s1 + $0xdc] sm:$0xf]
      %v335 = vld [vmem:[%s1 + $0xe0] sm:$0xf]
      %v336 = vld [vmem:[%s1 + $0xe4] sm:$0xf]
      %v337 = vld [vmem:[%s1 + $0xe8] sm:$0xf]
      %v338 = vld [vmem:[%s1 + $0xec] sm:$0xf]
      %v339 = vld [vmem:[%s1 + $0xf0] sm:$0xf]
      %v340 = vld [vmem:[%s1 + $0xf4] sm:$0xf]
      %v341 = vld [vmem:[%s1 + $0xf8] sm:$0xf]
      %v342 = vld [vmem:[%s1 + $0xfc] sm:$0xf]
      %v343 = vld [vmem:[%s2] sm:$0x1]
      %v345 = vlaneseq
      %v346 = vshrl.u32 %v345, 7
      %v347 = vsub.s32 0, %v346
      %v348 = vrot.slane %v343, %v347
      %v354 = vunpack.c.l.b16 %v275
      %v355 = vunpack.c.h.b16 %v275
      %v356 = vunpack.c.l.b16 %v276
      %v357 = vunpack.c.h.b16 %v276
      %v358 = vunpack.c.l.b16 %v277
      %v359 = vunpack.c.h.b16 %v277
      %v360 = vunpack.c.l.b16 %v278
      %v361 = vunpack.c.h.b16 %v278
      %v362 = vpack.c.b16 %v358, %v354
      %v363 = vpack.c.b16 %v359, %v355
      %v364 = vpack.c.b16 %v360, %v356
      %v365 = vpack.c.b16 %v361, %v357
      %v434 = vunpack.c.l.b16 %v279
      %v435 = vunpack.c.l.b16 %v280
      %v436 = vunpack.c.l.b16 %v281
      %v437 = vunpack.c.l.b16 %v282
      %v438 = vunpack.c.l.b16 %v283
      %v439 = vunpack.c.l.b16 %v284
      %v440 = vunpack.c.l.b16 %v285
      %v441 = vunpack.c.l.b16 %v286
      %v442 = vunpack.c.l.b16 %v287
      %v443 = vunpack.c.l.b16 %v288
      %v444 = vunpack.c.l.b16 %v289
      %v445 = vunpack.c.l.b16 %v290
      %v446 = vunpack.c.l.b16 %v291
      %v447 = vunpack.c.l.b16 %v292
      %v448 = vunpack.c.l.b16 %v293
      %v449 = vunpack.c.l.b16 %v294
      %v450 = vunpack.c.l.b16 %v295
      %v451 = vunpack.c.l.b16 %v296
      %v452 = vunpack.c.l.b16 %v297
      %v453 = vunpack.c.l.b16 %v298
      %v454 = vunpack.c.l.b16 %v299
      %v455 = vunpack.c.l.b16 %v300
      %v456 = vunpack.c.l.b16 %v301
      %v457 = vunpack.c.l.b16 %v302
      %v458 = vunpack.c.l.b16 %v303
      %v459 = vunpack.c.l.b16 %v304
      %v460 = vunpack.c.l.b16 %v305
      %v461 = vunpack.c.l.b16 %v306
      %v462 = vunpack.c.l.b16 %v307
      %v463 = vunpack.c.l.b16 %v308
      %v464 = vunpack.c.l.b16 %v309
      %v465 = vunpack.c.l.b16 %v310
      %v466 = vunpack.c.l.b16 %v311
      %v467 = vunpack.c.l.b16 %v312
      %v468 = vunpack.c.l.b16 %v313
      %v469 = vunpack.c.l.b16 %v314
      %v470 = vunpack.c.l.b16 %v315
      %v471 = vunpack.c.l.b16 %v316
      %v472 = vunpack.c.l.b16 %v317
      %v473 = vunpack.c.l.b16 %v318
      %v474 = vunpack.c.l.b16 %v319
      %v475 = vunpack.c.l.b16 %v320
      %v476 = vunpack.c.l.b16 %v321
      %v477 = vunpack.c.l.b16 %v322
      %v478 = vunpack.c.l.b16 %v323
      %v479 = vunpack.c.l.b16 %v324
      %v480 = vunpack.c.l.b16 %v325
      %v481 = vunpack.c.l.b16 %v326
      %v482 = vunpack.c.l.b16 %v327
      %v483 = vunpack.c.l.b16 %v328
      %v484 = vunpack.c.l.b16 %v329
      %v485 = vunpack.c.l.b16 %v330
      %v486 = vunpack.c.l.b16 %v331
      %v487 = vunpack.c.l.b16 %v332
      %v488 = vunpack.c.l.b16 %v333
      %v489 = vunpack.c.l.b16 %v334
      %v490 = vunpack.c.l.b16 %v335
      %v491 = vunpack.c.l.b16 %v336
      %v492 = vunpack.c.l.b16 %v337
      %v493 = vunpack.c.l.b16 %v338
      %v494 = vunpack.c.l.b16 %v339
      %v495 = vunpack.c.l.b16 %v340
      %v496 = vunpack.c.l.b16 %v341
      %v497 = vunpack.c.l.b16 %v342
      %v498 = vpack.c.b16 %v435, %v434
      %v499 = vpack.c.b16 %v437, %v436
      %v500 = vpack.c.b16 %v439, %v438
      %v501 = vpack.c.b16 %v441, %v440
      %v502 = vpack.c.b16 %v443, %v442
      %v503 = vpack.c.b16 %v445, %v444
      %v504 = vpack.c.b16 %v447, %v446
      %v505 = vpack.c.b16 %v449, %v448
      %v506 = vpack.c.b16 %v451, %v450
      %v507 = vpack.c.b16 %v453, %v452
      %v508 = vpack.c.b16 %v455, %v454
      %v509 = vpack.c.b16 %v457, %v456
      %v510 = vpack.c.b16 %v459, %v458
      %v511 = vpack.c.b16 %v461, %v460
      %v512 = vpack.c.b16 %v463, %v462
      %v513 = vpack.c.b16 %v465, %v464
      %v514 = vpack.c.b16 %v467, %v466
      %v515 = vpack.c.b16 %v469, %v468
      %v516 = vpack.c.b16 %v471, %v470
      %v517 = vpack.c.b16 %v473, %v472
      %v518 = vpack.c.b16 %v475, %v474
      %v519 = vpack.c.b16 %v477, %v476
      %v520 = vpack.c.b16 %v479, %v478
      %v521 = vpack.c.b16 %v481, %v480
      %v522 = vpack.c.b16 %v483, %v482
      %v523 = vpack.c.b16 %v485, %v484
      %v524 = vpack.c.b16 %v487, %v486
      %v525 = vpack.c.b16 %v489, %v488
      %v526 = vpack.c.b16 %v491, %v490
      %v527 = vpack.c.b16 %v493, %v492
      %v528 = vpack.c.b16 %v495, %v494
      %v529 = vpack.c.b16 %v497, %v496
      %562 = vmatprep.subr.bf16.mxu0 0
      %563 = vmatpush1.bf16.msra.mxu0 %v498
      %564 = vmatprep.subr.bf16.mxu0 0
      %565 = vmatpush1.bf16.msra.mxu0 %v499
      %566 = vmatprep.subr.bf16.mxu0 0
      %567 = vmatpush1.bf16.msra.mxu0 %v500
      %568 = vmatprep.subr.bf16.mxu0 0
      %569 = vmatpush1.bf16.msra.mxu0 %v501
      %570 = vmatprep.subr.bf16.mxu0 0
      %571 = vmatpush1.bf16.msra.mxu0 %v502
      %572 = vmatprep.subr.bf16.mxu0 0
      %573 = vmatpush1.bf16.msra.mxu0 %v503
      %574 = vmatprep.subr.bf16.mxu0 0
      %575 = vmatpush1.bf16.msra.mxu0 %v504
      %576 = vmatprep.subr.bf16.mxu0 0
      %577 = vmatpush1.bf16.msra.mxu0 %v505
      %578 = vmatprep.subr.bf16.mxu0 0
      %579 = vmatpush1.bf16.msra.mxu0 %v506
      %580 = vmatprep.subr.bf16.mxu0 0
      %581 = vmatpush1.bf16.msra.mxu0 %v507
      %582 = vmatprep.subr.bf16.mxu0 0
      %583 = vmatpush1.bf16.msra.mxu0 %v508
      %584 = vmatprep.subr.bf16.mxu0 0
      %585 = vmatpush1.bf16.msra.mxu0 %v509
      %586 = vmatprep.subr.bf16.mxu0 0
      %587 = vmatpush1.bf16.msra.mxu0 %v510
      %588 = vmatprep.subr.bf16.mxu0 0
      %589 = vmatpush1.bf16.msra.mxu0 %v511
      %590 = vmatprep.subr.bf16.mxu0 0
      %591 = vmatpush1.bf16.msra.mxu0 %v512
      %592 = vmatprep.subr.bf16.mxu0 0
      %593 = vmatpush1.bf16.msra.mxu0 %v513
      %594 = vmatprep.mubr.bf16.mxu0 %v363
      %595 = vmatmul.mubr.bf16.gmra.mrb[0].mxu0 %v362
      %v596 = vpop.f32.mrb[0].mxu0
      %v597 = vadd.f32 %v348, %v596
      %v598 = vpop.f32.mrb[0].mxu0
      %v599 = vpop.f32.mrb[0].mxu0
      %v600 = vadd.f32 %v348, %v599
      %v601 = vpop.f32.mrb[0].mxu0
      %602 = vdwg.mxu0
      %603 = vmatprep.subr.bf16.mxu0 0
      %604 = vmatpush1.bf16.msra.mxu0 %v514
      %605 = vmatprep.subr.bf16.mxu0 0
      %606 = vmatpush1.bf16.msra.mxu0 %v515
      %607 = vmatprep.subr.bf16.mxu0 0
      %608 = vmatpush1.bf16.msra.mxu0 %v516
      %609 = vmatprep.subr.bf16.mxu0 0
      %610 = vmatpush1.bf16.msra.mxu0 %v517
      %611 = vmatprep.subr.bf16.mxu0 0
      %612 = vmatpush1.bf16.msra.mxu0 %v518
      %613 = vmatprep.subr.bf16.mxu0 0
      %614 = vmatpush1.bf16.msra.mxu0 %v519
      %615 = vmatprep.subr.bf16.mxu0 0
      %616 = vmatpush1.bf16.msra.mxu0 %v520
      %617 = vmatprep.subr.bf16.mxu0 0
      %618 = vmatpush1.bf16.msra.mxu0 %v521
      %619 = vmatprep.subr.bf16.mxu0 0
      %620 = vmatpush1.bf16.msra.mxu0 %v522
      %621 = vmatprep.subr.bf16.mxu0 0
      %622 = vmatpush1.bf16.msra.mxu0 %v523
      %623 = vmatprep.subr.bf16.mxu0 0
      %624 = vmatpush1.bf16.msra.mxu0 %v524
      %625 = vmatprep.subr.bf16.mxu0 0
      %626 = vmatpush1.bf16.msra.mxu0 %v525
      %627 = vmatprep.subr.bf16.mxu0 0
      %628 = vmatpush1.bf16.msra.mxu0 %v526
      %629 = vmatprep.subr.bf16.mxu0 0
      %630 = vmatpush1.bf16.msra.mxu0 %v527
      %631 = vmatprep.subr.bf16.mxu0 0
      %632 = vmatpush1.bf16.msra.mxu0 %v528
      %633 = vmatprep.subr.bf16.mxu0 0
      %634 = vmatpush1.bf16.msra.mxu0 %v529
      %635 = vmatprep.mubr.bf16.mxu0 %v365
      %636 = vmatmul.mubr.bf16.gmra.mrb[0].mxu0 %v364
      %v637 = vpop.f32.mrb[0].mxu0
      %v638 = vadd.f32 %v597, %v637
      %v639 = vpop.f32.mrb[0].mxu0
      %v640 = vpop.f32.mrb[0].mxu0
      %v641 = vadd.f32 %v600, %v640
      %v642 = vpop.f32.mrb[0].mxu0
      %643 = vdwg.mxu0
      %v644 = vmax.f32 %v638, 0.0
      %v645 = vmax.f32 %v641, 0.0
      %v646 = vmin.f32 %v644, 6.0
      %v647 = vmin.f32 %v645, 6.0
      %v648 = vpack.c.bf16 %v647, %v646
      %v650 = vunpack.c.l.b16 %v648
      %v651 = vunpack.c.h.b16 %v648
      %v652 = vpack.c.b16 %v650, %v650
      %v653 = vpack.c.b16 %v651, %v651
      %656 = vst [vmem:[%s265] sm:$0xf] %v652
      %657 = vst [vmem:[%s265 + $0x4] sm:$0xf] %v653
      %v658 = vld [vmem:[%s3] sm:$0xff]
      %v659 = vld [vmem:[%s3 + $0x8] sm:$0xff]
      %v660 = vld [vmem:[%s3 + $0x10] sm:$0xff]
      %v661 = vld [vmem:[%s3 + $0x18] sm:$0xff]
      %v662 = vld [vmem:[%s3 + $0x20] sm:$0xff]
      %v663 = vld [vmem:[%s3 + $0x28] sm:$0xff]
      %v664 = vld [vmem:[%s3 + $0x30] sm:$0xff]
      %v665 = vld [vmem:[%s3 + $0x38] sm:$0xff]
      %v666 = vld [vmem:[%s3 + $0x40] sm:$0xff]
      %v667 = vld [vmem:[%s3 + $0x48] sm:$0xff]
      %v668 = vld [vmem:[%s3 + $0x50] sm:$0xff]
      %v669 = vld [vmem:[%s3 + $0x58] sm:$0xff]
      %v670 = vld [vmem:[%s3 + $0x60] sm:$0xff]
      %v671 = vld [vmem:[%s3 + $0x68] sm:$0xff]
      %v672 = vld [vmem:[%s3 + $0x70] sm:$0xff]
      %v673 = vld [vmem:[%s3 + $0x78] sm:$0xff]
      %v674 = vld [vmem:[%s4] sm:$0x3]
      %v676 = vlaneseq
      %v677 = vshrl.u32 %v676, 7
      %v678 = vsub.s32 0, %v677
      %v679 = vrot.slane %v674, %v678
      %v680 = vlaneseq
      %v681 = vshrl.u32 %v680, 7
      %v682 = vsub.s32 1, %v681
      %v683 = vrot.slane %v674, %v682
      %v702 = vunpack.c.l.b16 %v658
      %v703 = vunpack.c.h.b16 %v658
      %v704 = vunpack.c.l.b16 %v659
      %v705 = vunpack.c.h.b16 %v659
      %v706 = vunpack.c.l.b16 %v660
      %v707 = vunpack.c.h.b16 %v660
      %v708 = vunpack.c.l.b16 %v661
      %v709 = vunpack.c.h.b16 %v661
      %v710 = vunpack.c.l.b16 %v662
      %v711 = vunpack.c.h.b16 %v662
      %v712 = vunpack.c.l.b16 %v663
      %v713 = vunpack.c.h.b16 %v663
      %v714 = vunpack.c.l.b16 %v664
      %v715 = vunpack.c.h.b16 %v664
      %v716 = vunpack.c.l.b16 %v665
      %v717 = vunpack.c.h.b16 %v665
      %v718 = vunpack.c.l.b16 %v666
      %v719 = vunpack.c.h.b16 %v666
      %v720 = vunpack.c.l.b16 %v667
      %v721 = vunpack.c.h.b16 %v667
      %v722 = vunpack.c.l.b16 %v668
      %v723 = vunpack.c.h.b16 %v668
      %v724 = vunpack.c.l.b16 %v669
      %v725 = vunpack.c.h.b16 %v669
      %v726 = vunpack.c.l.b16 %v670
      %v727 = vunpack.c.h.b16 %v670
      %v728 = vunpack.c.l.b16 %v671
      %v729 = vunpack.c.h.b16 %v671
      %v730 = vunpack.c.l.b16 %v672
      %v731 = vunpack.c.h.b16 %v672
      %v732 = vunpack.c.l.b16 %v673
      %v733 = vunpack.c.h.b16 %v673
      %v734 = vpack.c.b16 %v704, %v702
      %v735 = vpack.c.b16 %v705, %v703
      %v736 = vpack.c.b16 %v708, %v706
      %v737 = vpack.c.b16 %v709, %v707
      %v738 = vpack.c.b16 %v712, %v710
      %v739 = vpack.c.b16 %v713, %v711
      %v740 = vpack.c.b16 %v716, %v714
      %v741 = vpack.c.b16 %v717, %v715
      %v742 = vpack.c.b16 %v720, %v718
      %v743 = vpack.c.b16 %v721, %v719
      %v744 = vpack.c.b16 %v724, %v722
      %v745 = vpack.c.b16 %v725, %v723
      %v746 = vpack.c.b16 %v728, %v726
      %v747 = vpack.c.b16 %v729, %v727
      %v748 = vpack.c.b16 %v732, %v730
      %v749 = vpack.c.b16 %v733, %v731
      %766 = vmatprep.subr.bf16.mxu0 %v735
      %767 = vmatpush1.bf16.msra.mxu0 %v734
      %768 = vmatprep.subr.bf16.mxu0 %v737
      %769 = vmatpush1.bf16.msra.mxu0 %v736
      %770 = vmatprep.subr.bf16.mxu0 %v739
      %771 = vmatpush1.bf16.msra.mxu0 %v738
      %772 = vmatprep.subr.bf16.mxu0 %v741
      %773 = vmatpush1.bf16.msra.mxu0 %v740
      %774 = vmatprep.subr.bf16.mxu0 %v743
      %775 = vmatpush1.bf16.msra.mxu0 %v742
      %776 = vmatprep.subr.bf16.mxu0 %v745
      %777 = vmatpush1.bf16.msra.mxu0 %v744
      %778 = vmatprep.subr.bf16.mxu0 %v747
      %779 = vmatpush1.bf16.msra.mxu0 %v746
      %780 = vmatprep.subr.bf16.mxu0 %v749
      %781 = vmatpush1.bf16.msra.mxu0 %v748
      %782 = vmatprep.subr.bf16.mxu0 0
      %783 = vmatpush1.bf16.msra.mxu0 0
      %784 = vmatprep.subr.bf16.mxu0 0
      %785 = vmatpush1.bf16.msra.mxu0 0
      %786 = vmatprep.subr.bf16.mxu0 0
      %787 = vmatpush1.bf16.msra.mxu0 0
      %788 = vmatprep.subr.bf16.mxu0 0
      %789 = vmatpush1.bf16.msra.mxu0 0
      %790 = vmatprep.subr.bf16.mxu0 0
      %791 = vmatpush1.bf16.msra.mxu0 0
      %792 = vmatprep.subr.bf16.mxu0 0
      %793 = vmatpush1.bf16.msra.mxu0 0
      %794 = vmatprep.subr.bf16.mxu0 0
      %795 = vmatpush1.bf16.msra.mxu0 0
      %796 = vmatprep.subr.bf16.mxu0 0
      %797 = vmatpush1.bf16.msra.mxu0 0
      %798 = vmatprep.mubr.bf16.mxu0 0
      %799 = vmatmul.mubr.bf16.gmra.mrb[0].mxu0 %v648
      %v800 = vpop.f32.mrb[0].mxu0
      %v801 = vadd.f32 %v679, %v800
      %v802 = vpop.f32.mrb[0].mxu0
      %v803 = vadd.f32 %v683, %v802
      %v804 = vpop.f32.mrb[0].mxu0
      %v805 = vadd.f32 %v679, %v804
      %v806 = vpop.f32.mrb[0].mxu0
      %v807 = vadd.f32 %v683, %v806
      %808 = vdwg.mxu0
      %v809 = vpack.c.bf16 %v805, %v801
      %v810 = vpack.c.bf16 %v807, %v803
      %v813 = vunpack.c.l.b16 %v809
      %v814 = vunpack.c.l.b16 %v810
      %v815 = vunpack.c.h.b16 %v809
      %v816 = vunpack.c.h.b16 %v810
      %v817 = vpack.c.b16 %v814, %v813
      %v818 = vpack.c.b16 %v816, %v815
      %821 = vst [vmem:[%s272] sm:$0xff] %v817
      %822 = vst [vmem:[%s272 + $0x8] sm:$0xff] %v818
      %s823 = smul.u32 2, %s18
      %p824 = scmp.lt.s32.totalorder %s823, 3
      %s825 = scalar_select %p824, %s823, 3
      %s826 = smul.addr %s825, 4
      %s827 = scalar_lea.vmem %s5, %s826
      %s828 = smul.u32 2, %s18
      %p829 = scmp.lt.s32.totalorder %s828, 3
      %s830 = scalar_select %p829, %s828, 3
      %s831 = smul.addr %s830, 2
      %s832 = smul.addr %s831, 4
      %s833 = scalar_lea.vmem %s6, %s832
      // Predicated region
      $region41: #{f_random_proj_forward.10} parent=39 // pred_check
        %p834 = pneg %p146
      $region42: #{f_random_proj_forward.10} parent=39 // pred_check_branch
        %836 = sbr.rel (%p834) target = $region44
      $region43: #{f_random_proj_forward.10} parent=39 // pred_region
        %s837 = smul.u32 2, %s18
      $region44: #{f_random_proj_forward.10} parent=39 // pred_fallthru
        _
      // Predicated region
      $region45: #{f_random_proj_forward.10} parent=39 // pred_check
        %p838 = pneg %p172
      $region46: #{f_random_proj_forward.10} parent=39 // pred_check_branch
        %840 = sbr.rel (%p838) target = $region48
      $region47: #{f_random_proj_forward.10} parent=39 // pred_region
        %s841 = smul.u32 2, %s18
      $region48: #{f_random_proj_forward.10} parent=39 // pred_fallthru
        _
    $region40: #{f_random_proj_forward.10} parent=5 // pred_fallthru
      _
    %p842 = scmp.le.s32.totalorder 2, %s13
    // Predicated region
    $region49: #{f_random_proj_forward.10} parent=5 // pred_check
      %p843 = pneg %p842
    $region50: #{f_random_proj_forward.10} parent=5 // pred_check_branch
      %845 = sbr.rel (%p843) target = $region52
    $region51: #{f_random_proj_forward.10} parent=5 // pred_region
      %s846 = ssub.s32 %s13, 2
      // Predicated region
      $region53: #{f_random_proj_forward.10} parent=51 // pred_check
        %p847 = pneg %p152
      $region54: #{f_random_proj_forward.10} parent=51 // pred_check_branch
        %849 = sbr.rel (%p847) target = $region56
      $region55: #{f_random_proj_forward.10} parent=51 // pred_region
        %s850 = smul.u32 2, %s19
        %p851 = scmp.lt.s32.totalorder %s850, 3
        %s852 = scalar_select %p851, %s850, 3
        %s853 = smul.addr %s852, 4
        %s854 = scalar_lea.vmem %s5, %s853
      $region56: #{f_random_proj_forward.10} parent=51 // pred_fallthru
        _
      // Predicated region
      $region57: #{f_random_proj_forward.10} parent=51 // pred_check
        %p855 = pneg %p178
      $region58: #{f_random_proj_forward.10} parent=51 // pred_check_branch
        %857 = sbr.rel (%p855) target = $region60
      $region59: #{f_random_proj_forward.10} parent=51 // pred_region
        %s858 = smul.u32 2, %s19
        %p859 = scmp.lt.s32.totalorder %s858, 3
        %s860 = scalar_select %p859, %s858, 3
        %s861 = smul.addr %s860, 2
        %s862 = smul.addr %s861, 4
        %s863 = scalar_lea.vmem %s6, %s862
      $region60: #{f_random_proj_forward.10} parent=51 // pred_fallthru
        _
    $region52: #{f_random_proj_forward.10} parent=5 // pred_fallthru
      _
  $region6: #{f_random_proj_forward.10} parent=0 // loop_footer
    %s17 = sadd.s32 1, %s13
  $region7: #{f_random_proj_forward.10} parent=0 // loop_footer_branch
    %12 = sbr.rel target = $region3
  $region8: #{f_random_proj_forward.10} parent=0 // loop_exit
    _

// kernel: f_random_proj_forward.11
$region0: #{f_random_proj_forward.11}
  #allocation0 [shape = 'u32[]', space=smem, size = 0x4, offset = 0x4, fixed_abs, tag = 'smem constant byte address 0x4 - core index']
  #allocation1 [shape = 'u32[144,128]{1,0:T(1,128)}', space=vmem, size = 0x12000, scoped, tag = 'internal scratch']
  %s0 = inlined_call_operand.vmem [shape: bf16[8,512], index: 0, kind: input, shape index: {}]
  %s1 = inlined_call_operand.vmem [shape: bf16[512,320], index: 1, kind: input, shape index: {}]
  %s2 = inlined_call_operand.vmem [shape: f32[1,320], index: 2, kind: input, shape index: {}]
  %s3 = inlined_call_operand.vmem [shape: bf16[320,512], index: 3, kind: input, shape index: {}]
  %s4 = inlined_call_operand.vmem [shape: f32[1,512], index: 4, kind: input, shape index: {}]
  %s5 = inlined_call_operand.vmem [shape: bf16[8,512], index: 5, kind: output, shape index: {}]
  %s6 = sld [smem:[#allocation0]]
  $region30: #{f_random_proj_forward.11} parent=0
    _
  %s8 = ssub.s32 1, %s6
  %s9 = scalar_select 0, %s8, %s6
  // Predicated region
  $region2: #{f_random_proj_forward.11} parent=0 // pred_check
    _
  $region3: #{f_random_proj_forward.11} parent=0 // pred_check_branch
    %11 = sbr.rel (0) target = $region5
  $region4: #{f_random_proj_forward.11} parent=0 // pred_region
    _
  $region5: #{f_random_proj_forward.11} parent=0 // pred_fallthru
    _
  // Predicated region
  $region6: #{f_random_proj_forward.11} parent=0 // pred_check
    _
  $region7: #{f_random_proj_forward.11} parent=0 // pred_check_branch
    %13 = sbr.rel (0) target = $region9
  $region8: #{f_random_proj_forward.11} parent=0 // pred_region
    _
  $region9: #{f_random_proj_forward.11} parent=0 // pred_fallthru
    _
  // Predicated region
  $region10: #{f_random_proj_forward.11} parent=0 // pred_check
    _
  $region11: #{f_random_proj_forward.11} parent=0 // pred_check_branch
    %15 = sbr.rel (0) target = $region13
  $region12: #{f_random_proj_forward.11} parent=0 // pred_region
    _
  $region13: #{f_random_proj_forward.11} parent=0 // pred_fallthru
    _
  // Predicated region
  $region14: #{f_random_proj_forward.11} parent=0 // pred_check
    _
  $region15: #{f_random_proj_forward.11} parent=0 // pred_check_branch
    %17 = sbr.rel (0) target = $region17
  $region16: #{f_random_proj_forward.11} parent=0 // pred_region
    _
  $region17: #{f_random_proj_forward.11} parent=0 // pred_fallthru
    _
  // Predicated region
  $region18: #{f_random_proj_forward.11} parent=0 // pred_check
    _
  $region19: #{f_random_proj_forward.11} parent=0 // pred_check_branch
    %19 = sbr.rel (0) target = $region21
  $region20: #{f_random_proj_forward.11} parent=0 // pred_region
    _
  $region21: #{f_random_proj_forward.11} parent=0 // pred_fallthru
    _
  %v21 = vld [vmem:[%s0] sm:$0xff]
  %v22 = vld [vmem:[%s0 + $0x8] sm:$0xff]
  %v23 = vld [vmem:[%s1] sm:$0xff]
  %v24 = vld [vmem:[%s1 + $0x8] sm:$0xf]
  %v25 = vld [vmem:[%s1 + $0xc] sm:$0xff]
  %v26 = vld [vmem:[%s1 + $0x14] sm:$0xf]
  %v27 = vld [vmem:[%s1 + $0x18] sm:$0xff]
  %v28 = vld [vmem:[%s1 + $0x20] sm:$0xf]
  %v29 = vld [vmem:[%s1 + $0x24] sm:$0xff]
  %v30 = vld [vmem:[%s1 + $0x2c] sm:$0xf]
  %v31 = vld [vmem:[%s1 + $0x30] sm:$0xff]
  %v32 = vld [vmem:[%s1 + $0x38] sm:$0xf]
  %v33 = vld [vmem:[%s1 + $0x3c] sm:$0xff]
  %v34 = vld [vmem:[%s1 + $0x44] sm:$0xf]
  %v35 = vld [vmem:[%s1 + $0x48] sm:$0xff]
  %v36 = vld [vmem:[%s1 + $0x50] sm:$0xf]
  %v37 = vld [vmem:[%s1 + $0x54] sm:$0xff]
  %v38 = vld [vmem:[%s1 + $0x5c] sm:$0xf]
  %v39 = vld [vmem:[%s1 + $0x60] sm:$0xff]
  %v40 = vld [vmem:[%s1 + $0x68] sm:$0xf]
  %v41 = vld [vmem:[%s1 + $0x6c] sm:$0xff]
  %v42 = vld [vmem:[%s1 + $0x74] sm:$0xf]
  %v43 = vld [vmem:[%s1 + $0x78] sm:$0xff]
  %v44 = vld [vmem:[%s1 + $0x80] sm:$0xf]
  %v45 = vld [vmem:[%s1 + $0x84] sm:$0xff]
  %v46 = vld [vmem:[%s1 + $0x8c] sm:$0xf]
  %v47 = vld [vmem:[%s1 + $0x90] sm:$0xff]
  %v48 = vld [vmem:[%s1 + $0x98] sm:$0xf]
  %v49 = vld [vmem:[%s1 + $0x9c] sm:$0xff]
  %v50 = vld [vmem:[%s1 + $0xa4] sm:$0xf]
  %v51 = vld [vmem:[%s1 + $0xa8] sm:$0xff]
  %v52 = vld [vmem:[%s1 + $0xb0] sm:$0xf]
  %v53 = vld [vmem:[%s1 + $0xb4] sm:$0xff]
  %v54 = vld [vmem:[%s1 + $0xbc] sm:$0xf]
  %v55 = vld [vmem:[%s1 + $0xc0] sm:$0xff]
  %v56 = vld [vmem:[%s1 + $0xc8] sm:$0xf]
  %v57 = vld [vmem:[%s1 + $0xcc] sm:$0xff]
  %v58 = vld [vmem:[%s1 + $0xd4] sm:$0xf]
  %v59 = vld [vmem:[%s1 + $0xd8] sm:$0xff]
  %v60 = vld [vmem:[%s1 + $0xe0] sm:$0xf]
  %v61 = vld [vmem:[%s1 + $0xe4] sm:$0xff]
  %v62 = vld [vmem:[%s1 + $0xec] sm:$0xf]
  %v63 = vld [vmem:[%s1 + $0xf0] sm:$0xff]
  %v64 = vld [vmem:[%s1 + $0xf8] sm:$0xf]
  %v65 = vld [vmem:[%s1 + $0xfc] sm:$0xff]
  %v66 = vld [vmem:[%s1 + $0x104] sm:$0xf]
  %v67 = vld [vmem:[%s1 + $0x108] sm:$0xff]
  %v68 = vld [vmem:[%s1 + $0x110] sm:$0xf]
  %v69 = vld [vmem:[%s1 + $0x114] sm:$0xff]
  %v70 = vld [vmem:[%s1 + $0x11c] sm:$0xf]
  %v71 = vld [vmem:[%s1 + $0x120] sm:$0xff]
  %v72 = vld [vmem:[%s1 + $0x128] sm:$0xf]
  %v73 = vld [vmem:[%s1 + $0x12c] sm:$0xff]
  %v74 = vld [vmem:[%s1 + $0x134] sm:$0xf]
  %v75 = vld [vmem:[%s1 + $0x138] sm:$0xff]
  %v76 = vld [vmem:[%s1 + $0x140] sm:$0xf]
  %v77 = vld [vmem:[%s1 + $0x144] sm:$0xff]
  %v78 = vld [vmem:[%s1 + $0x14c] sm:$0xf]
  %v79 = vld [vmem:[%s1 + $0x150] sm:$0xff]
  %v80 = vld [vmem:[%s1 + $0x158] sm:$0xf]
  %v81 = vld [vmem:[%s1 + $0x15c] sm:$0xff]
  %v82 = vld [vmem:[%s1 + $0x164] sm:$0xf]
  %v83 = vld [vmem:[%s1 + $0x168] sm:$0xff]
  %v84 = vld [vmem:[%s1 + $0x170] sm:$0xf]
  %v85 = vld [vmem:[%s1 + $0x174] sm:$0xff]
  %v86 = vld [vmem:[%s1 + $0x17c] sm:$0xf]
  %v87 = vld [vmem:[%s1 + $0x180] sm:$0xff]
  %v88 = vld [vmem:[%s1 + $0x188] sm:$0xf]
  %v89 = vld [vmem:[%s1 + $0x18c] sm:$0xff]
  %v90 = vld [vmem:[%s1 + $0x194] sm:$0xf]
  %v91 = vld [vmem:[%s1 + $0x198] sm:$0xff]
  %v92 = vld [vmem:[%s1 + $0x1a0] sm:$0xf]
  %v93 = vld [vmem:[%s1 + $0x1a4] sm:$0xff]
  %v94 = vld [vmem:[%s1 + $0x1ac] sm:$0xf]
  %v95 = vld [vmem:[%s1 + $0x1b0] sm:$0xff]
  %v96 = vld [vmem:[%s1 + $0x1b8] sm:$0xf]
  %v97 = vld [vmem:[%s1 + $0x1bc] sm:$0xff]
  %v98 = vld [vmem:[%s1 + $0x1c4] sm:$0xf]
  %v99 = vld [vmem:[%s1 + $0x1c8] sm:$0xff]
  %v100 = vld [vmem:[%s1 + $0x1d0] sm:$0xf]
  %v101 = vld [vmem:[%s1 + $0x1d4] sm:$0xff]
  %v102 = vld [vmem:[%s1 + $0x1dc] sm:$0xf]
  %v103 = vld [vmem:[%s1 + $0x1e0] sm:$0xff]
  %v104 = vld [vmem:[%s1 + $0x1e8] sm:$0xf]
  %v105 = vld [vmem:[%s1 + $0x1ec] sm:$0xff]
  %v106 = vld [vmem:[%s1 + $0x1f4] sm:$0xf]
  %v107 = vld [vmem:[%s1 + $0x1f8] sm:$0xff]
  %v108 = vld [vmem:[%s1 + $0x200] sm:$0xf]
  %v109 = vld [vmem:[%s1 + $0x204] sm:$0xff]
  %v110 = vld [vmem:[%s1 + $0x20c] sm:$0xf]
  %v111 = vld [vmem:[%s1 + $0x210] sm:$0xff]
  %v112 = vld [vmem:[%s1 + $0x218] sm:$0xf]
  %v113 = vld [vmem:[%s1 + $0x21c] sm:$0xff]
  %v114 = vld [vmem:[%s1 + $0x224] sm:$0xf]
  %v115 = vld [vmem:[%s1 + $0x228] sm:$0xff]
  %v116 = vld [vmem:[%s1 + $0x230] sm:$0xf]
  %v117 = vld [vmem:[%s1 + $0x234] sm:$0xff]
  %v118 = vld [vmem:[%s1 + $0x23c] sm:$0xf]
  %v119 = vld [vmem:[%s1 + $0x240] sm:$0xff]
  %v120 = vld [vmem:[%s1 + $0x248] sm:$0xf]
  %v121 = vld [vmem:[%s1 + $0x24c] sm:$0xff]
  %v122 = vld [vmem:[%s1 + $0x254] sm:$0xf]
  %v123 = vld [vmem:[%s1 + $0x258] sm:$0xff]
  %v124 = vld [vmem:[%s1 + $0x260] sm:$0xf]
  %v125 = vld [vmem:[%s1 + $0x264] sm:$0xff]
  %v126 = vld [vmem:[%s1 + $0x26c] sm:$0xf]
  %v127 = vld [vmem:[%s1 + $0x270] sm:$0xff]
  %v128 = vld [vmem:[%s1 + $0x278] sm:$0xf]
  %v129 = vld [vmem:[%s1 + $0x27c] sm:$0xff]
  %v130 = vld [vmem:[%s1 + $0x284] sm:$0xf]
  %v131 = vld [vmem:[%s1 + $0x288] sm:$0xff]
  %v132 = vld [vmem:[%s1 + $0x290] sm:$0xf]
  %v133 = vld [vmem:[%s1 + $0x294] sm:$0xff]
  %v134 = vld [vmem:[%s1 + $0x29c] sm:$0xf]
  %v135 = vld [vmem:[%s1 + $0x2a0] sm:$0xff]
  %v136 = vld [vmem:[%s1 + $0x2a8] sm:$0xf]
  %v137 = vld [vmem:[%s1 + $0x2ac] sm:$0xff]
  %v138 = vld [vmem:[%s1 + $0x2b4] sm:$0xf]
  %v139 = vld [vmem:[%s1 + $0x2b8] sm:$0xff]
  %v140 = vld [vmem:[%s1 + $0x2c0] sm:$0xf]
  %v141 = vld [vmem:[%s1 + $0x2c4] sm:$0xff]
  %v142 = vld [vmem:[%s1 + $0x2cc] sm:$0xf]
  %v143 = vld [vmem:[%s1 + $0x2d0] sm:$0xff]
  %v144 = vld [vmem:[%s1 + $0x2d8] sm:$0xf]
  %v145 = vld [vmem:[%s1 + $0x2dc] sm:$0xff]
  %v146 = vld [vmem:[%s1 + $0x2e4] sm:$0xf]
  %v147 = vld [vmem:[%s1 + $0x2e8] sm:$0xff]
  %v148 = vld [vmem:[%s1 + $0x2f0] sm:$0xf]
  %v149 = vld [vmem:[%s1 + $0x2f4] sm:$0xff]
  %v150 = vld [vmem:[%s1 + $0x2fc] sm:$0xf]
  %v151 = vld [vmem:[%s2] sm:$0x7]
  %v153 = vlaneseq
  %v154 = vshrl.u32 %v153, 7
  %v155 = vsub.s32 0, %v154
  %v156 = vrot.slane %v151, %v155
  %v157 = vlaneseq
  %v158 = vshrl.u32 %v157, 7
  %v159 = vsub.s32 1, %v158
  %v160 = vrot.slane %v151, %v159
  %v161 = vlaneseq
  %v162 = vshrl.u32 %v161, 7
  %v163 = vsub.s32 2, %v162
  %v164 = vrot.slane %v151, %v163
  %v170 = vunpack.c.l.b16 %v21
  %v171 = vunpack.c.h.b16 %v21
  %v172 = vunpack.c.l.b16 %v22
  %v173 = vunpack.c.h.b16 %v22
  %v174 = vpack.c.b16 %v170, %v170
  %v175 = vpack.c.b16 %v171, %v171
  %v176 = vpack.c.b16 %v172, %v172
  %v177 = vpack.c.b16 %v173, %v173
  %v310 = vunpack.c.l.b16 %v23
  %v311 = vunpack.c.h.b16 %v23
  %v312 = vunpack.c.l.b16 %v24
  %v313 = vunpack.c.l.b16 %v25
  %v314 = vunpack.c.h.b16 %v25
  %v315 = vunpack.c.l.b16 %v26
  %v316 = vunpack.c.l.b16 %v27
  %v317 = vunpack.c.h.b16 %v27
  %v318 = vunpack.c.l.b16 %v28
  %v319 = vunpack.c.l.b16 %v29
  %v320 = vunpack.c.h.b16 %v29
  %v321 = vunpack.c.l.b16 %v30
  %v322 = vunpack.c.l.b16 %v31
  %v323 = vunpack.c.h.b16 %v31
  %v324 = vunpack.c.l.b16 %v32
  %v325 = vunpack.c.l.b16 %v33
  %v326 = vunpack.c.h.b16 %v33
  %v327 = vunpack.c.l.b16 %v34
  %v328 = vunpack.c.l.b16 %v35
  %v329 = vunpack.c.h.b16 %v35
  %v330 = vunpack.c.l.b16 %v36
  %v331 = vunpack.c.l.b16 %v37
  %v332 = vunpack.c.h.b16 %v37
  %v333 = vunpack.c.l.b16 %v38
  %v334 = vunpack.c.l.b16 %v39
  %v335 = vunpack.c.h.b16 %v39
  %v336 = vunpack.c.l.b16 %v40
  %v337 = vunpack.c.l.b16 %v41
  %v338 = vunpack.c.h.b16 %v41
  %v339 = vunpack.c.l.b16 %v42
  %v340 = vunpack.c.l.b16 %v43
  %v341 = vunpack.c.h.b16 %v43
  %v342 = vunpack.c.l.b16 %v44
  %v343 = vunpack.c.l.b16 %v45
  %v344 = vunpack.c.h.b16 %v45
  %v345 = vunpack.c.l.b16 %v46
  %v346 = vunpack.c.l.b16 %v47
  %v347 = vunpack.c.h.b16 %v47
  %v348 = vunpack.c.l.b16 %v48
  %v349 = vunpack.c.l.b16 %v49
  %v350 = vunpack.c.h.b16 %v49
  %v351 = vunpack.c.l.b16 %v50
  %v352 = vunpack.c.l.b16 %v51
  %v353 = vunpack.c.h.b16 %v51
  %v354 = vunpack.c.l.b16 %v52
  %v355 = vunpack.c.l.b16 %v53
  %v356 = vunpack.c.h.b16 %v53
  %v357 = vunpack.c.l.b16 %v54
  %v358 = vunpack.c.l.b16 %v55
  %v359 = vunpack.c.h.b16 %v55
  %v360 = vunpack.c.l.b16 %v56
  %v361 = vunpack.c.l.b16 %v57
  %v362 = vunpack.c.h.b16 %v57
  %v363 = vunpack.c.l.b16 %v58
  %v364 = vunpack.c.l.b16 %v59
  %v365 = vunpack.c.h.b16 %v59
  %v366 = vunpack.c.l.b16 %v60
  %v367 = vunpack.c.l.b16 %v61
  %v368 = vunpack.c.h.b16 %v61
  %v369 = vunpack.c.l.b16 %v62
  %v370 = vunpack.c.l.b16 %v63
  %v371 = vunpack.c.h.b16 %v63
  %v372 = vunpack.c.l.b16 %v64
  %v373 = vunpack.c.l.b16 %v65
  %v374 = vunpack.c.h.b16 %v65
  %v375 = vunpack.c.l.b16 %v66
  %v376 = vunpack.c.l.b16 %v67
  %v377 = vunpack.c.h.b16 %v67
  %v378 = vunpack.c.l.b16 %v68
  %v379 = vunpack.c.l.b16 %v69
  %v380 = vunpack.c.h.b16 %v69
  %v381 = vunpack.c.l.b16 %v70
  %v382 = vunpack.c.l.b16 %v71
  %v383 = vunpack.c.h.b16 %v71
  %v384 = vunpack.c.l.b16 %v72
  %v385 = vunpack.c.l.b16 %v73
  %v386 = vunpack.c.h.b16 %v73
  %v387 = vunpack.c.l.b16 %v74
  %v388 = vunpack.c.l.b16 %v75
  %v389 = vunpack.c.h.b16 %v75
  %v390 = vunpack.c.l.b16 %v76
  %v391 = vunpack.c.l.b16 %v77
  %v392 = vunpack.c.h.b16 %v77
  %v393 = vunpack.c.l.b16 %v78
  %v394 = vunpack.c.l.b16 %v79
  %v395 = vunpack.c.h.b16 %v79
  %v396 = vunpack.c.l.b16 %v80
  %v397 = vunpack.c.l.b16 %v81
  %v398 = vunpack.c.h.b16 %v81
  %v399 = vunpack.c.l.b16 %v82
  %v400 = vunpack.c.l.b16 %v83
  %v401 = vunpack.c.h.b16 %v83
  %v402 = vunpack.c.l.b16 %v84
  %v403 = vunpack.c.l.b16 %v85
  %v404 = vunpack.c.h.b16 %v85
  %v405 = vunpack.c.l.b16 %v86
  %v406 = vunpack.c.l.b16 %v87
  %v407 = vunpack.c.h.b16 %v87
  %v408 = vunpack.c.l.b16 %v88
  %v409 = vunpack.c.l.b16 %v89
  %v410 = vunpack.c.h.b16 %v89
  %v411 = vunpack.c.l.b16 %v90
  %v412 = vunpack.c.l.b16 %v91
  %v413 = vunpack.c.h.b16 %v91
  %v414 = vunpack.c.l.b16 %v92
  %v415 = vunpack.c.l.b16 %v93
  %v416 = vunpack.c.h.b16 %v93
  %v417 = vunpack.c.l.b16 %v94
  %v418 = vunpack.c.l.b16 %v95
  %v419 = vunpack.c.h.b16 %v95
  %v420 = vunpack.c.l.b16 %v96
  %v421 = vunpack.c.l.b16 %v97
  %v422 = vunpack.c.h.b16 %v97
  %v423 = vunpack.c.l.b16 %v98
  %v424 = vunpack.c.l.b16 %v99
  %v425 = vunpack.c.h.b16 %v99
  %v426 = vunpack.c.l.b16 %v100
  %v427 = vunpack.c.l.b16 %v101
  %v428 = vunpack.c.h.b16 %v101
  %v429 = vunpack.c.l.b16 %v102
  %v430 = vunpack.c.l.b16 %v103
  %v431 = vunpack.c.h.b16 %v103
  %v432 = vunpack.c.l.b16 %v104
  %v433 = vunpack.c.l.b16 %v105
  %v434 = vunpack.c.h.b16 %v105
  %v435 = vunpack.c.l.b16 %v106
  %v436 = vunpack.c.l.b16 %v107
  %v437 = vunpack.c.h.b16 %v107
  %v438 = vunpack.c.l.b16 %v108
  %v439 = vunpack.c.l.b16 %v109
  %v440 = vunpack.c.h.b16 %v109
  %v441 = vunpack.c.l.b16 %v110
  %v442 = vunpack.c.l.b16 %v111
  %v443 = vunpack.c.h.b16 %v111
  %v444 = vunpack.c.l.b16 %v112
  %v445 = vunpack.c.l.b16 %v113
  %v446 = vunpack.c.h.b16 %v113
  %v447 = vunpack.c.l.b16 %v114
  %v448 = vunpack.c.l.b16 %v115
  %v449 = vunpack.c.h.b16 %v115
  %v450 = vunpack.c.l.b16 %v116
  %v451 = vunpack.c.l.b16 %v117
  %v452 = vunpack.c.h.b16 %v117
  %v453 = vunpack.c.l.b16 %v118
  %v454 = vunpack.c.l.b16 %v119
  %v455 = vunpack.c.h.b16 %v119
  %v456 = vunpack.c.l.b16 %v120
  %v457 = vunpack.c.l.b16 %v121
  %v458 = vunpack.c.h.b16 %v121
  %v459 = vunpack.c.l.b16 %v122
  %v460 = vunpack.c.l.b16 %v123
  %v461 = vunpack.c.h.b16 %v123
  %v462 = vunpack.c.l.b16 %v124
  %v463 = vunpack.c.l.b16 %v125
  %v464 = vunpack.c.h.b16 %v125
  %v465 = vunpack.c.l.b16 %v126
  %v466 = vunpack.c.l.b16 %v127
  %v467 = vunpack.c.h.b16 %v127
  %v468 = vunpack.c.l.b16 %v128
  %v469 = vunpack.c.l.b16 %v129
  %v470 = vunpack.c.h.b16 %v129
  %v471 = vunpack.c.l.b16 %v130
  %v472 = vunpack.c.l.b16 %v131
  %v473 = vunpack.c.h.b16 %v131
  %v474 = vunpack.c.l.b16 %v132
  %v475 = vunpack.c.l.b16 %v133
  %v476 = vunpack.c.h.b16 %v133
  %v477 = vunpack.c.l.b16 %v134
  %v478 = vunpack.c.l.b16 %v135
  %v479 = vunpack.c.h.b16 %v135
  %v480 = vunpack.c.l.b16 %v136
  %v481 = vunpack.c.l.b16 %v137
  %v482 = vunpack.c.h.b16 %v137
  %v483 = vunpack.c.l.b16 %v138
  %v484 = vunpack.c.l.b16 %v139
  %v485 = vunpack.c.h.b16 %v139
  %v486 = vunpack.c.l.b16 %v140
  %v487 = vunpack.c.l.b16 %v141
  %v488 = vunpack.c.h.b16 %v141
  %v489 = vunpack.c.l.b16 %v142
  %v490 = vunpack.c.l.b16 %v143
  %v491 = vunpack.c.h.b16 %v143
  %v492 = vunpack.c.l.b16 %v144
  %v493 = vunpack.c.l.b16 %v145
  %v494 = vunpack.c.h.b16 %v145
  %v495 = vunpack.c.l.b16 %v146
  %v496 = vunpack.c.l.b16 %v147
  %v497 = vunpack.c.h.b16 %v147
  %v498 = vunpack.c.l.b16 %v148
  %v499 = vunpack.c.l.b16 %v149
  %v500 = vunpack.c.h.b16 %v149
  %v501 = vunpack.c.l.b16 %v150
  %v502 = vpack.c.b16 %v313, %v310
  %v503 = vpack.c.b16 %v314, %v311
  %v504 = vpack.c.b16 %v315, %v312
  %v505 = vpack.c.b16 %v319, %v316
  %v506 = vpack.c.b16 %v320, %v317
  %v507 = vpack.c.b16 %v321, %v318
  %v508 = vpack.c.b16 %v325, %v322
  %v509 = vpack.c.b16 %v326, %v323
  %v510 = vpack.c.b16 %v327, %v324
  %v511 = vpack.c.b16 %v331, %v328
  %v512 = vpack.c.b16 %v332, %v329
  %v513 = vpack.c.b16 %v333, %v330
  %v514 = vpack.c.b16 %v337, %v334
  %v515 = vpack.c.b16 %v338, %v335
  %v516 = vpack.c.b16 %v339, %v336
  %v517 = vpack.c.b16 %v343, %v340
  %v518 = vpack.c.b16 %v344, %v341
  %v519 = vpack.c.b16 %v345, %v342
  %v520 = vpack.c.b16 %v349, %v346
  %v521 = vpack.c.b16 %v350, %v347
  %v522 = vpack.c.b16 %v351, %v348
  %v523 = vpack.c.b16 %v355, %v352
  %v524 = vpack.c.b16 %v356, %v353
  %v525 = vpack.c.b16 %v357, %v354
  %v526 = vpack.c.b16 %v361, %v358
  %v527 = vpack.c.b16 %v362, %v359
  %v528 = vpack.c.b16 %v363, %v360
  %v529 = vpack.c.b16 %v367, %v364
  %v530 = vpack.c.b16 %v368, %v365
  %v531 = vpack.c.b16 %v369, %v366
  %v532 = vpack.c.b16 %v373, %v370
  %v533 = vpack.c.b16 %v374, %v371
  %v534 = vpack.c.b16 %v375, %v372
  %v535 = vpack.c.b16 %v379, %v376
  %v536 = vpack.c.b16 %v380, %v377
  %v537 = vpack.c.b16 %v381, %v378
  %v538 = vpack.c.b16 %v385, %v382
  %v539 = vpack.c.b16 %v386, %v383
  %v540 = vpack.c.b16 %v387, %v384
  %v541 = vpack.c.b16 %v391, %v388
  %v542 = vpack.c.b16 %v392, %v389
  %v543 = vpack.c.b16 %v393, %v390
  %v544 = vpack.c.b16 %v397, %v394
  %v545 = vpack.c.b16 %v398, %v395
  %v546 = vpack.c.b16 %v399, %v396
  %v547 = vpack.c.b16 %v403, %v400
  %v548 = vpack.c.b16 %v404, %v401
  %v549 = vpack.c.b16 %v405, %v402
  %v550 = vpack.c.b16 %v409, %v406
  %v551 = vpack.c.b16 %v410, %v407
  %v552 = vpack.c.b16 %v411, %v408
  %v553 = vpack.c.b16 %v415, %v412
  %v554 = vpack.c.b16 %v416, %v413
  %v555 = vpack.c.b16 %v417, %v414
  %v556 = vpack.c.b16 %v421, %v418
  %v557 = vpack.c.b16 %v422, %v419
  %v558 = vpack.c.b16 %v423, %v420
  %v559 = vpack.c.b16 %v427, %v424
  %v560 = vpack.c.b16 %v428, %v425
  %v561 = vpack.c.b16 %v429, %v426
  %v562 = vpack.c.b16 %v433, %v430
  %v563 = vpack.c.b16 %v434, %v431
  %v564 = vpack.c.b16 %v435, %v432
  %v565 = vpack.c.b16 %v439, %v436
  %v566 = vpack.c.b16 %v440, %v437
  %v567 = vpack.c.b16 %v441, %v438
  %v568 = vpack.c.b16 %v445, %v442
  %v569 = vpack.c.b16 %v446, %v443
  %v570 = vpack.c.b16 %v447, %v444
  %v571 = vpack.c.b16 %v451, %v448
  %v572 = vpack.c.b16 %v452, %v449
  %v573 = vpack.c.b16 %v453, %v450
  %v574 = vpack.c.b16 %v457, %v454
  %v575 = vpack.c.b16 %v458, %v455
  %v576 = vpack.c.b16 %v459, %v456
  %v577 = vpack.c.b16 %v463, %v460
  %v578 = vpack.c.b16 %v464, %v461
  %v579 = vpack.c.b16 %v465, %v462
  %v580 = vpack.c.b16 %v469, %v466
  %v581 = vpack.c.b16 %v470, %v467
  %v582 = vpack.c.b16 %v471, %v468
  %v583 = vpack.c.b16 %v475, %v472
  %v584 = vpack.c.b16 %v476, %v473
  %v585 = vpack.c.b16 %v477, %v474
  %v586 = vpack.c.b16 %v481, %v478
  %v587 = vpack.c.b16 %v482, %v479
  %v588 = vpack.c.b16 %v483, %v480
  %v589 = vpack.c.b16 %v487, %v484
  %v590 = vpack.c.b16 %v488, %v485
  %v591 = vpack.c.b16 %v489, %v486
  %v592 = vpack.c.b16 %v493, %v490
  %v593 = vpack.c.b16 %v494, %v491
  %v594 = vpack.c.b16 %v495, %v492
  %v595 = vpack.c.b16 %v499, %v496
  %v596 = vpack.c.b16 %v500, %v497
  %v597 = vpack.c.b16 %v501, %v498
  %694 = vmatprep.subr.bf16.mxu0 %v503
  %695 = vmatpush1.bf16.msra.mxu0 %v502
  %696 = vmatprep.subr.bf16.mxu0 %v506
  %697 = vmatpush1.bf16.msra.mxu0 %v505
  %698 = vmatprep.subr.bf16.mxu0 %v509
  %699 = vmatpush1.bf16.msra.mxu0 %v508
  %700 = vmatprep.subr.bf16.mxu0 %v512
  %701 = vmatpush1.bf16.msra.mxu0 %v511
  %702 = vmatprep.subr.bf16.mxu0 %v515
  %703 = vmatpush1.bf16.msra.mxu0 %v514
  %704 = vmatprep.subr.bf16.mxu0 %v518
  %705 = vmatpush1.bf16.msra.mxu0 %v517
  %706 = vmatprep.subr.bf16.mxu0 %v521
  %707 = vmatpush1.bf16.msra.mxu0 %v520
  %708 = vmatprep.subr.bf16.mxu0 %v524
  %709 = vmatpush1.bf16.msra.mxu0 %v523
  %710 = vmatprep.subr.bf16.mxu0 %v527
  %711 = vmatpush1.bf16.msra.mxu0 %v526
  %712 = vmatprep.subr.bf16.mxu0 %v530
  %713 = vmatpush1.bf16.msra.mxu0 %v529
  %714 = vmatprep.subr.bf16.mxu0 %v533
  %715 = vmatpush1.bf16.msra.mxu0 %v532
  %716 = vmatprep.subr.bf16.mxu0 %v536
  %717 = vmatpush1.bf16.msra.mxu0 %v535
  %718 = vmatprep.subr.bf16.mxu0 %v539
  %719 = vmatpush1.bf16.msra.mxu0 %v538
  %720 = vmatprep.subr.bf16.mxu0 %v542
  %721 = vmatpush1.bf16.msra.mxu0 %v541
  %722 = vmatprep.subr.bf16.mxu0 %v545
  %723 = vmatpush1.bf16.msra.mxu0 %v544
  %724 = vmatprep.subr.bf16.mxu0 %v548
  %725 = vmatpush1.bf16.msra.mxu0 %v547
  %726 = vmatprep.mubr.bf16.mxu0 %v175
  %727 = vmatmul.mubr.bf16.gmra.mrb[0].mxu0 %v174
  %v728 = vpop.f32.mrb[0].mxu0
  %v729 = vadd.f32 %v156, %v728
  %v730 = vpop.f32.mrb[0].mxu0
  %v731 = vadd.f32 %v160, %v730
  %v732 = vpop.f32.mrb[0].mxu0
  %v733 = vpop.f32.mrb[0].mxu0
  %734 = vdwg.mxu0
  %735 = vmatprep.subr.bf16.mxu0 %v551
  %736 = vmatpush1.bf16.msra.mxu0 %v550
  %737 = vmatprep.subr.bf16.mxu0 %v554
  %738 = vmatpush1.bf16.msra.mxu0 %v553
  %739 = vmatprep.subr.bf16.mxu0 %v557
  %740 = vmatpush1.bf16.msra.mxu0 %v556
  %741 = vmatprep.subr.bf16.mxu0 %v560
  %742 = vmatpush1.bf16.msra.mxu0 %v559
  %743 = vmatprep.subr.bf16.mxu0 %v563
  %744 = vmatpush1.bf16.msra.mxu0 %v562
  %745 = vmatprep.subr.bf16.mxu0 %v566
  %746 = vmatpush1.bf16.msra.mxu0 %v565
  %747 = vmatprep.subr.bf16.mxu0 %v569
  %748 = vmatpush1.bf16.msra.mxu0 %v568
  %749 = vmatprep.subr.bf16.mxu0 %v572
  %750 = vmatpush1.bf16.msra.mxu0 %v571
  %751 = vmatprep.subr.bf16.mxu0 %v575
  %752 = vmatpush1.bf16.msra.mxu0 %v574
  %753 = vmatprep.subr.bf16.mxu0 %v578
  %754 = vmatpush1.bf16.msra.mxu0 %v577
  %755 = vmatprep.subr.bf16.mxu0 %v581
  %756 = vmatpush1.bf16.msra.mxu0 %v580
  %757 = vmatprep.subr.bf16.mxu0 %v584
  %758 = vmatpush1.bf16.msra.mxu0 %v583
  %759 = vmatprep.subr.bf16.mxu0 %v587
  %760 = vmatpush1.bf16.msra.mxu0 %v586
  %761 = vmatprep.subr.bf16.mxu0 %v590
  %762 = vmatpush1.bf16.msra.mxu0 %v589
  %763 = vmatprep.subr.bf16.mxu0 %v593
  %764 = vmatpush1.bf16.msra.mxu0 %v592
  %765 = vmatprep.subr.bf16.mxu0 %v596
  %766 = vmatpush1.bf16.msra.mxu0 %v595
  %767 = vmatprep.mubr.bf16.mxu0 %v177
  %768 = vmatmul.mubr.bf16.gmra.mrb[0].mxu0 %v176
  %v769 = vpop.f32.mrb[0].mxu0
  %v770 = vadd.f32 %v729, %v769
  %v771 = vpop.f32.mrb[0].mxu0
  %v772 = vadd.f32 %v731, %v771
  %v773 = vpop.f32.mrb[0].mxu0
  %v774 = vpop.f32.mrb[0].mxu0
  %775 = vdwg.mxu0
  %776 = vmatprep.subr.bf16.mxu0 0
  %777 = vmatpush1.bf16.msra.mxu0 %v504
  %778 = vmatprep.subr.bf16.mxu0 0
  %779 = vmatpush1.bf16.msra.mxu0 %v507
  %780 = vmatprep.subr.bf16.mxu0 0
  %781 = vmatpush1.bf16.msra.mxu0 %v510
  %782 = vmatprep.subr.bf16.mxu0 0
  %783 = vmatpush1.bf16.msra.mxu0 %v513
  %784 = vmatprep.subr.bf16.mxu0 0
  %785 = vmatpush1.bf16.msra.mxu0 %v516
  %786 = vmatprep.subr.bf16.mxu0 0
  %787 = vmatpush1.bf16.msra.mxu0 %v519
  %788 = vmatprep.subr.bf16.mxu0 0
  %789 = vmatpush1.bf16.msra.mxu0 %v522
  %790 = vmatprep.subr.bf16.mxu0 0
  %791 = vmatpush1.bf16.msra.mxu0 %v525
  %792 = vmatprep.subr.bf16.mxu0 0
  %793 = vmatpush1.bf16.msra.mxu0 %v528
  %794 = vmatprep.subr.bf16.mxu0 0
  %795 = vmatpush1.bf16.msra.mxu0 %v531
  %796 = vmatprep.subr.bf16.mxu0 0
  %797 = vmatpush1.bf16.msra.mxu0 %v534
  %798 = vmatprep.subr.bf16.mxu0 0
  %799 = vmatpush1.bf16.msra.mxu0 %v537
  %800 = vmatprep.subr.bf16.mxu0 0
  %801 = vmatpush1.bf16.msra.mxu0 %v540
  %802 = vmatprep.subr.bf16.mxu0 0
  %803 = vmatpush1.bf16.msra.mxu0 %v543
  %804 = vmatprep.subr.bf16.mxu0 0
  %805 = vmatpush1.bf16.msra.mxu0 %v546
  %806 = vmatprep.subr.bf16.mxu0 0
  %807 = vmatpush1.bf16.msra.mxu0 %v549
  %808 = vmatprep.mubr.bf16.mxu0 %v175
  %809 = vmatmul.mubr.bf16.gmra.mrb[0].mxu0 %v174
  %v810 = vpop.f32.mrb[0].mxu0
  %v811 = vadd.f32 %v164, %v810
  %v812 = vpop.f32.mrb[0].mxu0
  %v813 = vpop.f32.mrb[0].mxu0
  %v814 = vpop.f32.mrb[0].mxu0
  %815 = vdwg.mxu0
  %816 = vmatprep.subr.bf16.mxu0 0
  %817 = vmatpush1.bf16.msra.mxu0 %v552
  %818 = vmatprep.subr.bf16.mxu0 0
  %819 = vmatpush1.bf16.msra.mxu0 %v555
  %820 = vmatprep.subr.bf16.mxu0 0
  %821 = vmatpush1.bf16.msra.mxu0 %v558
  %822 = vmatprep.subr.bf16.mxu0 0
  %823 = vmatpush1.bf16.msra.mxu0 %v561
  %824 = vmatprep.subr.bf16.mxu0 0
  %825 = vmatpush1.bf16.msra.mxu0 %v564
  %826 = vmatprep.subr.bf16.mxu0 0
  %827 = vmatpush1.bf16.msra.mxu0 %v567
  %828 = vmatprep.subr.bf16.mxu0 0
  %829 = vmatpush1.bf16.msra.mxu0 %v570
  %830 = vmatprep.subr.bf16.mxu0 0
  %831 = vmatpush1.bf16.msra.mxu0 %v573
  %832 = vmatprep.subr.bf16.mxu0 0
  %833 = vmatpush1.bf16.msra.mxu0 %v576
  %834 = vmatprep.subr.bf16.mxu0 0
  %835 = vmatpush1.bf16.msra.mxu0 %v579
  %836 = vmatprep.subr.bf16.mxu0 0
  %837 = vmatpush1.bf16.msra.mxu0 %v582
  %838 = vmatprep.subr.bf16.mxu0 0
  %839 = vmatpush1.bf16.msra.mxu0 %v585
  %840 = vmatprep.subr.bf16.mxu0 0
  %841 = vmatpush1.bf16.msra.mxu0 %v588
  %842 = vmatprep.subr.bf16.mxu0 0
  %843 = vmatpush1.bf16.msra.mxu0 %v591
  %844 = vmatprep.subr.bf16.mxu0 0
  %845 = vmatpush1.bf16.msra.mxu0 %v594
  %846 = vmatprep.subr.bf16.mxu0 0
  %847 = vmatpush1.bf16.msra.mxu0 %v597
  %848 = vmatprep.mubr.bf16.mxu0 %v177
  %849 = vmatmul.mubr.bf16.gmra.mrb[0].mxu0 %v176
  %v850 = vpop.f32.mrb[0].mxu0
  %v851 = vadd.f32 %v811, %v850
  %v852 = vpop.f32.mrb[0].mxu0
  %v853 = vpop.f32.mrb[0].mxu0
  %v854 = vpop.f32.mrb[0].mxu0
  %855 = vdwg.mxu0
  %v856 = vmax.f32 %v770, 0.0
  %v857 = vmax.f32 %v772, 0.0
  %v858 = vmax.f32 %v851, 0.0
  %v859 = vmin.f32 %v856, 6.0
  %v860 = vmin.f32 %v857, 6.0
  %v861 = vmin.f32 %v858, 6.0
  %v862 = vpack.c.bf16 %v859, %v859
  %v863 = vpack.c.bf16 %v860, %v860
  %v864 = vpack.c.bf16 %v861, %v861
  %v865 = vld [vmem:[%s3] sm:$0xff]
  %v866 = vld [vmem:[%s3 + $0x8] sm:$0xff]
  %v867 = vld [vmem:[%s3 + $0x10] sm:$0xff]
  %v868 = vld [vmem:[%s3 + $0x18] sm:$0xff]
  %v869 = vld [vmem:[%s3 + $0x20] sm:$0xff]
  %v870 = vld [vmem:[%s3 + $0x28] sm:$0xff]
  %v871 = vld [vmem:[%s3 + $0x30] sm:$0xff]
  %v872 = vld [vmem:[%s3 + $0x38] sm:$0xff]
  %v873 = vld [vmem:[%s3 + $0x40] sm:$0xff]
  %v874 = vld [vmem:[%s3 + $0x48] sm:$0xff]
  %v875 = vld [vmem:[%s3 + $0x50] sm:$0xff]
  %v876 = vld [vmem:[%s3 + $0x58] sm:$0xff]
  %v877 = vld [vmem:[%s3 + $0x60] sm:$0xff]
  %v878 = vld [vmem:[%s3 + $0x68] sm:$0xff]
  %v879 = vld [vmem:[%s3 + $0x70] sm:$0xff]
  %v880 = vld [vmem:[%s3 + $0x78] sm:$0xff]
  %v881 = vld [vmem:[%s3 + $0x80] sm:$0xff]
  %v882 = vld [vmem:[%s3 + $0x88] sm:$0xff]
  %v883 = vld [vmem:[%s3 + $0x90] sm:$0xff]
  %v884 = vld [vmem:[%s3 + $0x98] sm:$0xff]
  %v885 = vld [vmem:[%s3 + $0xa0] sm:$0xff]
  %v886 = vld [vmem:[%s3 + $0xa8] sm:$0xff]
  %v887 = vld [vmem:[%s3 + $0xb0] sm:$0xff]
  %v888 = vld [vmem:[%s3 + $0xb8] sm:$0xff]
  %v889 = vld [vmem:[%s3 + $0xc0] sm:$0xff]
  %v890 = vld [vmem:[%s3 + $0xc8] sm:$0xff]
  %v891 = vld [vmem:[%s3 + $0xd0] sm:$0xff]
  %v892 = vld [vmem:[%s3 + $0xd8] sm:$0xff]
  %v893 = vld [vmem:[%s3 + $0xe0] sm:$0xff]
  %v894 = vld [vmem:[%s3 + $0xe8] sm:$0xff]
  %v895 = vld [vmem:[%s3 + $0xf0] sm:$0xff]
  %v896 = vld [vmem:[%s3 + $0xf8] sm:$0xff]
  %v897 = vld [vmem:[%s3 + $0x100] sm:$0xff]
  %v898 = vld [vmem:[%s3 + $0x108] sm:$0xff]
  %v899 = vld [vmem:[%s3 + $0x110] sm:$0xff]
  %v900 = vld [vmem:[%s3 + $0x118] sm:$0xff]
  %v901 = vld [vmem:[%s3 + $0x120] sm:$0xff]
  %v902 = vld [vmem:[%s3 + $0x128] sm:$0xff]
  %v903 = vld [vmem:[%s3 + $0x130] sm:$0xff]
  %v904 = vld [vmem:[%s3 + $0x138] sm:$0xff]
  %v905 = vld [vmem:[%s3 + $0x140] sm:$0xff]
  %v906 = vld [vmem:[%s3 + $0x148] sm:$0xff]
  %v907 = vld [vmem:[%s3 + $0x150] sm:$0xff]
  %v908 = vld [vmem:[%s3 + $0x158] sm:$0xff]
  %v909 = vld [vmem:[%s3 + $0x160] sm:$0xff]
  %v910 = vld [vmem:[%s3 + $0x168] sm:$0xff]
  %v911 = vld [vmem:[%s3 + $0x170] sm:$0xff]
  %v912 = vld [vmem:[%s3 + $0x178] sm:$0xff]
  %v913 = vld [vmem:[%s3 + $0x180] sm:$0xff]
  %v914 = vld [vmem:[%s3 + $0x188] sm:$0xff]
  %v915 = vld [vmem:[%s3 + $0x190] sm:$0xff]
  %v916 = vld [vmem:[%s3 + $0x198] sm:$0xff]
  %v917 = vld [vmem:[%s3 + $0x1a0] sm:$0xff]
  %v918 = vld [vmem:[%s3 + $0x1a8] sm:$0xff]
  %v919 = vld [vmem:[%s3 + $0x1b0] sm:$0xff]
  %v920 = vld [vmem:[%s3 + $0x1b8] sm:$0xff]
  %v921 = vld [vmem:[%s3 + $0x1c0] sm:$0xff]
  %v922 = vld [vmem:[%s3 + $0x1c8] sm:$0xff]
  %v923 = vld [vmem:[%s3 + $0x1d0] sm:$0xff]
  %v924 = vld [vmem:[%s3 + $0x1d8] sm:$0xff]
  %v925 = vld [vmem:[%s3 + $0x1e0] sm:$0xff]
  %v926 = vld [vmem:[%s3 + $0x1e8] sm:$0xff]
  %v927 = vld [vmem:[%s3 + $0x1f0] sm:$0xff]
  %v928 = vld [vmem:[%s3 + $0x1f8] sm:$0xff]
  %v929 = vld [vmem:[%s3 + $0x200] sm:$0xff]
  %v930 = vld [vmem:[%s3 + $0x208] sm:$0xff]
  %v931 = vld [vmem:[%s3 + $0x210] sm:$0xff]
  %v932 = vld [vmem:[%s3 + $0x218] sm:$0xff]
  %v933 = vld [vmem:[%s3 + $0x220] sm:$0xff]
  %v934 = vld [vmem:[%s3 + $0x228] sm:$0xff]
  %v935 = vld [vmem:[%s3 + $0x230] sm:$0xff]
  %v936 = vld [vmem:[%s3 + $0x238] sm:$0xff]
  %v937 = vld [vmem:[%s3 + $0x240] sm:$0xff]
  %v938 = vld [vmem:[%s3 + $0x248] sm:$0xff]
  %v939 = vld [vmem:[%s3 + $0x250] sm:$0xff]
  %v940 = vld [vmem:[%s3 + $0x258] sm:$0xff]
  %v941 = vld [vmem:[%s3 + $0x260] sm:$0xff]
  %v942 = vld [vmem:[%s3 + $0x268] sm:$0xff]
  %v943 = vld [vmem:[%s3 + $0x270] sm:$0xff]
  %v944 = vld [vmem:[%s3 + $0x278] sm:$0xff]
  %v945 = vld [vmem:[%s4] sm:$0xf]
  %v947 = vlaneseq
  %v948 = vshrl.u32 %v947, 7
  %v949 = vsub.s32 0, %v948
  %v950 = vrot.slane %v945, %v949
  %v951 = vlaneseq
  %v952 = vshrl.u32 %v951, 7
  %v953 = vsub.s32 1, %v952
  %v954 = vrot.slane %v945, %v953
  %v955 = vlaneseq
  %v956 = vshrl.u32 %v955, 7
  %v957 = vsub.s32 2, %v956
  %v958 = vrot.slane %v945, %v957
  %v959 = vlaneseq
  %v960 = vshrl.u32 %v959, 7
  %v961 = vsub.s32 3, %v960
  %v962 = vrot.slane %v945, %v961
  %v1047 = vunpack.c.l.b16 %v865
  %v1048 = vunpack.c.h.b16 %v865
  %v1049 = vunpack.c.l.b16 %v866
  %v1050 = vunpack.c.h.b16 %v866
  %v1051 = vunpack.c.l.b16 %v867
  %v1052 = vunpack.c.h.b16 %v867
  %v1053 = vunpack.c.l.b16 %v868
  %v1054 = vunpack.c.h.b16 %v868
  %v1055 = vunpack.c.l.b16 %v869
  %v1056 = vunpack.c.h.b16 %v869
  %v1057 = vunpack.c.l.b16 %v870
  %v1058 = vunpack.c.h.b16 %v870
  %v1059 = vunpack.c.l.b16 %v871
  %v1060 = vunpack.c.h.b16 %v871
  %v1061 = vunpack.c.l.b16 %v872
  %v1062 = vunpack.c.h.b16 %v872
  %v1063 = vunpack.c.l.b16 %v873
  %v1064 = vunpack.c.h.b16 %v873
  %v1065 = vunpack.c.l.b16 %v874
  %v1066 = vunpack.c.h.b16 %v874
  %v1067 = vunpack.c.l.b16 %v875
  %v1068 = vunpack.c.h.b16 %v875
  %v1069 = vunpack.c.l.b16 %v876
  %v1070 = vunpack.c.h.b16 %v876
  %v1071 = vunpack.c.l.b16 %v877
  %v1072 = vunpack.c.h.b16 %v877
  %v1073 = vunpack.c.l.b16 %v878
  %v1074 = vunpack.c.h.b16 %v878
  %v1075 = vunpack.c.l.b16 %v879
  %v1076 = vunpack.c.h.b16 %v879
  %v1077 = vunpack.c.l.b16 %v880
  %v1078 = vunpack.c.h.b16 %v880
  %v1079 = vunpack.c.l.b16 %v881
  %v1080 = vunpack.c.h.b16 %v881
  %v1081 = vunpack.c.l.b16 %v882
  %v1082 = vunpack.c.h.b16 %v882
  %v1083 = vunpack.c.l.b16 %v883
  %v1084 = vunpack.c.h.b16 %v883
  %v1085 = vunpack.c.l.b16 %v884
  %v1086 = vunpack.c.h.b16 %v884
  %v1087 = vunpack.c.l.b16 %v885
  %v1088 = vunpack.c.h.b16 %v885
  %v1089 = vunpack.c.l.b16 %v886
  %v1090 = vunpack.c.h.b16 %v886
  %v1091 = vunpack.c.l.b16 %v887
  %v1092 = vunpack.c.h.b16 %v887
  %v1093 = vunpack.c.l.b16 %v888
  %v1094 = vunpack.c.h.b16 %v888
  %v1095 = vunpack.c.l.b16 %v889
  %v1096 = vunpack.c.h.b16 %v889
  %v1097 = vunpack.c.l.b16 %v890
  %v1098 = vunpack.c.h.b16 %v890
  %v1099 = vunpack.c.l.b16 %v891
  %v1100 = vunpack.c.h.b16 %v891
  %v1101 = vunpack.c.l.b16 %v892
  %v1102 = vunpack.c.h.b16 %v892
  %v1103 = vunpack.c.l.b16 %v893
  %v1104 = vunpack.c.h.b16 %v893
  %v1105 = vunpack.c.l.b16 %v894
  %v1106 = vunpack.c.h.b16 %v894
  %v1107 = vunpack.c.l.b16 %v895
  %v1108 = vunpack.c.h.b16 %v895
  %v1109 = vunpack.c.l.b16 %v896
  %v1110 = vunpack.c.h.b16 %v896
  %v1111 = vunpack.c.l.b16 %v897
  %v1112 = vunpack.c.h.b16 %v897
  %v1113 = vunpack.c.l.b16 %v898
  %v1114 = vunpack.c.h.b16 %v898
  %v1115 = vunpack.c.l.b16 %v899
  %v1116 = vunpack.c.h.b16 %v899
  %v1117 = vunpack.c.l.b16 %v900
  %v1118 = vunpack.c.h.b16 %v900
  %v1119 = vunpack.c.l.b16 %v901
  %v1120 = vunpack.c.h.b16 %v901
  %v1121 = vunpack.c.l.b16 %v902
  %v1122 = vunpack.c.h.b16 %v902
  %v1123 = vunpack.c.l.b16 %v903
  %v1124 = vunpack.c.h.b16 %v903
  %v1125 = vunpack.c.l.b16 %v904
  %v1126 = vunpack.c.h.b16 %v904
  %v1127 = vunpack.c.l.b16 %v905
  %v1128 = vunpack.c.h.b16 %v905
  %v1129 = vunpack.c.l.b16 %v906
  %v1130 = vunpack.c.h.b16 %v906
  %v1131 = vunpack.c.l.b16 %v907
  %v1132 = vunpack.c.h.b16 %v907
  %v1133 = vunpack.c.l.b16 %v908
  %v1134 = vunpack.c.h.b16 %v908
  %v1135 = vunpack.c.l.b16 %v909
  %v1136 = vunpack.c.h.b16 %v909
  %v1137 = vunpack.c.l.b16 %v910
  %v1138 = vunpack.c.h.b16 %v910
  %v1139 = vunpack.c.l.b16 %v911
  %v1140 = vunpack.c.h.b16 %v911
  %v1141 = vunpack.c.l.b16 %v912
  %v1142 = vunpack.c.h.b16 %v912
  %v1143 = vunpack.c.l.b16 %v913
  %v1144 = vunpack.c.h.b16 %v913
  %v1145 = vunpack.c.l.b16 %v914
  %v1146 = vunpack.c.h.b16 %v914
  %v1147 = vunpack.c.l.b16 %v915
  %v1148 = vunpack.c.h.b16 %v915
  %v1149 = vunpack.c.l.b16 %v916
  %v1150 = vunpack.c.h.b16 %v916
  %v1151 = vunpack.c.l.b16 %v917
  %v1152 = vunpack.c.h.b16 %v917
  %v1153 = vunpack.c.l.b16 %v918
  %v1154 = vunpack.c.h.b16 %v918
  %v1155 = vunpack.c.l.b16 %v919
  %v1156 = vunpack.c.h.b16 %v919
  %v1157 = vunpack.c.l.b16 %v920
  %v1158 = vunpack.c.h.b16 %v920
  %v1159 = vunpack.c.l.b16 %v921
  %v1160 = vunpack.c.h.b16 %v921
  %v1161 = vunpack.c.l.b16 %v922
  %v1162 = vunpack.c.h.b16 %v922
  %v1163 = vunpack.c.l.b16 %v923
  %v1164 = vunpack.c.h.b16 %v923
  %v1165 = vunpack.c.l.b16 %v924
  %v1166 = vunpack.c.h.b16 %v924
  %v1167 = vunpack.c.l.b16 %v925
  %v1168 = vunpack.c.h.b16 %v925
  %v1169 = vunpack.c.l.b16 %v926
  %v1170 = vunpack.c.h.b16 %v926
  %v1171 = vunpack.c.l.b16 %v927
  %v1172 = vunpack.c.h.b16 %v927
  %v1173 = vunpack.c.l.b16 %v928
  %v1174 = vunpack.c.h.b16 %v928
  %v1175 = vunpack.c.l.b16 %v929
  %v1176 = vunpack.c.h.b16 %v929
  %v1177 = vunpack.c.l.b16 %v930
  %v1178 = vunpack.c.h.b16 %v930
  %v1179 = vunpack.c.l.b16 %v931
  %v1180 = vunpack.c.h.b16 %v931
  %v1181 = vunpack.c.l.b16 %v932
  %v1182 = vunpack.c.h.b16 %v932
  %v1183 = vunpack.c.l.b16 %v933
  %v1184 = vunpack.c.h.b16 %v933
  %v1185 = vunpack.c.l.b16 %v934
  %v1186 = vunpack.c.h.b16 %v934
  %v1187 = vunpack.c.l.b16 %v935
  %v1188 = vunpack.c.h.b16 %v935
  %v1189 = vunpack.c.l.b16 %v936
  %v1190 = vunpack.c.h.b16 %v936
  %v1191 = vunpack.c.l.b16 %v937
  %v1192 = vunpack.c.h.b16 %v937
  %v1193 = vunpack.c.l.b16 %v938
  %v1194 = vunpack.c.h.b16 %v938
  %v1195 = vunpack.c.l.b16 %v939
  %v1196 = vunpack.c.h.b16 %v939
  %v1197 = vunpack.c.l.b16 %v940
  %v1198 = vunpack.c.h.b16 %v940
  %v1199 = vunpack.c.l.b16 %v941
  %v1200 = vunpack.c.h.b16 %v941
  %v1201 = vunpack.c.l.b16 %v942
  %v1202 = vunpack.c.h.b16 %v942
  %v1203 = vunpack.c.l.b16 %v943
  %v1204 = vunpack.c.h.b16 %v943
  %v1205 = vunpack.c.l.b16 %v944
  %v1206 = vunpack.c.h.b16 %v944
  %v1207 = vpack.c.b16 %v1051, %v1047
  %v1208 = vpack.c.b16 %v1052, %v1048
  %v1209 = vpack.c.b16 %v1053, %v1049
  %v1210 = vpack.c.b16 %v1054, %v1050
  %v1211 = vpack.c.b16 %v1059, %v1055
  %v1212 = vpack.c.b16 %v1060, %v1056
  %v1213 = vpack.c.b16 %v1061, %v1057
  %v1214 = vpack.c.b16 %v1062, %v1058
  %v1215 = vpack.c.b16 %v1067, %v1063
  %v1216 = vpack.c.b16 %v1068, %v1064
  %v1217 = vpack.c.b16 %v1069, %v1065
  %v1218 = vpack.c.b16 %v1070, %v1066
  %v1219 = vpack.c.b16 %v1075, %v1071
  %v1220 = vpack.c.b16 %v1076, %v1072
  %v1221 = vpack.c.b16 %v1077, %v1073
  %v1222 = vpack.c.b16 %v1078, %v1074
  %v1223 = vpack.c.b16 %v1083, %v1079
  %v1224 = vpack.c.b16 %v1084, %v1080
  %v1225 = vpack.c.b16 %v1085, %v1081
  %v1226 = vpack.c.b16 %v1086, %v1082
  %v1227 = vpack.c.b16 %v1091, %v1087
  %v1228 = vpack.c.b16 %v1092, %v1088
  %v1229 = vpack.c.b16 %v1093, %v1089
  %v1230 = vpack.c.b16 %v1094, %v1090
  %v1231 = vpack.c.b16 %v1099, %v1095
  %v1232 = vpack.c.b16 %v1100, %v1096
  %v1233 = vpack.c.b16 %v1101, %v1097
  %v1234 = vpack.c.b16 %v1102, %v1098
  %v1235 = vpack.c.b16 %v1107, %v1103
  %v1236 = vpack.c.b16 %v1108, %v1104
  %v1237 = vpack.c.b16 %v1109, %v1105
  %v1238 = vpack.c.b16 %v1110, %v1106
  %v1239 = vpack.c.b16 %v1115, %v1111
  %v1240 = vpack.c.b16 %v1116, %v1112
  %v1241 = vpack.c.b16 %v1117, %v1113
  %v1242 = vpack.c.b16 %v1118, %v1114
  %v1243 = vpack.c.b16 %v1123, %v1119
  %v1244 = vpack.c.b16 %v1124, %v1120
  %v1245 = vpack.c.b16 %v1125, %v1121
  %v1246 = vpack.c.b16 %v1126, %v1122
  %v1247 = vpack.c.b16 %v1131, %v1127
  %v1248 = vpack.c.b16 %v1132, %v1128
  %v1249 = vpack.c.b16 %v1133, %v1129
  %v1250 = vpack.c.b16 %v1134, %v1130
  %v1251 = vpack.c.b16 %v1139, %v1135
  %v1252 = vpack.c.b16 %v1140, %v1136
  %v1253 = vpack.c.b16 %v1141, %v1137
  %v1254 = vpack.c.b16 %v1142, %v1138
  %v1255 = vpack.c.b16 %v1147, %v1143
  %v1256 = vpack.c.b16 %v1148, %v1144
  %v1257 = vpack.c.b16 %v1149, %v1145
  %v1258 = vpack.c.b16 %v1150, %v1146
  %v1259 = vpack.c.b16 %v1155, %v1151
  %v1260 = vpack.c.b16 %v1156, %v1152
  %v1261 = vpack.c.b16 %v1157, %v1153
  %v1262 = vpack.c.b16 %v1158, %v1154
  %v1263 = vpack.c.b16 %v1163, %v1159
  %v1264 = vpack.c.b16 %v1164, %v1160
  %v1265 = vpack.c.b16 %v1165, %v1161
  %v1266 = vpack.c.b16 %v1166, %v1162
  %v1267 = vpack.c.b16 %v1171, %v1167
  %v1268 = vpack.c.b16 %v1172, %v1168
  %v1269 = vpack.c.b16 %v1173, %v1169
  %v1270 = vpack.c.b16 %v1174, %v1170
  %v1271 = vpack.c.b16 %v1179, %v1175
  %v1272 = vpack.c.b16 %v1180, %v1176
  %v1273 = vpack.c.b16 %v1181, %v1177
  %v1274 = vpack.c.b16 %v1182, %v1178
  %v1275 = vpack.c.b16 %v1187, %v1183
  %v1276 = vpack.c.b16 %v1188, %v1184
  %v1277 = vpack.c.b16 %v1189, %v1185
  %v1278 = vpack.c.b16 %v1190, %v1186
  %v1279 = vpack.c.b16 %v1195, %v1191
  %v1280 = vpack.c.b16 %v1196, %v1192
  %v1281 = vpack.c.b16 %v1197, %v1193
  %v1282 = vpack.c.b16 %v1198, %v1194
  %v1283 = vpack.c.b16 %v1203, %v1199
  %v1284 = vpack.c.b16 %v1204, %v1200
  %v1285 = vpack.c.b16 %v1205, %v1201
  %v1286 = vpack.c.b16 %v1206, %v1202
  %vm1367 = vcmask 523264
  %v1369 = vsel %vm1367, %v864, 0
  %1371 = vmatprep.subr.bf16.mxu0 %v1208
  %1372 = vmatpush1.bf16.msra.mxu0 %v1207
  %1373 = vmatprep.subr.bf16.mxu0 %v1212
  %1374 = vmatpush1.bf16.msra.mxu0 %v1211
  %1375 = vmatprep.subr.bf16.mxu0 %v1216
  %1376 = vmatpush1.bf16.msra.mxu0 %v1215
  %1377 = vmatprep.subr.bf16.mxu0 %v1220
  %1378 = vmatpush1.bf16.msra.mxu0 %v1219
  %1379 = vmatprep.subr.bf16.mxu0 %v1224
  %1380 = vmatpush1.bf16.msra.mxu0 %v1223
  %1381 = vmatprep.subr.bf16.mxu0 %v1228
  %1382 = vmatpush1.bf16.msra.mxu0 %v1227
  %1383 = vmatprep.subr.bf16.mxu0 %v1232
  %1384 = vmatpush1.bf16.msra.mxu0 %v1231
  %1385 = vmatprep.subr.bf16.mxu0 %v1236
  %1386 = vmatpush1.bf16.msra.mxu0 %v1235
  %1387 = vmatprep.subr.bf16.mxu0 %v1240
  %1388 = vmatpush1.bf16.msra.mxu0 %v1239
  %1389 = vmatprep.subr.bf16.mxu0 %v1244
  %1390 = vmatpush1.bf16.msra.mxu0 %v1243
  %1391 = vmatprep.subr.bf16.mxu0 %v1248
  %1392 = vmatpush1.bf16.msra.mxu0 %v1247
  %1393 = vmatprep.subr.bf16.mxu0 %v1252
  %1394 = vmatpush1.bf16.msra.mxu0 %v1251
  %1395 = vmatprep.subr.bf16.mxu0 %v1256
  %1396 = vmatpush1.bf16.msra.mxu0 %v1255
  %1397 = vmatprep.subr.bf16.mxu0 %v1260
  %1398 = vmatpush1.bf16.msra.mxu0 %v1259
  %1399 = vmatprep.subr.bf16.mxu0 %v1264
  %1400 = vmatpush1.bf16.msra.mxu0 %v1263
  %1401 = vmatprep.subr.bf16.mxu0 %v1268
  %1402 = vmatpush1.bf16.msra.mxu0 %v1267
  %1403 = vmatprep.mubr.bf16.mxu0 %v863
  %1404 = vmatmul.mubr.bf16.gmra.mrb[0].mxu0 %v862
  %v1405 = vpop.f32.mrb[0].mxu0
  %v1406 = vadd.f32 %v950, %v1405
  %v1407 = vpop.f32.mrb[0].mxu0
  %v1408 = vadd.f32 %v954, %v1407
  %v1409 = vpop.f32.mrb[0].mxu0
  %v1410 = vpop.f32.mrb[0].mxu0
  %1411 = vdwg.mxu0
  %1412 = vmatprep.subr.bf16.mxu0 %v1272
  %1413 = vmatpush1.bf16.msra.mxu0 %v1271
  %1414 = vmatprep.subr.bf16.mxu0 %v1276
  %1415 = vmatpush1.bf16.msra.mxu0 %v1275
  %1416 = vmatprep.subr.bf16.mxu0 %v1280
  %1417 = vmatpush1.bf16.msra.mxu0 %v1279
  %1418 = vmatprep.subr.bf16.mxu0 %v1284
  %1419 = vmatpush1.bf16.msra.mxu0 %v1283
  %1420 = vmatprep.subr.bf16.mxu0 0
  %1421 = vmatpush1.bf16.msra.mxu0 0
  %1422 = vmatprep.subr.bf16.mxu0 0
  %1423 = vmatpush1.bf16.msra.mxu0 0
  %1424 = vmatprep.subr.bf16.mxu0 0
  %1425 = vmatpush1.bf16.msra.mxu0 0
  %1426 = vmatprep.subr.bf16.mxu0 0
  %1427 = vmatpush1.bf16.msra.mxu0 0
  %1428 = vmatprep.subr.bf16.mxu0 0
  %1429 = vmatpush1.bf16.msra.mxu0 0
  %1430 = vmatprep.subr.bf16.mxu0 0
  %1431 = vmatpush1.bf16.msra.mxu0 0
  %1432 = vmatprep.subr.bf16.mxu0 0
  %1433 = vmatpush1.bf16.msra.mxu0 0
  %1434 = vmatprep.subr.bf16.mxu0 0
  %1435 = vmatpush1.bf16.msra.mxu0 0
  %1436 = vmatprep.subr.bf16.mxu0 0
  %1437 = vmatpush1.bf16.msra.mxu0 0
  %1438 = vmatprep.subr.bf16.mxu0 0
  %1439 = vmatpush1.bf16.msra.mxu0 0
  %1440 = vmatprep.subr.bf16.mxu0 0
  %1441 = vmatpush1.bf16.msra.mxu0 0
  %1442 = vmatprep.subr.bf16.mxu0 0
  %1443 = vmatpush1.bf16.msra.mxu0 0
  %1444 = vmatprep.mubr.bf16.mxu0 0
  %1445 = vmatmul.mubr.bf16.gmra.mrb[0].mxu0 %v1369
  %v1446 = vpop.f32.mrb[0].mxu0
  %v1447 = vadd.f32 %v1406, %v1446
  %v1448 = vpop.f32.mrb[0].mxu0
  %v1449 = vadd.f32 %v1408, %v1448
  %v1450 = vpop.f32.mrb[0].mxu0
  %v1451 = vpop.f32.mrb[0].mxu0
  %1452 = vdwg.mxu0
  %1453 = vmatprep.subr.bf16.mxu0 %v1210
  %1454 = vmatpush1.bf16.msra.mxu0 %v1209
  %1455 = vmatprep.subr.bf16.mxu0 %v1214
  %1456 = vmatpush1.bf16.msra.mxu0 %v1213
  %1457 = vmatprep.subr.bf16.mxu0 %v1218
  %1458 = vmatpush1.bf16.msra.mxu0 %v1217
  %1459 = vmatprep.subr.bf16.mxu0 %v1222
  %1460 = vmatpush1.bf16.msra.mxu0 %v1221
  %1461 = vmatprep.subr.bf16.mxu0 %v1226
  %1462 = vmatpush1.bf16.msra.mxu0 %v1225
  %1463 = vmatprep.subr.bf16.mxu0 %v1230
  %1464 = vmatpush1.bf16.msra.mxu0 %v1229
  %1465 = vmatprep.subr.bf16.mxu0 %v1234
  %1466 = vmatpush1.bf16.msra.mxu0 %v1233
  %1467 = vmatprep.subr.bf16.mxu0 %v1238
  %1468 = vmatpush1.bf16.msra.mxu0 %v1237
  %1469 = vmatprep.subr.bf16.mxu0 %v1242
  %1470 = vmatpush1.bf16.msra.mxu0 %v1241
  %1471 = vmatprep.subr.bf16.mxu0 %v1246
  %1472 = vmatpush1.bf16.msra.mxu0 %v1245
  %1473 = vmatprep.subr.bf16.mxu0 %v1250
  %1474 = vmatpush1.bf16.msra.mxu0 %v1249
  %1475 = vmatprep.subr.bf16.mxu0 %v1254
  %1476 = vmatpush1.bf16.msra.mxu0 %v1253
  %1477 = vmatprep.subr.bf16.mxu0 %v1258
  %1478 = vmatpush1.bf16.msra.mxu0 %v1257
  %1479 = vmatprep.subr.bf16.mxu0 %v1262
  %1480 = vmatpush1.bf16.msra.mxu0 %v1261
  %1481 = vmatprep.subr.bf16.mxu0 %v1266
  %1482 = vmatpush1.bf16.msra.mxu0 %v1265
  %1483 = vmatprep.subr.bf16.mxu0 %v1270
  %1484 = vmatpush1.bf16.msra.mxu0 %v1269
  %1485 = vmatprep.mubr.bf16.mxu0 %v863
  %1486 = vmatmul.mubr.bf16.gmra.mrb[0].mxu0 %v862
  %v1487 = vpop.f32.mrb[0].mxu0
  %v1488 = vadd.f32 %v958, %v1487
  %v1489 = vpop.f32.mrb[0].mxu0
  %v1490 = vadd.f32 %v962, %v1489
  %v1491 = vpop.f32.mrb[0].mxu0
  %v1492 = vpop.f32.mrb[0].mxu0
  %1493 = vdwg.mxu0
  %1494 = vmatprep.subr.bf16.mxu0 %v1274
  %1495 = vmatpush1.bf16.msra.mxu0 %v1273
  %1496 = vmatprep.subr.bf16.mxu0 %v1278
  %1497 = vmatpush1.bf16.msra.mxu0 %v1277
  %1498 = vmatprep.subr.bf16.mxu0 %v1282
  %1499 = vmatpush1.bf16.msra.mxu0 %v1281
  %1500 = vmatprep.subr.bf16.mxu0 %v1286
  %1501 = vmatpush1.bf16.msra.mxu0 %v1285
  %1502 = vmatprep.subr.bf16.mxu0 0
  %1503 = vmatpush1.bf16.msra.mxu0 0
  %1504 = vmatprep.subr.bf16.mxu0 0
  %1505 = vmatpush1.bf16.msra.mxu0 0
  %1506 = vmatprep.subr.bf16.mxu0 0
  %1507 = vmatpush1.bf16.msra.mxu0 0
  %1508 = vmatprep.subr.bf16.mxu0 0
  %1509 = vmatpush1.bf16.msra.mxu0 0
  %1510 = vmatprep.subr.bf16.mxu0 0
  %1511 = vmatpush1.bf16.msra.mxu0 0
  %1512 = vmatprep.subr.bf16.mxu0 0
  %1513 = vmatpush1.bf16.msra.mxu0 0
  %1514 = vmatprep.subr.bf16.mxu0 0
  %1515 = vmatpush1.bf16.msra.mxu0 0
  %1516 = vmatprep.subr.bf16.mxu0 0
  %1517 = vmatpush1.bf16.msra.mxu0 0
  %1518 = vmatprep.subr.bf16.mxu0 0
  %1519 = vmatpush1.bf16.msra.mxu0 0
  %1520 = vmatprep.subr.bf16.mxu0 0
  %1521 = vmatpush1.bf16.msra.mxu0 0
  %1522 = vmatprep.subr.bf16.mxu0 0
  %1523 = vmatpush1.bf16.msra.mxu0 0
  %1524 = vmatprep.subr.bf16.mxu0 0
  %1525 = vmatpush1.bf16.msra.mxu0 0
  %1526 = vmatprep.mubr.bf16.mxu0 0
  %1527 = vmatmul.mubr.bf16.gmra.mrb[0].mxu0 %v1369
  %v1528 = vpop.f32.mrb[0].mxu0
  %v1529 = vadd.f32 %v1488, %v1528
  %v1530 = vpop.f32.mrb[0].mxu0
  %v1531 = vadd.f32 %v1490, %v1530
  %v1532 = vpop.f32.mrb[0].mxu0
  %v1533 = vpop.f32.mrb[0].mxu0
  %1534 = vdwg.mxu0
  %v1535 = vpack.c.bf16 %v1447, %v1447
  %v1536 = vpack.c.bf16 %v1449, %v1449
  %v1537 = vpack.c.bf16 %v1529, %v1529
  %v1538 = vpack.c.bf16 %v1531, %v1531
  %v1543 = vunpack.c.l.b16 %v1535
  %v1544 = vunpack.c.l.b16 %v1536
  %v1545 = vunpack.c.l.b16 %v1537
  %v1546 = vunpack.c.l.b16 %v1538
  %v1547 = vpack.c.b16 %v1544, %v1543
  %v1548 = vpack.c.b16 %v1546, %v1545
  %1551 = vst [vmem:[%s5] sm:$0xff] %v1547
  %1552 = vst [vmem:[%s5 + $0x8] sm:$0xff] %v1548
  // Predicated region
  $region22: #{f_random_proj_forward.11} parent=0 // pred_check
    _
  $region23: #{f_random_proj_forward.11} parent=0 // pred_check_branch
    %1554 = sbr.rel (0) target = $region25
  $region24: #{f_random_proj_forward.11} parent=0 // pred_region
    _
  $region25: #{f_random_proj_forward.11} parent=0 // pred_fallthru
    _
  // Predicated region
  $region26: #{f_random_proj_forward.11} parent=0 // pred_check
    _
  $region27: #{f_random_proj_forward.11} parent=0 // pred_check_branch
    %1556 = sbr.rel (0) target = $region29
  $region28: #{f_random_proj_forward.11} parent=0 // pred_region
    _
  $region29: #{f_random_proj_forward.11} parent=0 // pred_fallthru
    _

// kernel: f_random_proj_forward.12
$region0: #{f_random_proj_forward.12}
  #allocation0 [shape = 'u32[]', space=smem, size = 0x4, offset = 0x4, fixed_abs, tag = 'smem constant byte address 0x4 - core index']
  #allocation1 [shape = 'u32[144,128]{1,0:T(1,128)}', space=vmem, size = 0x12000, scoped, tag = 'internal scratch']
  %s0 = inlined_call_operand.vmem [shape: bf16[8,512], index: 0, kind: input, shape index: {}]
  %s1 = inlined_call_operand.vmem [shape: bf16[512,256], index: 1, kind: input, shape index: {}]
  %s2 = inlined_call_operand.vmem [shape: f32[1,256], index: 2, kind: input, shape index: {}]
  %s3 = inlined_call_operand.vmem [shape: bf16[8,256], index: 3, kind: output, shape index: {}]
  %s4 = sld [smem:[#allocation0]]
  $region22: #{f_random_proj_forward.12} parent=0
    _
  %s6 = ssub.s32 1, %s4
  %s7 = scalar_select 0, %s6, %s4
  // Predicated region
  $region2: #{f_random_proj_forward.12} parent=0 // pred_check
    _
  $region3: #{f_random_proj_forward.12} parent=0 // pred_check_branch
    %9 = sbr.rel (0) target = $region5
  $region4: #{f_random_proj_forward.12} parent=0 // pred_region
    _
  $region5: #{f_random_proj_forward.12} parent=0 // pred_fallthru
    _
  // Predicated region
  $region6: #{f_random_proj_forward.12} parent=0 // pred_check
    _
  $region7: #{f_random_proj_forward.12} parent=0 // pred_check_branch
    %11 = sbr.rel (0) target = $region9
  $region8: #{f_random_proj_forward.12} parent=0 // pred_region
    _
  $region9: #{f_random_proj_forward.12} parent=0 // pred_fallthru
    _
  // Predicated region
  $region10: #{f_random_proj_forward.12} parent=0 // pred_check
    _
  $region11: #{f_random_proj_forward.12} parent=0 // pred_check_branch
    %13 = sbr.rel (0) target = $region13
  $region12: #{f_random_proj_forward.12} parent=0 // pred_region
    _
  $region13: #{f_random_proj_forward.12} parent=0 // pred_fallthru
    _
  %v14 = vld [vmem:[%s0] sm:$0xff]
  %v15 = vld [vmem:[%s0 + $0x8] sm:$0xff]
  %v16 = vld [vmem:[%s1] sm:$0xff]
  %v17 = vld [vmem:[%s1 + $0x8] sm:$0xff]
  %v18 = vld [vmem:[%s1 + $0x10] sm:$0xff]
  %v19 = vld [vmem:[%s1 + $0x18] sm:$0xff]
  %v20 = vld [vmem:[%s1 + $0x20] sm:$0xff]
  %v21 = vld [vmem:[%s1 + $0x28] sm:$0xff]
  %v22 = vld [vmem:[%s1 + $0x30] sm:$0xff]
  %v23 = vld [vmem:[%s1 + $0x38] sm:$0xff]
  %v24 = vld [vmem:[%s1 + $0x40] sm:$0xff]
  %v25 = vld [vmem:[%s1 + $0x48] sm:$0xff]
  %v26 = vld [vmem:[%s1 + $0x50] sm:$0xff]
  %v27 = vld [vmem:[%s1 + $0x58] sm:$0xff]
  %v28 = vld [vmem:[%s1 + $0x60] sm:$0xff]
  %v29 = vld [vmem:[%s1 + $0x68] sm:$0xff]
  %v30 = vld [vmem:[%s1 + $0x70] sm:$0xff]
  %v31 = vld [vmem:[%s1 + $0x78] sm:$0xff]
  %v32 = vld [vmem:[%s1 + $0x80] sm:$0xff]
  %v33 = vld [vmem:[%s1 + $0x88] sm:$0xff]
  %v34 = vld [vmem:[%s1 + $0x90] sm:$0xff]
  %v35 = vld [vmem:[%s1 + $0x98] sm:$0xff]
  %v36 = vld [vmem:[%s1 + $0xa0] sm:$0xff]
  %v37 = vld [vmem:[%s1 + $0xa8] sm:$0xff]
  %v38 = vld [vmem:[%s1 + $0xb0] sm:$0xff]
  %v39 = vld [vmem:[%s1 + $0xb8] sm:$0xff]
  %v40 = vld [vmem:[%s1 + $0xc0] sm:$0xff]
  %v41 = vld [vmem:[%s1 + $0xc8] sm:$0xff]
  %v42 = vld [vmem:[%s1 + $0xd0] sm:$0xff]
  %v43 = vld [vmem:[%s1 + $0xd8] sm:$0xff]
  %v44 = vld [vmem:[%s1 + $0xe0] sm:$0xff]
  %v45 = vld [vmem:[%s1 + $0xe8] sm:$0xff]
  %v46 = vld [vmem:[%s1 + $0xf0] sm:$0xff]
  %v47 = vld [vmem:[%s1 + $0xf8] sm:$0xff]
  %v48 = vld [vmem:[%s1 + $0x100] sm:$0xff]
  %v49 = vld [vmem:[%s1 + $0x108] sm:$0xff]
  %v50 = vld [vmem:[%s1 + $0x110] sm:$0xff]
  %v51 = vld [vmem:[%s1 + $0x118] sm:$0xff]
  %v52 = vld [vmem:[%s1 + $0x120] sm:$0xff]
  %v53 = vld [vmem:[%s1 + $0x128] sm:$0xff]
  %v54 = vld [vmem:[%s1 + $0x130] sm:$0xff]
  %v55 = vld [vmem:[%s1 + $0x138] sm:$0xff]
  %v56 = vld [vmem:[%s1 + $0x140] sm:$0xff]
  %v57 = vld [vmem:[%s1 + $0x148] sm:$0xff]
  %v58 = vld [vmem:[%s1 + $0x150] sm:$0xff]
  %v59 = vld [vmem:[%s1 + $0x158] sm:$0xff]
  %v60 = vld [vmem:[%s1 + $0x160] sm:$0xff]
  %v61 = vld [vmem:[%s1 + $0x168] sm:$0xff]
  %v62 = vld [vmem:[%s1 + $0x170] sm:$0xff]
  %v63 = vld [vmem:[%s1 + $0x178] sm:$0xff]
  %v64 = vld [vmem:[%s1 + $0x180] sm:$0xff]
  %v65 = vld [vmem:[%s1 + $0x188] sm:$0xff]
  %v66 = vld [vmem:[%s1 + $0x190] sm:$0xff]
  %v67 = vld [vmem:[%s1 + $0x198] sm:$0xff]
  %v68 = vld [vmem:[%s1 + $0x1a0] sm:$0xff]
  %v69 = vld [vmem:[%s1 + $0x1a8] sm:$0xff]
  %v70 = vld [vmem:[%s1 + $0x1b0] sm:$0xff]
  %v71 = vld [vmem:[%s1 + $0x1b8] sm:$0xff]
  %v72 = vld [vmem:[%s1 + $0x1c0] sm:$0xff]
  %v73 = vld [vmem:[%s1 + $0x1c8] sm:$0xff]
  %v74 = vld [vmem:[%s1 + $0x1d0] sm:$0xff]
  %v75 = vld [vmem:[%s1 + $0x1d8] sm:$0xff]
  %v76 = vld [vmem:[%s1 + $0x1e0] sm:$0xff]
  %v77 = vld [vmem:[%s1 + $0x1e8] sm:$0xff]
  %v78 = vld [vmem:[%s1 + $0x1f0] sm:$0xff]
  %v79 = vld [vmem:[%s1 + $0x1f8] sm:$0xff]
  %v80 = vld [vmem:[%s2] sm:$0x3]
  %v82 = vlaneseq
  %v83 = vshrl.u32 %v82, 7
  %v84 = vsub.s32 0, %v83
  %v85 = vrot.slane %v80, %v84
  %v86 = vlaneseq
  %v87 = vshrl.u32 %v86, 7
  %v88 = vsub.s32 1, %v87
  %v89 = vrot.slane %v80, %v88
  %v94 = vunpack.c.l.b16 %v14
  %v95 = vunpack.c.h.b16 %v14
  %v96 = vunpack.c.l.b16 %v15
  %v97 = vunpack.c.h.b16 %v15
  %v98 = vpack.c.b16 %v94, %v94
  %v99 = vpack.c.b16 %v95, %v95
  %v100 = vpack.c.b16 %v96, %v96
  %v101 = vpack.c.b16 %v97, %v97
  %v170 = vunpack.c.l.b16 %v16
  %v171 = vunpack.c.h.b16 %v16
  %v172 = vunpack.c.l.b16 %v17
  %v173 = vunpack.c.h.b16 %v17
  %v174 = vunpack.c.l.b16 %v18
  %v175 = vunpack.c.h.b16 %v18
  %v176 = vunpack.c.l.b16 %v19
  %v177 = vunpack.c.h.b16 %v19
  %v178 = vunpack.c.l.b16 %v20
  %v179 = vunpack.c.h.b16 %v20
  %v180 = vunpack.c.l.b16 %v21
  %v181 = vunpack.c.h.b16 %v21
  %v182 = vunpack.c.l.b16 %v22
  %v183 = vunpack.c.h.b16 %v22
  %v184 = vunpack.c.l.b16 %v23
  %v185 = vunpack.c.h.b16 %v23
  %v186 = vunpack.c.l.b16 %v24
  %v187 = vunpack.c.h.b16 %v24
  %v188 = vunpack.c.l.b16 %v25
  %v189 = vunpack.c.h.b16 %v25
  %v190 = vunpack.c.l.b16 %v26
  %v191 = vunpack.c.h.b16 %v26
  %v192 = vunpack.c.l.b16 %v27
  %v193 = vunpack.c.h.b16 %v27
  %v194 = vunpack.c.l.b16 %v28
  %v195 = vunpack.c.h.b16 %v28
  %v196 = vunpack.c.l.b16 %v29
  %v197 = vunpack.c.h.b16 %v29
  %v198 = vunpack.c.l.b16 %v30
  %v199 = vunpack.c.h.b16 %v30
  %v200 = vunpack.c.l.b16 %v31
  %v201 = vunpack.c.h.b16 %v31
  %v202 = vunpack.c.l.b16 %v32
  %v203 = vunpack.c.h.b16 %v32
  %v204 = vunpack.c.l.b16 %v33
  %v205 = vunpack.c.h.b16 %v33
  %v206 = vunpack.c.l.b16 %v34
  %v207 = vunpack.c.h.b16 %v34
  %v208 = vunpack.c.l.b16 %v35
  %v209 = vunpack.c.h.b16 %v35
  %v210 = vunpack.c.l.b16 %v36
  %v211 = vunpack.c.h.b16 %v36
  %v212 = vunpack.c.l.b16 %v37
  %v213 = vunpack.c.h.b16 %v37
  %v214 = vunpack.c.l.b16 %v38
  %v215 = vunpack.c.h.b16 %v38
  %v216 = vunpack.c.l.b16 %v39
  %v217 = vunpack.c.h.b16 %v39
  %v218 = vunpack.c.l.b16 %v40
  %v219 = vunpack.c.h.b16 %v40
  %v220 = vunpack.c.l.b16 %v41
  %v221 = vunpack.c.h.b16 %v41
  %v222 = vunpack.c.l.b16 %v42
  %v223 = vunpack.c.h.b16 %v42
  %v224 = vunpack.c.l.b16 %v43
  %v225 = vunpack.c.h.b16 %v43
  %v226 = vunpack.c.l.b16 %v44
  %v227 = vunpack.c.h.b16 %v44
  %v228 = vunpack.c.l.b16 %v45
  %v229 = vunpack.c.h.b16 %v45
  %v230 = vunpack.c.l.b16 %v46
  %v231 = vunpack.c.h.b16 %v46
  %v232 = vunpack.c.l.b16 %v47
  %v233 = vunpack.c.h.b16 %v47
  %v234 = vunpack.c.l.b16 %v48
  %v235 = vunpack.c.h.b16 %v48
  %v236 = vunpack.c.l.b16 %v49
  %v237 = vunpack.c.h.b16 %v49
  %v238 = vunpack.c.l.b16 %v50
  %v239 = vunpack.c.h.b16 %v50
  %v240 = vunpack.c.l.b16 %v51
  %v241 = vunpack.c.h.b16 %v51
  %v242 = vunpack.c.l.b16 %v52
  %v243 = vunpack.c.h.b16 %v52
  %v244 = vunpack.c.l.b16 %v53
  %v245 = vunpack.c.h.b16 %v53
  %v246 = vunpack.c.l.b16 %v54
  %v247 = vunpack.c.h.b16 %v54
  %v248 = vunpack.c.l.b16 %v55
  %v249 = vunpack.c.h.b16 %v55
  %v250 = vunpack.c.l.b16 %v56
  %v251 = vunpack.c.h.b16 %v56
  %v252 = vunpack.c.l.b16 %v57
  %v253 = vunpack.c.h.b16 %v57
  %v254 = vunpack.c.l.b16 %v58
  %v255 = vunpack.c.h.b16 %v58
  %v256 = vunpack.c.l.b16 %v59
  %v257 = vunpack.c.h.b16 %v59
  %v258 = vunpack.c.l.b16 %v60
  %v259 = vunpack.c.h.b16 %v60
  %v260 = vunpack.c.l.b16 %v61
  %v261 = vunpack.c.h.b16 %v61
  %v262 = vunpack.c.l.b16 %v62
  %v263 = vunpack.c.h.b16 %v62
  %v264 = vunpack.c.l.b16 %v63
  %v265 = vunpack.c.h.b16 %v63
  %v266 = vunpack.c.l.b16 %v64
  %v267 = vunpack.c.h.b16 %v64
  %v268 = vunpack.c.l.b16 %v65
  %v269 = vunpack.c.h.b16 %v65
  %v270 = vunpack.c.l.b16 %v66
  %v271 = vunpack.c.h.b16 %v66
  %v272 = vunpack.c.l.b16 %v67
  %v273 = vunpack.c.h.b16 %v67
  %v274 = vunpack.c.l.b16 %v68
  %v275 = vunpack.c.h.b16 %v68
  %v276 = vunpack.c.l.b16 %v69
  %v277 = vunpack.c.h.b16 %v69
  %v278 = vunpack.c.l.b16 %v70
  %v279 = vunpack.c.h.b16 %v70
  %v280 = vunpack.c.l.b16 %v71
  %v281 = vunpack.c.h.b16 %v71
  %v282 = vunpack.c.l.b16 %v72
  %v283 = vunpack.c.h.b16 %v72
  %v284 = vunpack.c.l.b16 %v73
  %v285 = vunpack.c.h.b16 %v73
  %v286 = vunpack.c.l.b16 %v74
  %v287 = vunpack.c.h.b16 %v74
  %v288 = vunpack.c.l.b16 %v75
  %v289 = vunpack.c.h.b16 %v75
  %v290 = vunpack.c.l.b16 %v76
  %v291 = vunpack.c.h.b16 %v76
  %v292 = vunpack.c.l.b16 %v77
  %v293 = vunpack.c.h.b16 %v77
  %v294 = vunpack.c.l.b16 %v78
  %v295 = vunpack.c.h.b16 %v78
  %v296 = vunpack.c.l.b16 %v79
  %v297 = vunpack.c.h.b16 %v79
  %v298 = vpack.c.b16 %v172, %v170
  %v299 = vpack.c.b16 %v173, %v171
  %v300 = vpack.c.b16 %v176, %v174
  %v301 = vpack.c.b16 %v177, %v175
  %v302 = vpack.c.b16 %v180, %v178
  %v303 = vpack.c.b16 %v181, %v179
  %v304 = vpack.c.b16 %v184, %v182
  %v305 = vpack.c.b16 %v185, %v183
  %v306 = vpack.c.b16 %v188, %v186
  %v307 = vpack.c.b16 %v189, %v187
  %v308 = vpack.c.b16 %v192, %v190
  %v309 = vpack.c.b16 %v193, %v191
  %v310 = vpack.c.b16 %v196, %v194
  %v311 = vpack.c.b16 %v197, %v195
  %v312 = vpack.c.b16 %v200, %v198
  %v313 = vpack.c.b16 %v201, %v199
  %v314 = vpack.c.b16 %v204, %v202
  %v315 = vpack.c.b16 %v205, %v203
  %v316 = vpack.c.b16 %v208, %v206
  %v317 = vpack.c.b16 %v209, %v207
  %v318 = vpack.c.b16 %v212, %v210
  %v319 = vpack.c.b16 %v213, %v211
  %v320 = vpack.c.b16 %v216, %v214
  %v321 = vpack.c.b16 %v217, %v215
  %v322 = vpack.c.b16 %v220, %v218
  %v323 = vpack.c.b16 %v221, %v219
  %v324 = vpack.c.b16 %v224, %v222
  %v325 = vpack.c.b16 %v225, %v223
  %v326 = vpack.c.b16 %v228, %v226
  %v327 = vpack.c.b16 %v229, %v227
  %v328 = vpack.c.b16 %v232, %v230
  %v329 = vpack.c.b16 %v233, %v231
  %v330 = vpack.c.b16 %v236, %v234
  %v331 = vpack.c.b16 %v237, %v235
  %v332 = vpack.c.b16 %v240, %v238
  %v333 = vpack.c.b16 %v241, %v239
  %v334 = vpack.c.b16 %v244, %v242
  %v335 = vpack.c.b16 %v245, %v243
  %v336 = vpack.c.b16 %v248, %v246
  %v337 = vpack.c.b16 %v249, %v247
  %v338 = vpack.c.b16 %v252, %v250
  %v339 = vpack.c.b16 %v253, %v251
  %v340 = vpack.c.b16 %v256, %v254
  %v341 = vpack.c.b16 %v257, %v255
  %v342 = vpack.c.b16 %v260, %v258
  %v343 = vpack.c.b16 %v261, %v259
  %v344 = vpack.c.b16 %v264, %v262
  %v345 = vpack.c.b16 %v265, %v263
  %v346 = vpack.c.b16 %v268, %v266
  %v347 = vpack.c.b16 %v269, %v267
  %v348 = vpack.c.b16 %v272, %v270
  %v349 = vpack.c.b16 %v273, %v271
  %v350 = vpack.c.b16 %v276, %v274
  %v351 = vpack.c.b16 %v277, %v275
  %v352 = vpack.c.b16 %v280, %v278
  %v353 = vpack.c.b16 %v281, %v279
  %v354 = vpack.c.b16 %v284, %v282
  %v355 = vpack.c.b16 %v285, %v283
  %v356 = vpack.c.b16 %v288, %v286
  %v357 = vpack.c.b16 %v289, %v287
  %v358 = vpack.c.b16 %v292, %v290
  %v359 = vpack.c.b16 %v293, %v291
  %v360 = vpack.c.b16 %v296, %v294
  %v361 = vpack.c.b16 %v297, %v295
  %426 = vmatprep.subr.bf16.mxu0 %v299
  %427 = vmatpush1.bf16.msra.mxu0 %v298
  %428 = vmatprep.subr.bf16.mxu0 %v301
  %429 = vmatpush1.bf16.msra.mxu0 %v300
  %430 = vmatprep.subr.bf16.mxu0 %v303
  %431 = vmatpush1.bf16.msra.mxu0 %v302
  %432 = vmatprep.subr.bf16.mxu0 %v305
  %433 = vmatpush1.bf16.msra.mxu0 %v304
  %434 = vmatprep.subr.bf16.mxu0 %v307
  %435 = vmatpush1.bf16.msra.mxu0 %v306
  %436 = vmatprep.subr.bf16.mxu0 %v309
  %437 = vmatpush1.bf16.msra.mxu0 %v308
  %438 = vmatprep.subr.bf16.mxu0 %v311
  %439 = vmatpush1.bf16.msra.mxu0 %v310
  %440 = vmatprep.subr.bf16.mxu0 %v313
  %441 = vmatpush1.bf16.msra.mxu0 %v312
  %442 = vmatprep.subr.bf16.mxu0 %v315
  %443 = vmatpush1.bf16.msra.mxu0 %v314
  %444 = vmatprep.subr.bf16.mxu0 %v317
  %445 = vmatpush1.bf16.msra.mxu0 %v316
  %446 = vmatprep.subr.bf16.mxu0 %v319
  %447 = vmatpush1.bf16.msra.mxu0 %v318
  %448 = vmatprep.subr.bf16.mxu0 %v321
  %449 = vmatpush1.bf16.msra.mxu0 %v320
  %450 = vmatprep.subr.bf16.mxu0 %v323
  %451 = vmatpush1.bf16.msra.mxu0 %v322
  %452 = vmatprep.subr.bf16.mxu0 %v325
  %453 = vmatpush1.bf16.msra.mxu0 %v324
  %454 = vmatprep.subr.bf16.mxu0 %v327
  %455 = vmatpush1.bf16.msra.mxu0 %v326
  %456 = vmatprep.subr.bf16.mxu0 %v329
  %457 = vmatpush1.bf16.msra.mxu0 %v328
  %458 = vmatprep.mubr.bf16.mxu0 %v99
  %459 = vmatmul.mubr.bf16.gmra.mrb[0].mxu0 %v98
  %v460 = vpop.f32.mrb[0].mxu0
  %v461 = vadd.f32 %v85, %v460
  %v462 = vpop.f32.mrb[0].mxu0
  %v463 = vadd.f32 %v89, %v462
  %v464 = vpop.f32.mrb[0].mxu0
  %v465 = vpop.f32.mrb[0].mxu0
  %466 = vdwg.mxu0
  %467 = vmatprep.subr.bf16.mxu0 %v331
  %468 = vmatpush1.bf16.msra.mxu0 %v330
  %469 = vmatprep.subr.bf16.mxu0 %v333
  %470 = vmatpush1.bf16.msra.mxu0 %v332
  %471 = vmatprep.subr.bf16.mxu0 %v335
  %472 = vmatpush1.bf16.msra.mxu0 %v334
  %473 = vmatprep.subr.bf16.mxu0 %v337
  %474 = vmatpush1.bf16.msra.mxu0 %v336
  %475 = vmatprep.subr.bf16.mxu0 %v339
  %476 = vmatpush1.bf16.msra.mxu0 %v338
  %477 = vmatprep.subr.bf16.mxu0 %v341
  %478 = vmatpush1.bf16.msra.mxu0 %v340
  %479 = vmatprep.subr.bf16.mxu0 %v343
  %480 = vmatpush1.bf16.msra.mxu0 %v342
  %481 = vmatprep.subr.bf16.mxu0 %v345
  %482 = vmatpush1.bf16.msra.mxu0 %v344
  %483 = vmatprep.subr.bf16.mxu0 %v347
  %484 = vmatpush1.bf16.msra.mxu0 %v346
  %485 = vmatprep.subr.bf16.mxu0 %v349
  %486 = vmatpush1.bf16.msra.mxu0 %v348
  %487 = vmatprep.subr.bf16.mxu0 %v351
  %488 = vmatpush1.bf16.msra.mxu0 %v350
  %489 = vmatprep.subr.bf16.mxu0 %v353
  %490 = vmatpush1.bf16.msra.mxu0 %v352
  %491 = vmatprep.subr.bf16.mxu0 %v355
  %492 = vmatpush1.bf16.msra.mxu0 %v354
  %493 = vmatprep.subr.bf16.mxu0 %v357
  %494 = vmatpush1.bf16.msra.mxu0 %v356
  %495 = vmatprep.subr.bf16.mxu0 %v359
  %496 = vmatpush1.bf16.msra.mxu0 %v358
  %497 = vmatprep.subr.bf16.mxu0 %v361
  %498 = vmatpush1.bf16.msra.mxu0 %v360
  %499 = vmatprep.mubr.bf16.mxu0 %v101
  %500 = vmatmul.mubr.bf16.gmra.mrb[0].mxu0 %v100
  %v501 = vpop.f32.mrb[0].mxu0
  %v502 = vadd.f32 %v461, %v501
  %v503 = vpop.f32.mrb[0].mxu0
  %v504 = vadd.f32 %v463, %v503
  %v505 = vpop.f32.mrb[0].mxu0
  %v506 = vpop.f32.mrb[0].mxu0
  %507 = vdwg.mxu0
  %v508 = vpack.c.bf16 %v502, %v502
  %v509 = vpack.c.bf16 %v504, %v504
  %v512 = vunpack.c.l.b16 %v508
  %v513 = vunpack.c.l.b16 %v509
  %v514 = vpack.c.b16 %v513, %v512
  %516 = vst [vmem:[%s3] sm:$0xff] %v514
  // Predicated region
  $region14: #{f_random_proj_forward.12} parent=0 // pred_check
    _
  $region15: #{f_random_proj_forward.12} parent=0 // pred_check_branch
    %518 = sbr.rel (0) target = $region17
  $region16: #{f_random_proj_forward.12} parent=0 // pred_region
    _
  $region17: #{f_random_proj_forward.12} parent=0 // pred_fallthru
    _
  // Predicated region
  $region18: #{f_random_proj_forward.12} parent=0 // pred_check
    _
  $region19: #{f_random_proj_forward.12} parent=0 // pred_check_branch
    %520 = sbr.rel (0) target = $region21
  $region20: #{f_random_proj_forward.12} parent=0 // pred_region
    _
  $region21: #{f_random_proj_forward.12} parent=0 // pred_fallthru
    _

// kernel: f_random_proj_forward.13
$region0: #{f_random_proj_forward.13}
  #allocation0 [shape = 'u32[]', space=smem, size = 0x4, offset = 0x4, fixed_abs, tag = 'smem constant byte address 0x4 - core index']
  #allocation1 [shape = 'u32[144,128]{1,0:T(1,128)}', space=vmem, size = 0x12000, scoped, tag = 'internal scratch']
  %s0 = inlined_call_operand.vmem [shape: bf16[32,256], index: 0, kind: input, shape index: {}]
  %s1 = inlined_call_operand.vmem [shape: bf16[32,256], index: 1, kind: input, shape index: {}]
  %s2 = inlined_call_operand.vmem [shape: bf16[256,128], index: 2, kind: input, shape index: {}]
  %s3 = inlined_call_operand.vmem [shape: f32[1,128], index: 3, kind: input, shape index: {}]
  %s4 = inlined_call_operand.vmem [shape: bf16[32,128], index: 4, kind: output, shape index: {}]
  %s5 = sld [smem:[#allocation0]]
  $region49: #{f_random_proj_forward.13} parent=0
    _
  %s7 = ssub.s32 1, %s5
  %s8 = scalar_select 0, %s7, %s5
  loop: start=0, step=1, limit=4
  $region2: #{f_random_proj_forward.13} parent=0 // loop_pre_header
    _
  $region3: #{f_random_proj_forward.13} parent=0 // loop_header
    %s10 = sphi 0, %s14
    %p11 = scmp.ge.s32.totalorder %s10, 4
    %s20 = sphi 0, %s22
    %s23 = sphi 0, %s20
    %s24 = sphi 0, %s23
    %s40 = sphi 0, %s24
    %s46 = sphi 0, %s48
    %s49 = sphi 0, %s46
    %s50 = sphi 0, %s49
    %s66 = sphi 0, %s50
    %s70 = sphi 0, %s70
    %s72 = sphi 0, %s70
    %s73 = sphi 0, %s72
    %s87 = sphi 0, %s73
    %s91 = sphi 0, %s91
    %s93 = sphi 0, %s91
    %s94 = sphi 0, %s93
    %s108 = sphi 0, %s94
    %s114 = sphi 0, %s116
    %s117 = sphi 0, %s114
    %s118 = sphi 0, %s117
    %s134 = sphi 0, %s118
  $region4: #{f_random_proj_forward.13} parent=0 // loop_header_branch
    %13 = sbr.rel (%p11) target = $region8
  $region5: #{f_random_proj_forward.13} parent=0 // loop_body
    %s15 = ssub.s32 %s10, 1
    %s16 = ssub.s32 %s10, 2
    %s17 = sadd.s32 %s10, 1
    %s18 = ssub.s32 %s10, %s17
    %p19 = scmp.eq.s32.totalorder %s18, 0
    %s21 = sadd.s32 %s20, 1
    %s22 = scalar_select %p19, %s20, %s21
    %p25 = pneg %p19
    %p26 = scmp.eq.s32.totalorder %s10, 1
    %p27 = por %p25, %p26
    %p28 = scmp.ne.s32.totalorder %s20, %s23
    %p29 = scmp.eq.s32.totalorder %s10, 0
    %p30 = por %p28, %p29
    %p31 = scmp.ne.s32.totalorder %s20, %s23
    %p32 = scmp.eq.s32.totalorder %s15, 1
    %p33 = por %p31, %p32
    %p34 = scmp.ne.s32.totalorder %s23, %s24
    %p35 = scmp.eq.s32.totalorder %s15, 0
    %p36 = por %p34, %p35
    %p37 = scmp.ne.s32.totalorder %s23, %s24
    %p38 = scmp.eq.s32.totalorder %s16, 1
    %p39 = por %p37, %p38
    %p41 = scmp.ne.s32.totalorder %s24, %s40
    %p42 = scmp.eq.s32.totalorder %s16, 0
    %p43 = por %p41, %p42
    %s44 = ssub.s32 %s10, %s17
    %p45 = scmp.eq.s32.totalorder %s44, 0
    %s47 = sadd.s32 %s46, 1
    %s48 = scalar_select %p45, %s46, %s47
    %p51 = pneg %p45
    %p52 = scmp.eq.s32.totalorder %s10, 1
    %p53 = por %p51, %p52
    %p54 = scmp.ne.s32.totalorder %s46, %s49
    %p55 = scmp.eq.s32.totalorder %s10, 0
    %p56 = por %p54, %p55
    %p57 = scmp.ne.s32.totalorder %s46, %s49
    %p58 = scmp.eq.s32.totalorder %s15, 1
    %p59 = por %p57, %p58
    %p60 = scmp.ne.s32.totalorder %s49, %s50
    %p61 = scmp.eq.s32.totalorder %s15, 0
    %p62 = por %p60, %p61
    %p63 = scmp.ne.s32.totalorder %s49, %s50
    %p64 = scmp.eq.s32.totalorder %s16, 1
    %p65 = por %p63, %p64
    %p67 = scmp.ne.s32.totalorder %s50, %s66
    %p68 = scmp.eq.s32.totalorder %s16, 0
    %p69 = por %p67, %p68
    %s71 = sadd.s32 %s70, 1
    %p74 = scmp.eq.s32.totalorder %s10, 1
    %p75 = scmp.ne.s32.totalorder %s70, %s72
    %p76 = scmp.eq.s32.totalorder %s10, 0
    %p77 = por %p75, %p76
    %p78 = scmp.ne.s32.totalorder %s70, %s72
    %p79 = scmp.eq.s32.totalorder %s15, 1
    %p80 = por %p78, %p79
    %p81 = scmp.ne.s32.totalorder %s72, %s73
    %p82 = scmp.eq.s32.totalorder %s15, 0
    %p83 = por %p81, %p82
    %p84 = scmp.ne.s32.totalorder %s72, %s73
    %p85 = scmp.eq.s32.totalorder %s16, 1
    %p86 = por %p84, %p85
    %p88 = scmp.ne.s32.totalorder %s73, %s87
    %p89 = scmp.eq.s32.totalorder %s16, 0
    %p90 = por %p88, %p89
    %s92 = sadd.s32 %s91, 1
    %p95 = scmp.eq.s32.totalorder %s10, 1
    %p96 = scmp.ne.s32.totalorder %s91, %s93
    %p97 = scmp.eq.s32.totalorder %s10, 0
    %p98 = por %p96, %p97
    %p99 = scmp.ne.s32.totalorder %s91, %s93
    %p100 = scmp.eq.s32.totalorder %s15, 1
    %p101 = por %p99, %p100
    %p102 = scmp.ne.s32.totalorder %s93, %s94
    %p103 = scmp.eq.s32.totalorder %s15, 0
    %p104 = por %p102, %p103
    %p105 = scmp.ne.s32.totalorder %s93, %s94
    %p106 = scmp.eq.s32.totalorder %s16, 1
    %p107 = por %p105, %p106
    %p109 = scmp.ne.s32.totalorder %s94, %s108
    %p110 = scmp.eq.s32.totalorder %s16, 0
    %p111 = por %p109, %p110
    %s112 = ssub.s32 %s10, %s17
    %p113 = scmp.eq.s32.totalorder %s112, 0
    %s115 = sadd.s32 %s114, 1
    %s116 = scalar_select %p113, %s114, %s115
    %p119 = pneg %p113
    %p120 = scmp.eq.s32.totalorder %s10, 1
    %p121 = por %p119, %p120
    %p122 = scmp.ne.s32.totalorder %s114, %s117
    %p123 = scmp.eq.s32.totalorder %s10, 0
    %p124 = por %p122, %p123
    %p125 = scmp.ne.s32.totalorder %s114, %s117
    %p126 = scmp.eq.s32.totalorder %s15, 1
    %p127 = por %p125, %p126
    %p128 = scmp.ne.s32.totalorder %s117, %s118
    %p129 = scmp.eq.s32.totalorder %s15, 0
    %p130 = por %p128, %p129
    %p131 = scmp.ne.s32.totalorder %s117, %s118
    %p132 = scmp.eq.s32.totalorder %s16, 1
    %p133 = por %p131, %p132
    %p135 = scmp.ne.s32.totalorder %s118, %s134
    %p136 = scmp.eq.s32.totalorder %s16, 0
    %p137 = por %p135, %p136
    %p138 = scmp.le.s32.totalorder 1, %s10
    %p139 = scmp.lt.s32.totalorder %s10, 3
    %p140 = pnand %p138, %p139
    %p141 = pneg %p140
    // Predicated region
    $region9: #{f_random_proj_forward.13} parent=5 // pred_check
      _
    $region10: #{f_random_proj_forward.13} parent=5 // pred_check_branch
      %143 = sbr.rel (%p140) target = $region12
    $region11: #{f_random_proj_forward.13} parent=5 // pred_region
      %s144 = ssub.s32 %s10, 1
      // Predicated region
      $region13: #{f_random_proj_forward.13} parent=11 // pred_check
        %p145 = pneg %p83
      $region14: #{f_random_proj_forward.13} parent=11 // pred_check_branch
        %147 = sbr.rel (%p145) target = $region16
      $region15: #{f_random_proj_forward.13} parent=11 // pred_region
        _
      $region16: #{f_random_proj_forward.13} parent=11 // pred_fallthru
        _
      // Predicated region
      $region17: #{f_random_proj_forward.13} parent=11 // pred_check
        %p148 = pneg %p104
      $region18: #{f_random_proj_forward.13} parent=11 // pred_check_branch
        %150 = sbr.rel (%p148) target = $region20
      $region19: #{f_random_proj_forward.13} parent=11 // pred_region
        _
      $region20: #{f_random_proj_forward.13} parent=11 // pred_fallthru
        _
    $region12: #{f_random_proj_forward.13} parent=5 // pred_fallthru
      _
    %p151 = scmp.lt.s32.totalorder %s10, 2
    // Predicated region
    $region21: #{f_random_proj_forward.13} parent=5 // pred_check
      %p152 = pneg %p151
    $region22: #{f_random_proj_forward.13} parent=5 // pred_check_branch
      %154 = sbr.rel (%p152) target = $region24
    $region23: #{f_random_proj_forward.13} parent=5 // pred_region
      // Predicated region
      $region25: #{f_random_proj_forward.13} parent=23 // pred_check
        %p155 = pneg %p30
      $region26: #{f_random_proj_forward.13} parent=23 // pred_check_branch
        %157 = sbr.rel (%p155) target = $region28
      $region27: #{f_random_proj_forward.13} parent=23 // pred_region
        %s158 = smul.u32 2, %s10
        %p159 = scmp.lt.s32.totalorder %s158, 3
        %s160 = scalar_select %p159, %s158, 3
        %s161 = smul.addr %s160, 2
        %s162 = smul.addr %s161, 4
        %s163 = scalar_lea.vmem %s0, %s162
        %s164 = smul.u32 2, %s10
      $region28: #{f_random_proj_forward.13} parent=23 // pred_fallthru
        _
      // Predicated region
      $region29: #{f_random_proj_forward.13} parent=23 // pred_check
        %p165 = pneg %p56
      $region30: #{f_random_proj_forward.13} parent=23 // pred_check_branch
        %167 = sbr.rel (%p165) target = $region32
      $region31: #{f_random_proj_forward.13} parent=23 // pred_region
        %s168 = smul.u32 2, %s10
        %p169 = scmp.lt.s32.totalorder %s168, 3
        %s170 = scalar_select %p169, %s168, 3
        %s171 = smul.addr %s170, 2
        %s172 = smul.addr %s171, 4
        %s173 = scalar_lea.vmem %s1, %s172
        %s174 = smul.u32 2, %s10
      $region32: #{f_random_proj_forward.13} parent=23 // pred_fallthru
        _
    $region24: #{f_random_proj_forward.13} parent=5 // pred_fallthru
      _
    %p175 = scmp.le.s32.totalorder 1, %s10
    %p176 = scmp.lt.s32.totalorder %s10, 3
    %p177 = pnand %p175, %p176
    %p178 = pneg %p177
    // Predicated region
    $region33: #{f_random_proj_forward.13} parent=5 // pred_check
      _
    $region34: #{f_random_proj_forward.13} parent=5 // pred_check_branch
      %180 = sbr.rel (%p177) target = $region36
    $region35: #{f_random_proj_forward.13} parent=5 // pred_region
      %s181 = ssub.s32 %s10, 1
      %s182 = smul.u32 2, %s15
      %p183 = scmp.lt.s32.totalorder %s182, 3
      %s184 = scalar_select %p183, %s182, 3
      %s185 = smul.addr %s184, 2
      %s186 = smul.addr %s185, 4
      %s187 = scalar_lea.vmem %s0, %s186
      %p188 = pneg %p36
      %p189 = pneg %p33
      %s190 = smul.u32 2, %s15
      %p191 = scmp.lt.s32.totalorder %s190, 3
      %s192 = scalar_select %p191, %s190, 3
      %s193 = smul.addr %s192, 2
      %s194 = smul.addr %s193, 4
      %s195 = scalar_lea.vmem %s1, %s194
      %p196 = pneg %p62
      %p197 = pneg %p59
      %p198 = pneg %p83
      %p199 = pneg %p80
      %p200 = pneg %p104
      %p201 = pneg %p101
      %p202 = pneg %p130
      %p203 = pneg %p127
      %s204 = smul.u32 2, %s15
      %p205 = scmp.lt.s32.totalorder %s204, 3
      %s206 = scalar_select %p205, %s204, 3
      %s207 = smul.addr %s206, 4
      %s208 = scalar_lea.vmem %s4, %s207
      %s209 = smul.u32 2, %s15
      %p210 = scmp.lt.s32.totalorder %s209, 3
      %s211 = scalar_select %p210, %s209, 3
      %s212 = smul.addr %s211, 2
      %s213 = smul.addr %s212, 4
      %s214 = scalar_lea.vmem %s0, %s213
      %s215 = smul.u32 2, %s15
      %s216 = smul.u32 2, %s15
      %p217 = scmp.lt.s32.totalorder %s216, 3
      %s218 = scalar_select %p217, %s216, 3
      %s219 = smul.addr %s218, 2
      %s220 = smul.addr %s219, 4
      %s221 = scalar_lea.vmem %s1, %s220
      %s222 = smul.u32 2, %s15
      %s223 = smul.u32 2, %s15
      %p224 = scmp.lt.s32.totalorder %s223, 3
      %s225 = scalar_select %p224, %s223, 3
      %s226 = smul.addr %s225, 4
      %s227 = scalar_lea.vmem %s4, %s226
      %s228 = smul.u32 2, %s15
      %v230 = vld [vmem:[%s214] sm:$0xff]
      %v231 = vld [vmem:[%s214 + $0x8] sm:$0xff]
      %v232 = vld [vmem:[%s221] sm:$0xff]
      %v233 = vld [vmem:[%s221 + $0x8] sm:$0xff]
      %v234 = vadd.bf16 %v230, %v232
      %v235 = vadd.bf16 %v231, %v233
      %v236 = vld [vmem:[%s2] sm:$0xf]
      %v237 = vld [vmem:[%s2 + $0x4] sm:$0xf]
      %v238 = vld [vmem:[%s2 + $0x8] sm:$0xf]
      %v239 = vld [vmem:[%s2 + $0xc] sm:$0xf]
      %v240 = vld [vmem:[%s2 + $0x10] sm:$0xf]
      %v241 = vld [vmem:[%s2 + $0x14] sm:$0xf]
      %v242 = vld [vmem:[%s2 + $0x18] sm:$0xf]
      %v243 = vld [vmem:[%s2 + $0x1c] sm:$0xf]
      %v244 = vld [vmem:[%s2 + $0x20] sm:$0xf]
      %v245 = vld [vmem:[%s2 + $0x24] sm:$0xf]
      %v246 = vld [vmem:[%s2 + $0x28] sm:$0xf]
      %v247 = vld [vmem:[%s2 + $0x2c] sm:$0xf]
      %v248 = vld [vmem:[%s2 + $0x30] sm:$0xf]
      %v249 = vld [vmem:[%s2 + $0x34] sm:$0xf]
      %v250 = vld [vmem:[%s2 + $0x38] sm:$0xf]
      %v251 = vld [vmem:[%s2 + $0x3c] sm:$0xf]
      %v252 = vld [vmem:[%s2 + $0x40] sm:$0xf]
      %v253 = vld [vmem:[%s2 + $0x44] sm:$0xf]
      %v254 = vld [vmem:[%s2 + $0x48] sm:$0xf]
      %v255 = vld [vmem:[%s2 + $0x4c] sm:$0xf]
      %v256 = vld [vmem:[%s2 + $0x50] sm:$0xf]
      %v257 = vld [vmem:[%s2 + $0x54] sm:$0xf]
      %v258 = vld [vmem:[%s2 + $0x58] sm:$0xf]
      %v259 = vld [vmem:[%s2 + $0x5c] sm:$0xf]
      %v260 = vld [vmem:[%s2 + $0x60] sm:$0xf]
      %v261 = vld [vmem:[%s2 + $0x64] sm:$0xf]
      %v262 = vld [vmem:[%s2 + $0x68] sm:$0xf]
      %v263 = vld [vmem:[%s2 + $0x6c] sm:$0xf]
      %v264 = vld [vmem:[%s2 + $0x70] sm:$0xf]
      %v265 = vld [vmem:[%s2 + $0x74] sm:$0xf]
      %v266 = vld [vmem:[%s2 + $0x78] sm:$0xf]
      %v267 = vld [vmem:[%s2 + $0x7c] sm:$0xf]
      %v268 = vld [vmem:[%s3] sm:$0x1]
      %v270 = vlaneseq
      %v271 = vshrl.u32 %v270, 7
      %v272 = vsub.s32 0, %v271
      %v273 = vrot.slane %v268, %v272
      %v277 = vunpack.c.l.b16 %v234
      %v278 = vunpack.c.h.b16 %v234
      %v279 = vunpack.c.l.b16 %v235
      %v280 = vunpack.c.h.b16 %v235
      %v281 = vpack.c.b16 %v279, %v277
      %v282 = vpack.c.b16 %v280, %v278
      %v317 = vunpack.c.l.b16 %v236
      %v318 = vunpack.c.l.b16 %v237
      %v319 = vunpack.c.l.b16 %v238
      %v320 = vunpack.c.l.b16 %v239
      %v321 = vunpack.c.l.b16 %v240
      %v322 = vunpack.c.l.b16 %v241
      %v323 = vunpack.c.l.b16 %v242
      %v324 = vunpack.c.l.b16 %v243
      %v325 = vunpack.c.l.b16 %v244
      %v326 = vunpack.c.l.b16 %v245
      %v327 = vunpack.c.l.b16 %v246
      %v328 = vunpack.c.l.b16 %v247
      %v329 = vunpack.c.l.b16 %v248
      %v330 = vunpack.c.l.b16 %v249
      %v331 = vunpack.c.l.b16 %v250
      %v332 = vunpack.c.l.b16 %v251
      %v333 = vunpack.c.l.b16 %v252
      %v334 = vunpack.c.l.b16 %v253
      %v335 = vunpack.c.l.b16 %v254
      %v336 = vunpack.c.l.b16 %v255
      %v337 = vunpack.c.l.b16 %v256
      %v338 = vunpack.c.l.b16 %v257
      %v339 = vunpack.c.l.b16 %v258
      %v340 = vunpack.c.l.b16 %v259
      %v341 = vunpack.c.l.b16 %v260
      %v342 = vunpack.c.l.b16 %v261
      %v343 = vunpack.c.l.b16 %v262
      %v344 = vunpack.c.l.b16 %v263
      %v345 = vunpack.c.l.b16 %v264
      %v346 = vunpack.c.l.b16 %v265
      %v347 = vunpack.c.l.b16 %v266
      %v348 = vunpack.c.l.b16 %v267
      %v349 = vpack.c.b16 %v318, %v317
      %v350 = vpack.c.b16 %v320, %v319
      %v351 = vpack.c.b16 %v322, %v321
      %v352 = vpack.c.b16 %v324, %v323
      %v353 = vpack.c.b16 %v326, %v325
      %v354 = vpack.c.b16 %v328, %v327
      %v355 = vpack.c.b16 %v330, %v329
      %v356 = vpack.c.b16 %v332, %v331
      %v357 = vpack.c.b16 %v334, %v333
      %v358 = vpack.c.b16 %v336, %v335
      %v359 = vpack.c.b16 %v338, %v337
      %v360 = vpack.c.b16 %v340, %v339
      %v361 = vpack.c.b16 %v342, %v341
      %v362 = vpack.c.b16 %v344, %v343
      %v363 = vpack.c.b16 %v346, %v345
      %v364 = vpack.c.b16 %v348, %v347
      %381 = vmatprep.subr.bf16.mxu0 0
      %382 = vmatpush1.bf16.msra.mxu0 %v349
      %383 = vmatprep.subr.bf16.mxu0 0
      %384 = vmatpush1.bf16.msra.mxu0 %v350
      %385 = vmatprep.subr.bf16.mxu0 0
      %386 = vmatpush1.bf16.msra.mxu0 %v351
      %387 = vmatprep.subr.bf16.mxu0 0
      %388 = vmatpush1.bf16.msra.mxu0 %v352
      %389 = vmatprep.subr.bf16.mxu0 0
      %390 = vmatpush1.bf16.msra.mxu0 %v353
      %391 = vmatprep.subr.bf16.mxu0 0
      %392 = vmatpush1.bf16.msra.mxu0 %v354
      %393 = vmatprep.subr.bf16.mxu0 0
      %394 = vmatpush1.bf16.msra.mxu0 %v355
      %395 = vmatprep.subr.bf16.mxu0 0
      %396 = vmatpush1.bf16.msra.mxu0 %v356
      %397 = vmatprep.subr.bf16.mxu0 0
      %398 = vmatpush1.bf16.msra.mxu0 %v357
      %399 = vmatprep.subr.bf16.mxu0 0
      %400 = vmatpush1.bf16.msra.mxu0 %v358
      %401 = vmatprep.subr.bf16.mxu0 0
      %402 = vmatpush1.bf16.msra.mxu0 %v359
      %403 = vmatprep.subr.bf16.mxu0 0
      %404 = vmatpush1.bf16.msra.mxu0 %v360
      %405 = vmatprep.subr.bf16.mxu0 0
      %406 = vmatpush1.bf16.msra.mxu0 %v361
      %407 = vmatprep.subr.bf16.mxu0 0
      %408 = vmatpush1.bf16.msra.mxu0 %v362
      %409 = vmatprep.subr.bf16.mxu0 0
      %410 = vmatpush1.bf16.msra.mxu0 %v363
      %411 = vmatprep.subr.bf16.mxu0 0
      %412 = vmatpush1.bf16.msra.mxu0 %v364
      %413 = vmatprep.mubr.bf16.mxu0 %v282
      %414 = vmatmul.mubr.bf16.gmra.mrb[0].mxu0 %v281
      %v415 = vpop.f32.mrb[0].mxu0
      %v416 = vadd.f32 %v273, %v415
      %v417 = vpop.f32.mrb[0].mxu0
      %v418 = vpop.f32.mrb[0].mxu0
      %v419 = vadd.f32 %v273, %v418
      %v420 = vpop.f32.mrb[0].mxu0
      %421 = vdwg.mxu0
      %v422 = vpack.c.bf16 %v419, %v416
      %v424 = vunpack.c.l.b16 %v422
      %v425 = vunpack.c.h.b16 %v422
      %v426 = vpack.c.b16 %v424, %v424
      %v427 = vpack.c.b16 %v425, %v425
      %430 = vst [vmem:[%s227] sm:$0xf] %v426
      %431 = vst [vmem:[%s227 + $0x4] sm:$0xf] %v427
      %s432 = smul.u32 2, %s15
      %p433 = scmp.lt.s32.totalorder %s432, 3
      %s434 = scalar_select %p433, %s432, 3
      %s435 = smul.addr %s434, 4
      %s436 = scalar_lea.vmem %s4, %s435
      // Predicated region
      $region37: #{f_random_proj_forward.13} parent=35 // pred_check
        %p437 = pneg %p127
      $region38: #{f_random_proj_forward.13} parent=35 // pred_check_branch
        %439 = sbr.rel (%p437) target = $region40
      $region39: #{f_random_proj_forward.13} parent=35 // pred_region
        %s440 = smul.u32 2, %s15
      $region40: #{f_random_proj_forward.13} parent=35 // pred_fallthru
        _
    $region36: #{f_random_proj_forward.13} parent=5 // pred_fallthru
      _
    %p441 = scmp.le.s32.totalorder 2, %s10
    // Predicated region
    $region41: #{f_random_proj_forward.13} parent=5 // pred_check
      %p442 = pneg %p441
    $region42: #{f_random_proj_forward.13} parent=5 // pred_check_branch
      %444 = sbr.rel (%p442) target = $region44
    $region43: #{f_random_proj_forward.13} parent=5 // pred_region
      %s445 = ssub.s32 %s10, 2
      // Predicated region
      $region45: #{f_random_proj_forward.13} parent=43 // pred_check
        %p446 = pneg %p133
      $region46: #{f_random_proj_forward.13} parent=43 // pred_check_branch
        %448 = sbr.rel (%p446) target = $region48
      $region47: #{f_random_proj_forward.13} parent=43 // pred_region
        %s449 = smul.u32 2, %s16
        %p450 = scmp.lt.s32.totalorder %s449, 3
        %s451 = scalar_select %p450, %s449, 3
        %s452 = smul.addr %s451, 4
        %s453 = scalar_lea.vmem %s4, %s452
      $region48: #{f_random_proj_forward.13} parent=43 // pred_fallthru
        _
    $region44: #{f_random_proj_forward.13} parent=5 // pred_fallthru
      _
  $region6: #{f_random_proj_forward.13} parent=0 // loop_footer
    %s14 = sadd.s32 1, %s10
  $region7: #{f_random_proj_forward.13} parent=0 // loop_footer_branch
    %9 = sbr.rel target = $region3
  $region8: #{f_random_proj_forward.13} parent=0 // loop_exit
    _

// kernel: f_random_proj_forward.14
$region0: #{f_random_proj_forward.14}
  #allocation0 [shape = 'u32[]', space=smem, size = 0x4, offset = 0x4, fixed_abs, tag = 'smem constant byte address 0x4 - core index']
  #allocation1 [shape = 'u32[144,128]{1,0:T(1,128)}', space=vmem, size = 0x12000, scoped, tag = 'internal scratch']
  %s0 = inlined_call_operand.vmem [shape: bf16[64,256], index: 0, kind: input, shape index: {}]
  %s1 = inlined_call_operand.vmem [shape: bf16[64,256], index: 1, kind: input, shape index: {}]
  %s2 = inlined_call_operand.vmem [shape: bf16[256,128], index: 2, kind: input, shape index: {}]
  %s3 = inlined_call_operand.vmem [shape: f32[1,128], index: 3, kind: input, shape index: {}]
  %s4 = inlined_call_operand.vmem [shape: bf16[64,128], index: 4, kind: output, shape index: {}]
  %s5 = sld [smem:[#allocation0]]
  $region49: #{f_random_proj_forward.14} parent=0
    _
  %s7 = ssub.s32 1, %s5
  %s8 = scalar_select 0, %s7, %s5
  loop: start=0, step=1, limit=4
  $region2: #{f_random_proj_forward.14} parent=0 // loop_pre_header
    _
  $region3: #{f_random_proj_forward.14} parent=0 // loop_header
    %s10 = sphi 0, %s14
    %p11 = scmp.ge.s32.totalorder %s10, 4
    %s20 = sphi 0, %s22
    %s23 = sphi 0, %s20
    %s24 = sphi 0, %s23
    %s40 = sphi 0, %s24
    %s46 = sphi 0, %s48
    %s49 = sphi 0, %s46
    %s50 = sphi 0, %s49
    %s66 = sphi 0, %s50
    %s70 = sphi 0, %s70
    %s72 = sphi 0, %s70
    %s73 = sphi 0, %s72
    %s87 = sphi 0, %s73
    %s91 = sphi 0, %s91
    %s93 = sphi 0, %s91
    %s94 = sphi 0, %s93
    %s108 = sphi 0, %s94
    %s114 = sphi 0, %s116
    %s117 = sphi 0, %s114
    %s118 = sphi 0, %s117
    %s134 = sphi 0, %s118
  $region4: #{f_random_proj_forward.14} parent=0 // loop_header_branch
    %13 = sbr.rel (%p11) target = $region8
  $region5: #{f_random_proj_forward.14} parent=0 // loop_body
    %s15 = ssub.s32 %s10, 1
    %s16 = ssub.s32 %s10, 2
    %s17 = sadd.s32 %s10, 1
    %s18 = ssub.s32 %s10, %s17
    %p19 = scmp.eq.s32.totalorder %s18, 0
    %s21 = sadd.s32 %s20, 1
    %s22 = scalar_select %p19, %s20, %s21
    %p25 = pneg %p19
    %p26 = scmp.eq.s32.totalorder %s10, 1
    %p27 = por %p25, %p26
    %p28 = scmp.ne.s32.totalorder %s20, %s23
    %p29 = scmp.eq.s32.totalorder %s10, 0
    %p30 = por %p28, %p29
    %p31 = scmp.ne.s32.totalorder %s20, %s23
    %p32 = scmp.eq.s32.totalorder %s15, 1
    %p33 = por %p31, %p32
    %p34 = scmp.ne.s32.totalorder %s23, %s24
    %p35 = scmp.eq.s32.totalorder %s15, 0
    %p36 = por %p34, %p35
    %p37 = scmp.ne.s32.totalorder %s23, %s24
    %p38 = scmp.eq.s32.totalorder %s16, 1
    %p39 = por %p37, %p38
    %p41 = scmp.ne.s32.totalorder %s24, %s40
    %p42 = scmp.eq.s32.totalorder %s16, 0
    %p43 = por %p41, %p42
    %s44 = ssub.s32 %s10, %s17
    %p45 = scmp.eq.s32.totalorder %s44, 0
    %s47 = sadd.s32 %s46, 1
    %s48 = scalar_select %p45, %s46, %s47
    %p51 = pneg %p45
    %p52 = scmp.eq.s32.totalorder %s10, 1
    %p53 = por %p51, %p52
    %p54 = scmp.ne.s32.totalorder %s46, %s49
    %p55 = scmp.eq.s32.totalorder %s10, 0
    %p56 = por %p54, %p55
    %p57 = scmp.ne.s32.totalorder %s46, %s49
    %p58 = scmp.eq.s32.totalorder %s15, 1
    %p59 = por %p57, %p58
    %p60 = scmp.ne.s32.totalorder %s49, %s50
    %p61 = scmp.eq.s32.totalorder %s15, 0
    %p62 = por %p60, %p61
    %p63 = scmp.ne.s32.totalorder %s49, %s50
    %p64 = scmp.eq.s32.totalorder %s16, 1
    %p65 = por %p63, %p64
    %p67 = scmp.ne.s32.totalorder %s50, %s66
    %p68 = scmp.eq.s32.totalorder %s16, 0
    %p69 = por %p67, %p68
    %s71 = sadd.s32 %s70, 1
    %p74 = scmp.eq.s32.totalorder %s10, 1
    %p75 = scmp.ne.s32.totalorder %s70, %s72
    %p76 = scmp.eq.s32.totalorder %s10, 0
    %p77 = por %p75, %p76
    %p78 = scmp.ne.s32.totalorder %s70, %s72
    %p79 = scmp.eq.s32.totalorder %s15, 1
    %p80 = por %p78, %p79
    %p81 = scmp.ne.s32.totalorder %s72, %s73
    %p82 = scmp.eq.s32.totalorder %s15, 0
    %p83 = por %p81, %p82
    %p84 = scmp.ne.s32.totalorder %s72, %s73
    %p85 = scmp.eq.s32.totalorder %s16, 1
    %p86 = por %p84, %p85
    %p88 = scmp.ne.s32.totalorder %s73, %s87
    %p89 = scmp.eq.s32.totalorder %s16, 0
    %p90 = por %p88, %p89
    %s92 = sadd.s32 %s91, 1
    %p95 = scmp.eq.s32.totalorder %s10, 1
    %p96 = scmp.ne.s32.totalorder %s91, %s93
    %p97 = scmp.eq.s32.totalorder %s10, 0
    %p98 = por %p96, %p97
    %p99 = scmp.ne.s32.totalorder %s91, %s93
    %p100 = scmp.eq.s32.totalorder %s15, 1
    %p101 = por %p99, %p100
    %p102 = scmp.ne.s32.totalorder %s93, %s94
    %p103 = scmp.eq.s32.totalorder %s15, 0
    %p104 = por %p102, %p103
    %p105 = scmp.ne.s32.totalorder %s93, %s94
    %p106 = scmp.eq.s32.totalorder %s16, 1
    %p107 = por %p105, %p106
    %p109 = scmp.ne.s32.totalorder %s94, %s108
    %p110 = scmp.eq.s32.totalorder %s16, 0
    %p111 = por %p109, %p110
    %s112 = ssub.s32 %s10, %s17
    %p113 = scmp.eq.s32.totalorder %s112, 0
    %s115 = sadd.s32 %s114, 1
    %s116 = scalar_select %p113, %s114, %s115
    %p119 = pneg %p113
    %p120 = scmp.eq.s32.totalorder %s10, 1
    %p121 = por %p119, %p120
    %p122 = scmp.ne.s32.totalorder %s114, %s117
    %p123 = scmp.eq.s32.totalorder %s10, 0
    %p124 = por %p122, %p123
    %p125 = scmp.ne.s32.totalorder %s114, %s117
    %p126 = scmp.eq.s32.totalorder %s15, 1
    %p127 = por %p125, %p126
    %p128 = scmp.ne.s32.totalorder %s117, %s118
    %p129 = scmp.eq.s32.totalorder %s15, 0
    %p130 = por %p128, %p129
    %p131 = scmp.ne.s32.totalorder %s117, %s118
    %p132 = scmp.eq.s32.totalorder %s16, 1
    %p133 = por %p131, %p132
    %p135 = scmp.ne.s32.totalorder %s118, %s134
    %p136 = scmp.eq.s32.totalorder %s16, 0
    %p137 = por %p135, %p136
    %p138 = scmp.le.s32.totalorder 1, %s10
    %p139 = scmp.lt.s32.totalorder %s10, 3
    %p140 = pnand %p138, %p139
    %p141 = pneg %p140
    // Predicated region
    $region9: #{f_random_proj_forward.14} parent=5 // pred_check
      _
    $region10: #{f_random_proj_forward.14} parent=5 // pred_check_branch
      %143 = sbr.rel (%p140) target = $region12
    $region11: #{f_random_proj_forward.14} parent=5 // pred_region
      %s144 = ssub.s32 %s10, 1
      // Predicated region
      $region13: #{f_random_proj_forward.14} parent=11 // pred_check
        %p145 = pneg %p83
      $region14: #{f_random_proj_forward.14} parent=11 // pred_check_branch
        %147 = sbr.rel (%p145) target = $region16
      $region15: #{f_random_proj_forward.14} parent=11 // pred_region
        _
      $region16: #{f_random_proj_forward.14} parent=11 // pred_fallthru
        _
      // Predicated region
      $region17: #{f_random_proj_forward.14} parent=11 // pred_check
        %p148 = pneg %p104
      $region18: #{f_random_proj_forward.14} parent=11 // pred_check_branch
        %150 = sbr.rel (%p148) target = $region20
      $region19: #{f_random_proj_forward.14} parent=11 // pred_region
        _
      $region20: #{f_random_proj_forward.14} parent=11 // pred_fallthru
        _
    $region12: #{f_random_proj_forward.14} parent=5 // pred_fallthru
      _
    %p151 = scmp.lt.s32.totalorder %s10, 2
    // Predicated region
    $region21: #{f_random_proj_forward.14} parent=5 // pred_check
      %p152 = pneg %p151
    $region22: #{f_random_proj_forward.14} parent=5 // pred_check_branch
      %154 = sbr.rel (%p152) target = $region24
    $region23: #{f_random_proj_forward.14} parent=5 // pred_region
      // Predicated region
      $region25: #{f_random_proj_forward.14} parent=23 // pred_check
        %p155 = pneg %p30
      $region26: #{f_random_proj_forward.14} parent=23 // pred_check_branch
        %157 = sbr.rel (%p155) target = $region28
      $region27: #{f_random_proj_forward.14} parent=23 // pred_region
        %s158 = smul.u32 4, %s10
        %p159 = scmp.lt.s32.totalorder %s158, 7
        %s160 = scalar_select %p159, %s158, 7
        %s161 = smul.addr %s160, 2
        %s162 = smul.addr %s161, 4
        %s163 = scalar_lea.vmem %s0, %s162
        %s164 = smul.u32 4, %s10
      $region28: #{f_random_proj_forward.14} parent=23 // pred_fallthru
        _
      // Predicated region
      $region29: #{f_random_proj_forward.14} parent=23 // pred_check
        %p165 = pneg %p56
      $region30: #{f_random_proj_forward.14} parent=23 // pred_check_branch
        %167 = sbr.rel (%p165) target = $region32
      $region31: #{f_random_proj_forward.14} parent=23 // pred_region
        %s168 = smul.u32 4, %s10
        %p169 = scmp.lt.s32.totalorder %s168, 7
        %s170 = scalar_select %p169, %s168, 7
        %s171 = smul.addr %s170, 2
        %s172 = smul.addr %s171, 4
        %s173 = scalar_lea.vmem %s1, %s172
        %s174 = smul.u32 4, %s10
      $region32: #{f_random_proj_forward.14} parent=23 // pred_fallthru
        _
    $region24: #{f_random_proj_forward.14} parent=5 // pred_fallthru
      _
    %p175 = scmp.le.s32.totalorder 1, %s10
    %p176 = scmp.lt.s32.totalorder %s10, 3
    %p177 = pnand %p175, %p176
    %p178 = pneg %p177
    // Predicated region
    $region33: #{f_random_proj_forward.14} parent=5 // pred_check
      _
    $region34: #{f_random_proj_forward.14} parent=5 // pred_check_branch
      %180 = sbr.rel (%p177) target = $region36
    $region35: #{f_random_proj_forward.14} parent=5 // pred_region
      %s181 = ssub.s32 %s10, 1
      %s182 = smul.u32 4, %s15
      %p183 = scmp.lt.s32.totalorder %s182, 7
      %s184 = scalar_select %p183, %s182, 7
      %s185 = smul.addr %s184, 2
      %s186 = smul.addr %s185, 4
      %s187 = scalar_lea.vmem %s0, %s186
      %p188 = pneg %p36
      %p189 = pneg %p33
      %s190 = smul.u32 4, %s15
      %p191 = scmp.lt.s32.totalorder %s190, 7
      %s192 = scalar_select %p191, %s190, 7
      %s193 = smul.addr %s192, 2
      %s194 = smul.addr %s193, 4
      %s195 = scalar_lea.vmem %s1, %s194
      %p196 = pneg %p62
      %p197 = pneg %p59
      %p198 = pneg %p83
      %p199 = pneg %p80
      %p200 = pneg %p104
      %p201 = pneg %p101
      %p202 = pneg %p130
      %p203 = pneg %p127
      %s204 = smul.u32 4, %s15
      %p205 = scmp.lt.s32.totalorder %s204, 7
      %s206 = scalar_select %p205, %s204, 7
      %s207 = smul.addr %s206, 4
      %s208 = scalar_lea.vmem %s4, %s207
      %s209 = smul.u32 4, %s15
      %p210 = scmp.lt.s32.totalorder %s209, 7
      %s211 = scalar_select %p210, %s209, 7
      %s212 = smul.addr %s211, 2
      %s213 = smul.addr %s212, 4
      %s214 = scalar_lea.vmem %s0, %s213
      %s215 = smul.u32 4, %s15
      %s216 = smul.u32 4, %s15
      %p217 = scmp.lt.s32.totalorder %s216, 7
      %s218 = scalar_select %p217, %s216, 7
      %s219 = smul.addr %s218, 2
      %s220 = smul.addr %s219, 4
      %s221 = scalar_lea.vmem %s1, %s220
      %s222 = smul.u32 4, %s15
      %s223 = smul.u32 4, %s15
      %p224 = scmp.lt.s32.totalorder %s223, 7
      %s225 = scalar_select %p224, %s223, 7
      %s226 = smul.addr %s225, 4
      %s227 = scalar_lea.vmem %s4, %s226
      %s228 = smul.u32 4, %s15
      %v230 = vld [vmem:[%s214] sm:$0xff]
      %v231 = vld [vmem:[%s214 + $0x8] sm:$0xff]
      %v232 = vld [vmem:[%s214 + $0x10] sm:$0xff]
      %v233 = vld [vmem:[%s214 + $0x18] sm:$0xff]
      %v234 = vld [vmem:[%s221] sm:$0xff]
      %v235 = vld [vmem:[%s221 + $0x8] sm:$0xff]
      %v236 = vld [vmem:[%s221 + $0x10] sm:$0xff]
      %v237 = vld [vmem:[%s221 + $0x18] sm:$0xff]
      %v238 = vadd.bf16 %v230, %v234
      %v239 = vadd.bf16 %v231, %v235
      %v240 = vadd.bf16 %v232, %v236
      %v241 = vadd.bf16 %v233, %v237
      %v242 = vld [vmem:[%s2] sm:$0xf]
      %v243 = vld [vmem:[%s2 + $0x4] sm:$0xf]
      %v244 = vld [vmem:[%s2 + $0x8] sm:$0xf]
      %v245 = vld [vmem:[%s2 + $0xc] sm:$0xf]
      %v246 = vld [vmem:[%s2 + $0x10] sm:$0xf]
      %v247 = vld [vmem:[%s2 + $0x14] sm:$0xf]
      %v248 = vld [vmem:[%s2 + $0x18] sm:$0xf]
      %v249 = vld [vmem:[%s2 + $0x1c] sm:$0xf]
      %v250 = vld [vmem:[%s2 + $0x20] sm:$0xf]
      %v251 = vld [vmem:[%s2 + $0x24] sm:$0xf]
      %v252 = vld [vmem:[%s2 + $0x28] sm:$0xf]
      %v253 = vld [vmem:[%s2 + $0x2c] sm:$0xf]
      %v254 = vld [vmem:[%s2 + $0x30] sm:$0xf]
      %v255 = vld [vmem:[%s2 + $0x34] sm:$0xf]
      %v256 = vld [vmem:[%s2 + $0x38] sm:$0xf]
      %v257 = vld [vmem:[%s2 + $0x3c] sm:$0xf]
      %v258 = vld [vmem:[%s2 + $0x40] sm:$0xf]
      %v259 = vld [vmem:[%s2 + $0x44] sm:$0xf]
      %v260 = vld [vmem:[%s2 + $0x48] sm:$0xf]
      %v261 = vld [vmem:[%s2 + $0x4c] sm:$0xf]
      %v262 = vld [vmem:[%s2 + $0x50] sm:$0xf]
      %v263 = vld [vmem:[%s2 + $0x54] sm:$0xf]
      %v264 = vld [vmem:[%s2 + $0x58] sm:$0xf]
      %v265 = vld [vmem:[%s2 + $0x5c] sm:$0xf]
      %v266 = vld [vmem:[%s2 + $0x60] sm:$0xf]
      %v267 = vld [vmem:[%s2 + $0x64] sm:$0xf]
      %v268 = vld [vmem:[%s2 + $0x68] sm:$0xf]
      %v269 = vld [vmem:[%s2 + $0x6c] sm:$0xf]
      %v270 = vld [vmem:[%s2 + $0x70] sm:$0xf]
      %v271 = vld [vmem:[%s2 + $0x74] sm:$0xf]
      %v272 = vld [vmem:[%s2 + $0x78] sm:$0xf]
      %v273 = vld [vmem:[%s2 + $0x7c] sm:$0xf]
      %v274 = vld [vmem:[%s3] sm:$0x1]
      %v276 = vlaneseq
      %v277 = vshrl.u32 %v276, 7
      %v278 = vsub.s32 0, %v277
      %v279 = vrot.slane %v274, %v278
      %v285 = vunpack.c.l.b16 %v238
      %v286 = vunpack.c.h.b16 %v238
      %v287 = vunpack.c.l.b16 %v239
      %v288 = vunpack.c.h.b16 %v239
      %v289 = vunpack.c.l.b16 %v240
      %v290 = vunpack.c.h.b16 %v240
      %v291 = vunpack.c.l.b16 %v241
      %v292 = vunpack.c.h.b16 %v241
      %v293 = vpack.c.b16 %v287, %v285
      %v294 = vpack.c.b16 %v288, %v286
      %v295 = vpack.c.b16 %v291, %v289
      %v296 = vpack.c.b16 %v292, %v290
      %v333 = vunpack.c.l.b16 %v242
      %v334 = vunpack.c.l.b16 %v243
      %v335 = vunpack.c.l.b16 %v244
      %v336 = vunpack.c.l.b16 %v245
      %v337 = vunpack.c.l.b16 %v246
      %v338 = vunpack.c.l.b16 %v247
      %v339 = vunpack.c.l.b16 %v248
      %v340 = vunpack.c.l.b16 %v249
      %v341 = vunpack.c.l.b16 %v250
      %v342 = vunpack.c.l.b16 %v251
      %v343 = vunpack.c.l.b16 %v252
      %v344 = vunpack.c.l.b16 %v253
      %v345 = vunpack.c.l.b16 %v254
      %v346 = vunpack.c.l.b16 %v255
      %v347 = vunpack.c.l.b16 %v256
      %v348 = vunpack.c.l.b16 %v257
      %v349 = vunpack.c.l.b16 %v258
      %v350 = vunpack.c.l.b16 %v259
      %v351 = vunpack.c.l.b16 %v260
      %v352 = vunpack.c.l.b16 %v261
      %v353 = vunpack.c.l.b16 %v262
      %v354 = vunpack.c.l.b16 %v263
      %v355 = vunpack.c.l.b16 %v264
      %v356 = vunpack.c.l.b16 %v265
      %v357 = vunpack.c.l.b16 %v266
      %v358 = vunpack.c.l.b16 %v267
      %v359 = vunpack.c.l.b16 %v268
      %v360 = vunpack.c.l.b16 %v269
      %v361 = vunpack.c.l.b16 %v270
      %v362 = vunpack.c.l.b16 %v271
      %v363 = vunpack.c.l.b16 %v272
      %v364 = vunpack.c.l.b16 %v273
      %v365 = vpack.c.b16 %v334, %v333
      %v366 = vpack.c.b16 %v336, %v335
      %v367 = vpack.c.b16 %v338, %v337
      %v368 = vpack.c.b16 %v340, %v339
      %v369 = vpack.c.b16 %v342, %v341
      %v370 = vpack.c.b16 %v344, %v343
      %v371 = vpack.c.b16 %v346, %v345
      %v372 = vpack.c.b16 %v348, %v347
      %v373 = vpack.c.b16 %v350, %v349
      %v374 = vpack.c.b16 %v352, %v351
      %v375 = vpack.c.b16 %v354, %v353
      %v376 = vpack.c.b16 %v356, %v355
      %v377 = vpack.c.b16 %v358, %v357
      %v378 = vpack.c.b16 %v360, %v359
      %v379 = vpack.c.b16 %v362, %v361
      %v380 = vpack.c.b16 %v364, %v363
      %397 = vmatprep.subr.bf16.mxu0 0
      %398 = vmatpush1.bf16.msra.mxu0 %v365
      %399 = vmatprep.subr.bf16.mxu0 0
      %400 = vmatpush1.bf16.msra.mxu0 %v366
      %401 = vmatprep.subr.bf16.mxu0 0
      %402 = vmatpush1.bf16.msra.mxu0 %v367
      %403 = vmatprep.subr.bf16.mxu0 0
      %404 = vmatpush1.bf16.msra.mxu0 %v368
      %405 = vmatprep.subr.bf16.mxu0 0
      %406 = vmatpush1.bf16.msra.mxu0 %v369
      %407 = vmatprep.subr.bf16.mxu0 0
      %408 = vmatpush1.bf16.msra.mxu0 %v370
      %409 = vmatprep.subr.bf16.mxu0 0
      %410 = vmatpush1.bf16.msra.mxu0 %v371
      %411 = vmatprep.subr.bf16.mxu0 0
      %412 = vmatpush1.bf16.msra.mxu0 %v372
      %413 = vmatprep.subr.bf16.mxu0 0
      %414 = vmatpush1.bf16.msra.mxu0 %v373
      %415 = vmatprep.subr.bf16.mxu0 0
      %416 = vmatpush1.bf16.msra.mxu0 %v374
      %417 = vmatprep.subr.bf16.mxu0 0
      %418 = vmatpush1.bf16.msra.mxu0 %v375
      %419 = vmatprep.subr.bf16.mxu0 0
      %420 = vmatpush1.bf16.msra.mxu0 %v376
      %421 = vmatprep.subr.bf16.mxu0 0
      %422 = vmatpush1.bf16.msra.mxu0 %v377
      %423 = vmatprep.subr.bf16.mxu0 0
      %424 = vmatpush1.bf16.msra.mxu0 %v378
      %425 = vmatprep.subr.bf16.mxu0 0
      %426 = vmatpush1.bf16.msra.mxu0 %v379
      %427 = vmatprep.subr.bf16.mxu0 0
      %428 = vmatpush1.bf16.msra.mxu0 %v380
      %429 = vmatprep.mubr.bf16.mxu0 %v294
      %430 = vmatmul.mubr.bf16.gmra.mrb[0].mxu0 %v293
      %v431 = vpop.f32.mrb[0].mxu0
      %v432 = vadd.f32 %v279, %v431
      %v433 = vpop.f32.mrb[0].mxu0
      %v434 = vpop.f32.mrb[0].mxu0
      %v435 = vadd.f32 %v279, %v434
      %v436 = vpop.f32.mrb[0].mxu0
      %437 = vmatprep.mubr.bf16.mxu0 %v296
      %438 = vmatmul.mubr.bf16.gmra.mrb[0].mxu0 %v295
      %v439 = vpop.f32.mrb[0].mxu0
      %v440 = vadd.f32 %v279, %v439
      %v441 = vpop.f32.mrb[0].mxu0
      %v442 = vpop.f32.mrb[0].mxu0
      %v443 = vadd.f32 %v279, %v442
      %v444 = vpop.f32.mrb[0].mxu0
      %445 = vdwg.mxu0
      %v446 = vpack.c.bf16 %v435, %v432
      %v447 = vpack.c.bf16 %v443, %v440
      %v450 = vunpack.c.l.b16 %v446
      %v451 = vunpack.c.h.b16 %v446
      %v452 = vunpack.c.l.b16 %v447
      %v453 = vunpack.c.h.b16 %v447
      %v454 = vpack.c.b16 %v450, %v450
      %v455 = vpack.c.b16 %v451, %v451
      %v456 = vpack.c.b16 %v452, %v452
      %v457 = vpack.c.b16 %v453, %v453
      %462 = vst [vmem:[%s227] sm:$0xf] %v454
      %463 = vst [vmem:[%s227 + $0x4] sm:$0xf] %v455
      %464 = vst [vmem:[%s227 + $0x8] sm:$0xf] %v456
      %465 = vst [vmem:[%s227 + $0xc] sm:$0xf] %v457
      %s466 = smul.u32 4, %s15
      %p467 = scmp.lt.s32.totalorder %s466, 7
      %s468 = scalar_select %p467, %s466, 7
      %s469 = smul.addr %s468, 4
      %s470 = scalar_lea.vmem %s4, %s469
      // Predicated region
      $region37: #{f_random_proj_forward.14} parent=35 // pred_check
        %p471 = pneg %p127
      $region38: #{f_random_proj_forward.14} parent=35 // pred_check_branch
        %473 = sbr.rel (%p471) target = $region40
      $region39: #{f_random_proj_forward.14} parent=35 // pred_region
        %s474 = smul.u32 4, %s15
      $region40: #{f_random_proj_forward.14} parent=35 // pred_fallthru
        _
    $region36: #{f_random_proj_forward.14} parent=5 // pred_fallthru
      _
    %p475 = scmp.le.s32.totalorder 2, %s10
    // Predicated region
    $region41: #{f_random_proj_forward.14} parent=5 // pred_check
      %p476 = pneg %p475
    $region42: #{f_random_proj_forward.14} parent=5 // pred_check_branch
      %478 = sbr.rel (%p476) target = $region44
    $region43: #{f_random_proj_forward.14} parent=5 // pred_region
      %s479 = ssub.s32 %s10, 2
      // Predicated region
      $region45: #{f_random_proj_forward.14} parent=43 // pred_check
        %p480 = pneg %p133
      $region46: #{f_random_proj_forward.14} parent=43 // pred_check_branch
        %482 = sbr.rel (%p480) target = $region48
      $region47: #{f_random_proj_forward.14} parent=43 // pred_region
        %s483 = smul.u32 4, %s16
        %p484 = scmp.lt.s32.totalorder %s483, 7
        %s485 = scalar_select %p484, %s483, 7
        %s486 = smul.addr %s485, 4
        %s487 = scalar_lea.vmem %s4, %s486
      $region48: #{f_random_proj_forward.14} parent=43 // pred_fallthru
        _
    $region44: #{f_random_proj_forward.14} parent=5 // pred_fallthru
      _
  $region6: #{f_random_proj_forward.14} parent=0 // loop_footer
    %s14 = sadd.s32 1, %s10
  $region7: #{f_random_proj_forward.14} parent=0 // loop_footer_branch
    %9 = sbr.rel target = $region3
  $region8: #{f_random_proj_forward.14} parent=0 // loop_exit
    _

// kernel: f_random_proj_forward.15
$region0: #{f_random_proj_forward.15}
  #allocation0 [shape = 'u32[]', space=smem, size = 0x4, offset = 0x4, fixed_abs, tag = 'smem constant byte address 0x4 - core index']
  #allocation1 [shape = 'u32[144,128]{1,0:T(1,128)}', space=vmem, size = 0x12000, scoped, tag = 'internal scratch']
  %s0 = inlined_call_operand.vmem [shape: bf16[256,128], index: 0, kind: input, shape index: {}]
  %s1 = inlined_call_operand.vmem [shape: bf16[256,128], index: 1, kind: input, shape index: {}]
  %s2 = inlined_call_operand.vmem [shape: bf16[128,128], index: 2, kind: input, shape index: {}]
  %s3 = inlined_call_operand.vmem [shape: f32[1,128], index: 3, kind: input, shape index: {}]
  %s4 = inlined_call_operand.vmem [shape: bf16[256,128], index: 4, kind: output, shape index: {}]
  %s5 = sld [smem:[#allocation0]]
  $region49: #{f_random_proj_forward.15} parent=0
    _
  %s7 = ssub.s32 1, %s5
  %s8 = scalar_select 0, %s7, %s5
  loop: start=0, step=1, limit=4
  $region2: #{f_random_proj_forward.15} parent=0 // loop_pre_header
    _
  $region3: #{f_random_proj_forward.15} parent=0 // loop_header
    %s10 = sphi 0, %s14
    %p11 = scmp.ge.s32.totalorder %s10, 4
    %s20 = sphi 0, %s22
    %s23 = sphi 0, %s20
    %s24 = sphi 0, %s23
    %s40 = sphi 0, %s24
    %s46 = sphi 0, %s48
    %s49 = sphi 0, %s46
    %s50 = sphi 0, %s49
    %s66 = sphi 0, %s50
    %s70 = sphi 0, %s70
    %s72 = sphi 0, %s70
    %s73 = sphi 0, %s72
    %s87 = sphi 0, %s73
    %s91 = sphi 0, %s91
    %s93 = sphi 0, %s91
    %s94 = sphi 0, %s93
    %s108 = sphi 0, %s94
    %s114 = sphi 0, %s116
    %s117 = sphi 0, %s114
    %s118 = sphi 0, %s117
    %s134 = sphi 0, %s118
  $region4: #{f_random_proj_forward.15} parent=0 // loop_header_branch
    %13 = sbr.rel (%p11) target = $region8
  $region5: #{f_random_proj_forward.15} parent=0 // loop_body
    %s15 = ssub.s32 %s10, 1
    %s16 = ssub.s32 %s10, 2
    %s17 = sadd.s32 %s10, 1
    %s18 = ssub.s32 %s10, %s17
    %p19 = scmp.eq.s32.totalorder %s18, 0
    %s21 = sadd.s32 %s20, 1
    %s22 = scalar_select %p19, %s20, %s21
    %p25 = pneg %p19
    %p26 = scmp.eq.s32.totalorder %s10, 1
    %p27 = por %p25, %p26
    %p28 = scmp.ne.s32.totalorder %s20, %s23
    %p29 = scmp.eq.s32.totalorder %s10, 0
    %p30 = por %p28, %p29
    %p31 = scmp.ne.s32.totalorder %s20, %s23
    %p32 = scmp.eq.s32.totalorder %s15, 1
    %p33 = por %p31, %p32
    %p34 = scmp.ne.s32.totalorder %s23, %s24
    %p35 = scmp.eq.s32.totalorder %s15, 0
    %p36 = por %p34, %p35
    %p37 = scmp.ne.s32.totalorder %s23, %s24
    %p38 = scmp.eq.s32.totalorder %s16, 1
    %p39 = por %p37, %p38
    %p41 = scmp.ne.s32.totalorder %s24, %s40
    %p42 = scmp.eq.s32.totalorder %s16, 0
    %p43 = por %p41, %p42
    %s44 = ssub.s32 %s10, %s17
    %p45 = scmp.eq.s32.totalorder %s44, 0
    %s47 = sadd.s32 %s46, 1
    %s48 = scalar_select %p45, %s46, %s47
    %p51 = pneg %p45
    %p52 = scmp.eq.s32.totalorder %s10, 1
    %p53 = por %p51, %p52
    %p54 = scmp.ne.s32.totalorder %s46, %s49
    %p55 = scmp.eq.s32.totalorder %s10, 0
    %p56 = por %p54, %p55
    %p57 = scmp.ne.s32.totalorder %s46, %s49
    %p58 = scmp.eq.s32.totalorder %s15, 1
    %p59 = por %p57, %p58
    %p60 = scmp.ne.s32.totalorder %s49, %s50
    %p61 = scmp.eq.s32.totalorder %s15, 0
    %p62 = por %p60, %p61
    %p63 = scmp.ne.s32.totalorder %s49, %s50
    %p64 = scmp.eq.s32.totalorder %s16, 1
    %p65 = por %p63, %p64
    %p67 = scmp.ne.s32.totalorder %s50, %s66
    %p68 = scmp.eq.s32.totalorder %s16, 0
    %p69 = por %p67, %p68
    %s71 = sadd.s32 %s70, 1
    %p74 = scmp.eq.s32.totalorder %s10, 1
    %p75 = scmp.ne.s32.totalorder %s70, %s72
    %p76 = scmp.eq.s32.totalorder %s10, 0
    %p77 = por %p75, %p76
    %p78 = scmp.ne.s32.totalorder %s70, %s72
    %p79 = scmp.eq.s32.totalorder %s15, 1
    %p80 = por %p78, %p79
    %p81 = scmp.ne.s32.totalorder %s72, %s73
    %p82 = scmp.eq.s32.totalorder %s15, 0
    %p83 = por %p81, %p82
    %p84 = scmp.ne.s32.totalorder %s72, %s73
    %p85 = scmp.eq.s32.totalorder %s16, 1
    %p86 = por %p84, %p85
    %p88 = scmp.ne.s32.totalorder %s73, %s87
    %p89 = scmp.eq.s32.totalorder %s16, 0
    %p90 = por %p88, %p89
    %s92 = sadd.s32 %s91, 1
    %p95 = scmp.eq.s32.totalorder %s10, 1
    %p96 = scmp.ne.s32.totalorder %s91, %s93
    %p97 = scmp.eq.s32.totalorder %s10, 0
    %p98 = por %p96, %p97
    %p99 = scmp.ne.s32.totalorder %s91, %s93
    %p100 = scmp.eq.s32.totalorder %s15, 1
    %p101 = por %p99, %p100
    %p102 = scmp.ne.s32.totalorder %s93, %s94
    %p103 = scmp.eq.s32.totalorder %s15, 0
    %p104 = por %p102, %p103
    %p105 = scmp.ne.s32.totalorder %s93, %s94
    %p106 = scmp.eq.s32.totalorder %s16, 1
    %p107 = por %p105, %p106
    %p109 = scmp.ne.s32.totalorder %s94, %s108
    %p110 = scmp.eq.s32.totalorder %s16, 0
    %p111 = por %p109, %p110
    %s112 = ssub.s32 %s10, %s17
    %p113 = scmp.eq.s32.totalorder %s112, 0
    %s115 = sadd.s32 %s114, 1
    %s116 = scalar_select %p113, %s114, %s115
    %p119 = pneg %p113
    %p120 = scmp.eq.s32.totalorder %s10, 1
    %p121 = por %p119, %p120
    %p122 = scmp.ne.s32.totalorder %s114, %s117
    %p123 = scmp.eq.s32.totalorder %s10, 0
    %p124 = por %p122, %p123
    %p125 = scmp.ne.s32.totalorder %s114, %s117
    %p126 = scmp.eq.s32.totalorder %s15, 1
    %p127 = por %p125, %p126
    %p128 = scmp.ne.s32.totalorder %s117, %s118
    %p129 = scmp.eq.s32.totalorder %s15, 0
    %p130 = por %p128, %p129
    %p131 = scmp.ne.s32.totalorder %s117, %s118
    %p132 = scmp.eq.s32.totalorder %s16, 1
    %p133 = por %p131, %p132
    %p135 = scmp.ne.s32.totalorder %s118, %s134
    %p136 = scmp.eq.s32.totalorder %s16, 0
    %p137 = por %p135, %p136
    %p138 = scmp.le.s32.totalorder 1, %s10
    %p139 = scmp.lt.s32.totalorder %s10, 3
    %p140 = pnand %p138, %p139
    %p141 = pneg %p140
    // Predicated region
    $region9: #{f_random_proj_forward.15} parent=5 // pred_check
      _
    $region10: #{f_random_proj_forward.15} parent=5 // pred_check_branch
      %143 = sbr.rel (%p140) target = $region12
    $region11: #{f_random_proj_forward.15} parent=5 // pred_region
      %s144 = ssub.s32 %s10, 1
      // Predicated region
      $region13: #{f_random_proj_forward.15} parent=11 // pred_check
        %p145 = pneg %p83
      $region14: #{f_random_proj_forward.15} parent=11 // pred_check_branch
        %147 = sbr.rel (%p145) target = $region16
      $region15: #{f_random_proj_forward.15} parent=11 // pred_region
        _
      $region16: #{f_random_proj_forward.15} parent=11 // pred_fallthru
        _
      // Predicated region
      $region17: #{f_random_proj_forward.15} parent=11 // pred_check
        %p148 = pneg %p104
      $region18: #{f_random_proj_forward.15} parent=11 // pred_check_branch
        %150 = sbr.rel (%p148) target = $region20
      $region19: #{f_random_proj_forward.15} parent=11 // pred_region
        _
      $region20: #{f_random_proj_forward.15} parent=11 // pred_fallthru
        _
    $region12: #{f_random_proj_forward.15} parent=5 // pred_fallthru
      _
    %p151 = scmp.lt.s32.totalorder %s10, 2
    // Predicated region
    $region21: #{f_random_proj_forward.15} parent=5 // pred_check
      %p152 = pneg %p151
    $region22: #{f_random_proj_forward.15} parent=5 // pred_check_branch
      %154 = sbr.rel (%p152) target = $region24
    $region23: #{f_random_proj_forward.15} parent=5 // pred_region
      // Predicated region
      $region25: #{f_random_proj_forward.15} parent=23 // pred_check
        %p155 = pneg %p30
      $region26: #{f_random_proj_forward.15} parent=23 // pred_check_branch
        %157 = sbr.rel (%p155) target = $region28
      $region27: #{f_random_proj_forward.15} parent=23 // pred_region
        %s158 = smul.u32 16, %s10
        %p159 = scmp.lt.s32.totalorder %s158, 31
        %s160 = scalar_select %p159, %s158, 31
        %s161 = smul.addr %s160, 4
        %s162 = scalar_lea.vmem %s0, %s161
        %s163 = smul.u32 16, %s10
      $region28: #{f_random_proj_forward.15} parent=23 // pred_fallthru
        _
      // Predicated region
      $region29: #{f_random_proj_forward.15} parent=23 // pred_check
        %p164 = pneg %p56
      $region30: #{f_random_proj_forward.15} parent=23 // pred_check_branch
        %166 = sbr.rel (%p164) target = $region32
      $region31: #{f_random_proj_forward.15} parent=23 // pred_region
        %s167 = smul.u32 16, %s10
        %p168 = scmp.lt.s32.totalorder %s167, 31
        %s169 = scalar_select %p168, %s167, 31
        %s170 = smul.addr %s169, 4
        %s171 = scalar_lea.vmem %s1, %s170
        %s172 = smul.u32 16, %s10
      $region32: #{f_random_proj_forward.15} parent=23 // pred_fallthru
        _
    $region24: #{f_random_proj_forward.15} parent=5 // pred_fallthru
      _
    %p173 = scmp.le.s32.totalorder 1, %s10
    %p174 = scmp.lt.s32.totalorder %s10, 3
    %p175 = pnand %p173, %p174
    %p176 = pneg %p175
    // Predicated region
    $region33: #{f_random_proj_forward.15} parent=5 // pred_check
      _
    $region34: #{f_random_proj_forward.15} parent=5 // pred_check_branch
      %178 = sbr.rel (%p175) target = $region36
    $region35: #{f_random_proj_forward.15} parent=5 // pred_region
      %s179 = ssub.s32 %s10, 1
      %s180 = smul.u32 16, %s15
      %p181 = scmp.lt.s32.totalorder %s180, 31
      %s182 = scalar_select %p181, %s180, 31
      %s183 = smul.addr %s182, 4
      %s184 = scalar_lea.vmem %s0, %s183
      %p185 = pneg %p36
      %p186 = pneg %p33
      %s187 = smul.u32 16, %s15
      %p188 = scmp.lt.s32.totalorder %s187, 31
      %s189 = scalar_select %p188, %s187, 31
      %s190 = smul.addr %s189, 4
      %s191 = scalar_lea.vmem %s1, %s190
      %p192 = pneg %p62
      %p193 = pneg %p59
      %p194 = pneg %p83
      %p195 = pneg %p80
      %p196 = pneg %p104
      %p197 = pneg %p101
      %p198 = pneg %p130
      %p199 = pneg %p127
      %s200 = smul.u32 16, %s15
      %p201 = scmp.lt.s32.totalorder %s200, 31
      %s202 = scalar_select %p201, %s200, 31
      %s203 = smul.addr %s202, 4
      %s204 = scalar_lea.vmem %s4, %s203
      %s205 = smul.u32 16, %s15
      %p206 = scmp.lt.s32.totalorder %s205, 31
      %s207 = scalar_select %p206, %s205, 31
      %s208 = smul.addr %s207, 4
      %s209 = scalar_lea.vmem %s0, %s208
      %s210 = smul.u32 16, %s15
      %s211 = smul.u32 16, %s15
      %p212 = scmp.lt.s32.totalorder %s211, 31
      %s213 = scalar_select %p212, %s211, 31
      %s214 = smul.addr %s213, 4
      %s215 = scalar_lea.vmem %s1, %s214
      %s216 = smul.u32 16, %s15
      %s217 = smul.u32 16, %s15
      %p218 = scmp.lt.s32.totalorder %s217, 31
      %s219 = scalar_select %p218, %s217, 31
      %s220 = smul.addr %s219, 4
      %s221 = scalar_lea.vmem %s4, %s220
      %s222 = smul.u32 16, %s15
      %v224 = vld [vmem:[%s209] sm:$0xf]
      %v225 = vld [vmem:[%s209 + $0x4] sm:$0xf]
      %v226 = vld [vmem:[%s209 + $0x8] sm:$0xf]
      %v227 = vld [vmem:[%s209 + $0xc] sm:$0xf]
      %v228 = vld [vmem:[%s209 + $0x10] sm:$0xf]
      %v229 = vld [vmem:[%s209 + $0x14] sm:$0xf]
      %v230 = vld [vmem:[%s209 + $0x18] sm:$0xf]
      %v231 = vld [vmem:[%s209 + $0x1c] sm:$0xf]
      %v232 = vld [vmem:[%s209 + $0x20] sm:$0xf]
      %v233 = vld [vmem:[%s209 + $0x24] sm:$0xf]
      %v234 = vld [vmem:[%s209 + $0x28] sm:$0xf]
      %v235 = vld [vmem:[%s209 + $0x2c] sm:$0xf]
      %v236 = vld [vmem:[%s209 + $0x30] sm:$0xf]
      %v237 = vld [vmem:[%s209 + $0x34] sm:$0xf]
      %v238 = vld [vmem:[%s209 + $0x38] sm:$0xf]
      %v239 = vld [vmem:[%s209 + $0x3c] sm:$0xf]
      %v240 = vld [vmem:[%s215] sm:$0xf]
      %v241 = vld [vmem:[%s215 + $0x4] sm:$0xf]
      %v242 = vld [vmem:[%s215 + $0x8] sm:$0xf]
      %v243 = vld [vmem:[%s215 + $0xc] sm:$0xf]
      %v244 = vld [vmem:[%s215 + $0x10] sm:$0xf]
      %v245 = vld [vmem:[%s215 + $0x14] sm:$0xf]
      %v246 = vld [vmem:[%s215 + $0x18] sm:$0xf]
      %v247 = vld [vmem:[%s215 + $0x1c] sm:$0xf]
      %v248 = vld [vmem:[%s215 + $0x20] sm:$0xf]
      %v249 = vld [vmem:[%s215 + $0x24] sm:$0xf]
      %v250 = vld [vmem:[%s215 + $0x28] sm:$0xf]
      %v251 = vld [vmem:[%s215 + $0x2c] sm:$0xf]
      %v252 = vld [vmem:[%s215 + $0x30] sm:$0xf]
      %v253 = vld [vmem:[%s215 + $0x34] sm:$0xf]
      %v254 = vld [vmem:[%s215 + $0x38] sm:$0xf]
      %v255 = vld [vmem:[%s215 + $0x3c] sm:$0xf]
      %v256 = vadd.bf16 %v224, %v240
      %v257 = vadd.bf16 %v225, %v241
      %v258 = vadd.bf16 %v226, %v242
      %v259 = vadd.bf16 %v227, %v243
      %v260 = vadd.bf16 %v228, %v244
      %v261 = vadd.bf16 %v229, %v245
      %v262 = vadd.bf16 %v230, %v246
      %v263 = vadd.bf16 %v231, %v247
      %v264 = vadd.bf16 %v232, %v248
      %v265 = vadd.bf16 %v233, %v249
      %v266 = vadd.bf16 %v234, %v250
      %v267 = vadd.bf16 %v235, %v251
      %v268 = vadd.bf16 %v236, %v252
      %v269 = vadd.bf16 %v237, %v253
      %v270 = vadd.bf16 %v238, %v254
      %v271 = vadd.bf16 %v239, %v255
      %v272 = vld [vmem:[%s2] sm:$0xf]
      %v273 = vld [vmem:[%s2 + $0x4] sm:$0xf]
      %v274 = vld [vmem:[%s2 + $0x8] sm:$0xf]
      %v275 = vld [vmem:[%s2 + $0xc] sm:$0xf]
      %v276 = vld [vmem:[%s2 + $0x10] sm:$0xf]
      %v277 = vld [vmem:[%s2 + $0x14] sm:$0xf]
      %v278 = vld [vmem:[%s2 + $0x18] sm:$0xf]
      %v279 = vld [vmem:[%s2 + $0x1c] sm:$0xf]
      %v280 = vld [vmem:[%s2 + $0x20] sm:$0xf]
      %v281 = vld [vmem:[%s2 + $0x24] sm:$0xf]
      %v282 = vld [vmem:[%s2 + $0x28] sm:$0xf]
      %v283 = vld [vmem:[%s2 + $0x2c] sm:$0xf]
      %v284 = vld [vmem:[%s2 + $0x30] sm:$0xf]
      %v285 = vld [vmem:[%s2 + $0x34] sm:$0xf]
      %v286 = vld [vmem:[%s2 + $0x38] sm:$0xf]
      %v287 = vld [vmem:[%s2 + $0x3c] sm:$0xf]
      %v288 = vld [vmem:[%s3] sm:$0x1]
      %v290 = vlaneseq
      %v291 = vshrl.u32 %v290, 7
      %v292 = vsub.s32 0, %v291
      %v293 = vrot.slane %v288, %v292
      %v311 = vunpack.c.l.b16 %v256
      %v312 = vunpack.c.l.b16 %v257
      %v313 = vunpack.c.l.b16 %v258
      %v314 = vunpack.c.l.b16 %v259
      %v315 = vunpack.c.l.b16 %v260
      %v316 = vunpack.c.l.b16 %v261
      %v317 = vunpack.c.l.b16 %v262
      %v318 = vunpack.c.l.b16 %v263
      %v319 = vunpack.c.l.b16 %v264
      %v320 = vunpack.c.l.b16 %v265
      %v321 = vunpack.c.l.b16 %v266
      %v322 = vunpack.c.l.b16 %v267
      %v323 = vunpack.c.l.b16 %v268
      %v324 = vunpack.c.l.b16 %v269
      %v325 = vunpack.c.l.b16 %v270
      %v326 = vunpack.c.l.b16 %v271
      %v327 = vpack.c.b16 %v312, %v311
      %v328 = vpack.c.b16 %v314, %v313
      %v329 = vpack.c.b16 %v316, %v315
      %v330 = vpack.c.b16 %v318, %v317
      %v331 = vpack.c.b16 %v320, %v319
      %v332 = vpack.c.b16 %v322, %v321
      %v333 = vpack.c.b16 %v324, %v323
      %v334 = vpack.c.b16 %v326, %v325
      %v359 = vunpack.c.l.b16 %v272
      %v360 = vunpack.c.l.b16 %v273
      %v361 = vunpack.c.l.b16 %v274
      %v362 = vunpack.c.l.b16 %v275
      %v363 = vunpack.c.l.b16 %v276
      %v364 = vunpack.c.l.b16 %v277
      %v365 = vunpack.c.l.b16 %v278
      %v366 = vunpack.c.l.b16 %v279
      %v367 = vunpack.c.l.b16 %v280
      %v368 = vunpack.c.l.b16 %v281
      %v369 = vunpack.c.l.b16 %v282
      %v370 = vunpack.c.l.b16 %v283
      %v371 = vunpack.c.l.b16 %v284
      %v372 = vunpack.c.l.b16 %v285
      %v373 = vunpack.c.l.b16 %v286
      %v374 = vunpack.c.l.b16 %v287
      %v375 = vpack.c.b16 %v360, %v359
      %v376 = vpack.c.b16 %v362, %v361
      %v377 = vpack.c.b16 %v364, %v363
      %v378 = vpack.c.b16 %v366, %v365
      %v379 = vpack.c.b16 %v368, %v367
      %v380 = vpack.c.b16 %v370, %v369
      %v381 = vpack.c.b16 %v372, %v371
      %v382 = vpack.c.b16 %v374, %v373
      %391 = vmatprep.subr.bf16.mxu0 0
      %392 = vmatpush1.bf16.msra.mxu0 %v375
      %393 = vmatprep.subr.bf16.mxu0 0
      %394 = vmatpush1.bf16.msra.mxu0 %v376
      %395 = vmatprep.subr.bf16.mxu0 0
      %396 = vmatpush1.bf16.msra.mxu0 %v377
      %397 = vmatprep.subr.bf16.mxu0 0
      %398 = vmatpush1.bf16.msra.mxu0 %v378
      %399 = vmatprep.subr.bf16.mxu0 0
      %400 = vmatpush1.bf16.msra.mxu0 %v379
      %401 = vmatprep.subr.bf16.mxu0 0
      %402 = vmatpush1.bf16.msra.mxu0 %v380
      %403 = vmatprep.subr.bf16.mxu0 0
      %404 = vmatpush1.bf16.msra.mxu0 %v381
      %405 = vmatprep.subr.bf16.mxu0 0
      %406 = vmatpush1.bf16.msra.mxu0 %v382
      %407 = vmatprep.subr.bf16.mxu0 0
      %408 = vmatpush1.bf16.msra.mxu0 0
      %409 = vmatprep.subr.bf16.mxu0 0
      %410 = vmatpush1.bf16.msra.mxu0 0
      %411 = vmatprep.subr.bf16.mxu0 0
      %412 = vmatpush1.bf16.msra.mxu0 0
      %413 = vmatprep.subr.bf16.mxu0 0
      %414 = vmatpush1.bf16.msra.mxu0 0
      %415 = vmatprep.subr.bf16.mxu0 0
      %416 = vmatpush1.bf16.msra.mxu0 0
      %417 = vmatprep.subr.bf16.mxu0 0
      %418 = vmatpush1.bf16.msra.mxu0 0
      %419 = vmatprep.subr.bf16.mxu0 0
      %420 = vmatpush1.bf16.msra.mxu0 0
      %421 = vmatprep.subr.bf16.mxu0 0
      %422 = vmatpush1.bf16.msra.mxu0 0
      %423 = vmatprep.mubr.bf16.mxu0 0
      %424 = vmatmul.mubr.bf16.gmra.mrb[0].mxu0 %v327
      %v425 = vpop.f32.mrb[0].mxu0
      %v426 = vadd.f32 %v293, %v425
      %v427 = vpop.f32.mrb[0].mxu0
      %v428 = vpop.f32.mrb[0].mxu0
      %v429 = vadd.f32 %v293, %v428
      %v430 = vpop.f32.mrb[0].mxu0
      %431 = vmatprep.mubr.bf16.mxu0 0
      %432 = vmatmul.mubr.bf16.gmra.mrb[0].mxu0 %v328
      %v433 = vpop.f32.mrb[0].mxu0
      %v434 = vadd.f32 %v293, %v433
      %v435 = vpop.f32.mrb[0].mxu0
      %v436 = vpop.f32.mrb[0].mxu0
      %v437 = vadd.f32 %v293, %v436
      %v438 = vpop.f32.mrb[0].mxu0
      %439 = vmatprep.mubr.bf16.mxu0 0
      %440 = vmatmul.mubr.bf16.gmra.mrb[0].mxu0 %v329
      %v441 = vpop.f32.mrb[0].mxu0
      %v442 = vadd.f32 %v293, %v441
      %v443 = vpop.f32.mrb[0].mxu0
      %v444 = vpop.f32.mrb[0].mxu0
      %v445 = vadd.f32 %v293, %v444
      %v446 = vpop.f32.mrb[0].mxu0
      %447 = vmatprep.mubr.bf16.mxu0 0
      %448 = vmatmul.mubr.bf16.gmra.mrb[0].mxu0 %v330
      %v449 = vpop.f32.mrb[0].mxu0
      %v450 = vadd.f32 %v293, %v449
      %v451 = vpop.f32.mrb[0].mxu0
      %v452 = vpop.f32.mrb[0].mxu0
      %v453 = vadd.f32 %v293, %v452
      %v454 = vpop.f32.mrb[0].mxu0
      %455 = vmatprep.mubr.bf16.mxu0 0
      %456 = vmatmul.mubr.bf16.gmra.mrb[0].mxu0 %v331
      %v457 = vpop.f32.mrb[0].mxu0
      %v458 = vadd.f32 %v293, %v457
      %v459 = vpop.f32.mrb[0].mxu0
      %v460 = vpop.f32.mrb[0].mxu0
      %v461 = vadd.f32 %v293, %v460
      %v462 = vpop.f32.mrb[0].mxu0
      %463 = vmatprep.mubr.bf16.mxu0 0
      %464 = vmatmul.mubr.bf16.gmra.mrb[0].mxu0 %v332
      %v465 = vpop.f32.mrb[0].mxu0
      %v466 = vadd.f32 %v293, %v465
      %v467 = vpop.f32.mrb[0].mxu0
      %v468 = vpop.f32.mrb[0].mxu0
      %v469 = vadd.f32 %v293, %v468
      %v470 = vpop.f32.mrb[0].mxu0
      %471 = vmatprep.mubr.bf16.mxu0 0
      %472 = vmatmul.mubr.bf16.gmra.mrb[0].mxu0 %v333
      %v473 = vpop.f32.mrb[0].mxu0
      %v474 = vadd.f32 %v293, %v473
      %v475 = vpop.f32.mrb[0].mxu0
      %v476 = vpop.f32.mrb[0].mxu0
      %v477 = vadd.f32 %v293, %v476
      %v478 = vpop.f32.mrb[0].mxu0
      %479 = vmatprep.mubr.bf16.mxu0 0
      %480 = vmatmul.mubr.bf16.gmra.mrb[0].mxu0 %v334
      %v481 = vpop.f32.mrb[0].mxu0
      %v482 = vadd.f32 %v293, %v481
      %v483 = vpop.f32.mrb[0].mxu0
      %v484 = vpop.f32.mrb[0].mxu0
      %v485 = vadd.f32 %v293, %v484
      %v486 = vpop.f32.mrb[0].mxu0
      %487 = vdwg.mxu0
      %v488 = vpack.c.bf16 %v429, %v426
      %v489 = vpack.c.bf16 %v437, %v434
      %v490 = vpack.c.bf16 %v445, %v442
      %v491 = vpack.c.bf16 %v453, %v450
      %v492 = vpack.c.bf16 %v461, %v458
      %v493 = vpack.c.bf16 %v469, %v466
      %v494 = vpack.c.bf16 %v477, %v474
      %v495 = vpack.c.bf16 %v485, %v482
      %v504 = vunpack.c.l.b16 %v488
      %v505 = vunpack.c.h.b16 %v488
      %v506 = vunpack.c.l.b16 %v489
      %v507 = vunpack.c.h.b16 %v489
      %v508 = vunpack.c.l.b16 %v490
      %v509 = vunpack.c.h.b16 %v490
      %v510 = vunpack.c.l.b16 %v491
      %v511 = vunpack.c.h.b16 %v491
      %v512 = vunpack.c.l.b16 %v492
      %v513 = vunpack.c.h.b16 %v492
      %v514 = vunpack.c.l.b16 %v493
      %v515 = vunpack.c.h.b16 %v493
      %v516 = vunpack.c.l.b16 %v494
      %v517 = vunpack.c.h.b16 %v494
      %v518 = vunpack.c.l.b16 %v495
      %v519 = vunpack.c.h.b16 %v495
      %v520 = vpack.c.b16 %v504, %v504
      %v521 = vpack.c.b16 %v505, %v505
      %v522 = vpack.c.b16 %v506, %v506
      %v523 = vpack.c.b16 %v507, %v507
      %v524 = vpack.c.b16 %v508, %v508
      %v525 = vpack.c.b16 %v509, %v509
      %v526 = vpack.c.b16 %v510, %v510
      %v527 = vpack.c.b16 %v511, %v511
      %v528 = vpack.c.b16 %v512, %v512
      %v529 = vpack.c.b16 %v513, %v513
      %v530 = vpack.c.b16 %v514, %v514
      %v531 = vpack.c.b16 %v515, %v515
      %v532 = vpack.c.b16 %v516, %v516
      %v533 = vpack.c.b16 %v517, %v517
      %v534 = vpack.c.b16 %v518, %v518
      %v535 = vpack.c.b16 %v519, %v519
      %552 = vst [vmem:[%s221] sm:$0xf] %v520
      %553 = vst [vmem:[%s221 + $0x4] sm:$0xf] %v521
      %554 = vst [vmem:[%s221 + $0x8] sm:$0xf] %v522
      %555 = vst [vmem:[%s221 + $0xc] sm:$0xf] %v523
      %556 = vst [vmem:[%s221 + $0x10] sm:$0xf] %v524
      %557 = vst [vmem:[%s221 + $0x14] sm:$0xf] %v525
      %558 = vst [vmem:[%s221 + $0x18] sm:$0xf] %v526
      %559 = vst [vmem:[%s221 + $0x1c] sm:$0xf] %v527
      %560 = vst [vmem:[%s221 + $0x20] sm:$0xf] %v528
      %561 = vst [vmem:[%s221 + $0x24] sm:$0xf] %v529
      %562 = vst [vmem:[%s221 + $0x28] sm:$0xf] %v530
      %563 = vst [vmem:[%s221 + $0x2c] sm:$0xf] %v531
      %564 = vst [vmem:[%s221 + $0x30] sm:$0xf] %v532
      %565 = vst [vmem:[%s221 + $0x34] sm:$0xf] %v533
      %566 = vst [vmem:[%s221 + $0x38] sm:$0xf] %v534
      %567 = vst [vmem:[%s221 + $0x3c] sm:$0xf] %v535
      %s568 = smul.u32 16, %s15
      %p569 = scmp.lt.s32.totalorder %s568, 31
      %s570 = scalar_select %p569, %s568, 31
      %s571 = smul.addr %s570, 4
      %s572 = scalar_lea.vmem %s4, %s571
      // Predicated region
      $region37: #{f_random_proj_forward.15} parent=35 // pred_check
        %p573 = pneg %p127
      $region38: #{f_random_proj_forward.15} parent=35 // pred_check_branch
        %575 = sbr.rel (%p573) target = $region40
      $region39: #{f_random_proj_forward.15} parent=35 // pred_region
        %s576 = smul.u32 16, %s15
      $region40: #{f_random_proj_forward.15} parent=35 // pred_fallthru
        _
    $region36: #{f_random_proj_forward.15} parent=5 // pred_fallthru
      _
    %p577 = scmp.le.s32.totalorder 2, %s10
    // Predicated region
    $region41: #{f_random_proj_forward.15} parent=5 // pred_check
      %p578 = pneg %p577
    $region42: #{f_random_proj_forward.15} parent=5 // pred_check_branch
      %580 = sbr.rel (%p578) target = $region44
    $region43: #{f_random_proj_forward.15} parent=5 // pred_region
      %s581 = ssub.s32 %s10, 2
      // Predicated region
      $region45: #{f_random_proj_forward.15} parent=43 // pred_check
        %p582 = pneg %p133
      $region46: #{f_random_proj_forward.15} parent=43 // pred_check_branch
        %584 = sbr.rel (%p582) target = $region48
      $region47: #{f_random_proj_forward.15} parent=43 // pred_region
        %s585 = smul.u32 16, %s16
        %p586 = scmp.lt.s32.totalorder %s585, 31
        %s587 = scalar_select %p586, %s585, 31
        %s588 = smul.addr %s587, 4
        %s589 = scalar_lea.vmem %s4, %s588
      $region48: #{f_random_proj_forward.15} parent=43 // pred_fallthru
        _
    $region44: #{f_random_proj_forward.15} parent=5 // pred_fallthru
      _
  $region6: #{f_random_proj_forward.15} parent=0 // loop_footer
    %s14 = sadd.s32 1, %s10
  $region7: #{f_random_proj_forward.15} parent=0 // loop_footer_branch
    %9 = sbr.rel target = $region3
  $region8: #{f_random_proj_forward.15} parent=0 // loop_exit
    _

</llo_original>
